<compile_context>
chip_gen: v6e
topology: v6e:2x2x1
jax: 0.10.0
libtpu: 0.0.40
codegen_flags: <defaults>
</compile_context>

<pallas_src>
import functools

import jax
import jax.numpy as jnp
from jax.experimental import pallas as pl
from jax.experimental.pallas import tpu as pltpu

# ----- hyperparameters (match the PyTorch module) -----------------------------
n_embd = 384
block_size = 256
n_head = 6
n_layer = 6
head_size = n_embd // n_head
vocab_size = 65            # len(chars); tiny-shakespeare charset
vocab_pad = 128            # lane-dense padded lm_head output width
LN_EPS = 1e-5              # nn.LayerNorm default eps
ACT_DTYPE = jnp.bfloat16   # storage dtype for weights / activations
VMEM_LIMIT = 32 * 1024 * 1024
# dropout = 0.2 -> identity in eval / deterministic forward


def _row_tile(M):
    # Largest 128-friendly tile that still leaves >=2 grid steps (v7x megacore).
    for t in (512, 256, 128, 64, 32, 16, 8):
        if M % t == 0 and M // t >= 2:
            return t
    return M


def _cparams():
    return pltpu.CompilerParams(dimension_semantics=("parallel",),
                                vmem_limit_bytes=VMEM_LIMIT)


def _layernorm(x, g, b):
    mean = jnp.mean(x, axis=-1, keepdims=True)
    var = jnp.mean(jnp.square(x - mean), axis=-1, keepdims=True)
    return (x - mean) * jax.lax.rsqrt(var + LN_EPS) * g + b


# ----- fused transformer block kernel (grid over batch) ------------------------
def _block_kernel(x_ref, g1_ref, b1_ref, wqkv_ref, pw_ref, pb_ref,
                  g2_ref, b2_ref, w1_ref, fb1_ref, w2_ref, fb2_ref,
                  o_ref, *, scale):
    T = x_ref.shape[1]
    C = x_ref.shape[2]
    x = x_ref[0].astype(jnp.float32)                               # (T, C)

    # ---- LN1 + fused QKV matmul (one (T,384)x(384,1152) MXU pass) ----
    xn = _layernorm(x, g1_ref[...].astype(jnp.float32),
                    b1_ref[...].astype(jnp.float32))
    qkv = jnp.dot(xn.astype(wqkv_ref.dtype), wqkv_ref[...],
                  preferred_element_type=jnp.float32).astype(ACT_DTYPE)  # (T,3C)

    # ---- causal multi-head attention with incremental projection ----
    row = jax.lax.broadcasted_iota(jnp.int32, (T, T), 0)
    col = jax.lax.broadcasted_iota(jnp.int32, (T, T), 1)
    causal = col <= row                                            # shared by heads
    pw = pw_ref[...]                                               # (C, C) bf16
    y = pb_ref[...].astype(jnp.float32) + x                        # residual + bias
    # TODO(synk): causal kv-block skipping (skip upper-tri score blocks) is a
    # further ~2x on attention FLOPs once traffic is fused; not implemented.
    for h in range(n_head):
        q = qkv[:, h * head_size:(h + 1) * head_size]
        k = qkv[:, C + h * head_size:C + (h + 1) * head_size]
        v = qkv[:, 2 * C + h * head_size:2 * C + (h + 1) * head_size]
        # "nt" matmul: contract dim 1 of both operands, no k transpose.
        s = jax.lax.dot_general(q, k, (((1,), (1,)), ((), ())),
                                preferred_element_type=jnp.float32) * scale
        s = jnp.where(causal, s, -jnp.inf)                         # diag unmasked
        s = s - jnp.max(s, axis=-1, keepdims=True)
        p = jnp.exp(s)
        p = p * pl.reciprocal(jnp.sum(p, axis=-1, keepdims=True), approx=True)
        hv = jnp.dot(p.astype(v.dtype), v,
                     preferred_element_type=jnp.float32)           # (T, 64)
        # fold this head straight into the output projection
        y = y + jnp.dot(hv.astype(pw.dtype),
                        pw[h * head_size:(h + 1) * head_size, :],
                        preferred_element_type=jnp.float32)

    # ---- LN2 + FFN (w1, ReLU, w2) + residual; (T,1536) hidden stays in VMEM ----
    yn = _layernorm(y, g2_ref[...].astype(jnp.float32),
                    b2_ref[...].astype(jnp.float32))
    hdn = jnp.dot(yn.astype(w1_ref.dtype), w1_ref[...],
                  preferred_element_type=jnp.float32)
    hdn = jnp.maximum(hdn + fb1_ref[...].astype(jnp.float32), 0.0)
    out = jnp.dot(hdn.astype(w2_ref.dtype), w2_ref[...],
                  preferred_element_type=jnp.float32)
    out = out + fb2_ref[...].astype(jnp.float32) + y
    o_ref[0] = out.astype(o_ref.dtype)


def transformer_block(p, x, scale):
    B, T, C = x.shape
    H = 4 * C
    kern = functools.partial(_block_kernel, scale=scale)
    return pl.pallas_call(
        kern,
        out_shape=jax.ShapeDtypeStruct((B, T, C), x.dtype),
        grid=(B,),
        in_specs=[pl.BlockSpec((1, T, C), lambda b: (b, 0, 0)),      # x
                  pl.BlockSpec((1, C), lambda b: (0, 0)),            # ln1_g
                  pl.BlockSpec((1, C), lambda b: (0, 0)),            # ln1_b
                  pl.BlockSpec((C, 3 * C), lambda b: (0, 0)),        # wqkv
                  pl.BlockSpec((C, C), lambda b: (0, 0)),            # proj_w
                  pl.BlockSpec((1, C), lambda b: (0, 0)),            # proj_b
                  pl.BlockSpec((1, C), lambda b: (0, 0)),            # ln2_g
                  pl.BlockSpec((1, C), lambda b: (0, 0)),            # ln2_b
                  pl.BlockSpec((C, H), lambda b: (0, 0)),            # ff_w1
                  pl.BlockSpec((1, H), lambda b: (0, 0)),            # ff_b1
                  pl.BlockSpec((H, C), lambda b: (0, 0)),            # ff_w2
                  pl.BlockSpec((1, C), lambda b: (0, 0))],           # ff_b2
        out_specs=pl.BlockSpec((1, T, C), lambda b: (b, 0, 0)),
        compiler_params=_cparams(),
    )(x,
      p["ln1_g"].reshape(1, C), p["ln1_b"].reshape(1, C),
      p["wqkv"], p["proj_w"], p["proj_b"].reshape(1, C),
      p["ln2_g"].reshape(1, C), p["ln2_b"].reshape(1, C),
      p["ff_w1"], p["ff_b1"].reshape(1, H), p["ff_w2"], p["ff_b2"].reshape(1, C))


# ----- final LayerNorm + lm_head (tiled over rows) ------------------------------
def _ln_matmul_kernel(x_ref, g_ref, b_ref, w_ref, wb_ref, o_ref):
    x = x_ref[...].astype(jnp.float32)
    xn = _layernorm(x, g_ref[...].astype(jnp.float32),
                    b_ref[...].astype(jnp.float32))
    y = jnp.dot(xn.astype(w_ref.dtype), w_ref[...],
                preferred_element_type=jnp.float32)
    y = y + wb_ref[...].astype(jnp.float32)
    o_ref[...] = y.astype(o_ref.dtype)


def ln_matmul(x2d, gamma, beta, w, wb, out_dtype):
    M, C = x2d.shape
    K, N = w.shape
    tm = _row_tile(M)
    return pl.pallas_call(
        _ln_matmul_kernel,
        out_shape=jax.ShapeDtypeStruct((M, N), out_dtype),
        grid=(M // tm,),
        in_specs=[pl.BlockSpec((tm, C), lambda i: (i, 0)),
                  pl.BlockSpec((1, C), lambda i: (0, 0)),
                  pl.BlockSpec((1, C), lambda i: (0, 0)),
                  pl.BlockSpec((K, N), lambda i: (0, 0)),
                  pl.BlockSpec((1, N), lambda i: (0, 0))],
        out_specs=pl.BlockSpec((tm, N), lambda i: (i, 0)),
        compiler_params=_cparams(),
    )(x2d, gamma.reshape(1, C), beta.reshape(1, C), w, wb.reshape(1, N))


# ----- model (thin JAX glue around the fused Pallas kernels) --------------------
def forward(params, idx, targets=None):
    B, T = idx.shape
    tok = params["tok_emb"][idx]                  # (B, T, C) gather (glue)
    pos = params["pos_emb"][:T]                   # (T, C)
    x = (tok.astype(jnp.float32) + pos[None].astype(jnp.float32)).astype(ACT_DTYPE)
    # NOTE: reference Head scales by C**-0.5 where C == n_embd (not head_size).
    scale = float(n_embd) ** (-0.5)
    for blk in params["blocks"]:
        x = transformer_block(blk, x, scale)
    M = B * T
    # final LN + lm_head fused; output padded to 128 lanes, sliced back to 65.
    logits_pad = ln_matmul(x.reshape(M, n_embd), params["ln_f_g"], params["ln_f_b"],
                           params["lm_head_w"], params["lm_head_b"], jnp.float32)
    logits = logits_pad[:, :vocab_size].reshape(B, T, vocab_size)
    loss = None
    if targets is not None:
        lg = jax.nn.log_softmax(logits.reshape(B * T, vocab_size), axis=-1)
        loss = -jnp.mean(jnp.take_along_axis(lg, targets.reshape(-1, 1), axis=1))
    return logits, loss


# ----- deterministic parameter init --------------------------------------------
def _dense_init(key, fan_in, fan_out):
    bound = 1.0 / (fan_in ** 0.5)                 # PyTorch nn.Linear default init
    kw, kb = jax.random.split(key)
    w = jax.random.uniform(kw, (fan_in, fan_out), jnp.float32, -bound, bound)
    b = jax.random.uniform(kb, (fan_out,), jnp.float32, -bound, bound)
    return w, b


def init_params(key):
    keys = jax.random.split(key, 3 + n_layer)
    params = {
        "tok_emb": jax.random.normal(keys[0], (vocab_size, n_embd), jnp.float32).astype(ACT_DTYPE),
        "pos_emb": jax.random.normal(keys[1], (block_size, n_embd), jnp.float32).astype(ACT_DTYPE),
        "ln_f_g": jnp.ones((n_embd,), jnp.float32),
        "ln_f_b": jnp.zeros((n_embd,), jnp.float32),
    }
    lw, lb = _dense_init(keys[2], n_embd, vocab_size)
    params["lm_head_w"] = jnp.pad(lw, ((0, 0), (0, vocab_pad - vocab_size))).astype(ACT_DTYPE)
    params["lm_head_b"] = jnp.pad(lb, (0, vocab_pad - vocab_size))
    blocks = []
    for li in range(n_layer):
        bkeys = jax.random.split(keys[3 + li], 6)
        wq, _ = _dense_init(bkeys[0], n_embd, n_embd)   # bias=False in Head
        wk, _ = _dense_init(bkeys[1], n_embd, n_embd)
        wv, _ = _dense_init(bkeys[2], n_embd, n_embd)
        pw, pb = _dense_init(bkeys[3], n_embd, n_embd)
        w1, b1 = _dense_init(bkeys[4], n_embd, 4 * n_embd)
        w2, b2 = _dense_init(bkeys[5], 4 * n_embd, n_embd)
        blocks.append({
            "wqkv": jnp.concatenate([wq, wk, wv], axis=1).astype(ACT_DTYPE),
            "proj_w": pw.astype(ACT_DTYPE), "proj_b": pb,
            "ff_w1": w1.astype(ACT_DTYPE), "ff_b1": b1,
            "ff_w2": w2.astype(ACT_DTYPE), "ff_b2": b2,
            "ln1_g": jnp.ones((n_embd,), jnp.float32),
            "ln1_b": jnp.zeros((n_embd,), jnp.float32),
            "ln2_g": jnp.ones((n_embd,), jnp.float32),
            "ln2_b": jnp.zeros((n_embd,), jnp.float32),
        })
    params["blocks"] = blocks
    return params


# TODO(synk): generate() uses torch.multinomial autoregressive sampling; only the
# forward pass (logits, loss) is implemented here.

if __name__ == "__main__":
    key = jax.random.PRNGKey(0)
    pkey, ikey = jax.random.split(key)
    params = init_params(pkey)

    B, T = 2, 64                                   # small seq, T <= block_size
    idx = jax.random.randint(ikey, (B, T), 0, vocab_size, dtype=jnp.int32)

    logits, loss = jax.jit(lambda p, i: forward(p, i))(params, idx)
    logits = jax.block_until_ready(logits)
    assert logits.shape == (B, T, vocab_size)
    assert loss is None
    assert bool(jnp.all(jnp.isfinite(logits)))
    print("KERNEL_OK")
</pallas_src>

<mosaic_0001>
module attributes {stable_mosaic.version = 11 : i64} {
  func.func @_block_kernel(%arg0: i32, %arg1: memref<1x64x384xbf16, #tpu.memory_space<vmem>>, %arg2: memref<1x384xf32, #tpu.memory_space<vmem>>, %arg3: memref<1x384xf32, #tpu.memory_space<vmem>>, %arg4: memref<384x1152xbf16, #tpu.memory_space<vmem>>, %arg5: memref<384x384xbf16, #tpu.memory_space<vmem>>, %arg6: memref<1x384xf32, #tpu.memory_space<vmem>>, %arg7: memref<1x384xf32, #tpu.memory_space<vmem>>, %arg8: memref<1x384xf32, #tpu.memory_space<vmem>>, %arg9: memref<384x1536xbf16, #tpu.memory_space<vmem>>, %arg10: memref<1x1536xf32, #tpu.memory_space<vmem>>, %arg11: memref<1536x384xbf16, #tpu.memory_space<vmem>>, %arg12: memref<1x384xf32, #tpu.memory_space<vmem>>, %arg13: memref<1x64x384xbf16, #tpu.memory_space<vmem>>) attributes {dimension_semantics = [#tpu.dimension_semantics<parallel>], iteration_bounds = array<i64: 2>, scalar_prefetch = 0 : i64, scratch_operands = 0 : i64, tpu.core_type = #tpu.core_type<tc>, window_params = [{transform_indices = @transform_0, window_bounds = array<i64: 1, 64, 384>}, {pipeline_mode = #tpu.pipeline_mode<synchronous>, transform_indices = @transform_1, window_bounds = array<i64: 1, 384>}, {pipeline_mode = #tpu.pipeline_mode<synchronous>, transform_indices = @transform_2, window_bounds = array<i64: 1, 384>}, {pipeline_mode = #tpu.pipeline_mode<synchronous>, transform_indices = @transform_3, window_bounds = array<i64: 384, 1152>}, {pipeline_mode = #tpu.pipeline_mode<synchronous>, transform_indices = @transform_4, window_bounds = array<i64: 384, 384>}, {pipeline_mode = #tpu.pipeline_mode<synchronous>, transform_indices = @transform_5, window_bounds = array<i64: 1, 384>}, {pipeline_mode = #tpu.pipeline_mode<synchronous>, transform_indices = @transform_6, window_bounds = array<i64: 1, 384>}, {pipeline_mode = #tpu.pipeline_mode<synchronous>, transform_indices = @transform_7, window_bounds = array<i64: 1, 384>}, {pipeline_mode = #tpu.pipeline_mode<synchronous>, transform_indices = @transform_8, window_bounds = array<i64: 384, 1536>}, {pipeline_mode = #tpu.pipeline_mode<synchronous>, transform_indices = @transform_9, window_bounds = array<i64: 1, 1536>}, {pipeline_mode = #tpu.pipeline_mode<synchronous>, transform_indices = @transform_10, window_bounds = array<i64: 1536, 384>}, {pipeline_mode = #tpu.pipeline_mode<synchronous>, transform_indices = @transform_11, window_bounds = array<i64: 1, 384>}, {transform_indices = @transform_12, window_bounds = array<i64: 1, 64, 384>}]} {
    %c0 = arith.constant 0 : index
    %c0_0 = arith.constant 0 : index
    %c0_1 = arith.constant 0 : index
    %0 = vector.load %arg1[%c0, %c0_0, %c0_1] : memref<1x64x384xbf16, #tpu.memory_space<vmem>>, vector<1x64x384xbf16>
    %1 = vector.shape_cast %0 : vector<1x64x384xbf16> to vector<64x384xbf16>
    %2 = arith.extf %1 : vector<64x384xbf16> to vector<64x384xf32>
    %c0_2 = arith.constant 0 : index
    %c0_3 = arith.constant 0 : index
    %3 = vector.load %arg2[%c0_2, %c0_3] : memref<1x384xf32, #tpu.memory_space<vmem>>, vector<1x384xf32>
    %c0_4 = arith.constant 0 : index
    %c0_5 = arith.constant 0 : index
    %4 = vector.load %arg3[%c0_4, %c0_5] : memref<1x384xf32, #tpu.memory_space<vmem>>, vector<1x384xf32>
    %cst = arith.constant dense<0.000000e+00> : vector<64xf32>
    %5 = vector.multi_reduction <add>, %2, %cst [1] : vector<64x384xf32> to vector<64xf32>
    %6 = vector.shape_cast %5 : vector<64xf32> to vector<64x1xf32>
    %cst_6 = arith.constant 3.840000e+02 : f32
    %7 = vector.broadcast %cst_6 : f32 to vector<64x1xf32>
    %8 = arith.divf %6, %7 : vector<64x1xf32>
    %9 = vector.broadcast %8 : vector<64x1xf32> to vector<64x384xf32>
    %10 = arith.subf %2, %9 : vector<64x384xf32>
    %11 = arith.mulf %10, %10 : vector<64x384xf32>
    %cst_7 = arith.constant dense<0.000000e+00> : vector<64xf32>
    %12 = vector.multi_reduction <add>, %11, %cst_7 [1] : vector<64x384xf32> to vector<64xf32>
    %13 = vector.shape_cast %12 : vector<64xf32> to vector<64x1xf32>
    %cst_8 = arith.constant 3.840000e+02 : f32
    %14 = vector.broadcast %cst_8 : f32 to vector<64x1xf32>
    %15 = arith.divf %13, %14 : vector<64x1xf32>
    %16 = vector.broadcast %8 : vector<64x1xf32> to vector<64x384xf32>
    %17 = arith.subf %2, %16 : vector<64x384xf32>
    %cst_9 = arith.constant 9.99999974E-6 : f32
    %18 = vector.broadcast %cst_9 : f32 to vector<64x1xf32>
    %19 = arith.addf %15, %18 : vector<64x1xf32>
    %20 = math.rsqrt %19 : vector<64x1xf32>
    %21 = vector.broadcast %20 : vector<64x1xf32> to vector<64x384xf32>
    %22 = arith.mulf %17, %21 : vector<64x384xf32>
    %23 = vector.broadcast %3 : vector<1x384xf32> to vector<64x384xf32>
    %24 = arith.mulf %22, %23 : vector<64x384xf32>
    %25 = vector.broadcast %4 : vector<1x384xf32> to vector<64x384xf32>
    %26 = arith.addf %24, %25 : vector<64x384xf32>
    %27 = arith.truncf %26 : vector<64x384xf32> to vector<64x384xbf16>
    %c0_10 = arith.constant 0 : index
    %c0_11 = arith.constant 0 : index
    %28 = vector.load %arg4[%c0_10, %c0_11] : memref<384x1152xbf16, #tpu.memory_space<vmem>>, vector<384x1152xbf16>
    %cst_12 = arith.constant dense<0.000000e+00> : vector<64x1152xf32>
    %29 = tpu.matmul %27, %28, %cst_12 {dimension_numbers = #tpu.dot_dimension_numbers<[1], [0], [0], [1], [0, 0, 1, 1], [], []>} : vector<64x384xbf16>, vector<384x1152xbf16>, vector<64x1152xf32> -> vector<64x1152xf32>
    %30 = arith.truncf %29 : vector<64x1152xf32> to vector<64x1152xbf16>
    %31 = tpu.iota {dimensions = array<i32: 0>} : vector<64x64xi32>
    %32 = tpu.iota {dimensions = array<i32: 1>} : vector<64x64xi32>
    %33 = arith.cmpi sle, %32, %31 : vector<64x64xi32>
    %c0_13 = arith.constant 0 : index
    %c0_14 = arith.constant 0 : index
    %34 = vector.load %arg5[%c0_13, %c0_14] : memref<384x384xbf16, #tpu.memory_space<vmem>>, vector<384x384xbf16>
    %c0_15 = arith.constant 0 : index
    %c0_16 = arith.constant 0 : index
    %35 = vector.load %arg6[%c0_15, %c0_16] : memref<1x384xf32, #tpu.memory_space<vmem>>, vector<1x384xf32>
    %36 = vector.broadcast %35 : vector<1x384xf32> to vector<64x384xf32>
    %37 = arith.addf %36, %2 : vector<64x384xf32>
    %38 = vector.extract_strided_slice %30 {offsets = [0, 0], sizes = [64, 64], strides = [1, 1]} : vector<64x1152xbf16> to vector<64x64xbf16>
    %39 = vector.extract_strided_slice %30 {offsets = [0, 384], sizes = [64, 64], strides = [1, 1]} : vector<64x1152xbf16> to vector<64x64xbf16>
    %40 = vector.extract_strided_slice %30 {offsets = [0, 768], sizes = [64, 64], strides = [1, 1]} : vector<64x1152xbf16> to vector<64x64xbf16>
    %cst_17 = arith.constant dense<0.000000e+00> : vector<64x64xf32>
    %41 = tpu.matmul %38, %39, %cst_17 {dimension_numbers = #tpu.dot_dimension_numbers<[1], [1], [0], [0], [0, 0, 1, 0], [], []>} : vector<64x64xbf16>, vector<64x64xbf16>, vector<64x64xf32> -> vector<64x64xf32>
    %cst_18 = arith.constant 0.0510310382 : f32
    %42 = vector.broadcast %cst_18 : f32 to vector<64x64xf32>
    %43 = arith.mulf %41, %42 : vector<64x64xf32>
    %cst_19 = arith.constant 0xFF800000 : f32
    %44 = vector.broadcast %cst_19 : f32 to vector<64x64xf32>
    %45 = arith.select %33, %43, %44 : vector<64x64xi1>, vector<64x64xf32>
    %cst_20 = arith.constant dense<0xFF800000> : vector<64xf32>
    %46 = vector.multi_reduction <maximumf>, %45, %cst_20 [1] : vector<64x64xf32> to vector<64xf32>
    %47 = vector.shape_cast %46 : vector<64xf32> to vector<64x1xf32>
    %48 = vector.broadcast %47 : vector<64x1xf32> to vector<64x64xf32>
    %49 = arith.subf %45, %48 : vector<64x64xf32>
    %50 = math.exp %49 : vector<64x64xf32>
    %cst_21 = arith.constant dense<0.000000e+00> : vector<64xf32>
    %51 = vector.multi_reduction <add>, %50, %cst_21 [1] : vector<64x64xf32> to vector<64xf32>
    %52 = vector.shape_cast %51 : vector<64xf32> to vector<64x1xf32>
    %53 = tpu.reciprocal %52 {approx = true} : vector<64x1xf32> -> vector<64x1xf32>
    %54 = vector.broadcast %53 : vector<64x1xf32> to vector<64x64xf32>
    %55 = arith.mulf %50, %54 : vector<64x64xf32>
    %56 = arith.truncf %55 : vector<64x64xf32> to vector<64x64xbf16>
    %cst_22 = arith.constant dense<0.000000e+00> : vector<64x64xf32>
    %57 = tpu.matmul %56, %40, %cst_22 {dimension_numbers = #tpu.dot_dimension_numbers<[1], [0], [0], [1], [0, 0, 1, 1], [], []>} : vector<64x64xbf16>, vector<64x64xbf16>, vector<64x64xf32> -> vector<64x64xf32>
    %58 = arith.truncf %57 : vector<64x64xf32> to vector<64x64xbf16>
    %59 = vector.extract_strided_slice %34 {offsets = [0, 0], sizes = [64, 384], strides = [1, 1]} : vector<384x384xbf16> to vector<64x384xbf16>
    %cst_23 = arith.constant dense<0.000000e+00> : vector<64x384xf32>
    %60 = tpu.matmul %58, %59, %cst_23 {dimension_numbers = #tpu.dot_dimension_numbers<[1], [0], [0], [1], [0, 0, 1, 1], [], []>} : vector<64x64xbf16>, vector<64x384xbf16>, vector<64x384xf32> -> vector<64x384xf32>
    %61 = arith.addf %37, %60 : vector<64x384xf32>
    %62 = vector.extract_strided_slice %30 {offsets = [0, 64], sizes = [64, 64], strides = [1, 1]} : vector<64x1152xbf16> to vector<64x64xbf16>
    %63 = vector.extract_strided_slice %30 {offsets = [0, 448], sizes = [64, 64], strides = [1, 1]} : vector<64x1152xbf16> to vector<64x64xbf16>
    %64 = vector.extract_strided_slice %30 {offsets = [0, 832], sizes = [64, 64], strides = [1, 1]} : vector<64x1152xbf16> to vector<64x64xbf16>
    %cst_24 = arith.constant dense<0.000000e+00> : vector<64x64xf32>
    %65 = tpu.matmul %62, %63, %cst_24 {dimension_numbers = #tpu.dot_dimension_numbers<[1], [1], [0], [0], [0, 0, 1, 0], [], []>} : vector<64x64xbf16>, vector<64x64xbf16>, vector<64x64xf32> -> vector<64x64xf32>
    %cst_25 = arith.constant 0.0510310382 : f32
    %66 = vector.broadcast %cst_25 : f32 to vector<64x64xf32>
    %67 = arith.mulf %65, %66 : vector<64x64xf32>
    %cst_26 = arith.constant 0xFF800000 : f32
    %68 = vector.broadcast %cst_26 : f32 to vector<64x64xf32>
    %69 = arith.select %33, %67, %68 : vector<64x64xi1>, vector<64x64xf32>
    %cst_27 = arith.constant dense<0xFF800000> : vector<64xf32>
    %70 = vector.multi_reduction <maximumf>, %69, %cst_27 [1] : vector<64x64xf32> to vector<64xf32>
    %71 = vector.shape_cast %70 : vector<64xf32> to vector<64x1xf32>
    %72 = vector.broadcast %71 : vector<64x1xf32> to vector<64x64xf32>
    %73 = arith.subf %69, %72 : vector<64x64xf32>
    %74 = math.exp %73 : vector<64x64xf32>
    %cst_28 = arith.constant dense<0.000000e+00> : vector<64xf32>
    %75 = vector.multi_reduction <add>, %74, %cst_28 [1] : vector<64x64xf32> to vector<64xf32>
    %76 = vector.shape_cast %75 : vector<64xf32> to vector<64x1xf32>
    %77 = tpu.reciprocal %76 {approx = true} : vector<64x1xf32> -> vector<64x1xf32>
    %78 = vector.broadcast %77 : vector<64x1xf32> to vector<64x64xf32>
    %79 = arith.mulf %74, %78 : vector<64x64xf32>
    %80 = arith.truncf %79 : vector<64x64xf32> to vector<64x64xbf16>
    %cst_29 = arith.constant dense<0.000000e+00> : vector<64x64xf32>
    %81 = tpu.matmul %80, %64, %cst_29 {dimension_numbers = #tpu.dot_dimension_numbers<[1], [0], [0], [1], [0, 0, 1, 1], [], []>} : vector<64x64xbf16>, vector<64x64xbf16>, vector<64x64xf32> -> vector<64x64xf32>
    %82 = arith.truncf %81 : vector<64x64xf32> to vector<64x64xbf16>
    %83 = vector.extract_strided_slice %34 {offsets = [64, 0], sizes = [64, 384], strides = [1, 1]} : vector<384x384xbf16> to vector<64x384xbf16>
    %cst_30 = arith.constant dense<0.000000e+00> : vector<64x384xf32>
    %84 = tpu.matmul %82, %83, %cst_30 {dimension_numbers = #tpu.dot_dimension_numbers<[1], [0], [0], [1], [0, 0, 1, 1], [], []>} : vector<64x64xbf16>, vector<64x384xbf16>, vector<64x384xf32> -> vector<64x384xf32>
    %85 = arith.addf %61, %84 : vector<64x384xf32>
    %86 = vector.extract_strided_slice %30 {offsets = [0, 128], sizes = [64, 64], strides = [1, 1]} : vector<64x1152xbf16> to vector<64x64xbf16>
    %87 = vector.extract_strided_slice %30 {offsets = [0, 512], sizes = [64, 64], strides = [1, 1]} : vector<64x1152xbf16> to vector<64x64xbf16>
    %88 = vector.extract_strided_slice %30 {offsets = [0, 896], sizes = [64, 64], strides = [1, 1]} : vector<64x1152xbf16> to vector<64x64xbf16>
    %cst_31 = arith.constant dense<0.000000e+00> : vector<64x64xf32>
    %89 = tpu.matmul %86, %87, %cst_31 {dimension_numbers = #tpu.dot_dimension_numbers<[1], [1], [0], [0], [0, 0, 1, 0], [], []>} : vector<64x64xbf16>, vector<64x64xbf16>, vector<64x64xf32> -> vector<64x64xf32>
    %cst_32 = arith.constant 0.0510310382 : f32
    %90 = vector.broadcast %cst_32 : f32 to vector<64x64xf32>
    %91 = arith.mulf %89, %90 : vector<64x64xf32>
    %cst_33 = arith.constant 0xFF800000 : f32
    %92 = vector.broadcast %cst_33 : f32 to vector<64x64xf32>
    %93 = arith.select %33, %91, %92 : vector<64x64xi1>, vector<64x64xf32>
    %cst_34 = arith.constant dense<0xFF800000> : vector<64xf32>
    %94 = vector.multi_reduction <maximumf>, %93, %cst_34 [1] : vector<64x64xf32> to vector<64xf32>
    %95 = vector.shape_cast %94 : vector<64xf32> to vector<64x1xf32>
    %96 = vector.broadcast %95 : vector<64x1xf32> to vector<64x64xf32>
    %97 = arith.subf %93, %96 : vector<64x64xf32>
    %98 = math.exp %97 : vector<64x64xf32>
    %cst_35 = arith.constant dense<0.000000e+00> : vector<64xf32>
    %99 = vector.multi_reduction <add>, %98, %cst_35 [1] : vector<64x64xf32> to vector<64xf32>
    %100 = vector.shape_cast %99 : vector<64xf32> to vector<64x1xf32>
    %101 = tpu.reciprocal %100 {approx = true} : vector<64x1xf32> -> vector<64x1xf32>
    %102 = vector.broadcast %101 : vector<64x1xf32> to vector<64x64xf32>
    %103 = arith.mulf %98, %102 : vector<64x64xf32>
    %104 = arith.truncf %103 : vector<64x64xf32> to vector<64x64xbf16>
    %cst_36 = arith.constant dense<0.000000e+00> : vector<64x64xf32>
    %105 = tpu.matmul %104, %88, %cst_36 {dimension_numbers = #tpu.dot_dimension_numbers<[1], [0], [0], [1], [0, 0, 1, 1], [], []>} : vector<64x64xbf16>, vector<64x64xbf16>, vector<64x64xf32> -> vector<64x64xf32>
    %106 = arith.truncf %105 : vector<64x64xf32> to vector<64x64xbf16>
    %107 = vector.extract_strided_slice %34 {offsets = [128, 0], sizes = [64, 384], strides = [1, 1]} : vector<384x384xbf16> to vector<64x384xbf16>
    %cst_37 = arith.constant dense<0.000000e+00> : vector<64x384xf32>
    %108 = tpu.matmul %106, %107, %cst_37 {dimension_numbers = #tpu.dot_dimension_numbers<[1], [0], [0], [1], [0, 0, 1, 1], [], []>} : vector<64x64xbf16>, vector<64x384xbf16>, vector<64x384xf32> -> vector<64x384xf32>
    %109 = arith.addf %85, %108 : vector<64x384xf32>
    %110 = vector.extract_strided_slice %30 {offsets = [0, 192], sizes = [64, 64], strides = [1, 1]} : vector<64x1152xbf16> to vector<64x64xbf16>
    %111 = vector.extract_strided_slice %30 {offsets = [0, 576], sizes = [64, 64], strides = [1, 1]} : vector<64x1152xbf16> to vector<64x64xbf16>
    %112 = vector.extract_strided_slice %30 {offsets = [0, 960], sizes = [64, 64], strides = [1, 1]} : vector<64x1152xbf16> to vector<64x64xbf16>
    %cst_38 = arith.constant dense<0.000000e+00> : vector<64x64xf32>
    %113 = tpu.matmul %110, %111, %cst_38 {dimension_numbers = #tpu.dot_dimension_numbers<[1], [1], [0], [0], [0, 0, 1, 0], [], []>} : vector<64x64xbf16>, vector<64x64xbf16>, vector<64x64xf32> -> vector<64x64xf32>
    %cst_39 = arith.constant 0.0510310382 : f32
    %114 = vector.broadcast %cst_39 : f32 to vector<64x64xf32>
    %115 = arith.mulf %113, %114 : vector<64x64xf32>
    %cst_40 = arith.constant 0xFF800000 : f32
    %116 = vector.broadcast %cst_40 : f32 to vector<64x64xf32>
    %117 = arith.select %33, %115, %116 : vector<64x64xi1>, vector<64x64xf32>
    %cst_41 = arith.constant dense<0xFF800000> : vector<64xf32>
    %118 = vector.multi_reduction <maximumf>, %117, %cst_41 [1] : vector<64x64xf32> to vector<64xf32>
    %119 = vector.shape_cast %118 : vector<64xf32> to vector<64x1xf32>
    %120 = vector.broadcast %119 : vector<64x1xf32> to vector<64x64xf32>
    %121 = arith.subf %117, %120 : vector<64x64xf32>
    %122 = math.exp %121 : vector<64x64xf32>
    %cst_42 = arith.constant dense<0.000000e+00> : vector<64xf32>
    %123 = vector.multi_reduction <add>, %122, %cst_42 [1] : vector<64x64xf32> to vector<64xf32>
    %124 = vector.shape_cast %123 : vector<64xf32> to vector<64x1xf32>
    %125 = tpu.reciprocal %124 {approx = true} : vector<64x1xf32> -> vector<64x1xf32>
    %126 = vector.broadcast %125 : vector<64x1xf32> to vector<64x64xf32>
    %127 = arith.mulf %122, %126 : vector<64x64xf32>
    %128 = arith.truncf %127 : vector<64x64xf32> to vector<64x64xbf16>
    %cst_43 = arith.constant dense<0.000000e+00> : vector<64x64xf32>
    %129 = tpu.matmul %128, %112, %cst_43 {dimension_numbers = #tpu.dot_dimension_numbers<[1], [0], [0], [1], [0, 0, 1, 1], [], []>} : vector<64x64xbf16>, vector<64x64xbf16>, vector<64x64xf32> -> vector<64x64xf32>
    %130 = arith.truncf %129 : vector<64x64xf32> to vector<64x64xbf16>
    %131 = vector.extract_strided_slice %34 {offsets = [192, 0], sizes = [64, 384], strides = [1, 1]} : vector<384x384xbf16> to vector<64x384xbf16>
    %cst_44 = arith.constant dense<0.000000e+00> : vector<64x384xf32>
    %132 = tpu.matmul %130, %131, %cst_44 {dimension_numbers = #tpu.dot_dimension_numbers<[1], [0], [0], [1], [0, 0, 1, 1], [], []>} : vector<64x64xbf16>, vector<64x384xbf16>, vector<64x384xf32> -> vector<64x384xf32>
    %133 = arith.addf %109, %132 : vector<64x384xf32>
    %134 = vector.extract_strided_slice %30 {offsets = [0, 256], sizes = [64, 64], strides = [1, 1]} : vector<64x1152xbf16> to vector<64x64xbf16>
    %135 = vector.extract_strided_slice %30 {offsets = [0, 640], sizes = [64, 64], strides = [1, 1]} : vector<64x1152xbf16> to vector<64x64xbf16>
    %136 = vector.extract_strided_slice %30 {offsets = [0, 1024], sizes = [64, 64], strides = [1, 1]} : vector<64x1152xbf16> to vector<64x64xbf16>
    %cst_45 = arith.constant dense<0.000000e+00> : vector<64x64xf32>
    %137 = tpu.matmul %134, %135, %cst_45 {dimension_numbers = #tpu.dot_dimension_numbers<[1], [1], [0], [0], [0, 0, 1, 0], [], []>} : vector<64x64xbf16>, vector<64x64xbf16>, vector<64x64xf32> -> vector<64x64xf32>
    %cst_46 = arith.constant 0.0510310382 : f32
    %138 = vector.broadcast %cst_46 : f32 to vector<64x64xf32>
    %139 = arith.mulf %137, %138 : vector<64x64xf32>
    %cst_47 = arith.constant 0xFF800000 : f32
    %140 = vector.broadcast %cst_47 : f32 to vector<64x64xf32>
    %141 = arith.select %33, %139, %140 : vector<64x64xi1>, vector<64x64xf32>
    %cst_48 = arith.constant dense<0xFF800000> : vector<64xf32>
    %142 = vector.multi_reduction <maximumf>, %141, %cst_48 [1] : vector<64x64xf32> to vector<64xf32>
    %143 = vector.shape_cast %142 : vector<64xf32> to vector<64x1xf32>
    %144 = vector.broadcast %143 : vector<64x1xf32> to vector<64x64xf32>
    %145 = arith.subf %141, %144 : vector<64x64xf32>
    %146 = math.exp %145 : vector<64x64xf32>
    %cst_49 = arith.constant dense<0.000000e+00> : vector<64xf32>
    %147 = vector.multi_reduction <add>, %146, %cst_49 [1] : vector<64x64xf32> to vector<64xf32>
    %148 = vector.shape_cast %147 : vector<64xf32> to vector<64x1xf32>
    %149 = tpu.reciprocal %148 {approx = true} : vector<64x1xf32> -> vector<64x1xf32>
    %150 = vector.broadcast %149 : vector<64x1xf32> to vector<64x64xf32>
    %151 = arith.mulf %146, %150 : vector<64x64xf32>
    %152 = arith.truncf %151 : vector<64x64xf32> to vector<64x64xbf16>
    %cst_50 = arith.constant dense<0.000000e+00> : vector<64x64xf32>
    %153 = tpu.matmul %152, %136, %cst_50 {dimension_numbers = #tpu.dot_dimension_numbers<[1], [0], [0], [1], [0, 0, 1, 1], [], []>} : vector<64x64xbf16>, vector<64x64xbf16>, vector<64x64xf32> -> vector<64x64xf32>
    %154 = arith.truncf %153 : vector<64x64xf32> to vector<64x64xbf16>
    %155 = vector.extract_strided_slice %34 {offsets = [256, 0], sizes = [64, 384], strides = [1, 1]} : vector<384x384xbf16> to vector<64x384xbf16>
    %cst_51 = arith.constant dense<0.000000e+00> : vector<64x384xf32>
    %156 = tpu.matmul %154, %155, %cst_51 {dimension_numbers = #tpu.dot_dimension_numbers<[1], [0], [0], [1], [0, 0, 1, 1], [], []>} : vector<64x64xbf16>, vector<64x384xbf16>, vector<64x384xf32> -> vector<64x384xf32>
    %157 = arith.addf %133, %156 : vector<64x384xf32>
    %158 = vector.extract_strided_slice %30 {offsets = [0, 320], sizes = [64, 64], strides = [1, 1]} : vector<64x1152xbf16> to vector<64x64xbf16>
    %159 = vector.extract_strided_slice %30 {offsets = [0, 704], sizes = [64, 64], strides = [1, 1]} : vector<64x1152xbf16> to vector<64x64xbf16>
    %160 = vector.extract_strided_slice %30 {offsets = [0, 1088], sizes = [64, 64], strides = [1, 1]} : vector<64x1152xbf16> to vector<64x64xbf16>
    %cst_52 = arith.constant dense<0.000000e+00> : vector<64x64xf32>
    %161 = tpu.matmul %158, %159, %cst_52 {dimension_numbers = #tpu.dot_dimension_numbers<[1], [1], [0], [0], [0, 0, 1, 0], [], []>} : vector<64x64xbf16>, vector<64x64xbf16>, vector<64x64xf32> -> vector<64x64xf32>
    %cst_53 = arith.constant 0.0510310382 : f32
    %162 = vector.broadcast %cst_53 : f32 to vector<64x64xf32>
    %163 = arith.mulf %161, %162 : vector<64x64xf32>
    %cst_54 = arith.constant 0xFF800000 : f32
    %164 = vector.broadcast %cst_54 : f32 to vector<64x64xf32>
    %165 = arith.select %33, %163, %164 : vector<64x64xi1>, vector<64x64xf32>
    %cst_55 = arith.constant dense<0xFF800000> : vector<64xf32>
    %166 = vector.multi_reduction <maximumf>, %165, %cst_55 [1] : vector<64x64xf32> to vector<64xf32>
    %167 = vector.shape_cast %166 : vector<64xf32> to vector<64x1xf32>
    %168 = vector.broadcast %167 : vector<64x1xf32> to vector<64x64xf32>
    %169 = arith.subf %165, %168 : vector<64x64xf32>
    %170 = math.exp %169 : vector<64x64xf32>
    %cst_56 = arith.constant dense<0.000000e+00> : vector<64xf32>
    %171 = vector.multi_reduction <add>, %170, %cst_56 [1] : vector<64x64xf32> to vector<64xf32>
    %172 = vector.shape_cast %171 : vector<64xf32> to vector<64x1xf32>
    %173 = tpu.reciprocal %172 {approx = true} : vector<64x1xf32> -> vector<64x1xf32>
    %174 = vector.broadcast %173 : vector<64x1xf32> to vector<64x64xf32>
    %175 = arith.mulf %170, %174 : vector<64x64xf32>
    %176 = arith.truncf %175 : vector<64x64xf32> to vector<64x64xbf16>
    %cst_57 = arith.constant dense<0.000000e+00> : vector<64x64xf32>
    %177 = tpu.matmul %176, %160, %cst_57 {dimension_numbers = #tpu.dot_dimension_numbers<[1], [0], [0], [1], [0, 0, 1, 1], [], []>} : vector<64x64xbf16>, vector<64x64xbf16>, vector<64x64xf32> -> vector<64x64xf32>
    %178 = arith.truncf %177 : vector<64x64xf32> to vector<64x64xbf16>
    %179 = vector.extract_strided_slice %34 {offsets = [320, 0], sizes = [64, 384], strides = [1, 1]} : vector<384x384xbf16> to vector<64x384xbf16>
    %cst_58 = arith.constant dense<0.000000e+00> : vector<64x384xf32>
    %180 = tpu.matmul %178, %179, %cst_58 {dimension_numbers = #tpu.dot_dimension_numbers<[1], [0], [0], [1], [0, 0, 1, 1], [], []>} : vector<64x64xbf16>, vector<64x384xbf16>, vector<64x384xf32> -> vector<64x384xf32>
    %181 = arith.addf %157, %180 : vector<64x384xf32>
    %c0_59 = arith.constant 0 : index
    %c0_60 = arith.constant 0 : index
    %182 = vector.load %arg7[%c0_59, %c0_60] : memref<1x384xf32, #tpu.memory_space<vmem>>, vector<1x384xf32>
    %c0_61 = arith.constant 0 : index
    %c0_62 = arith.constant 0 : index
    %183 = vector.load %arg8[%c0_61, %c0_62] : memref<1x384xf32, #tpu.memory_space<vmem>>, vector<1x384xf32>
    %cst_63 = arith.constant dense<0.000000e+00> : vector<64xf32>
    %184 = vector.multi_reduction <add>, %181, %cst_63 [1] : vector<64x384xf32> to vector<64xf32>
    %185 = vector.shape_cast %184 : vector<64xf32> to vector<64x1xf32>
    %cst_64 = arith.constant 3.840000e+02 : f32
    %186 = vector.broadcast %cst_64 : f32 to vector<64x1xf32>
    %187 = arith.divf %185, %186 : vector<64x1xf32>
    %188 = vector.broadcast %187 : vector<64x1xf32> to vector<64x384xf32>
    %189 = arith.subf %181, %188 : vector<64x384xf32>
    %190 = arith.mulf %189, %189 : vector<64x384xf32>
    %cst_65 = arith.constant dense<0.000000e+00> : vector<64xf32>
    %191 = vector.multi_reduction <add>, %190, %cst_65 [1] : vector<64x384xf32> to vector<64xf32>
    %192 = vector.shape_cast %191 : vector<64xf32> to vector<64x1xf32>
    %cst_66 = arith.constant 3.840000e+02 : f32
    %193 = vector.broadcast %cst_66 : f32 to vector<64x1xf32>
    %194 = arith.divf %192, %193 : vector<64x1xf32>
    %195 = vector.broadcast %187 : vector<64x1xf32> to vector<64x384xf32>
    %196 = arith.subf %181, %195 : vector<64x384xf32>
    %cst_67 = arith.constant 9.99999974E-6 : f32
    %197 = vector.broadcast %cst_67 : f32 to vector<64x1xf32>
    %198 = arith.addf %194, %197 : vector<64x1xf32>
    %199 = math.rsqrt %198 : vector<64x1xf32>
    %200 = vector.broadcast %199 : vector<64x1xf32> to vector<64x384xf32>
    %201 = arith.mulf %196, %200 : vector<64x384xf32>
    %202 = vector.broadcast %182 : vector<1x384xf32> to vector<64x384xf32>
    %203 = arith.mulf %201, %202 : vector<64x384xf32>
    %204 = vector.broadcast %183 : vector<1x384xf32> to vector<64x384xf32>
    %205 = arith.addf %203, %204 : vector<64x384xf32>
    %206 = arith.truncf %205 : vector<64x384xf32> to vector<64x384xbf16>
    %c0_68 = arith.constant 0 : index
    %c0_69 = arith.constant 0 : index
    %207 = vector.load %arg9[%c0_68, %c0_69] : memref<384x1536xbf16, #tpu.memory_space<vmem>>, vector<384x1536xbf16>
    %cst_70 = arith.constant dense<0.000000e+00> : vector<64x1536xf32>
    %208 = tpu.matmul %206, %207, %cst_70 {dimension_numbers = #tpu.dot_dimension_numbers<[1], [0], [0], [1], [0, 0, 1, 1], [], []>} : vector<64x384xbf16>, vector<384x1536xbf16>, vector<64x1536xf32> -> vector<64x1536xf32>
    %c0_71 = arith.constant 0 : index
    %c0_72 = arith.constant 0 : index
    %209 = vector.load %arg10[%c0_71, %c0_72] : memref<1x1536xf32, #tpu.memory_space<vmem>>, vector<1x1536xf32>
    %210 = vector.broadcast %209 : vector<1x1536xf32> to vector<64x1536xf32>
    %211 = arith.addf %208, %210 : vector<64x1536xf32>
    %cst_73 = arith.constant 0.000000e+00 : f32
    %212 = vector.broadcast %cst_73 : f32 to vector<64x1536xf32>
    %213 = arith.maximumf %211, %212 : vector<64x1536xf32>
    %214 = arith.truncf %213 : vector<64x1536xf32> to vector<64x1536xbf16>
    %c0_74 = arith.constant 0 : index
    %c0_75 = arith.constant 0 : index
    %215 = vector.load %arg11[%c0_74, %c0_75] : memref<1536x384xbf16, #tpu.memory_space<vmem>>, vector<1536x384xbf16>
    %cst_76 = arith.constant dense<0.000000e+00> : vector<64x384xf32>
    %216 = tpu.matmul %214, %215, %cst_76 {dimension_numbers = #tpu.dot_dimension_numbers<[1], [0], [0], [1], [0, 0, 1, 1], [], []>} : vector<64x1536xbf16>, vector<1536x384xbf16>, vector<64x384xf32> -> vector<64x384xf32>
    %c0_77 = arith.constant 0 : index
    %c0_78 = arith.constant 0 : index
    %217 = vector.load %arg12[%c0_77, %c0_78] : memref<1x384xf32, #tpu.memory_space<vmem>>, vector<1x384xf32>
    %218 = vector.broadcast %217 : vector<1x384xf32> to vector<64x384xf32>
    %219 = arith.addf %216, %218 : vector<64x384xf32>
    %220 = arith.addf %219, %181 : vector<64x384xf32>
    %221 = arith.truncf %220 : vector<64x384xf32> to vector<64x384xbf16>
    %c0_79 = arith.constant 0 : index
    %c0_80 = arith.constant 0 : index
    %c0_81 = arith.constant 0 : index
    %222 = vector.load %arg13[%c0_79, %c0_80, %c0_81] : memref<1x64x384xbf16, #tpu.memory_space<vmem>>, vector<1x64x384xbf16>
    %223 = vector.shape_cast %222 : vector<1x64x384xbf16> to vector<64x384xbf16>
    %224 = vector.shape_cast %221 : vector<64x384xbf16> to vector<1x64x384xbf16>
    tpu.vector_store %arg13[%c0_79, %c0_80, %c0_81], %224 {strides = array<i32>} : memref<1x64x384xbf16, #tpu.memory_space<vmem>>, vector<1x64x384xbf16>,
    return
  }
  func.func @transform_0(%arg0: i32) -> (i32, i32, i32) {
    %c0_i32 = arith.constant 0 : i32
    %c0_i32_0 = arith.constant 0 : i32
    %c0_i32_1 = arith.constant 0 : i32
    return %arg0, %c0_i32, %c0_i32_0 : i32, i32, i32
  }
  func.func @transform_1(%arg0: i32) -> (i32, i32) {
    %c0_i32 = arith.constant 0 : i32
    %c0_i32_0 = arith.constant 0 : i32
    %c0_i32_1 = arith.constant 0 : i32
    return %c0_i32, %c0_i32_0 : i32, i32
  }
  func.func @transform_2(%arg0: i32) -> (i32, i32) {
    %c0_i32 = arith.constant 0 : i32
    %c0_i32_0 = arith.constant 0 : i32
    %c0_i32_1 = arith.constant 0 : i32
    return %c0_i32, %c0_i32_0 : i32, i32
  }
  func.func @transform_3(%arg0: i32) -> (i32, i32) {
    %c0_i32 = arith.constant 0 : i32
    %c0_i32_0 = arith.constant 0 : i32
    %c0_i32_1 = arith.constant 0 : i32
    return %c0_i32, %c0_i32_0 : i32, i32
  }
  func.func @transform_4(%arg0: i32) -> (i32, i32) {
    %c0_i32 = arith.constant 0 : i32
    %c0_i32_0 = arith.constant 0 : i32
    %c0_i32_1 = arith.constant 0 : i32
    return %c0_i32, %c0_i32_0 : i32, i32
  }
  func.func @transform_5(%arg0: i32) -> (i32, i32) {
    %c0_i32 = arith.constant 0 : i32
    %c0_i32_0 = arith.constant 0 : i32
    %c0_i32_1 = arith.constant 0 : i32
    return %c0_i32, %c0_i32_0 : i32, i32
  }
  func.func @transform_6(%arg0: i32) -> (i32, i32) {
    %c0_i32 = arith.constant 0 : i32
    %c0_i32_0 = arith.constant 0 : i32
    %c0_i32_1 = arith.constant 0 : i32
    return %c0_i32, %c0_i32_0 : i32, i32
  }
  func.func @transform_7(%arg0: i32) -> (i32, i32) {
    %c0_i32 = arith.constant 0 : i32
    %c0_i32_0 = arith.constant 0 : i32
    %c0_i32_1 = arith.constant 0 : i32
    return %c0_i32, %c0_i32_0 : i32, i32
  }
  func.func @transform_8(%arg0: i32) -> (i32, i32) {
    %c0_i32 = arith.constant 0 : i32
    %c0_i32_0 = arith.constant 0 : i32
    %c0_i32_1 = arith.constant 0 : i32
    return %c0_i32, %c0_i32_0 : i32, i32
  }
  func.func @transform_9(%arg0: i32) -> (i32, i32) {
    %c0_i32 = arith.constant 0 : i32
    %c0_i32_0 = arith.constant 0 : i32
    %c0_i32_1 = arith.constant 0 : i32
    return %c0_i32, %c0_i32_0 : i32, i32
  }
  func.func @transform_10(%arg0: i32) -> (i32, i32) {
    %c0_i32 = arith.constant 0 : i32
    %c0_i32_0 = arith.constant 0 : i32
    %c0_i32_1 = arith.constant 0 : i32
    return %c0_i32, %c0_i32_0 : i32, i32
  }
  func.func @transform_11(%arg0: i32) -> (i32, i32) {
    %c0_i32 = arith.constant 0 : i32
    %c0_i32_0 = arith.constant 0 : i32
    %c0_i32_1 = arith.constant 0 : i32
    return %c0_i32, %c0_i32_0 : i32, i32
  }
  func.func @transform_12(%arg0: i32) -> (i32, i32, i32) {
    %c0_i32 = arith.constant 0 : i32
    %c0_i32_0 = arith.constant 0 : i32
    %c0_i32_1 = arith.constant 0 : i32
    return %arg0, %c0_i32, %c0_i32_0 : i32, i32, i32
  }
}

module attributes {stable_mosaic.version = 11 : i64} {
  func.func @_ln_matmul_kernel(%arg0: i32, %arg1: memref<64x384xbf16, #tpu.memory_space<vmem>>, %arg2: memref<1x384xf32, #tpu.memory_space<vmem>>, %arg3: memref<1x384xf32, #tpu.memory_space<vmem>>, %arg4: memref<384x128xbf16, #tpu.memory_space<vmem>>, %arg5: memref<1x128xf32, #tpu.memory_space<vmem>>, %arg6: memref<64x128xf32, #tpu.memory_space<vmem>>) attributes {dimension_semantics = [#tpu.dimension_semantics<parallel>], iteration_bounds = array<i64: 2>, scalar_prefetch = 0 : i64, scratch_operands = 0 : i64, tpu.core_type = #tpu.core_type<tc>, window_params = [{transform_indices = @transform_0, window_bounds = array<i64: 64, 384>}, {pipeline_mode = #tpu.pipeline_mode<synchronous>, transform_indices = @transform_1, window_bounds = array<i64: 1, 384>}, {pipeline_mode = #tpu.pipeline_mode<synchronous>, transform_indices = @transform_2, window_bounds = array<i64: 1, 384>}, {pipeline_mode = #tpu.pipeline_mode<synchronous>, transform_indices = @transform_3, window_bounds = array<i64: 384, 128>}, {pipeline_mode = #tpu.pipeline_mode<synchronous>, transform_indices = @transform_4, window_bounds = array<i64: 1, 128>}, {transform_indices = @transform_5, window_bounds = array<i64: 64, 128>}]} {
    %c0 = arith.constant 0 : index
    %c0_0 = arith.constant 0 : index
    %0 = vector.load %arg1[%c0, %c0_0] : memref<64x384xbf16, #tpu.memory_space<vmem>>, vector<64x384xbf16>
    %1 = arith.extf %0 : vector<64x384xbf16> to vector<64x384xf32>
    %c0_1 = arith.constant 0 : index
    %c0_2 = arith.constant 0 : index
    %2 = vector.load %arg2[%c0_1, %c0_2] : memref<1x384xf32, #tpu.memory_space<vmem>>, vector<1x384xf32>
    %c0_3 = arith.constant 0 : index
    %c0_4 = arith.constant 0 : index
    %3 = vector.load %arg3[%c0_3, %c0_4] : memref<1x384xf32, #tpu.memory_space<vmem>>, vector<1x384xf32>
    %cst = arith.constant dense<0.000000e+00> : vector<64xf32>
    %4 = vector.multi_reduction <add>, %1, %cst [1] : vector<64x384xf32> to vector<64xf32>
    %5 = vector.shape_cast %4 : vector<64xf32> to vector<64x1xf32>
    %cst_5 = arith.constant 3.840000e+02 : f32
    %6 = vector.broadcast %cst_5 : f32 to vector<64x1xf32>
    %7 = arith.divf %5, %6 : vector<64x1xf32>
    %8 = vector.broadcast %7 : vector<64x1xf32> to vector<64x384xf32>
    %9 = arith.subf %1, %8 : vector<64x384xf32>
    %10 = arith.mulf %9, %9 : vector<64x384xf32>
    %cst_6 = arith.constant dense<0.000000e+00> : vector<64xf32>
    %11 = vector.multi_reduction <add>, %10, %cst_6 [1] : vector<64x384xf32> to vector<64xf32>
    %12 = vector.shape_cast %11 : vector<64xf32> to vector<64x1xf32>
    %cst_7 = arith.constant 3.840000e+02 : f32
    %13 = vector.broadcast %cst_7 : f32 to vector<64x1xf32>
    %14 = arith.divf %12, %13 : vector<64x1xf32>
    %15 = vector.broadcast %7 : vector<64x1xf32> to vector<64x384xf32>
    %16 = arith.subf %1, %15 : vector<64x384xf32>
    %cst_8 = arith.constant 9.99999974E-6 : f32
    %17 = vector.broadcast %cst_8 : f32 to vector<64x1xf32>
    %18 = arith.addf %14, %17 : vector<64x1xf32>
    %19 = math.rsqrt %18 : vector<64x1xf32>
    %20 = vector.broadcast %19 : vector<64x1xf32> to vector<64x384xf32>
    %21 = arith.mulf %16, %20 : vector<64x384xf32>
    %22 = vector.broadcast %2 : vector<1x384xf32> to vector<64x384xf32>
    %23 = arith.mulf %21, %22 : vector<64x384xf32>
    %24 = vector.broadcast %3 : vector<1x384xf32> to vector<64x384xf32>
    %25 = arith.addf %23, %24 : vector<64x384xf32>
    %26 = arith.truncf %25 : vector<64x384xf32> to vector<64x384xbf16>
    %c0_9 = arith.constant 0 : index
    %c0_10 = arith.constant 0 : index
    %27 = vector.load %arg4[%c0_9, %c0_10] : memref<384x128xbf16, #tpu.memory_space<vmem>>, vector<384x128xbf16>
    %cst_11 = arith.constant dense<0.000000e+00> : vector<64x128xf32>
    %28 = tpu.matmul %26, %27, %cst_11 {dimension_numbers = #tpu.dot_dimension_numbers<[1], [0], [0], [1], [0, 0, 1, 1], [], []>} : vector<64x384xbf16>, vector<384x128xbf16>, vector<64x128xf32> -> vector<64x128xf32>
    %c0_12 = arith.constant 0 : index
    %c0_13 = arith.constant 0 : index
    %29 = vector.load %arg5[%c0_12, %c0_13] : memref<1x128xf32, #tpu.memory_space<vmem>>, vector<1x128xf32>
    %30 = vector.broadcast %29 : vector<1x128xf32> to vector<64x128xf32>
    %31 = arith.addf %28, %30 : vector<64x128xf32>
    %c0_14 = arith.constant 0 : index
    %c0_15 = arith.constant 0 : index
    %32 = vector.load %arg6[%c0_14, %c0_15] : memref<64x128xf32, #tpu.memory_space<vmem>>, vector<64x128xf32>
    tpu.vector_store %arg6[%c0_14, %c0_15], %31 {strides = array<i32>} : memref<64x128xf32, #tpu.memory_space<vmem>>, vector<64x128xf32>,
    return
  }
  func.func @transform_0(%arg0: i32) -> (i32, i32) {
    %c0_i32 = arith.constant 0 : i32
    %c0_i32_0 = arith.constant 0 : i32
    return %arg0, %c0_i32 : i32, i32
  }
  func.func @transform_1(%arg0: i32) -> (i32, i32) {
    %c0_i32 = arith.constant 0 : i32
    %c0_i32_0 = arith.constant 0 : i32
    %c0_i32_1 = arith.constant 0 : i32
    return %c0_i32, %c0_i32_0 : i32, i32
  }
  func.func @transform_2(%arg0: i32) -> (i32, i32) {
    %c0_i32 = arith.constant 0 : i32
    %c0_i32_0 = arith.constant 0 : i32
    %c0_i32_1 = arith.constant 0 : i32
    return %c0_i32, %c0_i32_0 : i32, i32
  }
  func.func @transform_3(%arg0: i32) -> (i32, i32) {
    %c0_i32 = arith.constant 0 : i32
    %c0_i32_0 = arith.constant 0 : i32
    %c0_i32_1 = arith.constant 0 : i32
    return %c0_i32, %c0_i32_0 : i32, i32
  }
  func.func @transform_4(%arg0: i32) -> (i32, i32) {
    %c0_i32 = arith.constant 0 : i32
    %c0_i32_0 = arith.constant 0 : i32
    %c0_i32_1 = arith.constant 0 : i32
    return %c0_i32, %c0_i32_0 : i32, i32
  }
  func.func @transform_5(%arg0: i32) -> (i32, i32) {
    %c0_i32 = arith.constant 0 : i32
    %c0_i32_0 = arith.constant 0 : i32
    return %arg0, %c0_i32 : i32, i32
  }
}

</mosaic_0001>

<llo_original>
// kernel: _lambda_.13
$region0: #{_lambda_.13}
  #allocation0 [shape = 'u32[]', space=smem, size = 0x4, offset = 0x4, fixed_abs, tag = 'smem constant byte address 0x4 - core index']
  #allocation1 [shape = 'u32[144,128]{1,0:T(1,128)}', space=vmem, size = 0x12000, scoped, tag = 'internal scratch']
  %s0 = inlined_call_operand.vmem [shape: bf16[128,384], index: 0, kind: input, shape index: {}]
  %s1 = inlined_call_operand.vmem [shape: f32[1,384], index: 1, kind: input, shape index: {}]
  %s2 = inlined_call_operand.vmem [shape: f32[1,384], index: 2, kind: input, shape index: {}]
  %s3 = inlined_call_operand.vmem [shape: bf16[384,128], index: 3, kind: input, shape index: {}]
  %s4 = inlined_call_operand.vmem [shape: f32[1,128], index: 4, kind: input, shape index: {}]
  %s5 = inlined_call_operand.hbm [shape: f32[128,128], index: 5, kind: output, shape index: {}]
  %s6 = sld [smem:[#allocation0]]
  $region53: #{_lambda_.13} parent=0
    _
  %s8 = ssub.s32 1, %s6
  %s9 = scalar_select 0, %s8, %s6
  $region1: #{_lambda_.13} parent=0
    #allocation2 [shape = 'u8[65536]{0}', space=vmem, size = 0x10000, scoped, tag = 'output window, operand 0']
    #allocation3 [shape = 's32[2]{0}', space=sflag, size = 0x8, scoped, tag = 'scoped memory for _lambda_.13']
    %10 = vsyncpa [#allocation3], 0
    %s11 = scalar_lea.sflag [#allocation3], 1
    %12 = vsyncpa %s11, 0
    loop: start=0, step=1, limit=4
    $region2: #{_lambda_.13} parent=1 // loop_pre_header
      _
    $region3: #{_lambda_.13} parent=1 // loop_header
      %s14 = sphi 0, %s18
      %p15 = scmp.ge.s32.totalorder %s14, 4
      %s24 = sphi 0, %s26
      %s27 = sphi 0, %s24
      %s28 = sphi 0, %s27
      %s44 = sphi 0, %s28
      %s48 = sphi 0, %s48
      %s50 = sphi 0, %s48
      %s51 = sphi 0, %s50
      %s65 = sphi 0, %s51
      %s69 = sphi 0, %s69
      %s71 = sphi 0, %s69
      %s72 = sphi 0, %s71
      %s86 = sphi 0, %s72
      %s90 = sphi 0, %s90
      %s92 = sphi 0, %s90
      %s93 = sphi 0, %s92
      %s107 = sphi 0, %s93
      %s111 = sphi 0, %s111
      %s113 = sphi 0, %s111
      %s114 = sphi 0, %s113
      %s128 = sphi 0, %s114
      %s134 = sphi 0, %s136
      %s137 = sphi 0, %s134
      %s138 = sphi 0, %s137
      %s154 = sphi 0, %s138
    $region4: #{_lambda_.13} parent=1 // loop_header_branch
      %17 = sbr.rel (%p15) target = $region8
    $region5: #{_lambda_.13} parent=1 // loop_body
      %s19 = ssub.s32 %s14, 1
      %s20 = ssub.s32 %s14, 2
      %s21 = sadd.s32 %s14, 1
      %s22 = ssub.s32 %s14, %s21
      %p23 = scmp.eq.s32.totalorder %s22, 0
      %s25 = sadd.s32 %s24, 1
      %s26 = scalar_select %p23, %s24, %s25
      %p29 = pneg %p23
      %p30 = scmp.eq.s32.totalorder %s14, 1
      %p31 = por %p29, %p30
      %p32 = scmp.ne.s32.totalorder %s24, %s27
      %p33 = scmp.eq.s32.totalorder %s14, 0
      %p34 = por %p32, %p33
      %p35 = scmp.ne.s32.totalorder %s24, %s27
      %p36 = scmp.eq.s32.totalorder %s19, 1
      %p37 = por %p35, %p36
      %p38 = scmp.ne.s32.totalorder %s27, %s28
      %p39 = scmp.eq.s32.totalorder %s19, 0
      %p40 = por %p38, %p39
      %p41 = scmp.ne.s32.totalorder %s27, %s28
      %p42 = scmp.eq.s32.totalorder %s20, 1
      %p43 = por %p41, %p42
      %p45 = scmp.ne.s32.totalorder %s28, %s44
      %p46 = scmp.eq.s32.totalorder %s20, 0
      %p47 = por %p45, %p46
      %s49 = sadd.s32 %s48, 1
      %p52 = scmp.eq.s32.totalorder %s14, 1
      %p53 = scmp.ne.s32.totalorder %s48, %s50
      %p54 = scmp.eq.s32.totalorder %s14, 0
      %p55 = por %p53, %p54
      %p56 = scmp.ne.s32.totalorder %s48, %s50
      %p57 = scmp.eq.s32.totalorder %s19, 1
      %p58 = por %p56, %p57
      %p59 = scmp.ne.s32.totalorder %s50, %s51
      %p60 = scmp.eq.s32.totalorder %s19, 0
      %p61 = por %p59, %p60
      %p62 = scmp.ne.s32.totalorder %s50, %s51
      %p63 = scmp.eq.s32.totalorder %s20, 1
      %p64 = por %p62, %p63
      %p66 = scmp.ne.s32.totalorder %s51, %s65
      %p67 = scmp.eq.s32.totalorder %s20, 0
      %p68 = por %p66, %p67
      %s70 = sadd.s32 %s69, 1
      %p73 = scmp.eq.s32.totalorder %s14, 1
      %p74 = scmp.ne.s32.totalorder %s69, %s71
      %p75 = scmp.eq.s32.totalorder %s14, 0
      %p76 = por %p74, %p75
      %p77 = scmp.ne.s32.totalorder %s69, %s71
      %p78 = scmp.eq.s32.totalorder %s19, 1
      %p79 = por %p77, %p78
      %p80 = scmp.ne.s32.totalorder %s71, %s72
      %p81 = scmp.eq.s32.totalorder %s19, 0
      %p82 = por %p80, %p81
      %p83 = scmp.ne.s32.totalorder %s71, %s72
      %p84 = scmp.eq.s32.totalorder %s20, 1
      %p85 = por %p83, %p84
      %p87 = scmp.ne.s32.totalorder %s72, %s86
      %p88 = scmp.eq.s32.totalorder %s20, 0
      %p89 = por %p87, %p88
      %s91 = sadd.s32 %s90, 1
      %p94 = scmp.eq.s32.totalorder %s14, 1
      %p95 = scmp.ne.s32.totalorder %s90, %s92
      %p96 = scmp.eq.s32.totalorder %s14, 0
      %p97 = por %p95, %p96
      %p98 = scmp.ne.s32.totalorder %s90, %s92
      %p99 = scmp.eq.s32.totalorder %s19, 1
      %p100 = por %p98, %p99
      %p101 = scmp.ne.s32.totalorder %s92, %s93
      %p102 = scmp.eq.s32.totalorder %s19, 0
      %p103 = por %p101, %p102
      %p104 = scmp.ne.s32.totalorder %s92, %s93
      %p105 = scmp.eq.s32.totalorder %s20, 1
      %p106 = por %p104, %p105
      %p108 = scmp.ne.s32.totalorder %s93, %s107
      %p109 = scmp.eq.s32.totalorder %s20, 0
      %p110 = por %p108, %p109
      %s112 = sadd.s32 %s111, 1
      %p115 = scmp.eq.s32.totalorder %s14, 1
      %p116 = scmp.ne.s32.totalorder %s111, %s113
      %p117 = scmp.eq.s32.totalorder %s14, 0
      %p118 = por %p116, %p117
      %p119 = scmp.ne.s32.totalorder %s111, %s113
      %p120 = scmp.eq.s32.totalorder %s19, 1
      %p121 = por %p119, %p120
      %p122 = scmp.ne.s32.totalorder %s113, %s114
      %p123 = scmp.eq.s32.totalorder %s19, 0
      %p124 = por %p122, %p123
      %p125 = scmp.ne.s32.totalorder %s113, %s114
      %p126 = scmp.eq.s32.totalorder %s20, 1
      %p127 = por %p125, %p126
      %p129 = scmp.ne.s32.totalorder %s114, %s128
      %p130 = scmp.eq.s32.totalorder %s20, 0
      %p131 = por %p129, %p130
      %s132 = ssub.s32 %s14, %s21
      %p133 = scmp.eq.s32.totalorder %s132, 0
      %s135 = sadd.s32 %s134, 1
      %s136 = scalar_select %p133, %s134, %s135
      %p139 = pneg %p133
      %p140 = scmp.eq.s32.totalorder %s14, 1
      %p141 = por %p139, %p140
      %p142 = scmp.ne.s32.totalorder %s134, %s137
      %p143 = scmp.eq.s32.totalorder %s14, 0
      %p144 = por %p142, %p143
      %p145 = scmp.ne.s32.totalorder %s134, %s137
      %p146 = scmp.eq.s32.totalorder %s19, 1
      %p147 = por %p145, %p146
      %p148 = scmp.ne.s32.totalorder %s137, %s138
      %p149 = scmp.eq.s32.totalorder %s19, 0
      %p150 = por %p148, %p149
      %p151 = scmp.ne.s32.totalorder %s137, %s138
      %p152 = scmp.eq.s32.totalorder %s20, 1
      %p153 = por %p151, %p152
      %p155 = scmp.ne.s32.totalorder %s138, %s154
      %p156 = scmp.eq.s32.totalorder %s20, 0
      %p157 = por %p155, %p156
      %p158 = scmp.le.s32.totalorder 1, %s14
      %p159 = scmp.lt.s32.totalorder %s14, 3
      %p160 = pnand %p158, %p159
      %p161 = pneg %p160
      // Predicated region
      $region9: #{_lambda_.13} parent=5 // pred_check
        _
      $region10: #{_lambda_.13} parent=5 // pred_check_branch
        %163 = sbr.rel (%p160) target = $region12
      $region11: #{_lambda_.13} parent=5 // pred_region
        %s164 = ssub.s32 %s14, 1
        // Predicated region
        $region13: #{_lambda_.13} parent=11 // pred_check
          %p165 = pneg %p61
        $region14: #{_lambda_.13} parent=11 // pred_check_branch
          %167 = sbr.rel (%p165) target = $region16
        $region15: #{_lambda_.13} parent=11 // pred_region
          _
        $region16: #{_lambda_.13} parent=11 // pred_fallthru
          _
        // Predicated region
        $region17: #{_lambda_.13} parent=11 // pred_check
          %p168 = pneg %p82
        $region18: #{_lambda_.13} parent=11 // pred_check_branch
          %170 = sbr.rel (%p168) target = $region20
        $region19: #{_lambda_.13} parent=11 // pred_region
          _
        $region20: #{_lambda_.13} parent=11 // pred_fallthru
          _
        // Predicated region
        $region21: #{_lambda_.13} parent=11 // pred_check
          %p171 = pneg %p103
        $region22: #{_lambda_.13} parent=11 // pred_check_branch
          %173 = sbr.rel (%p171) target = $region24
        $region23: #{_lambda_.13} parent=11 // pred_region
          _
        $region24: #{_lambda_.13} parent=11 // pred_fallthru
          _
        // Predicated region
        $region25: #{_lambda_.13} parent=11 // pred_check
          %p174 = pneg %p124
        $region26: #{_lambda_.13} parent=11 // pred_check_branch
          %176 = sbr.rel (%p174) target = $region28
        $region27: #{_lambda_.13} parent=11 // pred_region
          _
        $region28: #{_lambda_.13} parent=11 // pred_fallthru
          _
      $region12: #{_lambda_.13} parent=5 // pred_fallthru
        _
      %p177 = scmp.lt.s32.totalorder %s14, 2
      // Predicated region
      $region29: #{_lambda_.13} parent=5 // pred_check
        %p178 = pneg %p177
      $region30: #{_lambda_.13} parent=5 // pred_check_branch
        %180 = sbr.rel (%p178) target = $region32
      $region31: #{_lambda_.13} parent=5 // pred_region
        // Predicated region
        $region33: #{_lambda_.13} parent=31 // pred_check
          %p181 = pneg %p34
        $region34: #{_lambda_.13} parent=31 // pred_check_branch
          %183 = sbr.rel (%p181) target = $region36
        $region35: #{_lambda_.13} parent=31 // pred_region
          %s184 = smul.u32 8, %s14
          %p185 = scmp.lt.s32.totalorder %s184, 15
          %s186 = scalar_select %p185, %s184, 15
          %s187 = smul.addr %s186, 3
          %s188 = smul.addr %s187, 4
          %s189 = scalar_lea.vmem %s0, %s188
          %s190 = smul.u32 8, %s14
        $region36: #{_lambda_.13} parent=31 // pred_fallthru
          _
      $region32: #{_lambda_.13} parent=5 // pred_fallthru
        _
      %p191 = scmp.le.s32.totalorder 1, %s14
      %p192 = scmp.lt.s32.totalorder %s14, 3
      %p193 = pnand %p191, %p192
      %p194 = pneg %p193
      // Predicated region
      $region37: #{_lambda_.13} parent=5 // pred_check
        _
      $region38: #{_lambda_.13} parent=5 // pred_check_branch
        %196 = sbr.rel (%p193) target = $region40
      $region39: #{_lambda_.13} parent=5 // pred_region
        %s197 = ssub.s32 %s14, 1
        %s198 = smul.u32 8, %s19
        %p199 = scmp.lt.s32.totalorder %s198, 15
        %s200 = scalar_select %p199, %s198, 15
        %s201 = smul.addr %s200, 3
        %s202 = smul.addr %s201, 4
        %s203 = scalar_lea.vmem %s0, %s202
        %p204 = pneg %p40
        %p205 = pneg %p37
        %p206 = pneg %p61
        %p207 = pneg %p58
        %p208 = pneg %p82
        %p209 = pneg %p79
        %p210 = pneg %p103
        %p211 = pneg %p100
        %p212 = pneg %p124
        %p213 = pneg %p121
        %p214 = pneg %p150
        %p215 = pneg %p147
        %s216 = sand.u32 %s137, 1
        %s217 = scalar_lea.sflag [#allocation3], %s216
        %s218 = sand.u32 %s137, 1
        %s219 = smul.addr %s218, 64
        %s220 = scalar_lea.vmem [#allocation2], %s219
        %s221 = smul.u32 8, %s19
        %p222 = scmp.lt.s32.totalorder %s221, 15
        %s223 = scalar_select %p222, %s221, 15
        %s224 = smul.addr %s223, 3
        %s225 = smul.addr %s224, 4
        %s226 = scalar_lea.vmem %s0, %s225
        %s227 = smul.u32 8, %s19
        %s228 = smul.u32 8, %s19
        %v230 = vld [vmem:[%s226] sm:$0xff]
        %v231 = vld [vmem:[%s226 + $0x8] sm:$0xf]
        %v232 = vld [vmem:[%s226 + $0xc] sm:$0xff]
        %v233 = vld [vmem:[%s226 + $0x14] sm:$0xf]
        %v234 = vld [vmem:[%s226 + $0x18] sm:$0xff]
        %v235 = vld [vmem:[%s226 + $0x20] sm:$0xf]
        %v236 = vld [vmem:[%s226 + $0x24] sm:$0xff]
        %v237 = vld [vmem:[%s226 + $0x2c] sm:$0xf]
        %v238 = vld [vmem:[%s226 + $0x30] sm:$0xff]
        %v239 = vld [vmem:[%s226 + $0x38] sm:$0xf]
        %v240 = vld [vmem:[%s226 + $0x3c] sm:$0xff]
        %v241 = vld [vmem:[%s226 + $0x44] sm:$0xf]
        %v242 = vld [vmem:[%s226 + $0x48] sm:$0xff]
        %v243 = vld [vmem:[%s226 + $0x50] sm:$0xf]
        %v244 = vld [vmem:[%s226 + $0x54] sm:$0xff]
        %v245 = vld [vmem:[%s226 + $0x5c] sm:$0xf]
        %v246 = vunpack.c.l.bf16 %v230
        %v247 = vunpack.c.h.bf16 %v230
        %v248 = vunpack.c.l.bf16 %v231
        %v249 = vunpack.c.l.bf16 %v232
        %v250 = vunpack.c.h.bf16 %v232
        %v251 = vunpack.c.l.bf16 %v233
        %v252 = vunpack.c.l.bf16 %v234
        %v253 = vunpack.c.h.bf16 %v234
        %v254 = vunpack.c.l.bf16 %v235
        %v255 = vunpack.c.l.bf16 %v236
        %v256 = vunpack.c.h.bf16 %v236
        %v257 = vunpack.c.l.bf16 %v237
        %v258 = vunpack.c.l.bf16 %v238
        %v259 = vunpack.c.h.bf16 %v238
        %v260 = vunpack.c.l.bf16 %v239
        %v261 = vunpack.c.l.bf16 %v240
        %v262 = vunpack.c.h.bf16 %v240
        %v263 = vunpack.c.l.bf16 %v241
        %v264 = vunpack.c.l.bf16 %v242
        %v265 = vunpack.c.h.bf16 %v242
        %v266 = vunpack.c.l.bf16 %v243
        %v267 = vunpack.c.l.bf16 %v244
        %v268 = vunpack.c.h.bf16 %v244
        %v269 = vunpack.c.l.bf16 %v245
        %v270 = vld [vmem:[%s1] sm:$0x7]
        %v271 = vld [vmem:[%s2] sm:$0x7]
        %v272 = vadd.f32 %v246, %v247
        %v273 = vadd.f32 %v272, %v248
        %274 = vadd.xlane.f32.xlu0 %v273
        %v275 = vpop.xlane.xlu0 %274
        %v276 = vadd.f32 %v249, %v250
        %v277 = vadd.f32 %v276, %v251
        %278 = vadd.xlane.f32.xlu0 %v277
        %v279 = vpop.xlane.xlu0 %278
        %v280 = vadd.f32 %v252, %v253
        %v281 = vadd.f32 %v280, %v254
        %282 = vadd.xlane.f32.xlu0 %v281
        %v283 = vpop.xlane.xlu0 %282
        %v284 = vadd.f32 %v255, %v256
        %v285 = vadd.f32 %v284, %v257
        %286 = vadd.xlane.f32.xlu0 %v285
        %v287 = vpop.xlane.xlu0 %286
        %v288 = vadd.f32 %v258, %v259
        %v289 = vadd.f32 %v288, %v260
        %290 = vadd.xlane.f32.xlu0 %v289
        %v291 = vpop.xlane.xlu0 %290
        %v292 = vadd.f32 %v261, %v262
        %v293 = vadd.f32 %v292, %v263
        %294 = vadd.xlane.f32.xlu0 %v293
        %v295 = vpop.xlane.xlu0 %294
        %v296 = vadd.f32 %v264, %v265
        %v297 = vadd.f32 %v296, %v266
        %298 = vadd.xlane.f32.xlu0 %v297
        %v299 = vpop.xlane.xlu0 %298
        %v300 = vadd.f32 %v267, %v268
        %v301 = vadd.f32 %v300, %v269
        %302 = vadd.xlane.f32.xlu0 %v301
        %v303 = vpop.xlane.xlu0 %302
        %v304 = vrcp.pop 384.0
        %v305 = vmul.f32 %v275, %v304
        %v306 = vmul.f32 %v279, %v304
        %v307 = vmul.f32 %v283, %v304
        %v308 = vmul.f32 %v287, %v304
        %v309 = vmul.f32 %v291, %v304
        %v310 = vmul.f32 %v295, %v304
        %v311 = vmul.f32 %v299, %v304
        %v312 = vmul.f32 %v303, %v304
        %v313 = vsub.f32 %v246, %v305
        %v314 = vsub.f32 %v247, %v305
        %v315 = vsub.f32 %v248, %v305
        %v316 = vsub.f32 %v249, %v306
        %v317 = vsub.f32 %v250, %v306
        %v318 = vsub.f32 %v251, %v306
        %v319 = vsub.f32 %v252, %v307
        %v320 = vsub.f32 %v253, %v307
        %v321 = vsub.f32 %v254, %v307
        %v322 = vsub.f32 %v255, %v308
        %v323 = vsub.f32 %v256, %v308
        %v324 = vsub.f32 %v257, %v308
        %v325 = vsub.f32 %v258, %v309
        %v326 = vsub.f32 %v259, %v309
        %v327 = vsub.f32 %v260, %v309
        %v328 = vsub.f32 %v261, %v310
        %v329 = vsub.f32 %v262, %v310
        %v330 = vsub.f32 %v263, %v310
        %v331 = vsub.f32 %v264, %v311
        %v332 = vsub.f32 %v265, %v311
        %v333 = vsub.f32 %v266, %v311
        %v334 = vsub.f32 %v267, %v312
        %v335 = vsub.f32 %v268, %v312
        %v336 = vsub.f32 %v269, %v312
        %v337 = vmul.f32 %v313, %v313
        %v338 = vmul.f32 %v314, %v314
        %v339 = vmul.f32 %v315, %v315
        %v340 = vmul.f32 %v316, %v316
        %v341 = vmul.f32 %v317, %v317
        %v342 = vmul.f32 %v318, %v318
        %v343 = vmul.f32 %v319, %v319
        %v344 = vmul.f32 %v320, %v320
        %v345 = vmul.f32 %v321, %v321
        %v346 = vmul.f32 %v322, %v322
        %v347 = vmul.f32 %v323, %v323
        %v348 = vmul.f32 %v324, %v324
        %v349 = vmul.f32 %v325, %v325
        %v350 = vmul.f32 %v326, %v326
        %v351 = vmul.f32 %v327, %v327
        %v352 = vmul.f32 %v328, %v328
        %v353 = vmul.f32 %v329, %v329
        %v354 = vmul.f32 %v330, %v330
        %v355 = vmul.f32 %v331, %v331
        %v356 = vmul.f32 %v332, %v332
        %v357 = vmul.f32 %v333, %v333
        %v358 = vmul.f32 %v334, %v334
        %v359 = vmul.f32 %v335, %v335
        %v360 = vmul.f32 %v336, %v336
        %v361 = vadd.f32 %v337, %v338
        %v362 = vadd.f32 %v361, %v339
        %363 = vadd.xlane.f32.xlu0 %v362
        %v364 = vpop.xlane.xlu0 %363
        %v365 = vadd.f32 %v340, %v341
        %v366 = vadd.f32 %v365, %v342
        %367 = vadd.xlane.f32.xlu0 %v366
        %v368 = vpop.xlane.xlu0 %367
        %v369 = vadd.f32 %v343, %v344
        %v370 = vadd.f32 %v369, %v345
        %371 = vadd.xlane.f32.xlu0 %v370
        %v372 = vpop.xlane.xlu0 %371
        %v373 = vadd.f32 %v346, %v347
        %v374 = vadd.f32 %v373, %v348
        %375 = vadd.xlane.f32.xlu0 %v374
        %v376 = vpop.xlane.xlu0 %375
        %v377 = vadd.f32 %v349, %v350
        %v378 = vadd.f32 %v377, %v351
        %379 = vadd.xlane.f32.xlu0 %v378
        %v380 = vpop.xlane.xlu0 %379
        %v381 = vadd.f32 %v352, %v353
        %v382 = vadd.f32 %v381, %v354
        %383 = vadd.xlane.f32.xlu0 %v382
        %v384 = vpop.xlane.xlu0 %383
        %v385 = vadd.f32 %v355, %v356
        %v386 = vadd.f32 %v385, %v357
        %387 = vadd.xlane.f32.xlu0 %v386
        %v388 = vpop.xlane.xlu0 %387
        %v389 = vadd.f32 %v358, %v359
        %v390 = vadd.f32 %v389, %v360
        %391 = vadd.xlane.f32.xlu0 %v390
        %v392 = vpop.xlane.xlu0 %391
        %v393 = vmul.f32 %v364, %v304
        %v394 = vmul.f32 %v368, %v304
        %v395 = vmul.f32 %v372, %v304
        %v396 = vmul.f32 %v376, %v304
        %v397 = vmul.f32 %v380, %v304
        %v398 = vmul.f32 %v384, %v304
        %v399 = vmul.f32 %v388, %v304
        %v400 = vmul.f32 %v392, %v304
        %v401 = vadd.f32 %v393, 1e-05
        %v402 = vadd.f32 %v394, 1e-05
        %v403 = vadd.f32 %v395, 1e-05
        %v404 = vadd.f32 %v396, 1e-05
        %v405 = vadd.f32 %v397, 1e-05
        %v406 = vadd.f32 %v398, 1e-05
        %v407 = vadd.f32 %v399, 1e-05
        %v408 = vadd.f32 %v400, 1e-05
        %v409 = vrsqrt.pop %v401
        %v410 = vrsqrt.pop %v402
        %v411 = vrsqrt.pop %v403
        %v412 = vrsqrt.pop %v404
        %v413 = vrsqrt.pop %v405
        %v414 = vrsqrt.pop %v406
        %v415 = vrsqrt.pop %v407
        %v416 = vrsqrt.pop %v408
        %v417 = vmul.f32 %v313, %v409
        %v418 = vmul.f32 %v314, %v409
        %v419 = vmul.f32 %v315, %v409
        %v420 = vmul.f32 %v316, %v410
        %v421 = vmul.f32 %v317, %v410
        %v422 = vmul.f32 %v318, %v410
        %v423 = vmul.f32 %v319, %v411
        %v424 = vmul.f32 %v320, %v411
        %v425 = vmul.f32 %v321, %v411
        %v426 = vmul.f32 %v322, %v412
        %v427 = vmul.f32 %v323, %v412
        %v428 = vmul.f32 %v324, %v412
        %v429 = vmul.f32 %v325, %v413
        %v430 = vmul.f32 %v326, %v413
        %v431 = vmul.f32 %v327, %v413
        %v432 = vmul.f32 %v328, %v414
        %v433 = vmul.f32 %v329, %v414
        %v434 = vmul.f32 %v330, %v414
        %v435 = vmul.f32 %v331, %v415
        %v436 = vmul.f32 %v332, %v415
        %v437 = vmul.f32 %v333, %v415
        %v438 = vmul.f32 %v334, %v416
        %v439 = vmul.f32 %v335, %v416
        %v440 = vmul.f32 %v336, %v416
        %v442 = vlaneseq
        %v443 = vshrl.u32 %v442, 7
        %v444 = vsub.s32 0, %v443
        %v445 = vrot.slane %v270, %v444
        %v446 = vlaneseq
        %v447 = vshrl.u32 %v446, 7
        %v448 = vsub.s32 1, %v447
        %v449 = vrot.slane %v270, %v448
        %v450 = vlaneseq
        %v451 = vshrl.u32 %v450, 7
        %v452 = vsub.s32 2, %v451
        %v453 = vrot.slane %v270, %v452
        %v457 = vmul.f32 %v417, %v445
        %v458 = vmul.f32 %v418, %v449
        %v459 = vmul.f32 %v419, %v453
        %v460 = vmul.f32 %v420, %v445
        %v461 = vmul.f32 %v421, %v449
        %v462 = vmul.f32 %v422, %v453
        %v463 = vmul.f32 %v423, %v445
        %v464 = vmul.f32 %v424, %v449
        %v465 = vmul.f32 %v425, %v453
        %v466 = vmul.f32 %v426, %v445
        %v467 = vmul.f32 %v427, %v449
        %v468 = vmul.f32 %v428, %v453
        %v469 = vmul.f32 %v429, %v445
        %v470 = vmul.f32 %v430, %v449
        %v471 = vmul.f32 %v431, %v453
        %v472 = vmul.f32 %v432, %v445
        %v473 = vmul.f32 %v433, %v449
        %v474 = vmul.f32 %v434, %v453
        %v475 = vmul.f32 %v435, %v445
        %v476 = vmul.f32 %v436, %v449
        %v477 = vmul.f32 %v437, %v453
        %v478 = vmul.f32 %v438, %v445
        %v479 = vmul.f32 %v439, %v449
        %v480 = vmul.f32 %v440, %v453
        %v482 = vlaneseq
        %v483 = vshrl.u32 %v482, 7
        %v484 = vsub.s32 0, %v483
        %v485 = vrot.slane %v271, %v484
        %v486 = vlaneseq
        %v487 = vshrl.u32 %v486, 7
        %v488 = vsub.s32 1, %v487
        %v489 = vrot.slane %v271, %v488
        %v490 = vlaneseq
        %v491 = vshrl.u32 %v490, 7
        %v492 = vsub.s32 2, %v491
        %v493 = vrot.slane %v271, %v492
        %v497 = vadd.f32 %v457, %v485
        %v498 = vadd.f32 %v458, %v489
        %v499 = vadd.f32 %v459, %v493
        %v500 = vadd.f32 %v460, %v485
        %v501 = vadd.f32 %v461, %v489
        %v502 = vadd.f32 %v462, %v493
        %v503 = vadd.f32 %v463, %v485
        %v504 = vadd.f32 %v464, %v489
        %v505 = vadd.f32 %v465, %v493
        %v506 = vadd.f32 %v466, %v485
        %v507 = vadd.f32 %v467, %v489
        %v508 = vadd.f32 %v468, %v493
        %v509 = vadd.f32 %v469, %v485
        %v510 = vadd.f32 %v470, %v489
        %v511 = vadd.f32 %v471, %v493
        %v512 = vadd.f32 %v472, %v485
        %v513 = vadd.f32 %v473, %v489
        %v514 = vadd.f32 %v474, %v493
        %v515 = vadd.f32 %v475, %v485
        %v516 = vadd.f32 %v476, %v489
        %v517 = vadd.f32 %v477, %v493
        %v518 = vadd.f32 %v478, %v485
        %v519 = vadd.f32 %v479, %v489
        %v520 = vadd.f32 %v480, %v493
        %v521 = vpack.c.bf16 %v500, %v497
        %v522 = vpack.c.bf16 %v501, %v498
        %v523 = vpack.c.bf16 %v502, %v499
        %v524 = vpack.c.bf16 %v506, %v503
        %v525 = vpack.c.bf16 %v507, %v504
        %v526 = vpack.c.bf16 %v508, %v505
        %v527 = vpack.c.bf16 %v512, %v509
        %v528 = vpack.c.bf16 %v513, %v510
        %v529 = vpack.c.bf16 %v514, %v511
        %v530 = vpack.c.bf16 %v518, %v515
        %v531 = vpack.c.bf16 %v519, %v516
        %v532 = vpack.c.bf16 %v520, %v517
        %v533 = vld [vmem:[%s3] sm:$0xf]
        %v534 = vld [vmem:[%s3 + $0x4] sm:$0xf]
        %v535 = vld [vmem:[%s3 + $0x8] sm:$0xf]
        %v536 = vld [vmem:[%s3 + $0xc] sm:$0xf]
        %v537 = vld [vmem:[%s3 + $0x10] sm:$0xf]
        %v538 = vld [vmem:[%s3 + $0x14] sm:$0xf]
        %v539 = vld [vmem:[%s3 + $0x18] sm:$0xf]
        %v540 = vld [vmem:[%s3 + $0x1c] sm:$0xf]
        %v541 = vld [vmem:[%s3 + $0x20] sm:$0xf]
        %v542 = vld [vmem:[%s3 + $0x24] sm:$0xf]
        %v543 = vld [vmem:[%s3 + $0x28] sm:$0xf]
        %v544 = vld [vmem:[%s3 + $0x2c] sm:$0xf]
        %v545 = vld [vmem:[%s3 + $0x30] sm:$0xf]
        %v546 = vld [vmem:[%s3 + $0x34] sm:$0xf]
        %v547 = vld [vmem:[%s3 + $0x38] sm:$0xf]
        %v548 = vld [vmem:[%s3 + $0x3c] sm:$0xf]
        %v549 = vld [vmem:[%s3 + $0x40] sm:$0xf]
        %v550 = vld [vmem:[%s3 + $0x44] sm:$0xf]
        %v551 = vld [vmem:[%s3 + $0x48] sm:$0xf]
        %v552 = vld [vmem:[%s3 + $0x4c] sm:$0xf]
        %v553 = vld [vmem:[%s3 + $0x50] sm:$0xf]
        %v554 = vld [vmem:[%s3 + $0x54] sm:$0xf]
        %v555 = vld [vmem:[%s3 + $0x58] sm:$0xf]
        %v556 = vld [vmem:[%s3 + $0x5c] sm:$0xf]
        %v557 = vld [vmem:[%s3 + $0x60] sm:$0xf]
        %v558 = vld [vmem:[%s3 + $0x64] sm:$0xf]
        %v559 = vld [vmem:[%s3 + $0x68] sm:$0xf]
        %v560 = vld [vmem:[%s3 + $0x6c] sm:$0xf]
        %v561 = vld [vmem:[%s3 + $0x70] sm:$0xf]
        %v562 = vld [vmem:[%s3 + $0x74] sm:$0xf]
        %v563 = vld [vmem:[%s3 + $0x78] sm:$0xf]
        %v564 = vld [vmem:[%s3 + $0x7c] sm:$0xf]
        %v565 = vld [vmem:[%s3 + $0x80] sm:$0xf]
        %v566 = vld [vmem:[%s3 + $0x84] sm:$0xf]
        %v567 = vld [vmem:[%s3 + $0x88] sm:$0xf]
        %v568 = vld [vmem:[%s3 + $0x8c] sm:$0xf]
        %v569 = vld [vmem:[%s3 + $0x90] sm:$0xf]
        %v570 = vld [vmem:[%s3 + $0x94] sm:$0xf]
        %v571 = vld [vmem:[%s3 + $0x98] sm:$0xf]
        %v572 = vld [vmem:[%s3 + $0x9c] sm:$0xf]
        %v573 = vld [vmem:[%s3 + $0xa0] sm:$0xf]
        %v574 = vld [vmem:[%s3 + $0xa4] sm:$0xf]
        %v575 = vld [vmem:[%s3 + $0xa8] sm:$0xf]
        %v576 = vld [vmem:[%s3 + $0xac] sm:$0xf]
        %v577 = vld [vmem:[%s3 + $0xb0] sm:$0xf]
        %v578 = vld [vmem:[%s3 + $0xb4] sm:$0xf]
        %v579 = vld [vmem:[%s3 + $0xb8] sm:$0xf]
        %v580 = vld [vmem:[%s3 + $0xbc] sm:$0xf]
        %v581 = vld [vmem:[%s4] sm:$0x1]
        %v583 = vlaneseq
        %v584 = vshrl.u32 %v583, 7
        %v585 = vsub.s32 0, %v584
        %v586 = vrot.slane %v581, %v585
        %v636 = vunpack.c.l.b16 %v533
        %v637 = vunpack.c.l.b16 %v534
        %v638 = vunpack.c.l.b16 %v535
        %v639 = vunpack.c.l.b16 %v536
        %v640 = vunpack.c.l.b16 %v537
        %v641 = vunpack.c.l.b16 %v538
        %v642 = vunpack.c.l.b16 %v539
        %v643 = vunpack.c.l.b16 %v540
        %v644 = vunpack.c.l.b16 %v541
        %v645 = vunpack.c.l.b16 %v542
        %v646 = vunpack.c.l.b16 %v543
        %v647 = vunpack.c.l.b16 %v544
        %v648 = vunpack.c.l.b16 %v545
        %v649 = vunpack.c.l.b16 %v546
        %v650 = vunpack.c.l.b16 %v547
        %v651 = vunpack.c.l.b16 %v548
        %v652 = vunpack.c.l.b16 %v549
        %v653 = vunpack.c.l.b16 %v550
        %v654 = vunpack.c.l.b16 %v551
        %v655 = vunpack.c.l.b16 %v552
        %v656 = vunpack.c.l.b16 %v553
        %v657 = vunpack.c.l.b16 %v554
        %v658 = vunpack.c.l.b16 %v555
        %v659 = vunpack.c.l.b16 %v556
        %v660 = vunpack.c.l.b16 %v557
        %v661 = vunpack.c.l.b16 %v558
        %v662 = vunpack.c.l.b16 %v559
        %v663 = vunpack.c.l.b16 %v560
        %v664 = vunpack.c.l.b16 %v561
        %v665 = vunpack.c.l.b16 %v562
        %v666 = vunpack.c.l.b16 %v563
        %v667 = vunpack.c.l.b16 %v564
        %v668 = vunpack.c.l.b16 %v565
        %v669 = vunpack.c.l.b16 %v566
        %v670 = vunpack.c.l.b16 %v567
        %v671 = vunpack.c.l.b16 %v568
        %v672 = vunpack.c.l.b16 %v569
        %v673 = vunpack.c.l.b16 %v570
        %v674 = vunpack.c.l.b16 %v571
        %v675 = vunpack.c.l.b16 %v572
        %v676 = vunpack.c.l.b16 %v573
        %v677 = vunpack.c.l.b16 %v574
        %v678 = vunpack.c.l.b16 %v575
        %v679 = vunpack.c.l.b16 %v576
        %v680 = vunpack.c.l.b16 %v577
        %v681 = vunpack.c.l.b16 %v578
        %v682 = vunpack.c.l.b16 %v579
        %v683 = vunpack.c.l.b16 %v580
        %v684 = vpack.c.b16 %v637, %v636
        %v685 = vpack.c.b16 %v639, %v638
        %v686 = vpack.c.b16 %v641, %v640
        %v687 = vpack.c.b16 %v643, %v642
        %v688 = vpack.c.b16 %v645, %v644
        %v689 = vpack.c.b16 %v647, %v646
        %v690 = vpack.c.b16 %v649, %v648
        %v691 = vpack.c.b16 %v651, %v650
        %v692 = vpack.c.b16 %v653, %v652
        %v693 = vpack.c.b16 %v655, %v654
        %v694 = vpack.c.b16 %v657, %v656
        %v695 = vpack.c.b16 %v659, %v658
        %v696 = vpack.c.b16 %v661, %v660
        %v697 = vpack.c.b16 %v663, %v662
        %v698 = vpack.c.b16 %v665, %v664
        %v699 = vpack.c.b16 %v667, %v666
        %v700 = vpack.c.b16 %v669, %v668
        %v701 = vpack.c.b16 %v671, %v670
        %v702 = vpack.c.b16 %v673, %v672
        %v703 = vpack.c.b16 %v675, %v674
        %v704 = vpack.c.b16 %v677, %v676
        %v705 = vpack.c.b16 %v679, %v678
        %v706 = vpack.c.b16 %v681, %v680
        %v707 = vpack.c.b16 %v683, %v682
        %732 = vmatprep.subr.bf16.mxu0 0
        %733 = vmatpush1.bf16.msra.mxu0 %v691
        %734 = vmatprep.subr.bf16.mxu0 0
        %735 = vmatpush1.bf16.msra.mxu0 %v690
        %736 = vmatprep.subr.bf16.mxu0 0
        %737 = vmatpush1.bf16.msra.mxu0 %v689
        %738 = vmatprep.subr.bf16.mxu0 0
        %739 = vmatpush1.bf16.msra.mxu0 %v688
        %740 = vmatprep.subr.bf16.mxu0 0
        %741 = vmatpush1.bf16.msra.mxu0 %v687
        %742 = vmatprep.subr.bf16.mxu0 0
        %743 = vmatpush1.bf16.msra.mxu0 %v686
        %744 = vmatprep.subr.bf16.mxu0 0
        %745 = vmatpush1.bf16.msra.mxu0 %v685
        %746 = vmatprep.subr.bf16.mxu0 0
        %747 = vmatpush1.bf16.msra.mxu0 %v684
        %748 = vmatprep.subr.bf16.mxu0 0
        %749 = vmatpush2.bf16.msra.mxu0 %v699
        %750 = vmatprep.subr.bf16.mxu0 0
        %751 = vmatpush2.bf16.msra.mxu0 %v698
        %752 = vmatprep.subr.bf16.mxu0 0
        %753 = vmatpush2.bf16.msra.mxu0 %v697
        %754 = vmatprep.subr.bf16.mxu0 0
        %755 = vmatpush2.bf16.msra.mxu0 %v696
        %756 = vmatprep.subr.bf16.mxu0 0
        %757 = vmatpush2.bf16.msra.mxu0 %v695
        %758 = vmatprep.subr.bf16.mxu0 0
        %759 = vmatpush2.bf16.msra.mxu0 %v694
        %760 = vmatprep.subr.bf16.mxu0 0
        %761 = vmatpush2.bf16.msra.mxu0 %v693
        %762 = vmatprep.subr.bf16.mxu0 0
        %763 = vmatpush2.bf16.msra.mxu0 %v692
        %764 = vmatprep.mubr.bf16.mxu0 %v522
        %765 = vmatmul.mubr.bf16.gmra.mxu0 %v521
        %v766 = vpop.f32.mrf.mxu0
        %v767 = vadd.f32 %v586, %v766
        %v768 = vpop.f32.mrf.mxu0
        %v769 = vpop.f32.mrf.mxu0
        %v770 = vadd.f32 %v586, %v769
        %v771 = vpop.f32.mrf.mxu0
        %772 = vmatprep.mubr.bf16.mxu0 %v525
        %773 = vmatmul.mubr.bf16.gmra.mxu0 %v524
        %v774 = vpop.f32.mrf.mxu0
        %v775 = vadd.f32 %v586, %v774
        %v776 = vpop.f32.mrf.mxu0
        %v777 = vpop.f32.mrf.mxu0
        %v778 = vadd.f32 %v586, %v777
        %v779 = vpop.f32.mrf.mxu0
        %780 = vmatprep.mubr.bf16.mxu0 %v528
        %781 = vmatmul.mubr.bf16.gmra.mxu0 %v527
        %v782 = vpop.f32.mrf.mxu0
        %v783 = vadd.f32 %v586, %v782
        %v784 = vpop.f32.mrf.mxu0
        %v785 = vpop.f32.mrf.mxu0
        %v786 = vadd.f32 %v586, %v785
        %v787 = vpop.f32.mrf.mxu0
        %788 = vmatprep.mubr.bf16.mxu0 %v531
        %789 = vmatmul.mubr.bf16.gmra.mxu0 %v530
        %v790 = vpop.f32.mrf.mxu0
        %v791 = vadd.f32 %v586, %v790
        %v792 = vpop.f32.mrf.mxu0
        %v793 = vpop.f32.mrf.mxu0
        %v794 = vadd.f32 %v586, %v793
        %v795 = vpop.f32.mrf.mxu0
        %796 = vdwg.mxu0
        %797 = vmatprep.subr.bf16.mxu0 0
        %798 = vmatpush1.bf16.msra.mxu0 %v707
        %799 = vmatprep.subr.bf16.mxu0 0
        %800 = vmatpush1.bf16.msra.mxu0 %v706
        %801 = vmatprep.subr.bf16.mxu0 0
        %802 = vmatpush1.bf16.msra.mxu0 %v705
        %803 = vmatprep.subr.bf16.mxu0 0
        %804 = vmatpush1.bf16.msra.mxu0 %v704
        %805 = vmatprep.subr.bf16.mxu0 0
        %806 = vmatpush1.bf16.msra.mxu0 %v703
        %807 = vmatprep.subr.bf16.mxu0 0
        %808 = vmatpush1.bf16.msra.mxu0 %v702
        %809 = vmatprep.subr.bf16.mxu0 0
        %810 = vmatpush1.bf16.msra.mxu0 %v701
        %811 = vmatprep.subr.bf16.mxu0 0
        %812 = vmatpush1.bf16.msra.mxu0 %v700
        %813 = vmatprep.subr.bf16.mxu0 0
        %814 = vmatpush2.bf16.msra.mxu0 0
        %815 = vmatprep.subr.bf16.mxu0 0
        %816 = vmatpush2.bf16.msra.mxu0 0
        %817 = vmatprep.subr.bf16.mxu0 0
        %818 = vmatpush2.bf16.msra.mxu0 0
        %819 = vmatprep.subr.bf16.mxu0 0
        %820 = vmatpush2.bf16.msra.mxu0 0
        %821 = vmatprep.subr.bf16.mxu0 0
        %822 = vmatpush2.bf16.msra.mxu0 0
        %823 = vmatprep.subr.bf16.mxu0 0
        %824 = vmatpush2.bf16.msra.mxu0 0
        %825 = vmatprep.subr.bf16.mxu0 0
        %826 = vmatpush2.bf16.msra.mxu0 0
        %827 = vmatprep.subr.bf16.mxu0 0
        %828 = vmatpush2.bf16.msra.mxu0 0
        %829 = vmatprep.mubr.bf16.mxu0 0
        %830 = vmatmul.mubr.bf16.gmra.mxu0 %v523
        %v831 = vpop.f32.mrf.mxu0
        %v832 = vadd.f32 %v767, %v831
        %v833 = vpop.f32.mrf.mxu0
        %v834 = vpop.f32.mrf.mxu0
        %v835 = vadd.f32 %v770, %v834
        %v836 = vpop.f32.mrf.mxu0
        %837 = vmatprep.mubr.bf16.mxu0 0
        %838 = vmatmul.mubr.bf16.gmra.mxu0 %v526
        %v839 = vpop.f32.mrf.mxu0
        %v840 = vadd.f32 %v775, %v839
        %v841 = vpop.f32.mrf.mxu0
        %v842 = vpop.f32.mrf.mxu0
        %v843 = vadd.f32 %v778, %v842
        %v844 = vpop.f32.mrf.mxu0
        %845 = vmatprep.mubr.bf16.mxu0 0
        %846 = vmatmul.mubr.bf16.gmra.mxu0 %v529
        %v847 = vpop.f32.mrf.mxu0
        %v848 = vadd.f32 %v783, %v847
        %v849 = vpop.f32.mrf.mxu0
        %v850 = vpop.f32.mrf.mxu0
        %v851 = vadd.f32 %v786, %v850
        %v852 = vpop.f32.mrf.mxu0
        %853 = vmatprep.mubr.bf16.mxu0 0
        %854 = vmatmul.mubr.bf16.gmra.mxu0 %v532
        %v855 = vpop.f32.mrf.mxu0
        %v856 = vadd.f32 %v791, %v855
        %v857 = vpop.f32.mrf.mxu0
        %v858 = vpop.f32.mrf.mxu0
        %v859 = vadd.f32 %v794, %v858
        %v860 = vpop.f32.mrf.mxu0
        %861 = vdwg.mxu0
        %862 = vst [vmem:[%s220] sm:$0xff] %v832
        %863 = vst [vmem:[%s220 + $0x8] sm:$0xff] %v835
        %864 = vst [vmem:[%s220 + $0x10] sm:$0xff] %v840
        %865 = vst [vmem:[%s220 + $0x18] sm:$0xff] %v843
        %866 = vst [vmem:[%s220 + $0x20] sm:$0xff] %v848
        %867 = vst [vmem:[%s220 + $0x28] sm:$0xff] %v851
        %868 = vst [vmem:[%s220 + $0x30] sm:$0xff] %v856
        %869 = vst [vmem:[%s220 + $0x38] sm:$0xff] %v859
        %s870 = sand.u32 %s137, 1
        %s871 = scalar_lea.sflag [#allocation3], %s870
        %s872 = sand.u32 %s137, 1
        %s873 = smul.addr %s872, 64
        %s874 = scalar_lea.vmem [#allocation2], %s873
        // Predicated region
        $region41: #{_lambda_.13} parent=39 // pred_check
          %p875 = pneg %p147
        $region42: #{_lambda_.13} parent=39 // pred_check_branch
          %877 = sbr.rel (%p875) target = $region44
        $region43: #{_lambda_.13} parent=39 // pred_region
          %s878 = smul.u32 8, %s19
          %s880 = ssub.s32 1024, 1024
          %881 = vsyncadd %s871, %s880
          %s882 = smul.addr %s878, 128
          %s883 = scalar_lea.hbm %s5, %s882
          %s884 = sshll.u32 %s874, 4
          %s885 = int_to_ptr.vmem [resolvable:$true] %s884
          %890 = dma.vmem_to_hbm [thread:$0]  %s885, 1024, %s883, %s871, 128, 128, 8
        $region44: #{_lambda_.13} parent=39 // pred_fallthru
          _
      $region40: #{_lambda_.13} parent=5 // pred_fallthru
        _
      %p891 = scmp.le.s32.totalorder 2, %s14
      // Predicated region
      $region45: #{_lambda_.13} parent=5 // pred_check
        %p892 = pneg %p891
      $region46: #{_lambda_.13} parent=5 // pred_check_branch
        %894 = sbr.rel (%p892) target = $region48
      $region47: #{_lambda_.13} parent=5 // pred_region
        %s895 = ssub.s32 %s14, 2
        // Predicated region
        $region49: #{_lambda_.13} parent=47 // pred_check
          %p896 = pneg %p153
        $region50: #{_lambda_.13} parent=47 // pred_check_branch
          %898 = sbr.rel (%p896) target = $region52
        $region51: #{_lambda_.13} parent=47 // pred_region
          %s899 = sand.u32 %s138, 1
          %s900 = scalar_lea.sflag [#allocation3], %s899
          %s901 = sand.u32 %s138, 1
          %s902 = smul.addr %s901, 64
          %s903 = scalar_lea.vmem [#allocation2], %s902
          %904 = dma.done %s900, 1024
        $region52: #{_lambda_.13} parent=47 // pred_fallthru
          _
      $region48: #{_lambda_.13} parent=5 // pred_fallthru
        _
    $region6: #{_lambda_.13} parent=1 // loop_footer
      %s18 = sadd.s32 1, %s14
    $region7: #{_lambda_.13} parent=1 // loop_footer_branch
      %13 = sbr.rel target = $region3
    $region8: #{_lambda_.13} parent=1 // loop_exit
      _
    %905 = vsyncpa [#allocation3], 1
    %s906 = scalar_lea.sflag [#allocation3], 1
    %907 = vsyncpa %s906, 1

// kernel: _lambda_.7
$region0: #{_lambda_.7}
  #allocation0 [shape = 'u32[]', space=smem, size = 0x4, offset = 0x4, fixed_abs, tag = 'smem constant byte address 0x4 - core index']
  #allocation1 [shape = 'u32[144,128]{1,0:T(1,128)}', space=vmem, size = 0x12000, scoped, tag = 'internal scratch']
  %s0 = inlined_call_operand.vmem [shape: bf16[2,64,384], index: 0, kind: input, shape index: {}]
  %s1 = inlined_call_operand.vmem [shape: f32[1,384], index: 1, kind: input, shape index: {}]
  %s2 = inlined_call_operand.vmem [shape: f32[1,384], index: 2, kind: input, shape index: {}]
  %s3 = inlined_call_operand.vmem [shape: bf16[384,1152], index: 3, kind: input, shape index: {}]
  %s4 = inlined_call_operand.vmem [shape: bf16[384,384], index: 4, kind: input, shape index: {}]
  %s5 = inlined_call_operand.vmem [shape: f32[1,384], index: 5, kind: input, shape index: {}]
  %s6 = inlined_call_operand.vmem [shape: f32[1,384], index: 6, kind: input, shape index: {}]
  %s7 = inlined_call_operand.vmem [shape: f32[1,384], index: 7, kind: input, shape index: {}]
  %s8 = inlined_call_operand.vmem [shape: bf16[384,1536], index: 8, kind: input, shape index: {}]
  %s9 = inlined_call_operand.vmem [shape: f32[1,1536], index: 9, kind: input, shape index: {}]
  %s10 = inlined_call_operand.vmem [shape: bf16[1536,384], index: 10, kind: input, shape index: {}]
  %s11 = inlined_call_operand.vmem [shape: f32[1,384], index: 11, kind: input, shape index: {}]
  %s12 = inlined_call_operand.vmem [shape: bf16[2,64,384], index: 12, kind: output, shape index: {}]
  %s13 = sld [smem:[#allocation0]]
  $region81: #{_lambda_.7} parent=0
    _
  %s15 = ssub.s32 1, %s13
  %s16 = scalar_select 0, %s15, %s13
  loop: start=0, step=1, limit=4
  $region2: #{_lambda_.7} parent=0 // loop_pre_header
    _
  $region3: #{_lambda_.7} parent=0 // loop_header
    %s18 = sphi 0, %s22
    %p19 = scmp.ge.s32.totalorder %s18, 4
    %s28 = sphi 0, %s30
    %s31 = sphi 0, %s28
    %s32 = sphi 0, %s31
    %s48 = sphi 0, %s32
    %s52 = sphi 0, %s52
    %s54 = sphi 0, %s52
    %s55 = sphi 0, %s54
    %s69 = sphi 0, %s55
    %s73 = sphi 0, %s73
    %s75 = sphi 0, %s73
    %s76 = sphi 0, %s75
    %s90 = sphi 0, %s76
    %s94 = sphi 0, %s94
    %s96 = sphi 0, %s94
    %s97 = sphi 0, %s96
    %s111 = sphi 0, %s97
    %s115 = sphi 0, %s115
    %s117 = sphi 0, %s115
    %s118 = sphi 0, %s117
    %s132 = sphi 0, %s118
    %s136 = sphi 0, %s136
    %s138 = sphi 0, %s136
    %s139 = sphi 0, %s138
    %s153 = sphi 0, %s139
    %s157 = sphi 0, %s157
    %s159 = sphi 0, %s157
    %s160 = sphi 0, %s159
    %s174 = sphi 0, %s160
    %s178 = sphi 0, %s178
    %s180 = sphi 0, %s178
    %s181 = sphi 0, %s180
    %s195 = sphi 0, %s181
    %s199 = sphi 0, %s199
    %s201 = sphi 0, %s199
    %s202 = sphi 0, %s201
    %s216 = sphi 0, %s202
    %s220 = sphi 0, %s220
    %s222 = sphi 0, %s220
    %s223 = sphi 0, %s222
    %s237 = sphi 0, %s223
    %s241 = sphi 0, %s241
    %s243 = sphi 0, %s241
    %s244 = sphi 0, %s243
    %s258 = sphi 0, %s244
    %s262 = sphi 0, %s262
    %s264 = sphi 0, %s262
    %s265 = sphi 0, %s264
    %s279 = sphi 0, %s265
    %s285 = sphi 0, %s287
    %s288 = sphi 0, %s285
    %s289 = sphi 0, %s288
    %s305 = sphi 0, %s289
  $region4: #{_lambda_.7} parent=0 // loop_header_branch
    %21 = sbr.rel (%p19) target = $region8
  $region5: #{_lambda_.7} parent=0 // loop_body
    %s23 = ssub.s32 %s18, 1
    %s24 = ssub.s32 %s18, 2
    %s25 = sadd.s32 %s18, 1
    %s26 = ssub.s32 %s18, %s25
    %p27 = scmp.eq.s32.totalorder %s26, 0
    %s29 = sadd.s32 %s28, 1
    %s30 = scalar_select %p27, %s28, %s29
    %p33 = pneg %p27
    %p34 = scmp.eq.s32.totalorder %s18, 1
    %p35 = por %p33, %p34
    %p36 = scmp.ne.s32.totalorder %s28, %s31
    %p37 = scmp.eq.s32.totalorder %s18, 0
    %p38 = por %p36, %p37
    %p39 = scmp.ne.s32.totalorder %s28, %s31
    %p40 = scmp.eq.s32.totalorder %s23, 1
    %p41 = por %p39, %p40
    %p42 = scmp.ne.s32.totalorder %s31, %s32
    %p43 = scmp.eq.s32.totalorder %s23, 0
    %p44 = por %p42, %p43
    %p45 = scmp.ne.s32.totalorder %s31, %s32
    %p46 = scmp.eq.s32.totalorder %s24, 1
    %p47 = por %p45, %p46
    %p49 = scmp.ne.s32.totalorder %s32, %s48
    %p50 = scmp.eq.s32.totalorder %s24, 0
    %p51 = por %p49, %p50
    %s53 = sadd.s32 %s52, 1
    %p56 = scmp.eq.s32.totalorder %s18, 1
    %p57 = scmp.ne.s32.totalorder %s52, %s54
    %p58 = scmp.eq.s32.totalorder %s18, 0
    %p59 = por %p57, %p58
    %p60 = scmp.ne.s32.totalorder %s52, %s54
    %p61 = scmp.eq.s32.totalorder %s23, 1
    %p62 = por %p60, %p61
    %p63 = scmp.ne.s32.totalorder %s54, %s55
    %p64 = scmp.eq.s32.totalorder %s23, 0
    %p65 = por %p63, %p64
    %p66 = scmp.ne.s32.totalorder %s54, %s55
    %p67 = scmp.eq.s32.totalorder %s24, 1
    %p68 = por %p66, %p67
    %p70 = scmp.ne.s32.totalorder %s55, %s69
    %p71 = scmp.eq.s32.totalorder %s24, 0
    %p72 = por %p70, %p71
    %s74 = sadd.s32 %s73, 1
    %p77 = scmp.eq.s32.totalorder %s18, 1
    %p78 = scmp.ne.s32.totalorder %s73, %s75
    %p79 = scmp.eq.s32.totalorder %s18, 0
    %p80 = por %p78, %p79
    %p81 = scmp.ne.s32.totalorder %s73, %s75
    %p82 = scmp.eq.s32.totalorder %s23, 1
    %p83 = por %p81, %p82
    %p84 = scmp.ne.s32.totalorder %s75, %s76
    %p85 = scmp.eq.s32.totalorder %s23, 0
    %p86 = por %p84, %p85
    %p87 = scmp.ne.s32.totalorder %s75, %s76
    %p88 = scmp.eq.s32.totalorder %s24, 1
    %p89 = por %p87, %p88
    %p91 = scmp.ne.s32.totalorder %s76, %s90
    %p92 = scmp.eq.s32.totalorder %s24, 0
    %p93 = por %p91, %p92
    %s95 = sadd.s32 %s94, 1
    %p98 = scmp.eq.s32.totalorder %s18, 1
    %p99 = scmp.ne.s32.totalorder %s94, %s96
    %p100 = scmp.eq.s32.totalorder %s18, 0
    %p101 = por %p99, %p100
    %p102 = scmp.ne.s32.totalorder %s94, %s96
    %p103 = scmp.eq.s32.totalorder %s23, 1
    %p104 = por %p102, %p103
    %p105 = scmp.ne.s32.totalorder %s96, %s97
    %p106 = scmp.eq.s32.totalorder %s23, 0
    %p107 = por %p105, %p106
    %p108 = scmp.ne.s32.totalorder %s96, %s97
    %p109 = scmp.eq.s32.totalorder %s24, 1
    %p110 = por %p108, %p109
    %p112 = scmp.ne.s32.totalorder %s97, %s111
    %p113 = scmp.eq.s32.totalorder %s24, 0
    %p114 = por %p112, %p113
    %s116 = sadd.s32 %s115, 1
    %p119 = scmp.eq.s32.totalorder %s18, 1
    %p120 = scmp.ne.s32.totalorder %s115, %s117
    %p121 = scmp.eq.s32.totalorder %s18, 0
    %p122 = por %p120, %p121
    %p123 = scmp.ne.s32.totalorder %s115, %s117
    %p124 = scmp.eq.s32.totalorder %s23, 1
    %p125 = por %p123, %p124
    %p126 = scmp.ne.s32.totalorder %s117, %s118
    %p127 = scmp.eq.s32.totalorder %s23, 0
    %p128 = por %p126, %p127
    %p129 = scmp.ne.s32.totalorder %s117, %s118
    %p130 = scmp.eq.s32.totalorder %s24, 1
    %p131 = por %p129, %p130
    %p133 = scmp.ne.s32.totalorder %s118, %s132
    %p134 = scmp.eq.s32.totalorder %s24, 0
    %p135 = por %p133, %p134
    %s137 = sadd.s32 %s136, 1
    %p140 = scmp.eq.s32.totalorder %s18, 1
    %p141 = scmp.ne.s32.totalorder %s136, %s138
    %p142 = scmp.eq.s32.totalorder %s18, 0
    %p143 = por %p141, %p142
    %p144 = scmp.ne.s32.totalorder %s136, %s138
    %p145 = scmp.eq.s32.totalorder %s23, 1
    %p146 = por %p144, %p145
    %p147 = scmp.ne.s32.totalorder %s138, %s139
    %p148 = scmp.eq.s32.totalorder %s23, 0
    %p149 = por %p147, %p148
    %p150 = scmp.ne.s32.totalorder %s138, %s139
    %p151 = scmp.eq.s32.totalorder %s24, 1
    %p152 = por %p150, %p151
    %p154 = scmp.ne.s32.totalorder %s139, %s153
    %p155 = scmp.eq.s32.totalorder %s24, 0
    %p156 = por %p154, %p155
    %s158 = sadd.s32 %s157, 1
    %p161 = scmp.eq.s32.totalorder %s18, 1
    %p162 = scmp.ne.s32.totalorder %s157, %s159
    %p163 = scmp.eq.s32.totalorder %s18, 0
    %p164 = por %p162, %p163
    %p165 = scmp.ne.s32.totalorder %s157, %s159
    %p166 = scmp.eq.s32.totalorder %s23, 1
    %p167 = por %p165, %p166
    %p168 = scmp.ne.s32.totalorder %s159, %s160
    %p169 = scmp.eq.s32.totalorder %s23, 0
    %p170 = por %p168, %p169
    %p171 = scmp.ne.s32.totalorder %s159, %s160
    %p172 = scmp.eq.s32.totalorder %s24, 1
    %p173 = por %p171, %p172
    %p175 = scmp.ne.s32.totalorder %s160, %s174
    %p176 = scmp.eq.s32.totalorder %s24, 0
    %p177 = por %p175, %p176
    %s179 = sadd.s32 %s178, 1
    %p182 = scmp.eq.s32.totalorder %s18, 1
    %p183 = scmp.ne.s32.totalorder %s178, %s180
    %p184 = scmp.eq.s32.totalorder %s18, 0
    %p185 = por %p183, %p184
    %p186 = scmp.ne.s32.totalorder %s178, %s180
    %p187 = scmp.eq.s32.totalorder %s23, 1
    %p188 = por %p186, %p187
    %p189 = scmp.ne.s32.totalorder %s180, %s181
    %p190 = scmp.eq.s32.totalorder %s23, 0
    %p191 = por %p189, %p190
    %p192 = scmp.ne.s32.totalorder %s180, %s181
    %p193 = scmp.eq.s32.totalorder %s24, 1
    %p194 = por %p192, %p193
    %p196 = scmp.ne.s32.totalorder %s181, %s195
    %p197 = scmp.eq.s32.totalorder %s24, 0
    %p198 = por %p196, %p197
    %s200 = sadd.s32 %s199, 1
    %p203 = scmp.eq.s32.totalorder %s18, 1
    %p204 = scmp.ne.s32.totalorder %s199, %s201
    %p205 = scmp.eq.s32.totalorder %s18, 0
    %p206 = por %p204, %p205
    %p207 = scmp.ne.s32.totalorder %s199, %s201
    %p208 = scmp.eq.s32.totalorder %s23, 1
    %p209 = por %p207, %p208
    %p210 = scmp.ne.s32.totalorder %s201, %s202
    %p211 = scmp.eq.s32.totalorder %s23, 0
    %p212 = por %p210, %p211
    %p213 = scmp.ne.s32.totalorder %s201, %s202
    %p214 = scmp.eq.s32.totalorder %s24, 1
    %p215 = por %p213, %p214
    %p217 = scmp.ne.s32.totalorder %s202, %s216
    %p218 = scmp.eq.s32.totalorder %s24, 0
    %p219 = por %p217, %p218
    %s221 = sadd.s32 %s220, 1
    %p224 = scmp.eq.s32.totalorder %s18, 1
    %p225 = scmp.ne.s32.totalorder %s220, %s222
    %p226 = scmp.eq.s32.totalorder %s18, 0
    %p227 = por %p225, %p226
    %p228 = scmp.ne.s32.totalorder %s220, %s222
    %p229 = scmp.eq.s32.totalorder %s23, 1
    %p230 = por %p228, %p229
    %p231 = scmp.ne.s32.totalorder %s222, %s223
    %p232 = scmp.eq.s32.totalorder %s23, 0
    %p233 = por %p231, %p232
    %p234 = scmp.ne.s32.totalorder %s222, %s223
    %p235 = scmp.eq.s32.totalorder %s24, 1
    %p236 = por %p234, %p235
    %p238 = scmp.ne.s32.totalorder %s223, %s237
    %p239 = scmp.eq.s32.totalorder %s24, 0
    %p240 = por %p238, %p239
    %s242 = sadd.s32 %s241, 1
    %p245 = scmp.eq.s32.totalorder %s18, 1
    %p246 = scmp.ne.s32.totalorder %s241, %s243
    %p247 = scmp.eq.s32.totalorder %s18, 0
    %p248 = por %p246, %p247
    %p249 = scmp.ne.s32.totalorder %s241, %s243
    %p250 = scmp.eq.s32.totalorder %s23, 1
    %p251 = por %p249, %p250
    %p252 = scmp.ne.s32.totalorder %s243, %s244
    %p253 = scmp.eq.s32.totalorder %s23, 0
    %p254 = por %p252, %p253
    %p255 = scmp.ne.s32.totalorder %s243, %s244
    %p256 = scmp.eq.s32.totalorder %s24, 1
    %p257 = por %p255, %p256
    %p259 = scmp.ne.s32.totalorder %s244, %s258
    %p260 = scmp.eq.s32.totalorder %s24, 0
    %p261 = por %p259, %p260
    %s263 = sadd.s32 %s262, 1
    %p266 = scmp.eq.s32.totalorder %s18, 1
    %p267 = scmp.ne.s32.totalorder %s262, %s264
    %p268 = scmp.eq.s32.totalorder %s18, 0
    %p269 = por %p267, %p268
    %p270 = scmp.ne.s32.totalorder %s262, %s264
    %p271 = scmp.eq.s32.totalorder %s23, 1
    %p272 = por %p270, %p271
    %p273 = scmp.ne.s32.totalorder %s264, %s265
    %p274 = scmp.eq.s32.totalorder %s23, 0
    %p275 = por %p273, %p274
    %p276 = scmp.ne.s32.totalorder %s264, %s265
    %p277 = scmp.eq.s32.totalorder %s24, 1
    %p278 = por %p276, %p277
    %p280 = scmp.ne.s32.totalorder %s265, %s279
    %p281 = scmp.eq.s32.totalorder %s24, 0
    %p282 = por %p280, %p281
    %s283 = ssub.s32 %s18, %s25
    %p284 = scmp.eq.s32.totalorder %s283, 0
    %s286 = sadd.s32 %s285, 1
    %s287 = scalar_select %p284, %s285, %s286
    %p290 = pneg %p284
    %p291 = scmp.eq.s32.totalorder %s18, 1
    %p292 = por %p290, %p291
    %p293 = scmp.ne.s32.totalorder %s285, %s288
    %p294 = scmp.eq.s32.totalorder %s18, 0
    %p295 = por %p293, %p294
    %p296 = scmp.ne.s32.totalorder %s285, %s288
    %p297 = scmp.eq.s32.totalorder %s23, 1
    %p298 = por %p296, %p297
    %p299 = scmp.ne.s32.totalorder %s288, %s289
    %p300 = scmp.eq.s32.totalorder %s23, 0
    %p301 = por %p299, %p300
    %p302 = scmp.ne.s32.totalorder %s288, %s289
    %p303 = scmp.eq.s32.totalorder %s24, 1
    %p304 = por %p302, %p303
    %p306 = scmp.ne.s32.totalorder %s289, %s305
    %p307 = scmp.eq.s32.totalorder %s24, 0
    %p308 = por %p306, %p307
    %p309 = scmp.le.s32.totalorder 1, %s18
    %p310 = scmp.lt.s32.totalorder %s18, 3
    %p311 = pnand %p309, %p310
    %p312 = pneg %p311
    // Predicated region
    $region9: #{_lambda_.7} parent=5 // pred_check
      _
    $region10: #{_lambda_.7} parent=5 // pred_check_branch
      %314 = sbr.rel (%p311) target = $region12
    $region11: #{_lambda_.7} parent=5 // pred_region
      %s315 = ssub.s32 %s18, 1
      // Predicated region
      $region13: #{_lambda_.7} parent=11 // pred_check
        %p316 = pneg %p65
      $region14: #{_lambda_.7} parent=11 // pred_check_branch
        %318 = sbr.rel (%p316) target = $region16
      $region15: #{_lambda_.7} parent=11 // pred_region
        _
      $region16: #{_lambda_.7} parent=11 // pred_fallthru
        _
      // Predicated region
      $region17: #{_lambda_.7} parent=11 // pred_check
        %p319 = pneg %p86
      $region18: #{_lambda_.7} parent=11 // pred_check_branch
        %321 = sbr.rel (%p319) target = $region20
      $region19: #{_lambda_.7} parent=11 // pred_region
        _
      $region20: #{_lambda_.7} parent=11 // pred_fallthru
        _
      // Predicated region
      $region21: #{_lambda_.7} parent=11 // pred_check
        %p322 = pneg %p107
      $region22: #{_lambda_.7} parent=11 // pred_check_branch
        %324 = sbr.rel (%p322) target = $region24
      $region23: #{_lambda_.7} parent=11 // pred_region
        _
      $region24: #{_lambda_.7} parent=11 // pred_fallthru
        _
      // Predicated region
      $region25: #{_lambda_.7} parent=11 // pred_check
        %p325 = pneg %p128
      $region26: #{_lambda_.7} parent=11 // pred_check_branch
        %327 = sbr.rel (%p325) target = $region28
      $region27: #{_lambda_.7} parent=11 // pred_region
        _
      $region28: #{_lambda_.7} parent=11 // pred_fallthru
        _
      // Predicated region
      $region29: #{_lambda_.7} parent=11 // pred_check
        %p328 = pneg %p149
      $region30: #{_lambda_.7} parent=11 // pred_check_branch
        %330 = sbr.rel (%p328) target = $region32
      $region31: #{_lambda_.7} parent=11 // pred_region
        _
      $region32: #{_lambda_.7} parent=11 // pred_fallthru
        _
      // Predicated region
      $region33: #{_lambda_.7} parent=11 // pred_check
        %p331 = pneg %p170
      $region34: #{_lambda_.7} parent=11 // pred_check_branch
        %333 = sbr.rel (%p331) target = $region36
      $region35: #{_lambda_.7} parent=11 // pred_region
        _
      $region36: #{_lambda_.7} parent=11 // pred_fallthru
        _
      // Predicated region
      $region37: #{_lambda_.7} parent=11 // pred_check
        %p334 = pneg %p191
      $region38: #{_lambda_.7} parent=11 // pred_check_branch
        %336 = sbr.rel (%p334) target = $region40
      $region39: #{_lambda_.7} parent=11 // pred_region
        _
      $region40: #{_lambda_.7} parent=11 // pred_fallthru
        _
      // Predicated region
      $region41: #{_lambda_.7} parent=11 // pred_check
        %p337 = pneg %p212
      $region42: #{_lambda_.7} parent=11 // pred_check_branch
        %339 = sbr.rel (%p337) target = $region44
      $region43: #{_lambda_.7} parent=11 // pred_region
        _
      $region44: #{_lambda_.7} parent=11 // pred_fallthru
        _
      // Predicated region
      $region45: #{_lambda_.7} parent=11 // pred_check
        %p340 = pneg %p233
      $region46: #{_lambda_.7} parent=11 // pred_check_branch
        %342 = sbr.rel (%p340) target = $region48
      $region47: #{_lambda_.7} parent=11 // pred_region
        _
      $region48: #{_lambda_.7} parent=11 // pred_fallthru
        _
      // Predicated region
      $region49: #{_lambda_.7} parent=11 // pred_check
        %p343 = pneg %p254
      $region50: #{_lambda_.7} parent=11 // pred_check_branch
        %345 = sbr.rel (%p343) target = $region52
      $region51: #{_lambda_.7} parent=11 // pred_region
        _
      $region52: #{_lambda_.7} parent=11 // pred_fallthru
        _
      // Predicated region
      $region53: #{_lambda_.7} parent=11 // pred_check
        %p346 = pneg %p275
      $region54: #{_lambda_.7} parent=11 // pred_check_branch
        %348 = sbr.rel (%p346) target = $region56
      $region55: #{_lambda_.7} parent=11 // pred_region
        _
      $region56: #{_lambda_.7} parent=11 // pred_fallthru
        _
    $region12: #{_lambda_.7} parent=5 // pred_fallthru
      _
    %p349 = scmp.lt.s32.totalorder %s18, 2
    // Predicated region
    $region57: #{_lambda_.7} parent=5 // pred_check
      %p350 = pneg %p349
    $region58: #{_lambda_.7} parent=5 // pred_check_branch
      %352 = sbr.rel (%p350) target = $region60
    $region59: #{_lambda_.7} parent=5 // pred_region
      // Predicated region
      $region61: #{_lambda_.7} parent=59 // pred_check
        %p353 = pneg %p38
      $region62: #{_lambda_.7} parent=59 // pred_check_branch
        %355 = sbr.rel (%p353) target = $region64
      $region63: #{_lambda_.7} parent=59 // pred_region
        %p356 = scmp.lt.s32.totalorder %s18, 1
        %s357 = scalar_select %p356, %s18, 1
        %s358 = smul.addr %s357, 24
        %s359 = smul.addr %s358, 4
        %s360 = scalar_lea.vmem %s0, %s359
      $region64: #{_lambda_.7} parent=59 // pred_fallthru
        _
    $region60: #{_lambda_.7} parent=5 // pred_fallthru
      _
    %p361 = scmp.le.s32.totalorder 1, %s18
    %p362 = scmp.lt.s32.totalorder %s18, 3
    %p363 = pnand %p361, %p362
    %p364 = pneg %p363
    // Predicated region
    $region65: #{_lambda_.7} parent=5 // pred_check
      _
    $region66: #{_lambda_.7} parent=5 // pred_check_branch
      %366 = sbr.rel (%p363) target = $region68
    $region67: #{_lambda_.7} parent=5 // pred_region
      %s367 = ssub.s32 %s18, 1
      %p368 = scmp.lt.s32.totalorder %s23, 1
      %s369 = scalar_select %p368, %s23, 1
      %s370 = smul.addr %s369, 24
      %s371 = smul.addr %s370, 4
      %s372 = scalar_lea.vmem %s0, %s371
      %p373 = pneg %p44
      %p374 = pneg %p41
      %p375 = pneg %p65
      %p376 = pneg %p62
      %p377 = pneg %p86
      %p378 = pneg %p83
      %p379 = pneg %p107
      %p380 = pneg %p104
      %p381 = pneg %p128
      %p382 = pneg %p125
      %p383 = pneg %p149
      %p384 = pneg %p146
      %p385 = pneg %p170
      %p386 = pneg %p167
      %p387 = pneg %p191
      %p388 = pneg %p188
      %p389 = pneg %p212
      %p390 = pneg %p209
      %p391 = pneg %p233
      %p392 = pneg %p230
      %p393 = pneg %p254
      %p394 = pneg %p251
      %p395 = pneg %p275
      %p396 = pneg %p272
      %p397 = pneg %p301
      %p398 = pneg %p298
      %p399 = scmp.lt.s32.totalorder %s23, 1
      %s400 = scalar_select %p399, %s23, 1
      %s401 = smul.addr %s400, 24
      %s402 = smul.addr %s401, 4
      %s403 = scalar_lea.vmem %s12, %s402
      %p404 = scmp.lt.s32.totalorder %s23, 1
      %s405 = scalar_select %p404, %s23, 1
      %s406 = smul.addr %s405, 24
      %s407 = smul.addr %s406, 4
      %s408 = scalar_lea.vmem %s0, %s407
      %p409 = scmp.lt.s32.totalorder %s23, 1
      %s410 = scalar_select %p409, %s23, 1
      %s411 = smul.addr %s410, 24
      %s412 = smul.addr %s411, 4
      %s413 = scalar_lea.vmem %s12, %s412
      %v415 = vld [vmem:[%s408] sm:$0xff]
      %v416 = vld [vmem:[%s408 + $0x8] sm:$0xf]
      %v417 = vld [vmem:[%s408 + $0xc] sm:$0xff]
      %v418 = vld [vmem:[%s408 + $0x14] sm:$0xf]
      %v419 = vld [vmem:[%s408 + $0x18] sm:$0xff]
      %v420 = vld [vmem:[%s408 + $0x20] sm:$0xf]
      %v421 = vld [vmem:[%s408 + $0x24] sm:$0xff]
      %v422 = vld [vmem:[%s408 + $0x2c] sm:$0xf]
      %v423 = vld [vmem:[%s408 + $0x30] sm:$0xff]
      %v424 = vld [vmem:[%s408 + $0x38] sm:$0xf]
      %v425 = vld [vmem:[%s408 + $0x3c] sm:$0xff]
      %v426 = vld [vmem:[%s408 + $0x44] sm:$0xf]
      %v427 = vld [vmem:[%s408 + $0x48] sm:$0xff]
      %v428 = vld [vmem:[%s408 + $0x50] sm:$0xf]
      %v429 = vld [vmem:[%s408 + $0x54] sm:$0xff]
      %v430 = vld [vmem:[%s408 + $0x5c] sm:$0xf]
      %v431 = vunpack.c.l.bf16 %v415
      %v432 = vunpack.c.h.bf16 %v415
      %v433 = vunpack.c.l.bf16 %v416
      %v434 = vunpack.c.l.bf16 %v417
      %v435 = vunpack.c.h.bf16 %v417
      %v436 = vunpack.c.l.bf16 %v418
      %v437 = vunpack.c.l.bf16 %v419
      %v438 = vunpack.c.h.bf16 %v419
      %v439 = vunpack.c.l.bf16 %v420
      %v440 = vunpack.c.l.bf16 %v421
      %v441 = vunpack.c.h.bf16 %v421
      %v442 = vunpack.c.l.bf16 %v422
      %v443 = vunpack.c.l.bf16 %v423
      %v444 = vunpack.c.h.bf16 %v423
      %v445 = vunpack.c.l.bf16 %v424
      %v446 = vunpack.c.l.bf16 %v425
      %v447 = vunpack.c.h.bf16 %v425
      %v448 = vunpack.c.l.bf16 %v426
      %v449 = vunpack.c.l.bf16 %v427
      %v450 = vunpack.c.h.bf16 %v427
      %v451 = vunpack.c.l.bf16 %v428
      %v452 = vunpack.c.l.bf16 %v429
      %v453 = vunpack.c.h.bf16 %v429
      %v454 = vunpack.c.l.bf16 %v430
      %v455 = vld [vmem:[%s1] sm:$0x7]
      %v456 = vld [vmem:[%s2] sm:$0x7]
      %v457 = vadd.f32 %v431, %v432
      %v458 = vadd.f32 %v457, %v433
      %459 = vadd.xlane.f32.xlu0 %v458
      %v460 = vpop.xlane.xlu0 %459
      %v461 = vadd.f32 %v434, %v435
      %v462 = vadd.f32 %v461, %v436
      %463 = vadd.xlane.f32.xlu0 %v462
      %v464 = vpop.xlane.xlu0 %463
      %v465 = vadd.f32 %v437, %v438
      %v466 = vadd.f32 %v465, %v439
      %467 = vadd.xlane.f32.xlu0 %v466
      %v468 = vpop.xlane.xlu0 %467
      %v469 = vadd.f32 %v440, %v441
      %v470 = vadd.f32 %v469, %v442
      %471 = vadd.xlane.f32.xlu0 %v470
      %v472 = vpop.xlane.xlu0 %471
      %v473 = vadd.f32 %v443, %v444
      %v474 = vadd.f32 %v473, %v445
      %475 = vadd.xlane.f32.xlu0 %v474
      %v476 = vpop.xlane.xlu0 %475
      %v477 = vadd.f32 %v446, %v447
      %v478 = vadd.f32 %v477, %v448
      %479 = vadd.xlane.f32.xlu0 %v478
      %v480 = vpop.xlane.xlu0 %479
      %v481 = vadd.f32 %v449, %v450
      %v482 = vadd.f32 %v481, %v451
      %483 = vadd.xlane.f32.xlu0 %v482
      %v484 = vpop.xlane.xlu0 %483
      %v485 = vadd.f32 %v452, %v453
      %v486 = vadd.f32 %v485, %v454
      %487 = vadd.xlane.f32.xlu0 %v486
      %v488 = vpop.xlane.xlu0 %487
      %v489 = vrcp.pop 384.0
      %v490 = vmul.f32 %v460, %v489
      %v491 = vmul.f32 %v464, %v489
      %v492 = vmul.f32 %v468, %v489
      %v493 = vmul.f32 %v472, %v489
      %v494 = vmul.f32 %v476, %v489
      %v495 = vmul.f32 %v480, %v489
      %v496 = vmul.f32 %v484, %v489
      %v497 = vmul.f32 %v488, %v489
      %v498 = vsub.f32 %v431, %v490
      %v499 = vsub.f32 %v432, %v490
      %v500 = vsub.f32 %v433, %v490
      %v501 = vsub.f32 %v434, %v491
      %v502 = vsub.f32 %v435, %v491
      %v503 = vsub.f32 %v436, %v491
      %v504 = vsub.f32 %v437, %v492
      %v505 = vsub.f32 %v438, %v492
      %v506 = vsub.f32 %v439, %v492
      %v507 = vsub.f32 %v440, %v493
      %v508 = vsub.f32 %v441, %v493
      %v509 = vsub.f32 %v442, %v493
      %v510 = vsub.f32 %v443, %v494
      %v511 = vsub.f32 %v444, %v494
      %v512 = vsub.f32 %v445, %v494
      %v513 = vsub.f32 %v446, %v495
      %v514 = vsub.f32 %v447, %v495
      %v515 = vsub.f32 %v448, %v495
      %v516 = vsub.f32 %v449, %v496
      %v517 = vsub.f32 %v450, %v496
      %v518 = vsub.f32 %v451, %v496
      %v519 = vsub.f32 %v452, %v497
      %v520 = vsub.f32 %v453, %v497
      %v521 = vsub.f32 %v454, %v497
      %v522 = vmul.f32 %v498, %v498
      %v523 = vmul.f32 %v499, %v499
      %v524 = vmul.f32 %v500, %v500
      %v525 = vmul.f32 %v501, %v501
      %v526 = vmul.f32 %v502, %v502
      %v527 = vmul.f32 %v503, %v503
      %v528 = vmul.f32 %v504, %v504
      %v529 = vmul.f32 %v505, %v505
      %v530 = vmul.f32 %v506, %v506
      %v531 = vmul.f32 %v507, %v507
      %v532 = vmul.f32 %v508, %v508
      %v533 = vmul.f32 %v509, %v509
      %v534 = vmul.f32 %v510, %v510
      %v535 = vmul.f32 %v511, %v511
      %v536 = vmul.f32 %v512, %v512
      %v537 = vmul.f32 %v513, %v513
      %v538 = vmul.f32 %v514, %v514
      %v539 = vmul.f32 %v515, %v515
      %v540 = vmul.f32 %v516, %v516
      %v541 = vmul.f32 %v517, %v517
      %v542 = vmul.f32 %v518, %v518
      %v543 = vmul.f32 %v519, %v519
      %v544 = vmul.f32 %v520, %v520
      %v545 = vmul.f32 %v521, %v521
      %v546 = vadd.f32 %v522, %v523
      %v547 = vadd.f32 %v546, %v524
      %548 = vadd.xlane.f32.xlu0 %v547
      %v549 = vpop.xlane.xlu0 %548
      %v550 = vadd.f32 %v525, %v526
      %v551 = vadd.f32 %v550, %v527
      %552 = vadd.xlane.f32.xlu0 %v551
      %v553 = vpop.xlane.xlu0 %552
      %v554 = vadd.f32 %v528, %v529
      %v555 = vadd.f32 %v554, %v530
      %556 = vadd.xlane.f32.xlu0 %v555
      %v557 = vpop.xlane.xlu0 %556
      %v558 = vadd.f32 %v531, %v532
      %v559 = vadd.f32 %v558, %v533
      %560 = vadd.xlane.f32.xlu0 %v559
      %v561 = vpop.xlane.xlu0 %560
      %v562 = vadd.f32 %v534, %v535
      %v563 = vadd.f32 %v562, %v536
      %564 = vadd.xlane.f32.xlu0 %v563
      %v565 = vpop.xlane.xlu0 %564
      %v566 = vadd.f32 %v537, %v538
      %v567 = vadd.f32 %v566, %v539
      %568 = vadd.xlane.f32.xlu0 %v567
      %v569 = vpop.xlane.xlu0 %568
      %v570 = vadd.f32 %v540, %v541
      %v571 = vadd.f32 %v570, %v542
      %572 = vadd.xlane.f32.xlu0 %v571
      %v573 = vpop.xlane.xlu0 %572
      %v574 = vadd.f32 %v543, %v544
      %v575 = vadd.f32 %v574, %v545
      %576 = vadd.xlane.f32.xlu0 %v575
      %v577 = vpop.xlane.xlu0 %576
      %v578 = vmul.f32 %v549, %v489
      %v579 = vmul.f32 %v553, %v489
      %v580 = vmul.f32 %v557, %v489
      %v581 = vmul.f32 %v561, %v489
      %v582 = vmul.f32 %v565, %v489
      %v583 = vmul.f32 %v569, %v489
      %v584 = vmul.f32 %v573, %v489
      %v585 = vmul.f32 %v577, %v489
      %v586 = vadd.f32 %v578, 1e-05
      %v587 = vadd.f32 %v579, 1e-05
      %v588 = vadd.f32 %v580, 1e-05
      %v589 = vadd.f32 %v581, 1e-05
      %v590 = vadd.f32 %v582, 1e-05
      %v591 = vadd.f32 %v583, 1e-05
      %v592 = vadd.f32 %v584, 1e-05
      %v593 = vadd.f32 %v585, 1e-05
      %v594 = vrsqrt.pop %v586
      %v595 = vrsqrt.pop %v587
      %v596 = vrsqrt.pop %v588
      %v597 = vrsqrt.pop %v589
      %v598 = vrsqrt.pop %v590
      %v599 = vrsqrt.pop %v591
      %v600 = vrsqrt.pop %v592
      %v601 = vrsqrt.pop %v593
      %v602 = vmul.f32 %v498, %v594
      %v603 = vmul.f32 %v499, %v594
      %v604 = vmul.f32 %v500, %v594
      %v605 = vmul.f32 %v501, %v595
      %v606 = vmul.f32 %v502, %v595
      %v607 = vmul.f32 %v503, %v595
      %v608 = vmul.f32 %v504, %v596
      %v609 = vmul.f32 %v505, %v596
      %v610 = vmul.f32 %v506, %v596
      %v611 = vmul.f32 %v507, %v597
      %v612 = vmul.f32 %v508, %v597
      %v613 = vmul.f32 %v509, %v597
      %v614 = vmul.f32 %v510, %v598
      %v615 = vmul.f32 %v511, %v598
      %v616 = vmul.f32 %v512, %v598
      %v617 = vmul.f32 %v513, %v599
      %v618 = vmul.f32 %v514, %v599
      %v619 = vmul.f32 %v515, %v599
      %v620 = vmul.f32 %v516, %v600
      %v621 = vmul.f32 %v517, %v600
      %v622 = vmul.f32 %v518, %v600
      %v623 = vmul.f32 %v519, %v601
      %v624 = vmul.f32 %v520, %v601
      %v625 = vmul.f32 %v521, %v601
      %v627 = vlaneseq
      %v628 = vshrl.u32 %v627, 7
      %v629 = vsub.s32 0, %v628
      %v630 = vrot.slane %v455, %v629
      %v631 = vlaneseq
      %v632 = vshrl.u32 %v631, 7
      %v633 = vsub.s32 1, %v632
      %v634 = vrot.slane %v455, %v633
      %v635 = vlaneseq
      %v636 = vshrl.u32 %v635, 7
      %v637 = vsub.s32 2, %v636
      %v638 = vrot.slane %v455, %v637
      %v642 = vmul.f32 %v602, %v630
      %v643 = vmul.f32 %v603, %v634
      %v644 = vmul.f32 %v604, %v638
      %v645 = vmul.f32 %v605, %v630
      %v646 = vmul.f32 %v606, %v634
      %v647 = vmul.f32 %v607, %v638
      %v648 = vmul.f32 %v608, %v630
      %v649 = vmul.f32 %v609, %v634
      %v650 = vmul.f32 %v610, %v638
      %v651 = vmul.f32 %v611, %v630
      %v652 = vmul.f32 %v612, %v634
      %v653 = vmul.f32 %v613, %v638
      %v654 = vmul.f32 %v614, %v630
      %v655 = vmul.f32 %v615, %v634
      %v656 = vmul.f32 %v616, %v638
      %v657 = vmul.f32 %v617, %v630
      %v658 = vmul.f32 %v618, %v634
      %v659 = vmul.f32 %v619, %v638
      %v660 = vmul.f32 %v620, %v630
      %v661 = vmul.f32 %v621, %v634
      %v662 = vmul.f32 %v622, %v638
      %v663 = vmul.f32 %v623, %v630
      %v664 = vmul.f32 %v624, %v634
      %v665 = vmul.f32 %v625, %v638
      %v667 = vlaneseq
      %v668 = vshrl.u32 %v667, 7
      %v669 = vsub.s32 0, %v668
      %v670 = vrot.slane %v456, %v669
      %v671 = vlaneseq
      %v672 = vshrl.u32 %v671, 7
      %v673 = vsub.s32 1, %v672
      %v674 = vrot.slane %v456, %v673
      %v675 = vlaneseq
      %v676 = vshrl.u32 %v675, 7
      %v677 = vsub.s32 2, %v676
      %v678 = vrot.slane %v456, %v677
      %v682 = vadd.f32 %v642, %v670
      %v683 = vadd.f32 %v643, %v674
      %v684 = vadd.f32 %v644, %v678
      %v685 = vadd.f32 %v645, %v670
      %v686 = vadd.f32 %v646, %v674
      %v687 = vadd.f32 %v647, %v678
      %v688 = vadd.f32 %v648, %v670
      %v689 = vadd.f32 %v649, %v674
      %v690 = vadd.f32 %v650, %v678
      %v691 = vadd.f32 %v651, %v670
      %v692 = vadd.f32 %v652, %v674
      %v693 = vadd.f32 %v653, %v678
      %v694 = vadd.f32 %v654, %v670
      %v695 = vadd.f32 %v655, %v674
      %v696 = vadd.f32 %v656, %v678
      %v697 = vadd.f32 %v657, %v670
      %v698 = vadd.f32 %v658, %v674
      %v699 = vadd.f32 %v659, %v678
      %v700 = vadd.f32 %v660, %v670
      %v701 = vadd.f32 %v661, %v674
      %v702 = vadd.f32 %v662, %v678
      %v703 = vadd.f32 %v663, %v670
      %v704 = vadd.f32 %v664, %v674
      %v705 = vadd.f32 %v665, %v678
      %v706 = vpack.c.bf16 %v685, %v682
      %v707 = vpack.c.bf16 %v686, %v683
      %v708 = vpack.c.bf16 %v687, %v684
      %v709 = vpack.c.bf16 %v691, %v688
      %v710 = vpack.c.bf16 %v692, %v689
      %v711 = vpack.c.bf16 %v693, %v690
      %v712 = vpack.c.bf16 %v697, %v694
      %v713 = vpack.c.bf16 %v698, %v695
      %v714 = vpack.c.bf16 %v699, %v696
      %v715 = vpack.c.bf16 %v703, %v700
      %v716 = vpack.c.bf16 %v704, %v701
      %v717 = vpack.c.bf16 %v705, %v702
      %v718 = vld [vmem:[%s3] sm:$0xff]
      %v719 = vld [vmem:[%s3 + $0x8] sm:$0xff]
      %v720 = vld [vmem:[%s3 + $0x10] sm:$0xff]
      %v721 = vld [vmem:[%s3 + $0x18] sm:$0xff]
      %v722 = vld [vmem:[%s3 + $0x20] sm:$0xf]
      %v723 = vld [vmem:[%s3 + $0x24] sm:$0xff]
      %v724 = vld [vmem:[%s3 + $0x2c] sm:$0xff]
      %v725 = vld [vmem:[%s3 + $0x34] sm:$0xff]
      %v726 = vld [vmem:[%s3 + $0x3c] sm:$0xff]
      %v727 = vld [vmem:[%s3 + $0x44] sm:$0xf]
      %v728 = vld [vmem:[%s3 + $0x48] sm:$0xff]
      %v729 = vld [vmem:[%s3 + $0x50] sm:$0xff]
      %v730 = vld [vmem:[%s3 + $0x58] sm:$0xff]
      %v731 = vld [vmem:[%s3 + $0x60] sm:$0xff]
      %v732 = vld [vmem:[%s3 + $0x68] sm:$0xf]
      %v733 = vld [vmem:[%s3 + $0x6c] sm:$0xff]
      %v734 = vld [vmem:[%s3 + $0x74] sm:$0xff]
      %v735 = vld [vmem:[%s3 + $0x7c] sm:$0xff]
      %v736 = vld [vmem:[%s3 + $0x84] sm:$0xff]
      %v737 = vld [vmem:[%s3 + $0x8c] sm:$0xf]
      %v738 = vld [vmem:[%s3 + $0x90] sm:$0xff]
      %v739 = vld [vmem:[%s3 + $0x98] sm:$0xff]
      %v740 = vld [vmem:[%s3 + $0xa0] sm:$0xff]
      %v741 = vld [vmem:[%s3 + $0xa8] sm:$0xff]
      %v742 = vld [vmem:[%s3 + $0xb0] sm:$0xf]
      %v743 = vld [vmem:[%s3 + $0xb4] sm:$0xff]
      %v744 = vld [vmem:[%s3 + $0xbc] sm:$0xff]
      %v745 = vld [vmem:[%s3 + $0xc4] sm:$0xff]
      %v746 = vld [vmem:[%s3 + $0xcc] sm:$0xff]
      %v747 = vld [vmem:[%s3 + $0xd4] sm:$0xf]
      %v748 = vld [vmem:[%s3 + $0xd8] sm:$0xff]
      %v749 = vld [vmem:[%s3 + $0xe0] sm:$0xff]
      %v750 = vld [vmem:[%s3 + $0xe8] sm:$0xff]
      %v751 = vld [vmem:[%s3 + $0xf0] sm:$0xff]
      %v752 = vld [vmem:[%s3 + $0xf8] sm:$0xf]
      %v753 = vld [vmem:[%s3 + $0xfc] sm:$0xff]
      %v754 = vld [vmem:[%s3 + $0x104] sm:$0xff]
      %v755 = vld [vmem:[%s3 + $0x10c] sm:$0xff]
      %v756 = vld [vmem:[%s3 + $0x114] sm:$0xff]
      %v757 = vld [vmem:[%s3 + $0x11c] sm:$0xf]
      %v758 = vld [vmem:[%s3 + $0x120] sm:$0xff]
      %v759 = vld [vmem:[%s3 + $0x128] sm:$0xff]
      %v760 = vld [vmem:[%s3 + $0x130] sm:$0xff]
      %v761 = vld [vmem:[%s3 + $0x138] sm:$0xff]
      %v762 = vld [vmem:[%s3 + $0x140] sm:$0xf]
      %v763 = vld [vmem:[%s3 + $0x144] sm:$0xff]
      %v764 = vld [vmem:[%s3 + $0x14c] sm:$0xff]
      %v765 = vld [vmem:[%s3 + $0x154] sm:$0xff]
      %v766 = vld [vmem:[%s3 + $0x15c] sm:$0xff]
      %v767 = vld [vmem:[%s3 + $0x164] sm:$0xf]
      %v768 = vld [vmem:[%s3 + $0x168] sm:$0xff]
      %v769 = vld [vmem:[%s3 + $0x170] sm:$0xff]
      %v770 = vld [vmem:[%s3 + $0x178] sm:$0xff]
      %v771 = vld [vmem:[%s3 + $0x180] sm:$0xff]
      %v772 = vld [vmem:[%s3 + $0x188] sm:$0xf]
      %v773 = vld [vmem:[%s3 + $0x18c] sm:$0xff]
      %v774 = vld [vmem:[%s3 + $0x194] sm:$0xff]
      %v775 = vld [vmem:[%s3 + $0x19c] sm:$0xff]
      %v776 = vld [vmem:[%s3 + $0x1a4] sm:$0xff]
      %v777 = vld [vmem:[%s3 + $0x1ac] sm:$0xf]
      %v778 = vld [vmem:[%s3 + $0x1b0] sm:$0xff]
      %v779 = vld [vmem:[%s3 + $0x1b8] sm:$0xff]
      %v780 = vld [vmem:[%s3 + $0x1c0] sm:$0xff]
      %v781 = vld [vmem:[%s3 + $0x1c8] sm:$0xff]
      %v782 = vld [vmem:[%s3 + $0x1d0] sm:$0xf]
      %v783 = vld [vmem:[%s3 + $0x1d4] sm:$0xff]
      %v784 = vld [vmem:[%s3 + $0x1dc] sm:$0xff]
      %v785 = vld [vmem:[%s3 + $0x1e4] sm:$0xff]
      %v786 = vld [vmem:[%s3 + $0x1ec] sm:$0xff]
      %v787 = vld [vmem:[%s3 + $0x1f4] sm:$0xf]
      %v788 = vld [vmem:[%s3 + $0x1f8] sm:$0xff]
      %v789 = vld [vmem:[%s3 + $0x200] sm:$0xff]
      %v790 = vld [vmem:[%s3 + $0x208] sm:$0xff]
      %v791 = vld [vmem:[%s3 + $0x210] sm:$0xff]
      %v792 = vld [vmem:[%s3 + $0x218] sm:$0xf]
      %v793 = vld [vmem:[%s3 + $0x21c] sm:$0xff]
      %v794 = vld [vmem:[%s3 + $0x224] sm:$0xff]
      %v795 = vld [vmem:[%s3 + $0x22c] sm:$0xff]
      %v796 = vld [vmem:[%s3 + $0x234] sm:$0xff]
      %v797 = vld [vmem:[%s3 + $0x23c] sm:$0xf]
      %v798 = vld [vmem:[%s3 + $0x240] sm:$0xff]
      %v799 = vld [vmem:[%s3 + $0x248] sm:$0xff]
      %v800 = vld [vmem:[%s3 + $0x250] sm:$0xff]
      %v801 = vld [vmem:[%s3 + $0x258] sm:$0xff]
      %v802 = vld [vmem:[%s3 + $0x260] sm:$0xf]
      %v803 = vld [vmem:[%s3 + $0x264] sm:$0xff]
      %v804 = vld [vmem:[%s3 + $0x26c] sm:$0xff]
      %v805 = vld [vmem:[%s3 + $0x274] sm:$0xff]
      %v806 = vld [vmem:[%s3 + $0x27c] sm:$0xff]
      %v807 = vld [vmem:[%s3 + $0x284] sm:$0xf]
      %v808 = vld [vmem:[%s3 + $0x288] sm:$0xff]
      %v809 = vld [vmem:[%s3 + $0x290] sm:$0xff]
      %v810 = vld [vmem:[%s3 + $0x298] sm:$0xff]
      %v811 = vld [vmem:[%s3 + $0x2a0] sm:$0xff]
      %v812 = vld [vmem:[%s3 + $0x2a8] sm:$0xf]
      %v813 = vld [vmem:[%s3 + $0x2ac] sm:$0xff]
      %v814 = vld [vmem:[%s3 + $0x2b4] sm:$0xff]
      %v815 = vld [vmem:[%s3 + $0x2bc] sm:$0xff]
      %v816 = vld [vmem:[%s3 + $0x2c4] sm:$0xff]
      %v817 = vld [vmem:[%s3 + $0x2cc] sm:$0xf]
      %v818 = vld [vmem:[%s3 + $0x2d0] sm:$0xff]
      %v819 = vld [vmem:[%s3 + $0x2d8] sm:$0xff]
      %v820 = vld [vmem:[%s3 + $0x2e0] sm:$0xff]
      %v821 = vld [vmem:[%s3 + $0x2e8] sm:$0xff]
      %v822 = vld [vmem:[%s3 + $0x2f0] sm:$0xf]
      %v823 = vld [vmem:[%s3 + $0x2f4] sm:$0xff]
      %v824 = vld [vmem:[%s3 + $0x2fc] sm:$0xff]
      %v825 = vld [vmem:[%s3 + $0x304] sm:$0xff]
      %v826 = vld [vmem:[%s3 + $0x30c] sm:$0xff]
      %v827 = vld [vmem:[%s3 + $0x314] sm:$0xf]
      %v828 = vld [vmem:[%s3 + $0x318] sm:$0xff]
      %v829 = vld [vmem:[%s3 + $0x320] sm:$0xff]
      %v830 = vld [vmem:[%s3 + $0x328] sm:$0xff]
      %v831 = vld [vmem:[%s3 + $0x330] sm:$0xff]
      %v832 = vld [vmem:[%s3 + $0x338] sm:$0xf]
      %v833 = vld [vmem:[%s3 + $0x33c] sm:$0xff]
      %v834 = vld [vmem:[%s3 + $0x344] sm:$0xff]
      %v835 = vld [vmem:[%s3 + $0x34c] sm:$0xff]
      %v836 = vld [vmem:[%s3 + $0x354] sm:$0xff]
      %v837 = vld [vmem:[%s3 + $0x35c] sm:$0xf]
      %v838 = vld [vmem:[%s3 + $0x360] sm:$0xff]
      %v839 = vld [vmem:[%s3 + $0x368] sm:$0xff]
      %v840 = vld [vmem:[%s3 + $0x370] sm:$0xff]
      %v841 = vld [vmem:[%s3 + $0x378] sm:$0xff]
      %v842 = vld [vmem:[%s3 + $0x380] sm:$0xf]
      %v843 = vld [vmem:[%s3 + $0x384] sm:$0xff]
      %v844 = vld [vmem:[%s3 + $0x38c] sm:$0xff]
      %v845 = vld [vmem:[%s3 + $0x394] sm:$0xff]
      %v846 = vld [vmem:[%s3 + $0x39c] sm:$0xff]
      %v847 = vld [vmem:[%s3 + $0x3a4] sm:$0xf]
      %v848 = vld [vmem:[%s3 + $0x3a8] sm:$0xff]
      %v849 = vld [vmem:[%s3 + $0x3b0] sm:$0xff]
      %v850 = vld [vmem:[%s3 + $0x3b8] sm:$0xff]
      %v851 = vld [vmem:[%s3 + $0x3c0] sm:$0xff]
      %v852 = vld [vmem:[%s3 + $0x3c8] sm:$0xf]
      %v853 = vld [vmem:[%s3 + $0x3cc] sm:$0xff]
      %v854 = vld [vmem:[%s3 + $0x3d4] sm:$0xff]
      %v855 = vld [vmem:[%s3 + $0x3dc] sm:$0xff]
      %v856 = vld [vmem:[%s3 + $0x3e4] sm:$0xff]
      %v857 = vld [vmem:[%s3 + $0x3ec] sm:$0xf]
      %v858 = vld [vmem:[%s3 + $0x3f0] sm:$0xff]
      %v859 = vld [vmem:[%s3 + $0x3f8] sm:$0xff]
      %v860 = vld [vmem:[%s3 + $0x400] sm:$0xff]
      %v861 = vld [vmem:[%s3 + $0x408] sm:$0xff]
      %v862 = vld [vmem:[%s3 + $0x410] sm:$0xf]
      %v863 = vld [vmem:[%s3 + $0x414] sm:$0xff]
      %v864 = vld [vmem:[%s3 + $0x41c] sm:$0xff]
      %v865 = vld [vmem:[%s3 + $0x424] sm:$0xff]
      %v866 = vld [vmem:[%s3 + $0x42c] sm:$0xff]
      %v867 = vld [vmem:[%s3 + $0x434] sm:$0xf]
      %v868 = vld [vmem:[%s3 + $0x438] sm:$0xff]
      %v869 = vld [vmem:[%s3 + $0x440] sm:$0xff]
      %v870 = vld [vmem:[%s3 + $0x448] sm:$0xff]
      %v871 = vld [vmem:[%s3 + $0x450] sm:$0xff]
      %v872 = vld [vmem:[%s3 + $0x458] sm:$0xf]
      %v873 = vld [vmem:[%s3 + $0x45c] sm:$0xff]
      %v874 = vld [vmem:[%s3 + $0x464] sm:$0xff]
      %v875 = vld [vmem:[%s3 + $0x46c] sm:$0xff]
      %v876 = vld [vmem:[%s3 + $0x474] sm:$0xff]
      %v877 = vld [vmem:[%s3 + $0x47c] sm:$0xf]
      %v878 = vld [vmem:[%s3 + $0x480] sm:$0xff]
      %v879 = vld [vmem:[%s3 + $0x488] sm:$0xff]
      %v880 = vld [vmem:[%s3 + $0x490] sm:$0xff]
      %v881 = vld [vmem:[%s3 + $0x498] sm:$0xff]
      %v882 = vld [vmem:[%s3 + $0x4a0] sm:$0xf]
      %v883 = vld [vmem:[%s3 + $0x4a4] sm:$0xff]
      %v884 = vld [vmem:[%s3 + $0x4ac] sm:$0xff]
      %v885 = vld [vmem:[%s3 + $0x4b4] sm:$0xff]
      %v886 = vld [vmem:[%s3 + $0x4bc] sm:$0xff]
      %v887 = vld [vmem:[%s3 + $0x4c4] sm:$0xf]
      %v888 = vld [vmem:[%s3 + $0x4c8] sm:$0xff]
      %v889 = vld [vmem:[%s3 + $0x4d0] sm:$0xff]
      %v890 = vld [vmem:[%s3 + $0x4d8] sm:$0xff]
      %v891 = vld [vmem:[%s3 + $0x4e0] sm:$0xff]
      %v892 = vld [vmem:[%s3 + $0x4e8] sm:$0xf]
      %v893 = vld [vmem:[%s3 + $0x4ec] sm:$0xff]
      %v894 = vld [vmem:[%s3 + $0x4f4] sm:$0xff]
      %v895 = vld [vmem:[%s3 + $0x4fc] sm:$0xff]
      %v896 = vld [vmem:[%s3 + $0x504] sm:$0xff]
      %v897 = vld [vmem:[%s3 + $0x50c] sm:$0xf]
      %v898 = vld [vmem:[%s3 + $0x510] sm:$0xff]
      %v899 = vld [vmem:[%s3 + $0x518] sm:$0xff]
      %v900 = vld [vmem:[%s3 + $0x520] sm:$0xff]
      %v901 = vld [vmem:[%s3 + $0x528] sm:$0xff]
      %v902 = vld [vmem:[%s3 + $0x530] sm:$0xf]
      %v903 = vld [vmem:[%s3 + $0x534] sm:$0xff]
      %v904 = vld [vmem:[%s3 + $0x53c] sm:$0xff]
      %v905 = vld [vmem:[%s3 + $0x544] sm:$0xff]
      %v906 = vld [vmem:[%s3 + $0x54c] sm:$0xff]
      %v907 = vld [vmem:[%s3 + $0x554] sm:$0xf]
      %v908 = vld [vmem:[%s3 + $0x558] sm:$0xff]
      %v909 = vld [vmem:[%s3 + $0x560] sm:$0xff]
      %v910 = vld [vmem:[%s3 + $0x568] sm:$0xff]
      %v911 = vld [vmem:[%s3 + $0x570] sm:$0xff]
      %v912 = vld [vmem:[%s3 + $0x578] sm:$0xf]
      %v913 = vld [vmem:[%s3 + $0x57c] sm:$0xff]
      %v914 = vld [vmem:[%s3 + $0x584] sm:$0xff]
      %v915 = vld [vmem:[%s3 + $0x58c] sm:$0xff]
      %v916 = vld [vmem:[%s3 + $0x594] sm:$0xff]
      %v917 = vld [vmem:[%s3 + $0x59c] sm:$0xf]
      %v918 = vld [vmem:[%s3 + $0x5a0] sm:$0xff]
      %v919 = vld [vmem:[%s3 + $0x5a8] sm:$0xff]
      %v920 = vld [vmem:[%s3 + $0x5b0] sm:$0xff]
      %v921 = vld [vmem:[%s3 + $0x5b8] sm:$0xff]
      %v922 = vld [vmem:[%s3 + $0x5c0] sm:$0xf]
      %v923 = vld [vmem:[%s3 + $0x5c4] sm:$0xff]
      %v924 = vld [vmem:[%s3 + $0x5cc] sm:$0xff]
      %v925 = vld [vmem:[%s3 + $0x5d4] sm:$0xff]
      %v926 = vld [vmem:[%s3 + $0x5dc] sm:$0xff]
      %v927 = vld [vmem:[%s3 + $0x5e4] sm:$0xf]
      %v928 = vld [vmem:[%s3 + $0x5e8] sm:$0xff]
      %v929 = vld [vmem:[%s3 + $0x5f0] sm:$0xff]
      %v930 = vld [vmem:[%s3 + $0x5f8] sm:$0xff]
      %v931 = vld [vmem:[%s3 + $0x600] sm:$0xff]
      %v932 = vld [vmem:[%s3 + $0x608] sm:$0xf]
      %v933 = vld [vmem:[%s3 + $0x60c] sm:$0xff]
      %v934 = vld [vmem:[%s3 + $0x614] sm:$0xff]
      %v935 = vld [vmem:[%s3 + $0x61c] sm:$0xff]
      %v936 = vld [vmem:[%s3 + $0x624] sm:$0xff]
      %v937 = vld [vmem:[%s3 + $0x62c] sm:$0xf]
      %v938 = vld [vmem:[%s3 + $0x630] sm:$0xff]
      %v939 = vld [vmem:[%s3 + $0x638] sm:$0xff]
      %v940 = vld [vmem:[%s3 + $0x640] sm:$0xff]
      %v941 = vld [vmem:[%s3 + $0x648] sm:$0xff]
      %v942 = vld [vmem:[%s3 + $0x650] sm:$0xf]
      %v943 = vld [vmem:[%s3 + $0x654] sm:$0xff]
      %v944 = vld [vmem:[%s3 + $0x65c] sm:$0xff]
      %v945 = vld [vmem:[%s3 + $0x664] sm:$0xff]
      %v946 = vld [vmem:[%s3 + $0x66c] sm:$0xff]
      %v947 = vld [vmem:[%s3 + $0x674] sm:$0xf]
      %v948 = vld [vmem:[%s3 + $0x678] sm:$0xff]
      %v949 = vld [vmem:[%s3 + $0x680] sm:$0xff]
      %v950 = vld [vmem:[%s3 + $0x688] sm:$0xff]
      %v951 = vld [vmem:[%s3 + $0x690] sm:$0xff]
      %v952 = vld [vmem:[%s3 + $0x698] sm:$0xf]
      %v953 = vld [vmem:[%s3 + $0x69c] sm:$0xff]
      %v954 = vld [vmem:[%s3 + $0x6a4] sm:$0xff]
      %v955 = vld [vmem:[%s3 + $0x6ac] sm:$0xff]
      %v956 = vld [vmem:[%s3 + $0x6b4] sm:$0xff]
      %v957 = vld [vmem:[%s3 + $0x6bc] sm:$0xf]
      %v1198 = vunpack.c.l.b16 %v718
      %v1199 = vunpack.c.h.b16 %v718
      %v1200 = vunpack.c.l.b16 %v719
      %v1201 = vunpack.c.h.b16 %v719
      %v1202 = vunpack.c.l.b16 %v720
      %v1203 = vunpack.c.h.b16 %v720
      %v1204 = vunpack.c.l.b16 %v721
      %v1205 = vunpack.c.h.b16 %v721
      %v1206 = vunpack.c.l.b16 %v722
      %v1207 = vunpack.c.l.b16 %v723
      %v1208 = vunpack.c.h.b16 %v723
      %v1209 = vunpack.c.l.b16 %v724
      %v1210 = vunpack.c.h.b16 %v724
      %v1211 = vunpack.c.l.b16 %v725
      %v1212 = vunpack.c.h.b16 %v725
      %v1213 = vunpack.c.l.b16 %v726
      %v1214 = vunpack.c.h.b16 %v726
      %v1215 = vunpack.c.l.b16 %v727
      %v1216 = vunpack.c.l.b16 %v728
      %v1217 = vunpack.c.h.b16 %v728
      %v1218 = vunpack.c.l.b16 %v729
      %v1219 = vunpack.c.h.b16 %v729
      %v1220 = vunpack.c.l.b16 %v730
      %v1221 = vunpack.c.h.b16 %v730
      %v1222 = vunpack.c.l.b16 %v731
      %v1223 = vunpack.c.h.b16 %v731
      %v1224 = vunpack.c.l.b16 %v732
      %v1225 = vunpack.c.l.b16 %v733
      %v1226 = vunpack.c.h.b16 %v733
      %v1227 = vunpack.c.l.b16 %v734
      %v1228 = vunpack.c.h.b16 %v734
      %v1229 = vunpack.c.l.b16 %v735
      %v1230 = vunpack.c.h.b16 %v735
      %v1231 = vunpack.c.l.b16 %v736
      %v1232 = vunpack.c.h.b16 %v736
      %v1233 = vunpack.c.l.b16 %v737
      %v1234 = vunpack.c.l.b16 %v738
      %v1235 = vunpack.c.h.b16 %v738
      %v1236 = vunpack.c.l.b16 %v739
      %v1237 = vunpack.c.h.b16 %v739
      %v1238 = vunpack.c.l.b16 %v740
      %v1239 = vunpack.c.h.b16 %v740
      %v1240 = vunpack.c.l.b16 %v741
      %v1241 = vunpack.c.h.b16 %v741
      %v1242 = vunpack.c.l.b16 %v742
      %v1243 = vunpack.c.l.b16 %v743
      %v1244 = vunpack.c.h.b16 %v743
      %v1245 = vunpack.c.l.b16 %v744
      %v1246 = vunpack.c.h.b16 %v744
      %v1247 = vunpack.c.l.b16 %v745
      %v1248 = vunpack.c.h.b16 %v745
      %v1249 = vunpack.c.l.b16 %v746
      %v1250 = vunpack.c.h.b16 %v746
      %v1251 = vunpack.c.l.b16 %v747
      %v1252 = vunpack.c.l.b16 %v748
      %v1253 = vunpack.c.h.b16 %v748
      %v1254 = vunpack.c.l.b16 %v749
      %v1255 = vunpack.c.h.b16 %v749
      %v1256 = vunpack.c.l.b16 %v750
      %v1257 = vunpack.c.h.b16 %v750
      %v1258 = vunpack.c.l.b16 %v751
      %v1259 = vunpack.c.h.b16 %v751
      %v1260 = vunpack.c.l.b16 %v752
      %v1261 = vunpack.c.l.b16 %v753
      %v1262 = vunpack.c.h.b16 %v753
      %v1263 = vunpack.c.l.b16 %v754
      %v1264 = vunpack.c.h.b16 %v754
      %v1265 = vunpack.c.l.b16 %v755
      %v1266 = vunpack.c.h.b16 %v755
      %v1267 = vunpack.c.l.b16 %v756
      %v1268 = vunpack.c.h.b16 %v756
      %v1269 = vunpack.c.l.b16 %v757
      %v1270 = vunpack.c.l.b16 %v758
      %v1271 = vunpack.c.h.b16 %v758
      %v1272 = vunpack.c.l.b16 %v759
      %v1273 = vunpack.c.h.b16 %v759
      %v1274 = vunpack.c.l.b16 %v760
      %v1275 = vunpack.c.h.b16 %v760
      %v1276 = vunpack.c.l.b16 %v761
      %v1277 = vunpack.c.h.b16 %v761
      %v1278 = vunpack.c.l.b16 %v762
      %v1279 = vunpack.c.l.b16 %v763
      %v1280 = vunpack.c.h.b16 %v763
      %v1281 = vunpack.c.l.b16 %v764
      %v1282 = vunpack.c.h.b16 %v764
      %v1283 = vunpack.c.l.b16 %v765
      %v1284 = vunpack.c.h.b16 %v765
      %v1285 = vunpack.c.l.b16 %v766
      %v1286 = vunpack.c.h.b16 %v766
      %v1287 = vunpack.c.l.b16 %v767
      %v1288 = vunpack.c.l.b16 %v768
      %v1289 = vunpack.c.h.b16 %v768
      %v1290 = vunpack.c.l.b16 %v769
      %v1291 = vunpack.c.h.b16 %v769
      %v1292 = vunpack.c.l.b16 %v770
      %v1293 = vunpack.c.h.b16 %v770
      %v1294 = vunpack.c.l.b16 %v771
      %v1295 = vunpack.c.h.b16 %v771
      %v1296 = vunpack.c.l.b16 %v772
      %v1297 = vunpack.c.l.b16 %v773
      %v1298 = vunpack.c.h.b16 %v773
      %v1299 = vunpack.c.l.b16 %v774
      %v1300 = vunpack.c.h.b16 %v774
      %v1301 = vunpack.c.l.b16 %v775
      %v1302 = vunpack.c.h.b16 %v775
      %v1303 = vunpack.c.l.b16 %v776
      %v1304 = vunpack.c.h.b16 %v776
      %v1305 = vunpack.c.l.b16 %v777
      %v1306 = vunpack.c.l.b16 %v778
      %v1307 = vunpack.c.h.b16 %v778
      %v1308 = vunpack.c.l.b16 %v779
      %v1309 = vunpack.c.h.b16 %v779
      %v1310 = vunpack.c.l.b16 %v780
      %v1311 = vunpack.c.h.b16 %v780
      %v1312 = vunpack.c.l.b16 %v781
      %v1313 = vunpack.c.h.b16 %v781
      %v1314 = vunpack.c.l.b16 %v782
      %v1315 = vunpack.c.l.b16 %v783
      %v1316 = vunpack.c.h.b16 %v783
      %v1317 = vunpack.c.l.b16 %v784
      %v1318 = vunpack.c.h.b16 %v784
      %v1319 = vunpack.c.l.b16 %v785
      %v1320 = vunpack.c.h.b16 %v785
      %v1321 = vunpack.c.l.b16 %v786
      %v1322 = vunpack.c.h.b16 %v786
      %v1323 = vunpack.c.l.b16 %v787
      %v1324 = vunpack.c.l.b16 %v788
      %v1325 = vunpack.c.h.b16 %v788
      %v1326 = vunpack.c.l.b16 %v789
      %v1327 = vunpack.c.h.b16 %v789
      %v1328 = vunpack.c.l.b16 %v790
      %v1329 = vunpack.c.h.b16 %v790
      %v1330 = vunpack.c.l.b16 %v791
      %v1331 = vunpack.c.h.b16 %v791
      %v1332 = vunpack.c.l.b16 %v792
      %v1333 = vunpack.c.l.b16 %v793
      %v1334 = vunpack.c.h.b16 %v793
      %v1335 = vunpack.c.l.b16 %v794
      %v1336 = vunpack.c.h.b16 %v794
      %v1337 = vunpack.c.l.b16 %v795
      %v1338 = vunpack.c.h.b16 %v795
      %v1339 = vunpack.c.l.b16 %v796
      %v1340 = vunpack.c.h.b16 %v796
      %v1341 = vunpack.c.l.b16 %v797
      %v1342 = vunpack.c.l.b16 %v798
      %v1343 = vunpack.c.h.b16 %v798
      %v1344 = vunpack.c.l.b16 %v799
      %v1345 = vunpack.c.h.b16 %v799
      %v1346 = vunpack.c.l.b16 %v800
      %v1347 = vunpack.c.h.b16 %v800
      %v1348 = vunpack.c.l.b16 %v801
      %v1349 = vunpack.c.h.b16 %v801
      %v1350 = vunpack.c.l.b16 %v802
      %v1351 = vunpack.c.l.b16 %v803
      %v1352 = vunpack.c.h.b16 %v803
      %v1353 = vunpack.c.l.b16 %v804
      %v1354 = vunpack.c.h.b16 %v804
      %v1355 = vunpack.c.l.b16 %v805
      %v1356 = vunpack.c.h.b16 %v805
      %v1357 = vunpack.c.l.b16 %v806
      %v1358 = vunpack.c.h.b16 %v806
      %v1359 = vunpack.c.l.b16 %v807
      %v1360 = vunpack.c.l.b16 %v808
      %v1361 = vunpack.c.h.b16 %v808
      %v1362 = vunpack.c.l.b16 %v809
      %v1363 = vunpack.c.h.b16 %v809
      %v1364 = vunpack.c.l.b16 %v810
      %v1365 = vunpack.c.h.b16 %v810
      %v1366 = vunpack.c.l.b16 %v811
      %v1367 = vunpack.c.h.b16 %v811
      %v1368 = vunpack.c.l.b16 %v812
      %v1369 = vunpack.c.l.b16 %v813
      %v1370 = vunpack.c.h.b16 %v813
      %v1371 = vunpack.c.l.b16 %v814
      %v1372 = vunpack.c.h.b16 %v814
      %v1373 = vunpack.c.l.b16 %v815
      %v1374 = vunpack.c.h.b16 %v815
      %v1375 = vunpack.c.l.b16 %v816
      %v1376 = vunpack.c.h.b16 %v816
      %v1377 = vunpack.c.l.b16 %v817
      %v1378 = vunpack.c.l.b16 %v818
      %v1379 = vunpack.c.h.b16 %v818
      %v1380 = vunpack.c.l.b16 %v819
      %v1381 = vunpack.c.h.b16 %v819
      %v1382 = vunpack.c.l.b16 %v820
      %v1383 = vunpack.c.h.b16 %v820
      %v1384 = vunpack.c.l.b16 %v821
      %v1385 = vunpack.c.h.b16 %v821
      %v1386 = vunpack.c.l.b16 %v822
      %v1387 = vunpack.c.l.b16 %v823
      %v1388 = vunpack.c.h.b16 %v823
      %v1389 = vunpack.c.l.b16 %v824
      %v1390 = vunpack.c.h.b16 %v824
      %v1391 = vunpack.c.l.b16 %v825
      %v1392 = vunpack.c.h.b16 %v825
      %v1393 = vunpack.c.l.b16 %v826
      %v1394 = vunpack.c.h.b16 %v826
      %v1395 = vunpack.c.l.b16 %v827
      %v1396 = vunpack.c.l.b16 %v828
      %v1397 = vunpack.c.h.b16 %v828
      %v1398 = vunpack.c.l.b16 %v829
      %v1399 = vunpack.c.h.b16 %v829
      %v1400 = vunpack.c.l.b16 %v830
      %v1401 = vunpack.c.h.b16 %v830
      %v1402 = vunpack.c.l.b16 %v831
      %v1403 = vunpack.c.h.b16 %v831
      %v1404 = vunpack.c.l.b16 %v832
      %v1405 = vunpack.c.l.b16 %v833
      %v1406 = vunpack.c.h.b16 %v833
      %v1407 = vunpack.c.l.b16 %v834
      %v1408 = vunpack.c.h.b16 %v834
      %v1409 = vunpack.c.l.b16 %v835
      %v1410 = vunpack.c.h.b16 %v835
      %v1411 = vunpack.c.l.b16 %v836
      %v1412 = vunpack.c.h.b16 %v836
      %v1413 = vunpack.c.l.b16 %v837
      %v1414 = vunpack.c.l.b16 %v838
      %v1415 = vunpack.c.h.b16 %v838
      %v1416 = vunpack.c.l.b16 %v839
      %v1417 = vunpack.c.h.b16 %v839
      %v1418 = vunpack.c.l.b16 %v840
      %v1419 = vunpack.c.h.b16 %v840
      %v1420 = vunpack.c.l.b16 %v841
      %v1421 = vunpack.c.h.b16 %v841
      %v1422 = vunpack.c.l.b16 %v842
      %v1423 = vunpack.c.l.b16 %v843
      %v1424 = vunpack.c.h.b16 %v843
      %v1425 = vunpack.c.l.b16 %v844
      %v1426 = vunpack.c.h.b16 %v844
      %v1427 = vunpack.c.l.b16 %v845
      %v1428 = vunpack.c.h.b16 %v845
      %v1429 = vunpack.c.l.b16 %v846
      %v1430 = vunpack.c.h.b16 %v846
      %v1431 = vunpack.c.l.b16 %v847
      %v1432 = vunpack.c.l.b16 %v848
      %v1433 = vunpack.c.h.b16 %v848
      %v1434 = vunpack.c.l.b16 %v849
      %v1435 = vunpack.c.h.b16 %v849
      %v1436 = vunpack.c.l.b16 %v850
      %v1437 = vunpack.c.h.b16 %v850
      %v1438 = vunpack.c.l.b16 %v851
      %v1439 = vunpack.c.h.b16 %v851
      %v1440 = vunpack.c.l.b16 %v852
      %v1441 = vunpack.c.l.b16 %v853
      %v1442 = vunpack.c.h.b16 %v853
      %v1443 = vunpack.c.l.b16 %v854
      %v1444 = vunpack.c.h.b16 %v854
      %v1445 = vunpack.c.l.b16 %v855
      %v1446 = vunpack.c.h.b16 %v855
      %v1447 = vunpack.c.l.b16 %v856
      %v1448 = vunpack.c.h.b16 %v856
      %v1449 = vunpack.c.l.b16 %v857
      %v1450 = vunpack.c.l.b16 %v858
      %v1451 = vunpack.c.h.b16 %v858
      %v1452 = vunpack.c.l.b16 %v859
      %v1453 = vunpack.c.h.b16 %v859
      %v1454 = vunpack.c.l.b16 %v860
      %v1455 = vunpack.c.h.b16 %v860
      %v1456 = vunpack.c.l.b16 %v861
      %v1457 = vunpack.c.h.b16 %v861
      %v1458 = vunpack.c.l.b16 %v862
      %v1459 = vunpack.c.l.b16 %v863
      %v1460 = vunpack.c.h.b16 %v863
      %v1461 = vunpack.c.l.b16 %v864
      %v1462 = vunpack.c.h.b16 %v864
      %v1463 = vunpack.c.l.b16 %v865
      %v1464 = vunpack.c.h.b16 %v865
      %v1465 = vunpack.c.l.b16 %v866
      %v1466 = vunpack.c.h.b16 %v866
      %v1467 = vunpack.c.l.b16 %v867
      %v1468 = vunpack.c.l.b16 %v868
      %v1469 = vunpack.c.h.b16 %v868
      %v1470 = vunpack.c.l.b16 %v869
      %v1471 = vunpack.c.h.b16 %v869
      %v1472 = vunpack.c.l.b16 %v870
      %v1473 = vunpack.c.h.b16 %v870
      %v1474 = vunpack.c.l.b16 %v871
      %v1475 = vunpack.c.h.b16 %v871
      %v1476 = vunpack.c.l.b16 %v872
      %v1477 = vunpack.c.l.b16 %v873
      %v1478 = vunpack.c.h.b16 %v873
      %v1479 = vunpack.c.l.b16 %v874
      %v1480 = vunpack.c.h.b16 %v874
      %v1481 = vunpack.c.l.b16 %v875
      %v1482 = vunpack.c.h.b16 %v875
      %v1483 = vunpack.c.l.b16 %v876
      %v1484 = vunpack.c.h.b16 %v876
      %v1485 = vunpack.c.l.b16 %v877
      %v1486 = vunpack.c.l.b16 %v878
      %v1487 = vunpack.c.h.b16 %v878
      %v1488 = vunpack.c.l.b16 %v879
      %v1489 = vunpack.c.h.b16 %v879
      %v1490 = vunpack.c.l.b16 %v880
      %v1491 = vunpack.c.h.b16 %v880
      %v1492 = vunpack.c.l.b16 %v881
      %v1493 = vunpack.c.h.b16 %v881
      %v1494 = vunpack.c.l.b16 %v882
      %v1495 = vunpack.c.l.b16 %v883
      %v1496 = vunpack.c.h.b16 %v883
      %v1497 = vunpack.c.l.b16 %v884
      %v1498 = vunpack.c.h.b16 %v884
      %v1499 = vunpack.c.l.b16 %v885
      %v1500 = vunpack.c.h.b16 %v885
      %v1501 = vunpack.c.l.b16 %v886
      %v1502 = vunpack.c.h.b16 %v886
      %v1503 = vunpack.c.l.b16 %v887
      %v1504 = vunpack.c.l.b16 %v888
      %v1505 = vunpack.c.h.b16 %v888
      %v1506 = vunpack.c.l.b16 %v889
      %v1507 = vunpack.c.h.b16 %v889
      %v1508 = vunpack.c.l.b16 %v890
      %v1509 = vunpack.c.h.b16 %v890
      %v1510 = vunpack.c.l.b16 %v891
      %v1511 = vunpack.c.h.b16 %v891
      %v1512 = vunpack.c.l.b16 %v892
      %v1513 = vunpack.c.l.b16 %v893
      %v1514 = vunpack.c.h.b16 %v893
      %v1515 = vunpack.c.l.b16 %v894
      %v1516 = vunpack.c.h.b16 %v894
      %v1517 = vunpack.c.l.b16 %v895
      %v1518 = vunpack.c.h.b16 %v895
      %v1519 = vunpack.c.l.b16 %v896
      %v1520 = vunpack.c.h.b16 %v896
      %v1521 = vunpack.c.l.b16 %v897
      %v1522 = vunpack.c.l.b16 %v898
      %v1523 = vunpack.c.h.b16 %v898
      %v1524 = vunpack.c.l.b16 %v899
      %v1525 = vunpack.c.h.b16 %v899
      %v1526 = vunpack.c.l.b16 %v900
      %v1527 = vunpack.c.h.b16 %v900
      %v1528 = vunpack.c.l.b16 %v901
      %v1529 = vunpack.c.h.b16 %v901
      %v1530 = vunpack.c.l.b16 %v902
      %v1531 = vunpack.c.l.b16 %v903
      %v1532 = vunpack.c.h.b16 %v903
      %v1533 = vunpack.c.l.b16 %v904
      %v1534 = vunpack.c.h.b16 %v904
      %v1535 = vunpack.c.l.b16 %v905
      %v1536 = vunpack.c.h.b16 %v905
      %v1537 = vunpack.c.l.b16 %v906
      %v1538 = vunpack.c.h.b16 %v906
      %v1539 = vunpack.c.l.b16 %v907
      %v1540 = vunpack.c.l.b16 %v908
      %v1541 = vunpack.c.h.b16 %v908
      %v1542 = vunpack.c.l.b16 %v909
      %v1543 = vunpack.c.h.b16 %v909
      %v1544 = vunpack.c.l.b16 %v910
      %v1545 = vunpack.c.h.b16 %v910
      %v1546 = vunpack.c.l.b16 %v911
      %v1547 = vunpack.c.h.b16 %v911
      %v1548 = vunpack.c.l.b16 %v912
      %v1549 = vunpack.c.l.b16 %v913
      %v1550 = vunpack.c.h.b16 %v913
      %v1551 = vunpack.c.l.b16 %v914
      %v1552 = vunpack.c.h.b16 %v914
      %v1553 = vunpack.c.l.b16 %v915
      %v1554 = vunpack.c.h.b16 %v915
      %v1555 = vunpack.c.l.b16 %v916
      %v1556 = vunpack.c.h.b16 %v916
      %v1557 = vunpack.c.l.b16 %v917
      %v1558 = vunpack.c.l.b16 %v918
      %v1559 = vunpack.c.h.b16 %v918
      %v1560 = vunpack.c.l.b16 %v919
      %v1561 = vunpack.c.h.b16 %v919
      %v1562 = vunpack.c.l.b16 %v920
      %v1563 = vunpack.c.h.b16 %v920
      %v1564 = vunpack.c.l.b16 %v921
      %v1565 = vunpack.c.h.b16 %v921
      %v1566 = vunpack.c.l.b16 %v922
      %v1567 = vunpack.c.l.b16 %v923
      %v1568 = vunpack.c.h.b16 %v923
      %v1569 = vunpack.c.l.b16 %v924
      %v1570 = vunpack.c.h.b16 %v924
      %v1571 = vunpack.c.l.b16 %v925
      %v1572 = vunpack.c.h.b16 %v925
      %v1573 = vunpack.c.l.b16 %v926
      %v1574 = vunpack.c.h.b16 %v926
      %v1575 = vunpack.c.l.b16 %v927
      %v1576 = vunpack.c.l.b16 %v928
      %v1577 = vunpack.c.h.b16 %v928
      %v1578 = vunpack.c.l.b16 %v929
      %v1579 = vunpack.c.h.b16 %v929
      %v1580 = vunpack.c.l.b16 %v930
      %v1581 = vunpack.c.h.b16 %v930
      %v1582 = vunpack.c.l.b16 %v931
      %v1583 = vunpack.c.h.b16 %v931
      %v1584 = vunpack.c.l.b16 %v932
      %v1585 = vunpack.c.l.b16 %v933
      %v1586 = vunpack.c.h.b16 %v933
      %v1587 = vunpack.c.l.b16 %v934
      %v1588 = vunpack.c.h.b16 %v934
      %v1589 = vunpack.c.l.b16 %v935
      %v1590 = vunpack.c.h.b16 %v935
      %v1591 = vunpack.c.l.b16 %v936
      %v1592 = vunpack.c.h.b16 %v936
      %v1593 = vunpack.c.l.b16 %v937
      %v1594 = vunpack.c.l.b16 %v938
      %v1595 = vunpack.c.h.b16 %v938
      %v1596 = vunpack.c.l.b16 %v939
      %v1597 = vunpack.c.h.b16 %v939
      %v1598 = vunpack.c.l.b16 %v940
      %v1599 = vunpack.c.h.b16 %v940
      %v1600 = vunpack.c.l.b16 %v941
      %v1601 = vunpack.c.h.b16 %v941
      %v1602 = vunpack.c.l.b16 %v942
      %v1603 = vunpack.c.l.b16 %v943
      %v1604 = vunpack.c.h.b16 %v943
      %v1605 = vunpack.c.l.b16 %v944
      %v1606 = vunpack.c.h.b16 %v944
      %v1607 = vunpack.c.l.b16 %v945
      %v1608 = vunpack.c.h.b16 %v945
      %v1609 = vunpack.c.l.b16 %v946
      %v1610 = vunpack.c.h.b16 %v946
      %v1611 = vunpack.c.l.b16 %v947
      %v1612 = vunpack.c.l.b16 %v948
      %v1613 = vunpack.c.h.b16 %v948
      %v1614 = vunpack.c.l.b16 %v949
      %v1615 = vunpack.c.h.b16 %v949
      %v1616 = vunpack.c.l.b16 %v950
      %v1617 = vunpack.c.h.b16 %v950
      %v1618 = vunpack.c.l.b16 %v951
      %v1619 = vunpack.c.h.b16 %v951
      %v1620 = vunpack.c.l.b16 %v952
      %v1621 = vunpack.c.l.b16 %v953
      %v1622 = vunpack.c.h.b16 %v953
      %v1623 = vunpack.c.l.b16 %v954
      %v1624 = vunpack.c.h.b16 %v954
      %v1625 = vunpack.c.l.b16 %v955
      %v1626 = vunpack.c.h.b16 %v955
      %v1627 = vunpack.c.l.b16 %v956
      %v1628 = vunpack.c.h.b16 %v956
      %v1629 = vunpack.c.l.b16 %v957
      %v1630 = vpack.c.b16 %v1207, %v1198
      %v1631 = vpack.c.b16 %v1208, %v1199
      %v1632 = vpack.c.b16 %v1209, %v1200
      %v1633 = vpack.c.b16 %v1210, %v1201
      %v1634 = vpack.c.b16 %v1211, %v1202
      %v1635 = vpack.c.b16 %v1212, %v1203
      %v1636 = vpack.c.b16 %v1213, %v1204
      %v1637 = vpack.c.b16 %v1214, %v1205
      %v1638 = vpack.c.b16 %v1215, %v1206
      %v1639 = vpack.c.b16 %v1225, %v1216
      %v1640 = vpack.c.b16 %v1226, %v1217
      %v1641 = vpack.c.b16 %v1227, %v1218
      %v1642 = vpack.c.b16 %v1228, %v1219
      %v1643 = vpack.c.b16 %v1229, %v1220
      %v1644 = vpack.c.b16 %v1230, %v1221
      %v1645 = vpack.c.b16 %v1231, %v1222
      %v1646 = vpack.c.b16 %v1232, %v1223
      %v1647 = vpack.c.b16 %v1233, %v1224
      %v1648 = vpack.c.b16 %v1243, %v1234
      %v1649 = vpack.c.b16 %v1244, %v1235
      %v1650 = vpack.c.b16 %v1245, %v1236
      %v1651 = vpack.c.b16 %v1246, %v1237
      %v1652 = vpack.c.b16 %v1247, %v1238
      %v1653 = vpack.c.b16 %v1248, %v1239
      %v1654 = vpack.c.b16 %v1249, %v1240
      %v1655 = vpack.c.b16 %v1250, %v1241
      %v1656 = vpack.c.b16 %v1251, %v1242
      %v1657 = vpack.c.b16 %v1261, %v1252
      %v1658 = vpack.c.b16 %v1262, %v1253
      %v1659 = vpack.c.b16 %v1263, %v1254
      %v1660 = vpack.c.b16 %v1264, %v1255
      %v1661 = vpack.c.b16 %v1265, %v1256
      %v1662 = vpack.c.b16 %v1266, %v1257
      %v1663 = vpack.c.b16 %v1267, %v1258
      %v1664 = vpack.c.b16 %v1268, %v1259
      %v1665 = vpack.c.b16 %v1269, %v1260
      %v1666 = vpack.c.b16 %v1279, %v1270
      %v1667 = vpack.c.b16 %v1280, %v1271
      %v1668 = vpack.c.b16 %v1281, %v1272
      %v1669 = vpack.c.b16 %v1282, %v1273
      %v1670 = vpack.c.b16 %v1283, %v1274
      %v1671 = vpack.c.b16 %v1284, %v1275
      %v1672 = vpack.c.b16 %v1285, %v1276
      %v1673 = vpack.c.b16 %v1286, %v1277
      %v1674 = vpack.c.b16 %v1287, %v1278
      %v1675 = vpack.c.b16 %v1297, %v1288
      %v1676 = vpack.c.b16 %v1298, %v1289
      %v1677 = vpack.c.b16 %v1299, %v1290
      %v1678 = vpack.c.b16 %v1300, %v1291
      %v1679 = vpack.c.b16 %v1301, %v1292
      %v1680 = vpack.c.b16 %v1302, %v1293
      %v1681 = vpack.c.b16 %v1303, %v1294
      %v1682 = vpack.c.b16 %v1304, %v1295
      %v1683 = vpack.c.b16 %v1305, %v1296
      %v1684 = vpack.c.b16 %v1315, %v1306
      %v1685 = vpack.c.b16 %v1316, %v1307
      %v1686 = vpack.c.b16 %v1317, %v1308
      %v1687 = vpack.c.b16 %v1318, %v1309
      %v1688 = vpack.c.b16 %v1319, %v1310
      %v1689 = vpack.c.b16 %v1320, %v1311
      %v1690 = vpack.c.b16 %v1321, %v1312
      %v1691 = vpack.c.b16 %v1322, %v1313
      %v1692 = vpack.c.b16 %v1323, %v1314
      %v1693 = vpack.c.b16 %v1333, %v1324
      %v1694 = vpack.c.b16 %v1334, %v1325
      %v1695 = vpack.c.b16 %v1335, %v1326
      %v1696 = vpack.c.b16 %v1336, %v1327
      %v1697 = vpack.c.b16 %v1337, %v1328
      %v1698 = vpack.c.b16 %v1338, %v1329
      %v1699 = vpack.c.b16 %v1339, %v1330
      %v1700 = vpack.c.b16 %v1340, %v1331
      %v1701 = vpack.c.b16 %v1341, %v1332
      %v1702 = vpack.c.b16 %v1351, %v1342
      %v1703 = vpack.c.b16 %v1352, %v1343
      %v1704 = vpack.c.b16 %v1353, %v1344
      %v1705 = vpack.c.b16 %v1354, %v1345
      %v1706 = vpack.c.b16 %v1355, %v1346
      %v1707 = vpack.c.b16 %v1356, %v1347
      %v1708 = vpack.c.b16 %v1357, %v1348
      %v1709 = vpack.c.b16 %v1358, %v1349
      %v1710 = vpack.c.b16 %v1359, %v1350
      %v1711 = vpack.c.b16 %v1369, %v1360
      %v1712 = vpack.c.b16 %v1370, %v1361
      %v1713 = vpack.c.b16 %v1371, %v1362
      %v1714 = vpack.c.b16 %v1372, %v1363
      %v1715 = vpack.c.b16 %v1373, %v1364
      %v1716 = vpack.c.b16 %v1374, %v1365
      %v1717 = vpack.c.b16 %v1375, %v1366
      %v1718 = vpack.c.b16 %v1376, %v1367
      %v1719 = vpack.c.b16 %v1377, %v1368
      %v1720 = vpack.c.b16 %v1387, %v1378
      %v1721 = vpack.c.b16 %v1388, %v1379
      %v1722 = vpack.c.b16 %v1389, %v1380
      %v1723 = vpack.c.b16 %v1390, %v1381
      %v1724 = vpack.c.b16 %v1391, %v1382
      %v1725 = vpack.c.b16 %v1392, %v1383
      %v1726 = vpack.c.b16 %v1393, %v1384
      %v1727 = vpack.c.b16 %v1394, %v1385
      %v1728 = vpack.c.b16 %v1395, %v1386
      %v1729 = vpack.c.b16 %v1405, %v1396
      %v1730 = vpack.c.b16 %v1406, %v1397
      %v1731 = vpack.c.b16 %v1407, %v1398
      %v1732 = vpack.c.b16 %v1408, %v1399
      %v1733 = vpack.c.b16 %v1409, %v1400
      %v1734 = vpack.c.b16 %v1410, %v1401
      %v1735 = vpack.c.b16 %v1411, %v1402
      %v1736 = vpack.c.b16 %v1412, %v1403
      %v1737 = vpack.c.b16 %v1413, %v1404
      %v1738 = vpack.c.b16 %v1423, %v1414
      %v1739 = vpack.c.b16 %v1424, %v1415
      %v1740 = vpack.c.b16 %v1425, %v1416
      %v1741 = vpack.c.b16 %v1426, %v1417
      %v1742 = vpack.c.b16 %v1427, %v1418
      %v1743 = vpack.c.b16 %v1428, %v1419
      %v1744 = vpack.c.b16 %v1429, %v1420
      %v1745 = vpack.c.b16 %v1430, %v1421
      %v1746 = vpack.c.b16 %v1431, %v1422
      %v1747 = vpack.c.b16 %v1441, %v1432
      %v1748 = vpack.c.b16 %v1442, %v1433
      %v1749 = vpack.c.b16 %v1443, %v1434
      %v1750 = vpack.c.b16 %v1444, %v1435
      %v1751 = vpack.c.b16 %v1445, %v1436
      %v1752 = vpack.c.b16 %v1446, %v1437
      %v1753 = vpack.c.b16 %v1447, %v1438
      %v1754 = vpack.c.b16 %v1448, %v1439
      %v1755 = vpack.c.b16 %v1449, %v1440
      %v1756 = vpack.c.b16 %v1459, %v1450
      %v1757 = vpack.c.b16 %v1460, %v1451
      %v1758 = vpack.c.b16 %v1461, %v1452
      %v1759 = vpack.c.b16 %v1462, %v1453
      %v1760 = vpack.c.b16 %v1463, %v1454
      %v1761 = vpack.c.b16 %v1464, %v1455
      %v1762 = vpack.c.b16 %v1465, %v1456
      %v1763 = vpack.c.b16 %v1466, %v1457
      %v1764 = vpack.c.b16 %v1467, %v1458
      %v1765 = vpack.c.b16 %v1477, %v1468
      %v1766 = vpack.c.b16 %v1478, %v1469
      %v1767 = vpack.c.b16 %v1479, %v1470
      %v1768 = vpack.c.b16 %v1480, %v1471
      %v1769 = vpack.c.b16 %v1481, %v1472
      %v1770 = vpack.c.b16 %v1482, %v1473
      %v1771 = vpack.c.b16 %v1483, %v1474
      %v1772 = vpack.c.b16 %v1484, %v1475
      %v1773 = vpack.c.b16 %v1485, %v1476
      %v1774 = vpack.c.b16 %v1495, %v1486
      %v1775 = vpack.c.b16 %v1496, %v1487
      %v1776 = vpack.c.b16 %v1497, %v1488
      %v1777 = vpack.c.b16 %v1498, %v1489
      %v1778 = vpack.c.b16 %v1499, %v1490
      %v1779 = vpack.c.b16 %v1500, %v1491
      %v1780 = vpack.c.b16 %v1501, %v1492
      %v1781 = vpack.c.b16 %v1502, %v1493
      %v1782 = vpack.c.b16 %v1503, %v1494
      %v1783 = vpack.c.b16 %v1513, %v1504
      %v1784 = vpack.c.b16 %v1514, %v1505
      %v1785 = vpack.c.b16 %v1515, %v1506
      %v1786 = vpack.c.b16 %v1516, %v1507
      %v1787 = vpack.c.b16 %v1517, %v1508
      %v1788 = vpack.c.b16 %v1518, %v1509
      %v1789 = vpack.c.b16 %v1519, %v1510
      %v1790 = vpack.c.b16 %v1520, %v1511
      %v1791 = vpack.c.b16 %v1521, %v1512
      %v1792 = vpack.c.b16 %v1531, %v1522
      %v1793 = vpack.c.b16 %v1532, %v1523
      %v1794 = vpack.c.b16 %v1533, %v1524
      %v1795 = vpack.c.b16 %v1534, %v1525
      %v1796 = vpack.c.b16 %v1535, %v1526
      %v1797 = vpack.c.b16 %v1536, %v1527
      %v1798 = vpack.c.b16 %v1537, %v1528
      %v1799 = vpack.c.b16 %v1538, %v1529
      %v1800 = vpack.c.b16 %v1539, %v1530
      %v1801 = vpack.c.b16 %v1549, %v1540
      %v1802 = vpack.c.b16 %v1550, %v1541
      %v1803 = vpack.c.b16 %v1551, %v1542
      %v1804 = vpack.c.b16 %v1552, %v1543
      %v1805 = vpack.c.b16 %v1553, %v1544
      %v1806 = vpack.c.b16 %v1554, %v1545
      %v1807 = vpack.c.b16 %v1555, %v1546
      %v1808 = vpack.c.b16 %v1556, %v1547
      %v1809 = vpack.c.b16 %v1557, %v1548
      %v1810 = vpack.c.b16 %v1567, %v1558
      %v1811 = vpack.c.b16 %v1568, %v1559
      %v1812 = vpack.c.b16 %v1569, %v1560
      %v1813 = vpack.c.b16 %v1570, %v1561
      %v1814 = vpack.c.b16 %v1571, %v1562
      %v1815 = vpack.c.b16 %v1572, %v1563
      %v1816 = vpack.c.b16 %v1573, %v1564
      %v1817 = vpack.c.b16 %v1574, %v1565
      %v1818 = vpack.c.b16 %v1575, %v1566
      %v1819 = vpack.c.b16 %v1585, %v1576
      %v1820 = vpack.c.b16 %v1586, %v1577
      %v1821 = vpack.c.b16 %v1587, %v1578
      %v1822 = vpack.c.b16 %v1588, %v1579
      %v1823 = vpack.c.b16 %v1589, %v1580
      %v1824 = vpack.c.b16 %v1590, %v1581
      %v1825 = vpack.c.b16 %v1591, %v1582
      %v1826 = vpack.c.b16 %v1592, %v1583
      %v1827 = vpack.c.b16 %v1593, %v1584
      %v1828 = vpack.c.b16 %v1603, %v1594
      %v1829 = vpack.c.b16 %v1604, %v1595
      %v1830 = vpack.c.b16 %v1605, %v1596
      %v1831 = vpack.c.b16 %v1606, %v1597
      %v1832 = vpack.c.b16 %v1607, %v1598
      %v1833 = vpack.c.b16 %v1608, %v1599
      %v1834 = vpack.c.b16 %v1609, %v1600
      %v1835 = vpack.c.b16 %v1610, %v1601
      %v1836 = vpack.c.b16 %v1611, %v1602
      %v1837 = vpack.c.b16 %v1621, %v1612
      %v1838 = vpack.c.b16 %v1622, %v1613
      %v1839 = vpack.c.b16 %v1623, %v1614
      %v1840 = vpack.c.b16 %v1624, %v1615
      %v1841 = vpack.c.b16 %v1625, %v1616
      %v1842 = vpack.c.b16 %v1626, %v1617
      %v1843 = vpack.c.b16 %v1627, %v1618
      %v1844 = vpack.c.b16 %v1628, %v1619
      %v1845 = vpack.c.b16 %v1629, %v1620
      %2062 = vmatprep.subr.bf16.mxu0 %v1694
      %2063 = vmatpush1.bf16.msra.mxu0 %v1693
      %2064 = vmatprep.subr.bf16.mxu0 %v1685
      %2065 = vmatpush1.bf16.msra.mxu0 %v1684
      %2066 = vmatprep.subr.bf16.mxu0 %v1676
      %2067 = vmatpush1.bf16.msra.mxu0 %v1675
      %2068 = vmatprep.subr.bf16.mxu0 %v1667
      %2069 = vmatpush1.bf16.msra.mxu0 %v1666
      %2070 = vmatprep.subr.bf16.mxu0 %v1658
      %2071 = vmatpush1.bf16.msra.mxu0 %v1657
      %2072 = vmatprep.subr.bf16.mxu0 %v1649
      %2073 = vmatpush1.bf16.msra.mxu0 %v1648
      %2074 = vmatprep.subr.bf16.mxu0 %v1640
      %2075 = vmatpush1.bf16.msra.mxu0 %v1639
      %2076 = vmatprep.subr.bf16.mxu0 %v1631
      %2077 = vmatpush1.bf16.msra.mxu0 %v1630
      %2078 = vmatprep.subr.bf16.mxu0 %v1766
      %2079 = vmatpush2.bf16.msra.mxu0 %v1765
      %2080 = vmatprep.subr.bf16.mxu0 %v1757
      %2081 = vmatpush2.bf16.msra.mxu0 %v1756
      %2082 = vmatprep.subr.bf16.mxu0 %v1748
      %2083 = vmatpush2.bf16.msra.mxu0 %v1747
      %2084 = vmatprep.subr.bf16.mxu0 %v1739
      %2085 = vmatpush2.bf16.msra.mxu0 %v1738
      %2086 = vmatprep.subr.bf16.mxu0 %v1730
      %2087 = vmatpush2.bf16.msra.mxu0 %v1729
      %2088 = vmatprep.subr.bf16.mxu0 %v1721
      %2089 = vmatpush2.bf16.msra.mxu0 %v1720
      %2090 = vmatprep.subr.bf16.mxu0 %v1712
      %2091 = vmatpush2.bf16.msra.mxu0 %v1711
      %2092 = vmatprep.subr.bf16.mxu0 %v1703
      %2093 = vmatpush2.bf16.msra.mxu0 %v1702
      %2094 = vmatprep.mubr.bf16.mxu0 %v707
      %2095 = vmatmul.mubr.bf16.gmra.mxu0 %v706
      %v2096 = vpop.f32.mrf.mxu0
      %v2097 = vadd.f32 0.0, %v2096
      %v2098 = vpop.f32.mrf.mxu0
      %v2099 = vadd.f32 0.0, %v2098
      %v2100 = vpop.f32.mrf.mxu0
      %v2101 = vadd.f32 0.0, %v2100
      %v2102 = vpop.f32.mrf.mxu0
      %v2103 = vadd.f32 0.0, %v2102
      %2104 = vmatprep.mubr.bf16.mxu0 %v710
      %2105 = vmatmul.mubr.bf16.gmra.mxu0 %v709
      %v2106 = vpop.f32.mrf.mxu0
      %v2107 = vadd.f32 0.0, %v2106
      %v2108 = vpop.f32.mrf.mxu0
      %v2109 = vadd.f32 0.0, %v2108
      %v2110 = vpop.f32.mrf.mxu0
      %v2111 = vadd.f32 0.0, %v2110
      %v2112 = vpop.f32.mrf.mxu0
      %v2113 = vadd.f32 0.0, %v2112
      %2114 = vmatprep.mubr.bf16.mxu0 %v713
      %2115 = vmatmul.mubr.bf16.gmra.mxu0 %v712
      %v2116 = vpop.f32.mrf.mxu0
      %v2117 = vadd.f32 0.0, %v2116
      %v2118 = vpop.f32.mrf.mxu0
      %v2119 = vadd.f32 0.0, %v2118
      %v2120 = vpop.f32.mrf.mxu0
      %v2121 = vadd.f32 0.0, %v2120
      %v2122 = vpop.f32.mrf.mxu0
      %v2123 = vadd.f32 0.0, %v2122
      %2124 = vmatprep.mubr.bf16.mxu0 %v716
      %2125 = vmatmul.mubr.bf16.gmra.mxu0 %v715
      %v2126 = vpop.f32.mrf.mxu0
      %v2127 = vadd.f32 0.0, %v2126
      %v2128 = vpop.f32.mrf.mxu0
      %v2129 = vadd.f32 0.0, %v2128
      %v2130 = vpop.f32.mrf.mxu0
      %v2131 = vadd.f32 0.0, %v2130
      %v2132 = vpop.f32.mrf.mxu0
      %v2133 = vadd.f32 0.0, %v2132
      %2134 = vdwg.mxu0
      %2135 = vmatprep.subr.bf16.mxu0 %v1838
      %2136 = vmatpush1.bf16.msra.mxu0 %v1837
      %2137 = vmatprep.subr.bf16.mxu0 %v1829
      %2138 = vmatpush1.bf16.msra.mxu0 %v1828
      %2139 = vmatprep.subr.bf16.mxu0 %v1820
      %2140 = vmatpush1.bf16.msra.mxu0 %v1819
      %2141 = vmatprep.subr.bf16.mxu0 %v1811
      %2142 = vmatpush1.bf16.msra.mxu0 %v1810
      %2143 = vmatprep.subr.bf16.mxu0 %v1802
      %2144 = vmatpush1.bf16.msra.mxu0 %v1801
      %2145 = vmatprep.subr.bf16.mxu0 %v1793
      %2146 = vmatpush1.bf16.msra.mxu0 %v1792
      %2147 = vmatprep.subr.bf16.mxu0 %v1784
      %2148 = vmatpush1.bf16.msra.mxu0 %v1783
      %2149 = vmatprep.subr.bf16.mxu0 %v1775
      %2150 = vmatpush1.bf16.msra.mxu0 %v1774
      %2151 = vmatprep.subr.bf16.mxu0 0
      %2152 = vmatpush2.bf16.msra.mxu0 0
      %2153 = vmatprep.subr.bf16.mxu0 0
      %2154 = vmatpush2.bf16.msra.mxu0 0
      %2155 = vmatprep.subr.bf16.mxu0 0
      %2156 = vmatpush2.bf16.msra.mxu0 0
      %2157 = vmatprep.subr.bf16.mxu0 0
      %2158 = vmatpush2.bf16.msra.mxu0 0
      %2159 = vmatprep.subr.bf16.mxu0 0
      %2160 = vmatpush2.bf16.msra.mxu0 0
      %2161 = vmatprep.subr.bf16.mxu0 0
      %2162 = vmatpush2.bf16.msra.mxu0 0
      %2163 = vmatprep.subr.bf16.mxu0 0
      %2164 = vmatpush2.bf16.msra.mxu0 0
      %2165 = vmatprep.subr.bf16.mxu0 0
      %2166 = vmatpush2.bf16.msra.mxu0 0
      %2167 = vmatprep.mubr.bf16.mxu0 0
      %2168 = vmatmul.mubr.bf16.gmra.mxu0 %v708
      %v2169 = vpop.f32.mrf.mxu0
      %v2170 = vadd.f32 %v2097, %v2169
      %v2171 = vpop.f32.mrf.mxu0
      %v2172 = vadd.f32 %v2099, %v2171
      %v2173 = vpop.f32.mrf.mxu0
      %v2174 = vadd.f32 %v2101, %v2173
      %v2175 = vpop.f32.mrf.mxu0
      %v2176 = vadd.f32 %v2103, %v2175
      %2177 = vmatprep.mubr.bf16.mxu0 0
      %2178 = vmatmul.mubr.bf16.gmra.mxu0 %v711
      %v2179 = vpop.f32.mrf.mxu0
      %v2180 = vadd.f32 %v2107, %v2179
      %v2181 = vpop.f32.mrf.mxu0
      %v2182 = vadd.f32 %v2109, %v2181
      %v2183 = vpop.f32.mrf.mxu0
      %v2184 = vadd.f32 %v2111, %v2183
      %v2185 = vpop.f32.mrf.mxu0
      %v2186 = vadd.f32 %v2113, %v2185
      %2187 = vmatprep.mubr.bf16.mxu0 0
      %2188 = vmatmul.mubr.bf16.gmra.mxu0 %v714
      %v2189 = vpop.f32.mrf.mxu0
      %v2190 = vadd.f32 %v2117, %v2189
      %v2191 = vpop.f32.mrf.mxu0
      %v2192 = vadd.f32 %v2119, %v2191
      %v2193 = vpop.f32.mrf.mxu0
      %v2194 = vadd.f32 %v2121, %v2193
      %v2195 = vpop.f32.mrf.mxu0
      %v2196 = vadd.f32 %v2123, %v2195
      %2197 = vmatprep.mubr.bf16.mxu0 0
      %2198 = vmatmul.mubr.bf16.gmra.mxu0 %v717
      %v2199 = vpop.f32.mrf.mxu0
      %v2200 = vadd.f32 %v2127, %v2199
      %v2201 = vpop.f32.mrf.mxu0
      %v2202 = vadd.f32 %v2129, %v2201
      %v2203 = vpop.f32.mrf.mxu0
      %v2204 = vadd.f32 %v2131, %v2203
      %v2205 = vpop.f32.mrf.mxu0
      %v2206 = vadd.f32 %v2133, %v2205
      %2207 = vdwg.mxu0
      %2208 = vmatprep.subr.bf16.mxu0 %v1696
      %2209 = vmatpush1.bf16.msra.mxu0 %v1695
      %2210 = vmatprep.subr.bf16.mxu0 %v1687
      %2211 = vmatpush1.bf16.msra.mxu0 %v1686
      %2212 = vmatprep.subr.bf16.mxu0 %v1678
      %2213 = vmatpush1.bf16.msra.mxu0 %v1677
      %2214 = vmatprep.subr.bf16.mxu0 %v1669
      %2215 = vmatpush1.bf16.msra.mxu0 %v1668
      %2216 = vmatprep.subr.bf16.mxu0 %v1660
      %2217 = vmatpush1.bf16.msra.mxu0 %v1659
      %2218 = vmatprep.subr.bf16.mxu0 %v1651
      %2219 = vmatpush1.bf16.msra.mxu0 %v1650
      %2220 = vmatprep.subr.bf16.mxu0 %v1642
      %2221 = vmatpush1.bf16.msra.mxu0 %v1641
      %2222 = vmatprep.subr.bf16.mxu0 %v1633
      %2223 = vmatpush1.bf16.msra.mxu0 %v1632
      %2224 = vmatprep.subr.bf16.mxu0 %v1768
      %2225 = vmatpush2.bf16.msra.mxu0 %v1767
      %2226 = vmatprep.subr.bf16.mxu0 %v1759
      %2227 = vmatpush2.bf16.msra.mxu0 %v1758
      %2228 = vmatprep.subr.bf16.mxu0 %v1750
      %2229 = vmatpush2.bf16.msra.mxu0 %v1749
      %2230 = vmatprep.subr.bf16.mxu0 %v1741
      %2231 = vmatpush2.bf16.msra.mxu0 %v1740
      %2232 = vmatprep.subr.bf16.mxu0 %v1732
      %2233 = vmatpush2.bf16.msra.mxu0 %v1731
      %2234 = vmatprep.subr.bf16.mxu0 %v1723
      %2235 = vmatpush2.bf16.msra.mxu0 %v1722
      %2236 = vmatprep.subr.bf16.mxu0 %v1714
      %2237 = vmatpush2.bf16.msra.mxu0 %v1713
      %2238 = vmatprep.subr.bf16.mxu0 %v1705
      %2239 = vmatpush2.bf16.msra.mxu0 %v1704
      %2240 = vmatprep.mubr.bf16.mxu0 %v707
      %2241 = vmatmul.mubr.bf16.gmra.mxu0 %v706
      %v2242 = vpop.f32.mrf.mxu0
      %v2243 = vadd.f32 0.0, %v2242
      %v2244 = vpop.f32.mrf.mxu0
      %v2245 = vadd.f32 0.0, %v2244
      %v2246 = vpop.f32.mrf.mxu0
      %v2247 = vadd.f32 0.0, %v2246
      %v2248 = vpop.f32.mrf.mxu0
      %v2249 = vadd.f32 0.0, %v2248
      %2250 = vmatprep.mubr.bf16.mxu0 %v710
      %2251 = vmatmul.mubr.bf16.gmra.mxu0 %v709
      %v2252 = vpop.f32.mrf.mxu0
      %v2253 = vadd.f32 0.0, %v2252
      %v2254 = vpop.f32.mrf.mxu0
      %v2255 = vadd.f32 0.0, %v2254
      %v2256 = vpop.f32.mrf.mxu0
      %v2257 = vadd.f32 0.0, %v2256
      %v2258 = vpop.f32.mrf.mxu0
      %v2259 = vadd.f32 0.0, %v2258
      %2260 = vmatprep.mubr.bf16.mxu0 %v713
      %2261 = vmatmul.mubr.bf16.gmra.mxu0 %v712
      %v2262 = vpop.f32.mrf.mxu0
      %v2263 = vadd.f32 0.0, %v2262
      %v2264 = vpop.f32.mrf.mxu0
      %v2265 = vadd.f32 0.0, %v2264
      %v2266 = vpop.f32.mrf.mxu0
      %v2267 = vadd.f32 0.0, %v2266
      %v2268 = vpop.f32.mrf.mxu0
      %v2269 = vadd.f32 0.0, %v2268
      %2270 = vmatprep.mubr.bf16.mxu0 %v716
      %2271 = vmatmul.mubr.bf16.gmra.mxu0 %v715
      %v2272 = vpop.f32.mrf.mxu0
      %v2273 = vadd.f32 0.0, %v2272
      %v2274 = vpop.f32.mrf.mxu0
      %v2275 = vadd.f32 0.0, %v2274
      %v2276 = vpop.f32.mrf.mxu0
      %v2277 = vadd.f32 0.0, %v2276
      %v2278 = vpop.f32.mrf.mxu0
      %v2279 = vadd.f32 0.0, %v2278
      %2280 = vdwg.mxu0
      %2281 = vmatprep.subr.bf16.mxu0 %v1840
      %2282 = vmatpush1.bf16.msra.mxu0 %v1839
      %2283 = vmatprep.subr.bf16.mxu0 %v1831
      %2284 = vmatpush1.bf16.msra.mxu0 %v1830
      %2285 = vmatprep.subr.bf16.mxu0 %v1822
      %2286 = vmatpush1.bf16.msra.mxu0 %v1821
      %2287 = vmatprep.subr.bf16.mxu0 %v1813
      %2288 = vmatpush1.bf16.msra.mxu0 %v1812
      %2289 = vmatprep.subr.bf16.mxu0 %v1804
      %2290 = vmatpush1.bf16.msra.mxu0 %v1803
      %2291 = vmatprep.subr.bf16.mxu0 %v1795
      %2292 = vmatpush1.bf16.msra.mxu0 %v1794
      %2293 = vmatprep.subr.bf16.mxu0 %v1786
      %2294 = vmatpush1.bf16.msra.mxu0 %v1785
      %2295 = vmatprep.subr.bf16.mxu0 %v1777
      %2296 = vmatpush1.bf16.msra.mxu0 %v1776
      %2297 = vmatprep.subr.bf16.mxu0 0
      %2298 = vmatpush2.bf16.msra.mxu0 0
      %2299 = vmatprep.subr.bf16.mxu0 0
      %2300 = vmatpush2.bf16.msra.mxu0 0
      %2301 = vmatprep.subr.bf16.mxu0 0
      %2302 = vmatpush2.bf16.msra.mxu0 0
      %2303 = vmatprep.subr.bf16.mxu0 0
      %2304 = vmatpush2.bf16.msra.mxu0 0
      %2305 = vmatprep.subr.bf16.mxu0 0
      %2306 = vmatpush2.bf16.msra.mxu0 0
      %2307 = vmatprep.subr.bf16.mxu0 0
      %2308 = vmatpush2.bf16.msra.mxu0 0
      %2309 = vmatprep.subr.bf16.mxu0 0
      %2310 = vmatpush2.bf16.msra.mxu0 0
      %2311 = vmatprep.subr.bf16.mxu0 0
      %2312 = vmatpush2.bf16.msra.mxu0 0
      %2313 = vmatprep.mubr.bf16.mxu0 0
      %2314 = vmatmul.mubr.bf16.gmra.mxu0 %v708
      %v2315 = vpop.f32.mrf.mxu0
      %v2316 = vadd.f32 %v2243, %v2315
      %v2317 = vpop.f32.mrf.mxu0
      %v2318 = vadd.f32 %v2245, %v2317
      %v2319 = vpop.f32.mrf.mxu0
      %v2320 = vadd.f32 %v2247, %v2319
      %v2321 = vpop.f32.mrf.mxu0
      %v2322 = vadd.f32 %v2249, %v2321
      %2323 = vmatprep.mubr.bf16.mxu0 0
      %2324 = vmatmul.mubr.bf16.gmra.mxu0 %v711
      %v2325 = vpop.f32.mrf.mxu0
      %v2326 = vadd.f32 %v2253, %v2325
      %v2327 = vpop.f32.mrf.mxu0
      %v2328 = vadd.f32 %v2255, %v2327
      %v2329 = vpop.f32.mrf.mxu0
      %v2330 = vadd.f32 %v2257, %v2329
      %v2331 = vpop.f32.mrf.mxu0
      %v2332 = vadd.f32 %v2259, %v2331
      %2333 = vmatprep.mubr.bf16.mxu0 0
      %2334 = vmatmul.mubr.bf16.gmra.mxu0 %v714
      %v2335 = vpop.f32.mrf.mxu0
      %v2336 = vadd.f32 %v2263, %v2335
      %v2337 = vpop.f32.mrf.mxu0
      %v2338 = vadd.f32 %v2265, %v2337
      %v2339 = vpop.f32.mrf.mxu0
      %v2340 = vadd.f32 %v2267, %v2339
      %v2341 = vpop.f32.mrf.mxu0
      %v2342 = vadd.f32 %v2269, %v2341
      %2343 = vmatprep.mubr.bf16.mxu0 0
      %2344 = vmatmul.mubr.bf16.gmra.mxu0 %v717
      %v2345 = vpop.f32.mrf.mxu0
      %v2346 = vadd.f32 %v2273, %v2345
      %v2347 = vpop.f32.mrf.mxu0
      %v2348 = vadd.f32 %v2275, %v2347
      %v2349 = vpop.f32.mrf.mxu0
      %v2350 = vadd.f32 %v2277, %v2349
      %v2351 = vpop.f32.mrf.mxu0
      %v2352 = vadd.f32 %v2279, %v2351
      %2353 = vdwg.mxu0
      %2354 = vmatprep.subr.bf16.mxu0 %v1698
      %2355 = vmatpush1.bf16.msra.mxu0 %v1697
      %2356 = vmatprep.subr.bf16.mxu0 %v1689
      %2357 = vmatpush1.bf16.msra.mxu0 %v1688
      %2358 = vmatprep.subr.bf16.mxu0 %v1680
      %2359 = vmatpush1.bf16.msra.mxu0 %v1679
      %2360 = vmatprep.subr.bf16.mxu0 %v1671
      %2361 = vmatpush1.bf16.msra.mxu0 %v1670
      %2362 = vmatprep.subr.bf16.mxu0 %v1662
      %2363 = vmatpush1.bf16.msra.mxu0 %v1661
      %2364 = vmatprep.subr.bf16.mxu0 %v1653
      %2365 = vmatpush1.bf16.msra.mxu0 %v1652
      %2366 = vmatprep.subr.bf16.mxu0 %v1644
      %2367 = vmatpush1.bf16.msra.mxu0 %v1643
      %2368 = vmatprep.subr.bf16.mxu0 %v1635
      %2369 = vmatpush1.bf16.msra.mxu0 %v1634
      %2370 = vmatprep.subr.bf16.mxu0 %v1770
      %2371 = vmatpush2.bf16.msra.mxu0 %v1769
      %2372 = vmatprep.subr.bf16.mxu0 %v1761
      %2373 = vmatpush2.bf16.msra.mxu0 %v1760
      %2374 = vmatprep.subr.bf16.mxu0 %v1752
      %2375 = vmatpush2.bf16.msra.mxu0 %v1751
      %2376 = vmatprep.subr.bf16.mxu0 %v1743
      %2377 = vmatpush2.bf16.msra.mxu0 %v1742
      %2378 = vmatprep.subr.bf16.mxu0 %v1734
      %2379 = vmatpush2.bf16.msra.mxu0 %v1733
      %2380 = vmatprep.subr.bf16.mxu0 %v1725
      %2381 = vmatpush2.bf16.msra.mxu0 %v1724
      %2382 = vmatprep.subr.bf16.mxu0 %v1716
      %2383 = vmatpush2.bf16.msra.mxu0 %v1715
      %2384 = vmatprep.subr.bf16.mxu0 %v1707
      %2385 = vmatpush2.bf16.msra.mxu0 %v1706
      %2386 = vmatprep.mubr.bf16.mxu0 %v707
      %2387 = vmatmul.mubr.bf16.gmra.mxu0 %v706
      %v2388 = vpop.f32.mrf.mxu0
      %v2389 = vadd.f32 0.0, %v2388
      %v2390 = vpop.f32.mrf.mxu0
      %v2391 = vadd.f32 0.0, %v2390
      %v2392 = vpop.f32.mrf.mxu0
      %v2393 = vadd.f32 0.0, %v2392
      %v2394 = vpop.f32.mrf.mxu0
      %v2395 = vadd.f32 0.0, %v2394
      %2396 = vmatprep.mubr.bf16.mxu0 %v710
      %2397 = vmatmul.mubr.bf16.gmra.mxu0 %v709
      %v2398 = vpop.f32.mrf.mxu0
      %v2399 = vadd.f32 0.0, %v2398
      %v2400 = vpop.f32.mrf.mxu0
      %v2401 = vadd.f32 0.0, %v2400
      %v2402 = vpop.f32.mrf.mxu0
      %v2403 = vadd.f32 0.0, %v2402
      %v2404 = vpop.f32.mrf.mxu0
      %v2405 = vadd.f32 0.0, %v2404
      %2406 = vmatprep.mubr.bf16.mxu0 %v713
      %2407 = vmatmul.mubr.bf16.gmra.mxu0 %v712
      %v2408 = vpop.f32.mrf.mxu0
      %v2409 = vadd.f32 0.0, %v2408
      %v2410 = vpop.f32.mrf.mxu0
      %v2411 = vadd.f32 0.0, %v2410
      %v2412 = vpop.f32.mrf.mxu0
      %v2413 = vadd.f32 0.0, %v2412
      %v2414 = vpop.f32.mrf.mxu0
      %v2415 = vadd.f32 0.0, %v2414
      %2416 = vmatprep.mubr.bf16.mxu0 %v716
      %2417 = vmatmul.mubr.bf16.gmra.mxu0 %v715
      %v2418 = vpop.f32.mrf.mxu0
      %v2419 = vadd.f32 0.0, %v2418
      %v2420 = vpop.f32.mrf.mxu0
      %v2421 = vadd.f32 0.0, %v2420
      %v2422 = vpop.f32.mrf.mxu0
      %v2423 = vadd.f32 0.0, %v2422
      %v2424 = vpop.f32.mrf.mxu0
      %v2425 = vadd.f32 0.0, %v2424
      %2426 = vdwg.mxu0
      %2427 = vmatprep.subr.bf16.mxu0 %v1842
      %2428 = vmatpush1.bf16.msra.mxu0 %v1841
      %2429 = vmatprep.subr.bf16.mxu0 %v1833
      %2430 = vmatpush1.bf16.msra.mxu0 %v1832
      %2431 = vmatprep.subr.bf16.mxu0 %v1824
      %2432 = vmatpush1.bf16.msra.mxu0 %v1823
      %2433 = vmatprep.subr.bf16.mxu0 %v1815
      %2434 = vmatpush1.bf16.msra.mxu0 %v1814
      %2435 = vmatprep.subr.bf16.mxu0 %v1806
      %2436 = vmatpush1.bf16.msra.mxu0 %v1805
      %2437 = vmatprep.subr.bf16.mxu0 %v1797
      %2438 = vmatpush1.bf16.msra.mxu0 %v1796
      %2439 = vmatprep.subr.bf16.mxu0 %v1788
      %2440 = vmatpush1.bf16.msra.mxu0 %v1787
      %2441 = vmatprep.subr.bf16.mxu0 %v1779
      %2442 = vmatpush1.bf16.msra.mxu0 %v1778
      %2443 = vmatprep.subr.bf16.mxu0 0
      %2444 = vmatpush2.bf16.msra.mxu0 0
      %2445 = vmatprep.subr.bf16.mxu0 0
      %2446 = vmatpush2.bf16.msra.mxu0 0
      %2447 = vmatprep.subr.bf16.mxu0 0
      %2448 = vmatpush2.bf16.msra.mxu0 0
      %2449 = vmatprep.subr.bf16.mxu0 0
      %2450 = vmatpush2.bf16.msra.mxu0 0
      %2451 = vmatprep.subr.bf16.mxu0 0
      %2452 = vmatpush2.bf16.msra.mxu0 0
      %2453 = vmatprep.subr.bf16.mxu0 0
      %2454 = vmatpush2.bf16.msra.mxu0 0
      %2455 = vmatprep.subr.bf16.mxu0 0
      %2456 = vmatpush2.bf16.msra.mxu0 0
      %2457 = vmatprep.subr.bf16.mxu0 0
      %2458 = vmatpush2.bf16.msra.mxu0 0
      %2459 = vmatprep.mubr.bf16.mxu0 0
      %2460 = vmatmul.mubr.bf16.gmra.mxu0 %v708
      %v2461 = vpop.f32.mrf.mxu0
      %v2462 = vadd.f32 %v2389, %v2461
      %v2463 = vpop.f32.mrf.mxu0
      %v2464 = vadd.f32 %v2391, %v2463
      %v2465 = vpop.f32.mrf.mxu0
      %v2466 = vadd.f32 %v2393, %v2465
      %v2467 = vpop.f32.mrf.mxu0
      %v2468 = vadd.f32 %v2395, %v2467
      %2469 = vmatprep.mubr.bf16.mxu0 0
      %2470 = vmatmul.mubr.bf16.gmra.mxu0 %v711
      %v2471 = vpop.f32.mrf.mxu0
      %v2472 = vadd.f32 %v2399, %v2471
      %v2473 = vpop.f32.mrf.mxu0
      %v2474 = vadd.f32 %v2401, %v2473
      %v2475 = vpop.f32.mrf.mxu0
      %v2476 = vadd.f32 %v2403, %v2475
      %v2477 = vpop.f32.mrf.mxu0
      %v2478 = vadd.f32 %v2405, %v2477
      %2479 = vmatprep.mubr.bf16.mxu0 0
      %2480 = vmatmul.mubr.bf16.gmra.mxu0 %v714
      %v2481 = vpop.f32.mrf.mxu0
      %v2482 = vadd.f32 %v2409, %v2481
      %v2483 = vpop.f32.mrf.mxu0
      %v2484 = vadd.f32 %v2411, %v2483
      %v2485 = vpop.f32.mrf.mxu0
      %v2486 = vadd.f32 %v2413, %v2485
      %v2487 = vpop.f32.mrf.mxu0
      %v2488 = vadd.f32 %v2415, %v2487
      %2489 = vmatprep.mubr.bf16.mxu0 0
      %2490 = vmatmul.mubr.bf16.gmra.mxu0 %v717
      %v2491 = vpop.f32.mrf.mxu0
      %v2492 = vadd.f32 %v2419, %v2491
      %v2493 = vpop.f32.mrf.mxu0
      %v2494 = vadd.f32 %v2421, %v2493
      %v2495 = vpop.f32.mrf.mxu0
      %v2496 = vadd.f32 %v2423, %v2495
      %v2497 = vpop.f32.mrf.mxu0
      %v2498 = vadd.f32 %v2425, %v2497
      %2499 = vdwg.mxu0
      %2500 = vmatprep.subr.bf16.mxu0 %v1700
      %2501 = vmatpush1.bf16.msra.mxu0 %v1699
      %2502 = vmatprep.subr.bf16.mxu0 %v1691
      %2503 = vmatpush1.bf16.msra.mxu0 %v1690
      %2504 = vmatprep.subr.bf16.mxu0 %v1682
      %2505 = vmatpush1.bf16.msra.mxu0 %v1681
      %2506 = vmatprep.subr.bf16.mxu0 %v1673
      %2507 = vmatpush1.bf16.msra.mxu0 %v1672
      %2508 = vmatprep.subr.bf16.mxu0 %v1664
      %2509 = vmatpush1.bf16.msra.mxu0 %v1663
      %2510 = vmatprep.subr.bf16.mxu0 %v1655
      %2511 = vmatpush1.bf16.msra.mxu0 %v1654
      %2512 = vmatprep.subr.bf16.mxu0 %v1646
      %2513 = vmatpush1.bf16.msra.mxu0 %v1645
      %2514 = vmatprep.subr.bf16.mxu0 %v1637
      %2515 = vmatpush1.bf16.msra.mxu0 %v1636
      %2516 = vmatprep.subr.bf16.mxu0 %v1772
      %2517 = vmatpush2.bf16.msra.mxu0 %v1771
      %2518 = vmatprep.subr.bf16.mxu0 %v1763
      %2519 = vmatpush2.bf16.msra.mxu0 %v1762
      %2520 = vmatprep.subr.bf16.mxu0 %v1754
      %2521 = vmatpush2.bf16.msra.mxu0 %v1753
      %2522 = vmatprep.subr.bf16.mxu0 %v1745
      %2523 = vmatpush2.bf16.msra.mxu0 %v1744
      %2524 = vmatprep.subr.bf16.mxu0 %v1736
      %2525 = vmatpush2.bf16.msra.mxu0 %v1735
      %2526 = vmatprep.subr.bf16.mxu0 %v1727
      %2527 = vmatpush2.bf16.msra.mxu0 %v1726
      %2528 = vmatprep.subr.bf16.mxu0 %v1718
      %2529 = vmatpush2.bf16.msra.mxu0 %v1717
      %2530 = vmatprep.subr.bf16.mxu0 %v1709
      %2531 = vmatpush2.bf16.msra.mxu0 %v1708
      %2532 = vmatprep.mubr.bf16.mxu0 %v707
      %2533 = vmatmul.mubr.bf16.gmra.mxu0 %v706
      %v2534 = vpop.f32.mrf.mxu0
      %v2535 = vadd.f32 0.0, %v2534
      %v2536 = vpop.f32.mrf.mxu0
      %v2537 = vadd.f32 0.0, %v2536
      %v2538 = vpop.f32.mrf.mxu0
      %v2539 = vadd.f32 0.0, %v2538
      %v2540 = vpop.f32.mrf.mxu0
      %v2541 = vadd.f32 0.0, %v2540
      %2542 = vmatprep.mubr.bf16.mxu0 %v710
      %2543 = vmatmul.mubr.bf16.gmra.mxu0 %v709
      %v2544 = vpop.f32.mrf.mxu0
      %v2545 = vadd.f32 0.0, %v2544
      %v2546 = vpop.f32.mrf.mxu0
      %v2547 = vadd.f32 0.0, %v2546
      %v2548 = vpop.f32.mrf.mxu0
      %v2549 = vadd.f32 0.0, %v2548
      %v2550 = vpop.f32.mrf.mxu0
      %v2551 = vadd.f32 0.0, %v2550
      %2552 = vmatprep.mubr.bf16.mxu0 %v713
      %2553 = vmatmul.mubr.bf16.gmra.mxu0 %v712
      %v2554 = vpop.f32.mrf.mxu0
      %v2555 = vadd.f32 0.0, %v2554
      %v2556 = vpop.f32.mrf.mxu0
      %v2557 = vadd.f32 0.0, %v2556
      %v2558 = vpop.f32.mrf.mxu0
      %v2559 = vadd.f32 0.0, %v2558
      %v2560 = vpop.f32.mrf.mxu0
      %v2561 = vadd.f32 0.0, %v2560
      %2562 = vmatprep.mubr.bf16.mxu0 %v716
      %2563 = vmatmul.mubr.bf16.gmra.mxu0 %v715
      %v2564 = vpop.f32.mrf.mxu0
      %v2565 = vadd.f32 0.0, %v2564
      %v2566 = vpop.f32.mrf.mxu0
      %v2567 = vadd.f32 0.0, %v2566
      %v2568 = vpop.f32.mrf.mxu0
      %v2569 = vadd.f32 0.0, %v2568
      %v2570 = vpop.f32.mrf.mxu0
      %v2571 = vadd.f32 0.0, %v2570
      %2572 = vdwg.mxu0
      %2573 = vmatprep.subr.bf16.mxu0 %v1844
      %2574 = vmatpush1.bf16.msra.mxu0 %v1843
      %2575 = vmatprep.subr.bf16.mxu0 %v1835
      %2576 = vmatpush1.bf16.msra.mxu0 %v1834
      %2577 = vmatprep.subr.bf16.mxu0 %v1826
      %2578 = vmatpush1.bf16.msra.mxu0 %v1825
      %2579 = vmatprep.subr.bf16.mxu0 %v1817
      %2580 = vmatpush1.bf16.msra.mxu0 %v1816
      %2581 = vmatprep.subr.bf16.mxu0 %v1808
      %2582 = vmatpush1.bf16.msra.mxu0 %v1807
      %2583 = vmatprep.subr.bf16.mxu0 %v1799
      %2584 = vmatpush1.bf16.msra.mxu0 %v1798
      %2585 = vmatprep.subr.bf16.mxu0 %v1790
      %2586 = vmatpush1.bf16.msra.mxu0 %v1789
      %2587 = vmatprep.subr.bf16.mxu0 %v1781
      %2588 = vmatpush1.bf16.msra.mxu0 %v1780
      %2589 = vmatprep.subr.bf16.mxu0 0
      %2590 = vmatpush2.bf16.msra.mxu0 0
      %2591 = vmatprep.subr.bf16.mxu0 0
      %2592 = vmatpush2.bf16.msra.mxu0 0
      %2593 = vmatprep.subr.bf16.mxu0 0
      %2594 = vmatpush2.bf16.msra.mxu0 0
      %2595 = vmatprep.subr.bf16.mxu0 0
      %2596 = vmatpush2.bf16.msra.mxu0 0
      %2597 = vmatprep.subr.bf16.mxu0 0
      %2598 = vmatpush2.bf16.msra.mxu0 0
      %2599 = vmatprep.subr.bf16.mxu0 0
      %2600 = vmatpush2.bf16.msra.mxu0 0
      %2601 = vmatprep.subr.bf16.mxu0 0
      %2602 = vmatpush2.bf16.msra.mxu0 0
      %2603 = vmatprep.subr.bf16.mxu0 0
      %2604 = vmatpush2.bf16.msra.mxu0 0
      %2605 = vmatprep.mubr.bf16.mxu0 0
      %2606 = vmatmul.mubr.bf16.gmra.mxu0 %v708
      %v2607 = vpop.f32.mrf.mxu0
      %v2608 = vadd.f32 %v2535, %v2607
      %v2609 = vpop.f32.mrf.mxu0
      %v2610 = vadd.f32 %v2537, %v2609
      %v2611 = vpop.f32.mrf.mxu0
      %v2612 = vadd.f32 %v2539, %v2611
      %v2613 = vpop.f32.mrf.mxu0
      %v2614 = vadd.f32 %v2541, %v2613
      %2615 = vmatprep.mubr.bf16.mxu0 0
      %2616 = vmatmul.mubr.bf16.gmra.mxu0 %v711
      %v2617 = vpop.f32.mrf.mxu0
      %v2618 = vadd.f32 %v2545, %v2617
      %v2619 = vpop.f32.mrf.mxu0
      %v2620 = vadd.f32 %v2547, %v2619
      %v2621 = vpop.f32.mrf.mxu0
      %v2622 = vadd.f32 %v2549, %v2621
      %v2623 = vpop.f32.mrf.mxu0
      %v2624 = vadd.f32 %v2551, %v2623
      %2625 = vmatprep.mubr.bf16.mxu0 0
      %2626 = vmatmul.mubr.bf16.gmra.mxu0 %v714
      %v2627 = vpop.f32.mrf.mxu0
      %v2628 = vadd.f32 %v2555, %v2627
      %v2629 = vpop.f32.mrf.mxu0
      %v2630 = vadd.f32 %v2557, %v2629
      %v2631 = vpop.f32.mrf.mxu0
      %v2632 = vadd.f32 %v2559, %v2631
      %v2633 = vpop.f32.mrf.mxu0
      %v2634 = vadd.f32 %v2561, %v2633
      %2635 = vmatprep.mubr.bf16.mxu0 0
      %2636 = vmatmul.mubr.bf16.gmra.mxu0 %v717
      %v2637 = vpop.f32.mrf.mxu0
      %v2638 = vadd.f32 %v2565, %v2637
      %v2639 = vpop.f32.mrf.mxu0
      %v2640 = vadd.f32 %v2567, %v2639
      %v2641 = vpop.f32.mrf.mxu0
      %v2642 = vadd.f32 %v2569, %v2641
      %v2643 = vpop.f32.mrf.mxu0
      %v2644 = vadd.f32 %v2571, %v2643
      %2645 = vdwg.mxu0
      %2646 = vmatprep.subr.bf16.mxu0 0
      %2647 = vmatpush1.bf16.msra.mxu0 %v1701
      %2648 = vmatprep.subr.bf16.mxu0 0
      %2649 = vmatpush1.bf16.msra.mxu0 %v1692
      %2650 = vmatprep.subr.bf16.mxu0 0
      %2651 = vmatpush1.bf16.msra.mxu0 %v1683
      %2652 = vmatprep.subr.bf16.mxu0 0
      %2653 = vmatpush1.bf16.msra.mxu0 %v1674
      %2654 = vmatprep.subr.bf16.mxu0 0
      %2655 = vmatpush1.bf16.msra.mxu0 %v1665
      %2656 = vmatprep.subr.bf16.mxu0 0
      %2657 = vmatpush1.bf16.msra.mxu0 %v1656
      %2658 = vmatprep.subr.bf16.mxu0 0
      %2659 = vmatpush1.bf16.msra.mxu0 %v1647
      %2660 = vmatprep.subr.bf16.mxu0 0
      %2661 = vmatpush1.bf16.msra.mxu0 %v1638
      %2662 = vmatprep.subr.bf16.mxu0 0
      %2663 = vmatpush2.bf16.msra.mxu0 %v1773
      %2664 = vmatprep.subr.bf16.mxu0 0
      %2665 = vmatpush2.bf16.msra.mxu0 %v1764
      %2666 = vmatprep.subr.bf16.mxu0 0
      %2667 = vmatpush2.bf16.msra.mxu0 %v1755
      %2668 = vmatprep.subr.bf16.mxu0 0
      %2669 = vmatpush2.bf16.msra.mxu0 %v1746
      %2670 = vmatprep.subr.bf16.mxu0 0
      %2671 = vmatpush2.bf16.msra.mxu0 %v1737
      %2672 = vmatprep.subr.bf16.mxu0 0
      %2673 = vmatpush2.bf16.msra.mxu0 %v1728
      %2674 = vmatprep.subr.bf16.mxu0 0
      %2675 = vmatpush2.bf16.msra.mxu0 %v1719
      %2676 = vmatprep.subr.bf16.mxu0 0
      %2677 = vmatpush2.bf16.msra.mxu0 %v1710
      %2678 = vmatprep.mubr.bf16.mxu0 %v707
      %2679 = vmatmul.mubr.bf16.gmra.mxu0 %v706
      %v2680 = vpop.f32.mrf.mxu0
      %v2681 = vadd.f32 0.0, %v2680
      %v2682 = vpop.f32.mrf.mxu0
      %v2683 = vpop.f32.mrf.mxu0
      %v2684 = vadd.f32 0.0, %v2683
      %v2685 = vpop.f32.mrf.mxu0
      %2686 = vmatprep.mubr.bf16.mxu0 %v710
      %2687 = vmatmul.mubr.bf16.gmra.mxu0 %v709
      %v2688 = vpop.f32.mrf.mxu0
      %v2689 = vadd.f32 0.0, %v2688
      %v2690 = vpop.f32.mrf.mxu0
      %v2691 = vpop.f32.mrf.mxu0
      %v2692 = vadd.f32 0.0, %v2691
      %v2693 = vpop.f32.mrf.mxu0
      %2694 = vmatprep.mubr.bf16.mxu0 %v713
      %2695 = vmatmul.mubr.bf16.gmra.mxu0 %v712
      %v2696 = vpop.f32.mrf.mxu0
      %v2697 = vadd.f32 0.0, %v2696
      %v2698 = vpop.f32.mrf.mxu0
      %v2699 = vpop.f32.mrf.mxu0
      %v2700 = vadd.f32 0.0, %v2699
      %v2701 = vpop.f32.mrf.mxu0
      %2702 = vmatprep.mubr.bf16.mxu0 %v716
      %2703 = vmatmul.mubr.bf16.gmra.mxu0 %v715
      %v2704 = vpop.f32.mrf.mxu0
      %v2705 = vadd.f32 0.0, %v2704
      %v2706 = vpop.f32.mrf.mxu0
      %v2707 = vpop.f32.mrf.mxu0
      %v2708 = vadd.f32 0.0, %v2707
      %v2709 = vpop.f32.mrf.mxu0
      %2710 = vdwg.mxu0
      %2711 = vmatprep.subr.bf16.mxu0 0
      %2712 = vmatpush1.bf16.msra.mxu0 %v1845
      %2713 = vmatprep.subr.bf16.mxu0 0
      %2714 = vmatpush1.bf16.msra.mxu0 %v1836
      %2715 = vmatprep.subr.bf16.mxu0 0
      %2716 = vmatpush1.bf16.msra.mxu0 %v1827
      %2717 = vmatprep.subr.bf16.mxu0 0
      %2718 = vmatpush1.bf16.msra.mxu0 %v1818
      %2719 = vmatprep.subr.bf16.mxu0 0
      %2720 = vmatpush1.bf16.msra.mxu0 %v1809
      %2721 = vmatprep.subr.bf16.mxu0 0
      %2722 = vmatpush1.bf16.msra.mxu0 %v1800
      %2723 = vmatprep.subr.bf16.mxu0 0
      %2724 = vmatpush1.bf16.msra.mxu0 %v1791
      %2725 = vmatprep.subr.bf16.mxu0 0
      %2726 = vmatpush1.bf16.msra.mxu0 %v1782
      %2727 = vmatprep.subr.bf16.mxu0 0
      %2728 = vmatpush2.bf16.msra.mxu0 0
      %2729 = vmatprep.subr.bf16.mxu0 0
      %2730 = vmatpush2.bf16.msra.mxu0 0
      %2731 = vmatprep.subr.bf16.mxu0 0
      %2732 = vmatpush2.bf16.msra.mxu0 0
      %2733 = vmatprep.subr.bf16.mxu0 0
      %2734 = vmatpush2.bf16.msra.mxu0 0
      %2735 = vmatprep.subr.bf16.mxu0 0
      %2736 = vmatpush2.bf16.msra.mxu0 0
      %2737 = vmatprep.subr.bf16.mxu0 0
      %2738 = vmatpush2.bf16.msra.mxu0 0
      %2739 = vmatprep.subr.bf16.mxu0 0
      %2740 = vmatpush2.bf16.msra.mxu0 0
      %2741 = vmatprep.subr.bf16.mxu0 0
      %2742 = vmatpush2.bf16.msra.mxu0 0
      %2743 = vmatprep.mubr.bf16.mxu0 0
      %2744 = vmatmul.mubr.bf16.gmra.mxu0 %v708
      %v2745 = vpop.f32.mrf.mxu0
      %v2746 = vadd.f32 %v2681, %v2745
      %v2747 = vpop.f32.mrf.mxu0
      %v2748 = vpop.f32.mrf.mxu0
      %v2749 = vadd.f32 %v2684, %v2748
      %v2750 = vpop.f32.mrf.mxu0
      %2751 = vmatprep.mubr.bf16.mxu0 0
      %2752 = vmatmul.mubr.bf16.gmra.mxu0 %v711
      %v2753 = vpop.f32.mrf.mxu0
      %v2754 = vadd.f32 %v2689, %v2753
      %v2755 = vpop.f32.mrf.mxu0
      %v2756 = vpop.f32.mrf.mxu0
      %v2757 = vadd.f32 %v2692, %v2756
      %v2758 = vpop.f32.mrf.mxu0
      %2759 = vmatprep.mubr.bf16.mxu0 0
      %2760 = vmatmul.mubr.bf16.gmra.mxu0 %v714
      %v2761 = vpop.f32.mrf.mxu0
      %v2762 = vadd.f32 %v2697, %v2761
      %v2763 = vpop.f32.mrf.mxu0
      %v2764 = vpop.f32.mrf.mxu0
      %v2765 = vadd.f32 %v2700, %v2764
      %v2766 = vpop.f32.mrf.mxu0
      %2767 = vmatprep.mubr.bf16.mxu0 0
      %2768 = vmatmul.mubr.bf16.gmra.mxu0 %v717
      %v2769 = vpop.f32.mrf.mxu0
      %v2770 = vadd.f32 %v2705, %v2769
      %v2771 = vpop.f32.mrf.mxu0
      %v2772 = vpop.f32.mrf.mxu0
      %v2773 = vadd.f32 %v2708, %v2772
      %v2774 = vpop.f32.mrf.mxu0
      %2775 = vdwg.mxu0
      %v2776 = vpack.c.bf16 %v2174, %v2170
      %v2777 = vpack.c.bf16 %v2176, %v2172
      %v2778 = vpack.c.bf16 %v2320, %v2316
      %v2779 = vpack.c.bf16 %v2322, %v2318
      %v2780 = vpack.c.bf16 %v2466, %v2462
      %v2781 = vpack.c.bf16 %v2468, %v2464
      %v2782 = vpack.c.bf16 %v2612, %v2608
      %v2783 = vpack.c.bf16 %v2614, %v2610
      %v2784 = vpack.c.bf16 %v2749, %v2746
      %v2785 = vpack.c.bf16 %v2184, %v2180
      %v2786 = vpack.c.bf16 %v2186, %v2182
      %v2787 = vpack.c.bf16 %v2330, %v2326
      %v2788 = vpack.c.bf16 %v2332, %v2328
      %v2789 = vpack.c.bf16 %v2476, %v2472
      %v2790 = vpack.c.bf16 %v2478, %v2474
      %v2791 = vpack.c.bf16 %v2622, %v2618
      %v2792 = vpack.c.bf16 %v2624, %v2620
      %v2793 = vpack.c.bf16 %v2757, %v2754
      %v2794 = vpack.c.bf16 %v2194, %v2190
      %v2795 = vpack.c.bf16 %v2196, %v2192
      %v2796 = vpack.c.bf16 %v2340, %v2336
      %v2797 = vpack.c.bf16 %v2342, %v2338
      %v2798 = vpack.c.bf16 %v2486, %v2482
      %v2799 = vpack.c.bf16 %v2488, %v2484
      %v2800 = vpack.c.bf16 %v2632, %v2628
      %v2801 = vpack.c.bf16 %v2634, %v2630
      %v2802 = vpack.c.bf16 %v2765, %v2762
      %v2803 = vpack.c.bf16 %v2204, %v2200
      %v2804 = vpack.c.bf16 %v2206, %v2202
      %v2805 = vpack.c.bf16 %v2350, %v2346
      %v2806 = vpack.c.bf16 %v2352, %v2348
      %v2807 = vpack.c.bf16 %v2496, %v2492
      %v2808 = vpack.c.bf16 %v2498, %v2494
      %v2809 = vpack.c.bf16 %v2642, %v2638
      %v2810 = vpack.c.bf16 %v2644, %v2640
      %v2811 = vpack.c.bf16 %v2773, %v2770
      %v2812 = vlaneseq
      %v2813 = vshrl.u32 %v2812, 7
      %v2814 = vadd.s32 %v2813, 8
      %v2815 = vadd.s32 %v2813, 16
      %v2816 = vadd.s32 %v2813, 24
      %v2817 = vadd.s32 %v2813, 32
      %v2818 = vadd.s32 %v2813, 40
      %v2819 = vadd.s32 %v2813, 48
      %v2820 = vadd.s32 %v2813, 56
      %v2821 = vlaneseq
      %v2822 = vand.u32 %v2821, 127
      %vm2823 = vcmp.le.s32.totalorder %v2822, %v2813
      %vm2824 = vcmp.le.s32.totalorder %v2822, %v2814
      %vm2825 = vcmp.le.s32.totalorder %v2822, %v2815
      %vm2826 = vcmp.le.s32.totalorder %v2822, %v2816
      %vm2827 = vcmp.le.s32.totalorder %v2822, %v2817
      %vm2828 = vcmp.le.s32.totalorder %v2822, %v2818
      %vm2829 = vcmp.le.s32.totalorder %v2822, %v2819
      %vm2830 = vcmp.le.s32.totalorder %v2822, %v2820
      %v2831 = vld [vmem:[%s4] sm:$0xff]
      %v2832 = vld [vmem:[%s4 + $0x8] sm:$0xf]
      %v2833 = vld [vmem:[%s4 + $0xc] sm:$0xff]
      %v2834 = vld [vmem:[%s4 + $0x14] sm:$0xf]
      %v2835 = vld [vmem:[%s4 + $0x18] sm:$0xff]
      %v2836 = vld [vmem:[%s4 + $0x20] sm:$0xf]
      %v2837 = vld [vmem:[%s4 + $0x24] sm:$0xff]
      %v2838 = vld [vmem:[%s4 + $0x2c] sm:$0xf]
      %v2839 = vld [vmem:[%s4 + $0x30] sm:$0xff]
      %v2840 = vld [vmem:[%s4 + $0x38] sm:$0xf]
      %v2841 = vld [vmem:[%s4 + $0x3c] sm:$0xff]
      %v2842 = vld [vmem:[%s4 + $0x44] sm:$0xf]
      %v2843 = vld [vmem:[%s4 + $0x48] sm:$0xff]
      %v2844 = vld [vmem:[%s4 + $0x50] sm:$0xf]
      %v2845 = vld [vmem:[%s4 + $0x54] sm:$0xff]
      %v2846 = vld [vmem:[%s4 + $0x5c] sm:$0xf]
      %v2847 = vld [vmem:[%s4 + $0x60] sm:$0xff]
      %v2848 = vld [vmem:[%s4 + $0x68] sm:$0xf]
      %v2849 = vld [vmem:[%s4 + $0x6c] sm:$0xff]
      %v2850 = vld [vmem:[%s4 + $0x74] sm:$0xf]
      %v2851 = vld [vmem:[%s4 + $0x78] sm:$0xff]
      %v2852 = vld [vmem:[%s4 + $0x80] sm:$0xf]
      %v2853 = vld [vmem:[%s4 + $0x84] sm:$0xff]
      %v2854 = vld [vmem:[%s4 + $0x8c] sm:$0xf]
      %v2855 = vld [vmem:[%s4 + $0x90] sm:$0xff]
      %v2856 = vld [vmem:[%s4 + $0x98] sm:$0xf]
      %v2857 = vld [vmem:[%s4 + $0x9c] sm:$0xff]
      %v2858 = vld [vmem:[%s4 + $0xa4] sm:$0xf]
      %v2859 = vld [vmem:[%s4 + $0xa8] sm:$0xff]
      %v2860 = vld [vmem:[%s4 + $0xb0] sm:$0xf]
      %v2861 = vld [vmem:[%s4 + $0xb4] sm:$0xff]
      %v2862 = vld [vmem:[%s4 + $0xbc] sm:$0xf]
      %v2863 = vld [vmem:[%s4 + $0xc0] sm:$0xff]
      %v2864 = vld [vmem:[%s4 + $0xc8] sm:$0xf]
      %v2865 = vld [vmem:[%s4 + $0xcc] sm:$0xff]
      %v2866 = vld [vmem:[%s4 + $0xd4] sm:$0xf]
      %v2867 = vld [vmem:[%s4 + $0xd8] sm:$0xff]
      %v2868 = vld [vmem:[%s4 + $0xe0] sm:$0xf]
      %v2869 = vld [vmem:[%s4 + $0xe4] sm:$0xff]
      %v2870 = vld [vmem:[%s4 + $0xec] sm:$0xf]
      %v2871 = vld [vmem:[%s4 + $0xf0] sm:$0xff]
      %v2872 = vld [vmem:[%s4 + $0xf8] sm:$0xf]
      %v2873 = vld [vmem:[%s4 + $0xfc] sm:$0xff]
      %v2874 = vld [vmem:[%s4 + $0x104] sm:$0xf]
      %v2875 = vld [vmem:[%s4 + $0x108] sm:$0xff]
      %v2876 = vld [vmem:[%s4 + $0x110] sm:$0xf]
      %v2877 = vld [vmem:[%s4 + $0x114] sm:$0xff]
      %v2878 = vld [vmem:[%s4 + $0x11c] sm:$0xf]
      %v2879 = vld [vmem:[%s4 + $0x120] sm:$0xff]
      %v2880 = vld [vmem:[%s4 + $0x128] sm:$0xf]
      %v2881 = vld [vmem:[%s4 + $0x12c] sm:$0xff]
      %v2882 = vld [vmem:[%s4 + $0x134] sm:$0xf]
      %v2883 = vld [vmem:[%s4 + $0x138] sm:$0xff]
      %v2884 = vld [vmem:[%s4 + $0x140] sm:$0xf]
      %v2885 = vld [vmem:[%s4 + $0x144] sm:$0xff]
      %v2886 = vld [vmem:[%s4 + $0x14c] sm:$0xf]
      %v2887 = vld [vmem:[%s4 + $0x150] sm:$0xff]
      %v2888 = vld [vmem:[%s4 + $0x158] sm:$0xf]
      %v2889 = vld [vmem:[%s4 + $0x15c] sm:$0xff]
      %v2890 = vld [vmem:[%s4 + $0x164] sm:$0xf]
      %v2891 = vld [vmem:[%s4 + $0x168] sm:$0xff]
      %v2892 = vld [vmem:[%s4 + $0x170] sm:$0xf]
      %v2893 = vld [vmem:[%s4 + $0x174] sm:$0xff]
      %v2894 = vld [vmem:[%s4 + $0x17c] sm:$0xf]
      %v2895 = vld [vmem:[%s4 + $0x180] sm:$0xff]
      %v2896 = vld [vmem:[%s4 + $0x188] sm:$0xf]
      %v2897 = vld [vmem:[%s4 + $0x18c] sm:$0xff]
      %v2898 = vld [vmem:[%s4 + $0x194] sm:$0xf]
      %v2899 = vld [vmem:[%s4 + $0x198] sm:$0xff]
      %v2900 = vld [vmem:[%s4 + $0x1a0] sm:$0xf]
      %v2901 = vld [vmem:[%s4 + $0x1a4] sm:$0xff]
      %v2902 = vld [vmem:[%s4 + $0x1ac] sm:$0xf]
      %v2903 = vld [vmem:[%s4 + $0x1b0] sm:$0xff]
      %v2904 = vld [vmem:[%s4 + $0x1b8] sm:$0xf]
      %v2905 = vld [vmem:[%s4 + $0x1bc] sm:$0xff]
      %v2906 = vld [vmem:[%s4 + $0x1c4] sm:$0xf]
      %v2907 = vld [vmem:[%s4 + $0x1c8] sm:$0xff]
      %v2908 = vld [vmem:[%s4 + $0x1d0] sm:$0xf]
      %v2909 = vld [vmem:[%s4 + $0x1d4] sm:$0xff]
      %v2910 = vld [vmem:[%s4 + $0x1dc] sm:$0xf]
      %v2911 = vld [vmem:[%s4 + $0x1e0] sm:$0xff]
      %v2912 = vld [vmem:[%s4 + $0x1e8] sm:$0xf]
      %v2913 = vld [vmem:[%s4 + $0x1ec] sm:$0xff]
      %v2914 = vld [vmem:[%s4 + $0x1f4] sm:$0xf]
      %v2915 = vld [vmem:[%s4 + $0x1f8] sm:$0xff]
      %v2916 = vld [vmem:[%s4 + $0x200] sm:$0xf]
      %v2917 = vld [vmem:[%s4 + $0x204] sm:$0xff]
      %v2918 = vld [vmem:[%s4 + $0x20c] sm:$0xf]
      %v2919 = vld [vmem:[%s4 + $0x210] sm:$0xff]
      %v2920 = vld [vmem:[%s4 + $0x218] sm:$0xf]
      %v2921 = vld [vmem:[%s4 + $0x21c] sm:$0xff]
      %v2922 = vld [vmem:[%s4 + $0x224] sm:$0xf]
      %v2923 = vld [vmem:[%s4 + $0x228] sm:$0xff]
      %v2924 = vld [vmem:[%s4 + $0x230] sm:$0xf]
      %v2925 = vld [vmem:[%s4 + $0x234] sm:$0xff]
      %v2926 = vld [vmem:[%s4 + $0x23c] sm:$0xf]
      %v2927 = vld [vmem:[%s5] sm:$0x7]
      %v2929 = vlaneseq
      %v2930 = vshrl.u32 %v2929, 7
      %v2931 = vsub.s32 0, %v2930
      %v2932 = vrot.slane %v2927, %v2931
      %v2933 = vlaneseq
      %v2934 = vshrl.u32 %v2933, 7
      %v2935 = vsub.s32 1, %v2934
      %v2936 = vrot.slane %v2927, %v2935
      %v2937 = vlaneseq
      %v2938 = vshrl.u32 %v2937, 7
      %v2939 = vsub.s32 2, %v2938
      %v2940 = vrot.slane %v2927, %v2939
      %v2944 = vadd.f32 %v2932, %v431
      %v2945 = vadd.f32 %v2936, %v432
      %v2946 = vadd.f32 %v2940, %v433
      %v2947 = vadd.f32 %v2932, %v434
      %v2948 = vadd.f32 %v2936, %v435
      %v2949 = vadd.f32 %v2940, %v436
      %v2950 = vadd.f32 %v2932, %v437
      %v2951 = vadd.f32 %v2936, %v438
      %v2952 = vadd.f32 %v2940, %v439
      %v2953 = vadd.f32 %v2932, %v440
      %v2954 = vadd.f32 %v2936, %v441
      %v2955 = vadd.f32 %v2940, %v442
      %v2956 = vadd.f32 %v2932, %v443
      %v2957 = vadd.f32 %v2936, %v444
      %v2958 = vadd.f32 %v2940, %v445
      %v2959 = vadd.f32 %v2932, %v446
      %v2960 = vadd.f32 %v2936, %v447
      %v2961 = vadd.f32 %v2940, %v448
      %v2962 = vadd.f32 %v2932, %v449
      %v2963 = vadd.f32 %v2936, %v450
      %v2964 = vadd.f32 %v2940, %v451
      %v2965 = vadd.f32 %v2932, %v452
      %v2966 = vadd.f32 %v2936, %v453
      %v2967 = vadd.f32 %v2940, %v454
      %vm2968 = vcmask 523264
      %v2970 = vsel %vm2968, %v2776, 0
      %v2973 = vsel %vm2968, %v2785, 0
      %v2976 = vsel %vm2968, %v2794, 0
      %v2979 = vsel %vm2968, %v2803, 0
      %v2982 = vsel %vm2968, %v2779, 0
      %v2985 = vsel %vm2968, %v2788, 0
      %v2988 = vsel %vm2968, %v2797, 0
      %v2991 = vsel %vm2968, %v2806, 0
      %2993 = vmatprep.subr.bf16.mxu0 0
      %2994 = vmatpush1.bf16.xpose.msra.mxu0 0
      %2995 = vmatprep.subr.bf16.mxu0 0
      %2996 = vmatpush1.bf16.xpose.msra.mxu0 0
      %2997 = vmatprep.subr.bf16.mxu0 0
      %2998 = vmatpush1.bf16.xpose.msra.mxu0 0
      %2999 = vmatprep.subr.bf16.mxu0 0
      %3000 = vmatpush1.bf16.xpose.msra.mxu0 0
      %3001 = vmatprep.subr.bf16.mxu0 0
      %3002 = vmatpush1.bf16.xpose.msra.mxu0 %v2991
      %3003 = vmatprep.subr.bf16.mxu0 0
      %3004 = vmatpush1.bf16.xpose.msra.mxu0 %v2988
      %3005 = vmatprep.subr.bf16.mxu0 0
      %3006 = vmatpush1.bf16.xpose.msra.mxu0 %v2985
      %3007 = vmatprep.subr.bf16.mxu0 0
      %3008 = vmatpush1.bf16.xpose.msra.mxu0 %v2982
      %3009 = vmatprep.subr.bf16.mxu0 0
      %3010 = vmatpush2.bf16.xpose.msra.mxu0 0
      %3011 = vmatprep.subr.bf16.mxu0 0
      %3012 = vmatpush2.bf16.xpose.msra.mxu0 0
      %3013 = vmatprep.subr.bf16.mxu0 0
      %3014 = vmatpush2.bf16.xpose.msra.mxu0 0
      %3015 = vmatprep.subr.bf16.mxu0 0
      %3016 = vmatpush2.bf16.xpose.msra.mxu0 0
      %3017 = vmatprep.subr.bf16.mxu0 0
      %3018 = vmatpush2.bf16.xpose.msra.mxu0 0
      %3019 = vmatprep.subr.bf16.mxu0 0
      %3020 = vmatpush2.bf16.xpose.msra.mxu0 0
      %3021 = vmatprep.subr.bf16.mxu0 0
      %3022 = vmatpush2.bf16.xpose.msra.mxu0 0
      %3023 = vmatprep.subr.bf16.mxu0 0
      %3024 = vmatpush2.bf16.xpose.msra.mxu0 0
      %3025 = vmatprep.mubr.bf16.mxu0 0
      %3026 = vmatmul.mubr.bf16.gmra.mxu0 %v2970
      %v3027 = vpop.f32.mrf.mxu0
      %v3028 = vadd.f32 0.0, %v3027
      %v3029 = vpop.f32.mrf.mxu0
      %v3030 = vpop.f32.mrf.mxu0
      %v3031 = vadd.f32 0.0, %v3030
      %v3032 = vpop.f32.mrf.mxu0
      %3033 = vmatprep.mubr.bf16.mxu0 0
      %3034 = vmatmul.mubr.bf16.gmra.mxu0 %v2973
      %v3035 = vpop.f32.mrf.mxu0
      %v3036 = vadd.f32 0.0, %v3035
      %v3037 = vpop.f32.mrf.mxu0
      %v3038 = vpop.f32.mrf.mxu0
      %v3039 = vadd.f32 0.0, %v3038
      %v3040 = vpop.f32.mrf.mxu0
      %3041 = vmatprep.mubr.bf16.mxu0 0
      %3042 = vmatmul.mubr.bf16.gmra.mxu0 %v2976
      %v3043 = vpop.f32.mrf.mxu0
      %v3044 = vadd.f32 0.0, %v3043
      %v3045 = vpop.f32.mrf.mxu0
      %v3046 = vpop.f32.mrf.mxu0
      %v3047 = vadd.f32 0.0, %v3046
      %v3048 = vpop.f32.mrf.mxu0
      %3049 = vmatprep.mubr.bf16.mxu0 0
      %3050 = vmatmul.mubr.bf16.gmra.mxu0 %v2979
      %v3051 = vpop.f32.mrf.mxu0
      %v3052 = vadd.f32 0.0, %v3051
      %v3053 = vpop.f32.mrf.mxu0
      %v3054 = vpop.f32.mrf.mxu0
      %v3055 = vadd.f32 0.0, %v3054
      %v3056 = vpop.f32.mrf.mxu0
      %3057 = vdwg.mxu0
      %v3058 = vmul.f32 %v3028, 0.05103104
      %v3059 = vmul.f32 %v3031, 0.05103104
      %v3060 = vmul.f32 %v3036, 0.05103104
      %v3061 = vmul.f32 %v3039, 0.05103104
      %v3062 = vmul.f32 %v3044, 0.05103104
      %v3063 = vmul.f32 %v3047, 0.05103104
      %v3064 = vmul.f32 %v3052, 0.05103104
      %v3065 = vmul.f32 %v3055, 0.05103104
      %v3066 = vsel %vm2823, %v3058, -inf
      %v3067 = vsel %vm2824, %v3059, -inf
      %v3068 = vsel %vm2825, %v3060, -inf
      %v3069 = vsel %vm2826, %v3061, -inf
      %v3070 = vsel %vm2827, %v3062, -inf
      %v3071 = vsel %vm2828, %v3063, -inf
      %v3072 = vsel %vm2829, %v3064, -inf
      %v3073 = vsel %vm2830, %v3065, -inf
      %v3074 = vsel %vm2968, %v3066, -inf
      %3075 = vmax.xlane.f32.xlu0 %v3074
      %v3076 = vpop.xlane.xlu0 %3075
      %v3077 = vsel %vm2968, %v3067, -inf
      %3078 = vmax.xlane.f32.xlu0 %v3077
      %v3079 = vpop.xlane.xlu0 %3078
      %v3080 = vsel %vm2968, %v3068, -inf
      %3081 = vmax.xlane.f32.xlu0 %v3080
      %v3082 = vpop.xlane.xlu0 %3081
      %v3083 = vsel %vm2968, %v3069, -inf
      %3084 = vmax.xlane.f32.xlu0 %v3083
      %v3085 = vpop.xlane.xlu0 %3084
      %v3086 = vsel %vm2968, %v3070, -inf
      %3087 = vmax.xlane.f32.xlu0 %v3086
      %v3088 = vpop.xlane.xlu0 %3087
      %v3089 = vsel %vm2968, %v3071, -inf
      %3090 = vmax.xlane.f32.xlu0 %v3089
      %v3091 = vpop.xlane.xlu0 %3090
      %v3092 = vsel %vm2968, %v3072, -inf
      %3093 = vmax.xlane.f32.xlu0 %v3092
      %v3094 = vpop.xlane.xlu0 %3093
      %v3095 = vsel %vm2968, %v3073, -inf
      %3096 = vmax.xlane.f32.xlu0 %v3095
      %v3097 = vpop.xlane.xlu0 %3096
      %v3098 = vsub.f32 %v3066, %v3076
      %v3099 = vsub.f32 %v3067, %v3079
      %v3100 = vsub.f32 %v3068, %v3082
      %v3101 = vsub.f32 %v3069, %v3085
      %v3102 = vsub.f32 %v3070, %v3088
      %v3103 = vsub.f32 %v3071, %v3091
      %v3104 = vsub.f32 %v3072, %v3094
      %v3105 = vsub.f32 %v3073, %v3097
      %v3106 = vmul.f32 %v3098, 1.442695
      %v3107 = vpow.pop %v3106
      %v3108 = vmul.f32 %v3099, 1.442695
      %v3109 = vpow.pop %v3108
      %v3110 = vmul.f32 %v3100, 1.442695
      %v3111 = vpow.pop %v3110
      %v3112 = vmul.f32 %v3101, 1.442695
      %v3113 = vpow.pop %v3112
      %v3114 = vmul.f32 %v3102, 1.442695
      %v3115 = vpow.pop %v3114
      %v3116 = vmul.f32 %v3103, 1.442695
      %v3117 = vpow.pop %v3116
      %v3118 = vmul.f32 %v3104, 1.442695
      %v3119 = vpow.pop %v3118
      %v3120 = vmul.f32 %v3105, 1.442695
      %v3121 = vpow.pop %v3120
      %v3122 = vsel %vm2968, %v3107, 0.0
      %3123 = vadd.xlane.f32.xlu0 %v3122
      %v3124 = vpop.xlane.xlu0 %3123
      %v3125 = vsel %vm2968, %v3109, 0.0
      %3126 = vadd.xlane.f32.xlu0 %v3125
      %v3127 = vpop.xlane.xlu0 %3126
      %v3128 = vsel %vm2968, %v3111, 0.0
      %3129 = vadd.xlane.f32.xlu0 %v3128
      %v3130 = vpop.xlane.xlu0 %3129
      %v3131 = vsel %vm2968, %v3113, 0.0
      %3132 = vadd.xlane.f32.xlu0 %v3131
      %v3133 = vpop.xlane.xlu0 %3132
      %v3134 = vsel %vm2968, %v3115, 0.0
      %3135 = vadd.xlane.f32.xlu0 %v3134
      %v3136 = vpop.xlane.xlu0 %3135
      %v3137 = vsel %vm2968, %v3117, 0.0
      %3138 = vadd.xlane.f32.xlu0 %v3137
      %v3139 = vpop.xlane.xlu0 %3138
      %v3140 = vsel %vm2968, %v3119, 0.0
      %3141 = vadd.xlane.f32.xlu0 %v3140
      %v3142 = vpop.xlane.xlu0 %3141
      %v3143 = vsel %vm2968, %v3121, 0.0
      %3144 = vadd.xlane.f32.xlu0 %v3143
      %v3145 = vpop.xlane.xlu0 %3144
      %v3146 = vrcp.pop %v3124
      %v3147 = vrcp.pop %v3127
      %v3148 = vrcp.pop %v3130
      %v3149 = vrcp.pop %v3133
      %v3150 = vrcp.pop %v3136
      %v3151 = vrcp.pop %v3139
      %v3152 = vrcp.pop %v3142
      %v3153 = vrcp.pop %v3145
      %v3154 = vmul.f32 %v3107, %v3146
      %v3155 = vmul.f32 %v3109, %v3147
      %v3156 = vmul.f32 %v3111, %v3148
      %v3157 = vmul.f32 %v3113, %v3149
      %v3158 = vmul.f32 %v3115, %v3150
      %v3159 = vmul.f32 %v3117, %v3151
      %v3160 = vmul.f32 %v3119, %v3152
      %v3161 = vmul.f32 %v3121, %v3153
      %v3162 = vpack.c.bf16 %v3155, %v3154
      %v3163 = vpack.c.bf16 %v3157, %v3156
      %v3164 = vpack.c.bf16 %v3159, %v3158
      %v3165 = vpack.c.bf16 %v3161, %v3160
      %v3167 = vsel %vm2968, %v3162, 0
      %v3170 = vsel %vm2968, %v3163, 0
      %v3173 = vsel %vm2968, %v3164, 0
      %v3176 = vsel %vm2968, %v3165, 0
      %3178 = vmatprep.subr.bf16.mxu0 0
      %3179 = vmatpush1.bf16.msra.mxu0 0
      %3180 = vmatprep.subr.bf16.mxu0 0
      %3181 = vmatpush1.bf16.msra.mxu0 0
      %3182 = vmatprep.subr.bf16.mxu0 0
      %3183 = vmatpush1.bf16.msra.mxu0 0
      %3184 = vmatprep.subr.bf16.mxu0 0
      %3185 = vmatpush1.bf16.msra.mxu0 0
      %3186 = vmatprep.subr.bf16.mxu0 0
      %3187 = vmatpush1.bf16.msra.mxu0 %v2809
      %3188 = vmatprep.subr.bf16.mxu0 0
      %3189 = vmatpush1.bf16.msra.mxu0 %v2800
      %3190 = vmatprep.subr.bf16.mxu0 0
      %3191 = vmatpush1.bf16.msra.mxu0 %v2791
      %3192 = vmatprep.subr.bf16.mxu0 0
      %3193 = vmatpush1.bf16.msra.mxu0 %v2782
      %3194 = vmatprep.subr.bf16.mxu0 0
      %3195 = vmatpush2.bf16.msra.mxu0 0
      %3196 = vmatprep.subr.bf16.mxu0 0
      %3197 = vmatpush2.bf16.msra.mxu0 0
      %3198 = vmatprep.subr.bf16.mxu0 0
      %3199 = vmatpush2.bf16.msra.mxu0 0
      %3200 = vmatprep.subr.bf16.mxu0 0
      %3201 = vmatpush2.bf16.msra.mxu0 0
      %3202 = vmatprep.subr.bf16.mxu0 0
      %3203 = vmatpush2.bf16.msra.mxu0 0
      %3204 = vmatprep.subr.bf16.mxu0 0
      %3205 = vmatpush2.bf16.msra.mxu0 0
      %3206 = vmatprep.subr.bf16.mxu0 0
      %3207 = vmatpush2.bf16.msra.mxu0 0
      %3208 = vmatprep.subr.bf16.mxu0 0
      %3209 = vmatpush2.bf16.msra.mxu0 0
      %3210 = vmatprep.mubr.bf16.mxu0 0
      %3211 = vmatmul.mubr.bf16.gmra.mxu0 %v3167
      %v3212 = vpop.f32.mrf.mxu0
      %v3213 = vadd.f32 0.0, %v3212
      %v3214 = vpop.f32.mrf.mxu0
      %v3215 = vpop.f32.mrf.mxu0
      %v3216 = vadd.f32 0.0, %v3215
      %v3217 = vpop.f32.mrf.mxu0
      %3218 = vmatprep.mubr.bf16.mxu0 0
      %3219 = vmatmul.mubr.bf16.gmra.mxu0 %v3170
      %v3220 = vpop.f32.mrf.mxu0
      %v3221 = vadd.f32 0.0, %v3220
      %v3222 = vpop.f32.mrf.mxu0
      %v3223 = vpop.f32.mrf.mxu0
      %v3224 = vadd.f32 0.0, %v3223
      %v3225 = vpop.f32.mrf.mxu0
      %3226 = vmatprep.mubr.bf16.mxu0 0
      %3227 = vmatmul.mubr.bf16.gmra.mxu0 %v3173
      %v3228 = vpop.f32.mrf.mxu0
      %v3229 = vadd.f32 0.0, %v3228
      %v3230 = vpop.f32.mrf.mxu0
      %v3231 = vpop.f32.mrf.mxu0
      %v3232 = vadd.f32 0.0, %v3231
      %v3233 = vpop.f32.mrf.mxu0
      %3234 = vmatprep.mubr.bf16.mxu0 0
      %3235 = vmatmul.mubr.bf16.gmra.mxu0 %v3176
      %v3236 = vpop.f32.mrf.mxu0
      %v3237 = vadd.f32 0.0, %v3236
      %v3238 = vpop.f32.mrf.mxu0
      %v3239 = vpop.f32.mrf.mxu0
      %v3240 = vadd.f32 0.0, %v3239
      %v3241 = vpop.f32.mrf.mxu0
      %3242 = vdwg.mxu0
      %v3243 = vpack.c.bf16 %v3216, %v3213
      %v3244 = vpack.c.bf16 %v3224, %v3221
      %v3245 = vpack.c.bf16 %v3232, %v3229
      %v3246 = vpack.c.bf16 %v3240, %v3237
      %v3263 = vunpack.c.l.b16 %v2831
      %v3264 = vunpack.c.h.b16 %v2831
      %v3265 = vunpack.c.l.b16 %v2832
      %v3266 = vunpack.c.l.b16 %v2833
      %v3267 = vunpack.c.h.b16 %v2833
      %v3268 = vunpack.c.l.b16 %v2834
      %v3269 = vunpack.c.l.b16 %v2835
      %v3270 = vunpack.c.h.b16 %v2835
      %v3271 = vunpack.c.l.b16 %v2836
      %v3272 = vunpack.c.l.b16 %v2837
      %v3273 = vunpack.c.h.b16 %v2837
      %v3274 = vunpack.c.l.b16 %v2838
      %v3275 = vunpack.c.l.b16 %v2839
      %v3276 = vunpack.c.h.b16 %v2839
      %v3277 = vunpack.c.l.b16 %v2840
      %v3278 = vunpack.c.l.b16 %v2841
      %v3279 = vunpack.c.h.b16 %v2841
      %v3280 = vunpack.c.l.b16 %v2842
      %v3281 = vunpack.c.l.b16 %v2843
      %v3282 = vunpack.c.h.b16 %v2843
      %v3283 = vunpack.c.l.b16 %v2844
      %v3284 = vunpack.c.l.b16 %v2845
      %v3285 = vunpack.c.h.b16 %v2845
      %v3286 = vunpack.c.l.b16 %v2846
      %v3287 = vpack.c.b16 %v3266, %v3263
      %v3288 = vpack.c.b16 %v3267, %v3264
      %v3289 = vpack.c.b16 %v3268, %v3265
      %v3290 = vpack.c.b16 %v3272, %v3269
      %v3291 = vpack.c.b16 %v3273, %v3270
      %v3292 = vpack.c.b16 %v3274, %v3271
      %v3293 = vpack.c.b16 %v3278, %v3275
      %v3294 = vpack.c.b16 %v3279, %v3276
      %v3295 = vpack.c.b16 %v3280, %v3277
      %v3296 = vpack.c.b16 %v3284, %v3281
      %v3297 = vpack.c.b16 %v3285, %v3282
      %v3298 = vpack.c.b16 %v3286, %v3283
      %v3312 = vsel %vm2968, %v3243, 0
      %v3315 = vsel %vm2968, %v3244, 0
      %v3318 = vsel %vm2968, %v3245, 0
      %v3321 = vsel %vm2968, %v3246, 0
      %3323 = vmatprep.subr.bf16.mxu0 0
      %3324 = vmatpush1.bf16.msra.mxu0 0
      %3325 = vmatprep.subr.bf16.mxu0 0
      %3326 = vmatpush1.bf16.msra.mxu0 0
      %3327 = vmatprep.subr.bf16.mxu0 0
      %3328 = vmatpush1.bf16.msra.mxu0 0
      %3329 = vmatprep.subr.bf16.mxu0 0
      %3330 = vmatpush1.bf16.msra.mxu0 0
      %3331 = vmatprep.subr.bf16.mxu0 %v3297
      %3332 = vmatpush1.bf16.msra.mxu0 %v3296
      %3333 = vmatprep.subr.bf16.mxu0 %v3294
      %3334 = vmatpush1.bf16.msra.mxu0 %v3293
      %3335 = vmatprep.subr.bf16.mxu0 %v3291
      %3336 = vmatpush1.bf16.msra.mxu0 %v3290
      %3337 = vmatprep.subr.bf16.mxu0 %v3288
      %3338 = vmatpush1.bf16.msra.mxu0 %v3287
      %3339 = vmatprep.subr.bf16.mxu0 0
      %3340 = vmatpush2.bf16.msra.mxu0 0
      %3341 = vmatprep.subr.bf16.mxu0 0
      %3342 = vmatpush2.bf16.msra.mxu0 0
      %3343 = vmatprep.subr.bf16.mxu0 0
      %3344 = vmatpush2.bf16.msra.mxu0 0
      %3345 = vmatprep.subr.bf16.mxu0 0
      %3346 = vmatpush2.bf16.msra.mxu0 0
      %3347 = vmatprep.subr.bf16.mxu0 0
      %3348 = vmatpush2.bf16.msra.mxu0 0
      %3349 = vmatprep.subr.bf16.mxu0 0
      %3350 = vmatpush2.bf16.msra.mxu0 0
      %3351 = vmatprep.subr.bf16.mxu0 0
      %3352 = vmatpush2.bf16.msra.mxu0 0
      %3353 = vmatprep.subr.bf16.mxu0 0
      %3354 = vmatpush2.bf16.msra.mxu0 0
      %3355 = vmatprep.mubr.bf16.mxu0 0
      %3356 = vmatmul.mubr.bf16.gmra.mxu0 %v3312
      %v3357 = vpop.f32.mrf.mxu0
      %v3358 = vadd.f32 0.0, %v3357
      %v3359 = vpop.f32.mrf.mxu0
      %v3360 = vadd.f32 0.0, %v3359
      %v3361 = vpop.f32.mrf.mxu0
      %v3362 = vadd.f32 0.0, %v3361
      %v3363 = vpop.f32.mrf.mxu0
      %v3364 = vadd.f32 0.0, %v3363
      %3365 = vmatprep.mubr.bf16.mxu0 0
      %3366 = vmatmul.mubr.bf16.gmra.mxu0 %v3315
      %v3367 = vpop.f32.mrf.mxu0
      %v3368 = vadd.f32 0.0, %v3367
      %v3369 = vpop.f32.mrf.mxu0
      %v3370 = vadd.f32 0.0, %v3369
      %v3371 = vpop.f32.mrf.mxu0
      %v3372 = vadd.f32 0.0, %v3371
      %v3373 = vpop.f32.mrf.mxu0
      %v3374 = vadd.f32 0.0, %v3373
      %3375 = vmatprep.mubr.bf16.mxu0 0
      %3376 = vmatmul.mubr.bf16.gmra.mxu0 %v3318
      %v3377 = vpop.f32.mrf.mxu0
      %v3378 = vadd.f32 0.0, %v3377
      %v3379 = vpop.f32.mrf.mxu0
      %v3380 = vadd.f32 0.0, %v3379
      %v3381 = vpop.f32.mrf.mxu0
      %v3382 = vadd.f32 0.0, %v3381
      %v3383 = vpop.f32.mrf.mxu0
      %v3384 = vadd.f32 0.0, %v3383
      %3385 = vmatprep.mubr.bf16.mxu0 0
      %3386 = vmatmul.mubr.bf16.gmra.mxu0 %v3321
      %v3387 = vpop.f32.mrf.mxu0
      %v3388 = vadd.f32 0.0, %v3387
      %v3389 = vpop.f32.mrf.mxu0
      %v3390 = vadd.f32 0.0, %v3389
      %v3391 = vpop.f32.mrf.mxu0
      %v3392 = vadd.f32 0.0, %v3391
      %v3393 = vpop.f32.mrf.mxu0
      %v3394 = vadd.f32 0.0, %v3393
      %3395 = vdwg.mxu0
      %3396 = vmatprep.subr.bf16.mxu0 0
      %3397 = vmatpush1.bf16.msra.mxu0 0
      %3398 = vmatprep.subr.bf16.mxu0 0
      %3399 = vmatpush1.bf16.msra.mxu0 0
      %3400 = vmatprep.subr.bf16.mxu0 0
      %3401 = vmatpush1.bf16.msra.mxu0 0
      %3402 = vmatprep.subr.bf16.mxu0 0
      %3403 = vmatpush1.bf16.msra.mxu0 0
      %3404 = vmatprep.subr.bf16.mxu0 0
      %3405 = vmatpush1.bf16.msra.mxu0 %v3298
      %3406 = vmatprep.subr.bf16.mxu0 0
      %3407 = vmatpush1.bf16.msra.mxu0 %v3295
      %3408 = vmatprep.subr.bf16.mxu0 0
      %3409 = vmatpush1.bf16.msra.mxu0 %v3292
      %3410 = vmatprep.subr.bf16.mxu0 0
      %3411 = vmatpush1.bf16.msra.mxu0 %v3289
      %3412 = vmatprep.subr.bf16.mxu0 0
      %3413 = vmatpush2.bf16.msra.mxu0 0
      %3414 = vmatprep.subr.bf16.mxu0 0
      %3415 = vmatpush2.bf16.msra.mxu0 0
      %3416 = vmatprep.subr.bf16.mxu0 0
      %3417 = vmatpush2.bf16.msra.mxu0 0
      %3418 = vmatprep.subr.bf16.mxu0 0
      %3419 = vmatpush2.bf16.msra.mxu0 0
      %3420 = vmatprep.subr.bf16.mxu0 0
      %3421 = vmatpush2.bf16.msra.mxu0 0
      %3422 = vmatprep.subr.bf16.mxu0 0
      %3423 = vmatpush2.bf16.msra.mxu0 0
      %3424 = vmatprep.subr.bf16.mxu0 0
      %3425 = vmatpush2.bf16.msra.mxu0 0
      %3426 = vmatprep.subr.bf16.mxu0 0
      %3427 = vmatpush2.bf16.msra.mxu0 0
      %3428 = vmatprep.mubr.bf16.mxu0 0
      %3429 = vmatmul.mubr.bf16.gmra.mxu0 %v3312
      %v3430 = vpop.f32.mrf.mxu0
      %v3431 = vadd.f32 0.0, %v3430
      %v3432 = vpop.f32.mrf.mxu0
      %v3433 = vpop.f32.mrf.mxu0
      %v3434 = vadd.f32 0.0, %v3433
      %v3435 = vpop.f32.mrf.mxu0
      %3436 = vmatprep.mubr.bf16.mxu0 0
      %3437 = vmatmul.mubr.bf16.gmra.mxu0 %v3315
      %v3438 = vpop.f32.mrf.mxu0
      %v3439 = vadd.f32 0.0, %v3438
      %v3440 = vpop.f32.mrf.mxu0
      %v3441 = vpop.f32.mrf.mxu0
      %v3442 = vadd.f32 0.0, %v3441
      %v3443 = vpop.f32.mrf.mxu0
      %3444 = vmatprep.mubr.bf16.mxu0 0
      %3445 = vmatmul.mubr.bf16.gmra.mxu0 %v3318
      %v3446 = vpop.f32.mrf.mxu0
      %v3447 = vadd.f32 0.0, %v3446
      %v3448 = vpop.f32.mrf.mxu0
      %v3449 = vpop.f32.mrf.mxu0
      %v3450 = vadd.f32 0.0, %v3449
      %v3451 = vpop.f32.mrf.mxu0
      %3452 = vmatprep.mubr.bf16.mxu0 0
      %3453 = vmatmul.mubr.bf16.gmra.mxu0 %v3321
      %v3454 = vpop.f32.mrf.mxu0
      %v3455 = vadd.f32 0.0, %v3454
      %v3456 = vpop.f32.mrf.mxu0
      %v3457 = vpop.f32.mrf.mxu0
      %v3458 = vadd.f32 0.0, %v3457
      %v3459 = vpop.f32.mrf.mxu0
      %3460 = vdwg.mxu0
      %v3461 = vadd.f32 %v2944, %v3358
      %v3462 = vadd.f32 %v2945, %v3360
      %v3463 = vadd.f32 %v2946, %v3431
      %v3464 = vadd.f32 %v2947, %v3362
      %v3465 = vadd.f32 %v2948, %v3364
      %v3466 = vadd.f32 %v2949, %v3434
      %v3467 = vadd.f32 %v2950, %v3368
      %v3468 = vadd.f32 %v2951, %v3370
      %v3469 = vadd.f32 %v2952, %v3439
      %v3470 = vadd.f32 %v2953, %v3372
      %v3471 = vadd.f32 %v2954, %v3374
      %v3472 = vadd.f32 %v2955, %v3442
      %v3473 = vadd.f32 %v2956, %v3378
      %v3474 = vadd.f32 %v2957, %v3380
      %v3475 = vadd.f32 %v2958, %v3447
      %v3476 = vadd.f32 %v2959, %v3382
      %v3477 = vadd.f32 %v2960, %v3384
      %v3478 = vadd.f32 %v2961, %v3450
      %v3479 = vadd.f32 %v2962, %v3388
      %v3480 = vadd.f32 %v2963, %v3390
      %v3481 = vadd.f32 %v2964, %v3455
      %v3482 = vadd.f32 %v2965, %v3392
      %v3483 = vadd.f32 %v2966, %v3394
      %v3484 = vadd.f32 %v2967, %v3458
      %3489 = vrot.lane.b32.xlu0 %v2776, 64
      %v3490 = vpop.permute.xlu0 %3489
      %3491 = vrot.lane.b32.xlu0 %v2785, 64
      %v3492 = vpop.permute.xlu0 %3491
      %3493 = vrot.lane.b32.xlu0 %v2794, 64
      %v3494 = vpop.permute.xlu0 %3493
      %3495 = vrot.lane.b32.xlu0 %v2803, 64
      %v3496 = vpop.permute.xlu0 %3495
      %3501 = vrot.lane.b32.xlu0 %v2779, 64
      %v3502 = vpop.permute.xlu0 %3501
      %3503 = vrot.lane.b32.xlu0 %v2788, 64
      %v3504 = vpop.permute.xlu0 %3503
      %3505 = vrot.lane.b32.xlu0 %v2797, 64
      %v3506 = vpop.permute.xlu0 %3505
      %3507 = vrot.lane.b32.xlu0 %v2806, 64
      %v3508 = vpop.permute.xlu0 %3507
      %v3510 = vsel %vm2968, %v3490, 0
      %v3513 = vsel %vm2968, %v3492, 0
      %v3516 = vsel %vm2968, %v3494, 0
      %v3519 = vsel %vm2968, %v3496, 0
      %v3522 = vsel %vm2968, %v3502, 0
      %v3525 = vsel %vm2968, %v3504, 0
      %v3528 = vsel %vm2968, %v3506, 0
      %v3531 = vsel %vm2968, %v3508, 0
      %3533 = vmatprep.subr.bf16.mxu0 0
      %3534 = vmatpush1.bf16.xpose.msra.mxu0 0
      %3535 = vmatprep.subr.bf16.mxu0 0
      %3536 = vmatpush1.bf16.xpose.msra.mxu0 0
      %3537 = vmatprep.subr.bf16.mxu0 0
      %3538 = vmatpush1.bf16.xpose.msra.mxu0 0
      %3539 = vmatprep.subr.bf16.mxu0 0
      %3540 = vmatpush1.bf16.xpose.msra.mxu0 0
      %3541 = vmatprep.subr.bf16.mxu0 0
      %3542 = vmatpush1.bf16.xpose.msra.mxu0 %v3531
      %3543 = vmatprep.subr.bf16.mxu0 0
      %3544 = vmatpush1.bf16.xpose.msra.mxu0 %v3528
      %3545 = vmatprep.subr.bf16.mxu0 0
      %3546 = vmatpush1.bf16.xpose.msra.mxu0 %v3525
      %3547 = vmatprep.subr.bf16.mxu0 0
      %3548 = vmatpush1.bf16.xpose.msra.mxu0 %v3522
      %3549 = vmatprep.subr.bf16.mxu0 0
      %3550 = vmatpush2.bf16.xpose.msra.mxu0 0
      %3551 = vmatprep.subr.bf16.mxu0 0
      %3552 = vmatpush2.bf16.xpose.msra.mxu0 0
      %3553 = vmatprep.subr.bf16.mxu0 0
      %3554 = vmatpush2.bf16.xpose.msra.mxu0 0
      %3555 = vmatprep.subr.bf16.mxu0 0
      %3556 = vmatpush2.bf16.xpose.msra.mxu0 0
      %3557 = vmatprep.subr.bf16.mxu0 0
      %3558 = vmatpush2.bf16.xpose.msra.mxu0 0
      %3559 = vmatprep.subr.bf16.mxu0 0
      %3560 = vmatpush2.bf16.xpose.msra.mxu0 0
      %3561 = vmatprep.subr.bf16.mxu0 0
      %3562 = vmatpush2.bf16.xpose.msra.mxu0 0
      %3563 = vmatprep.subr.bf16.mxu0 0
      %3564 = vmatpush2.bf16.xpose.msra.mxu0 0
      %3565 = vmatprep.mubr.bf16.mxu0 0
      %3566 = vmatmul.mubr.bf16.gmra.mxu0 %v3510
      %v3567 = vpop.f32.mrf.mxu0
      %v3568 = vadd.f32 0.0, %v3567
      %v3569 = vpop.f32.mrf.mxu0
      %v3570 = vpop.f32.mrf.mxu0
      %v3571 = vadd.f32 0.0, %v3570
      %v3572 = vpop.f32.mrf.mxu0
      %3573 = vmatprep.mubr.bf16.mxu0 0
      %3574 = vmatmul.mubr.bf16.gmra.mxu0 %v3513
      %v3575 = vpop.f32.mrf.mxu0
      %v3576 = vadd.f32 0.0, %v3575
      %v3577 = vpop.f32.mrf.mxu0
      %v3578 = vpop.f32.mrf.mxu0
      %v3579 = vadd.f32 0.0, %v3578
      %v3580 = vpop.f32.mrf.mxu0
      %3581 = vmatprep.mubr.bf16.mxu0 0
      %3582 = vmatmul.mubr.bf16.gmra.mxu0 %v3516
      %v3583 = vpop.f32.mrf.mxu0
      %v3584 = vadd.f32 0.0, %v3583
      %v3585 = vpop.f32.mrf.mxu0
      %v3586 = vpop.f32.mrf.mxu0
      %v3587 = vadd.f32 0.0, %v3586
      %v3588 = vpop.f32.mrf.mxu0
      %3589 = vmatprep.mubr.bf16.mxu0 0
      %3590 = vmatmul.mubr.bf16.gmra.mxu0 %v3519
      %v3591 = vpop.f32.mrf.mxu0
      %v3592 = vadd.f32 0.0, %v3591
      %v3593 = vpop.f32.mrf.mxu0
      %v3594 = vpop.f32.mrf.mxu0
      %v3595 = vadd.f32 0.0, %v3594
      %v3596 = vpop.f32.mrf.mxu0
      %3597 = vdwg.mxu0
      %v3598 = vmul.f32 %v3568, 0.05103104
      %v3599 = vmul.f32 %v3571, 0.05103104
      %v3600 = vmul.f32 %v3576, 0.05103104
      %v3601 = vmul.f32 %v3579, 0.05103104
      %v3602 = vmul.f32 %v3584, 0.05103104
      %v3603 = vmul.f32 %v3587, 0.05103104
      %v3604 = vmul.f32 %v3592, 0.05103104
      %v3605 = vmul.f32 %v3595, 0.05103104
      %v3606 = vsel %vm2823, %v3598, -inf
      %v3607 = vsel %vm2824, %v3599, -inf
      %v3608 = vsel %vm2825, %v3600, -inf
      %v3609 = vsel %vm2826, %v3601, -inf
      %v3610 = vsel %vm2827, %v3602, -inf
      %v3611 = vsel %vm2828, %v3603, -inf
      %v3612 = vsel %vm2829, %v3604, -inf
      %v3613 = vsel %vm2830, %v3605, -inf
      %v3614 = vsel %vm2968, %v3606, -inf
      %3615 = vmax.xlane.f32.xlu0 %v3614
      %v3616 = vpop.xlane.xlu0 %3615
      %v3617 = vsel %vm2968, %v3607, -inf
      %3618 = vmax.xlane.f32.xlu0 %v3617
      %v3619 = vpop.xlane.xlu0 %3618
      %v3620 = vsel %vm2968, %v3608, -inf
      %3621 = vmax.xlane.f32.xlu0 %v3620
      %v3622 = vpop.xlane.xlu0 %3621
      %v3623 = vsel %vm2968, %v3609, -inf
      %3624 = vmax.xlane.f32.xlu0 %v3623
      %v3625 = vpop.xlane.xlu0 %3624
      %v3626 = vsel %vm2968, %v3610, -inf
      %3627 = vmax.xlane.f32.xlu0 %v3626
      %v3628 = vpop.xlane.xlu0 %3627
      %v3629 = vsel %vm2968, %v3611, -inf
      %3630 = vmax.xlane.f32.xlu0 %v3629
      %v3631 = vpop.xlane.xlu0 %3630
      %v3632 = vsel %vm2968, %v3612, -inf
      %3633 = vmax.xlane.f32.xlu0 %v3632
      %v3634 = vpop.xlane.xlu0 %3633
      %v3635 = vsel %vm2968, %v3613, -inf
      %3636 = vmax.xlane.f32.xlu0 %v3635
      %v3637 = vpop.xlane.xlu0 %3636
      %v3638 = vsub.f32 %v3606, %v3616
      %v3639 = vsub.f32 %v3607, %v3619
      %v3640 = vsub.f32 %v3608, %v3622
      %v3641 = vsub.f32 %v3609, %v3625
      %v3642 = vsub.f32 %v3610, %v3628
      %v3643 = vsub.f32 %v3611, %v3631
      %v3644 = vsub.f32 %v3612, %v3634
      %v3645 = vsub.f32 %v3613, %v3637
      %v3646 = vmul.f32 %v3638, 1.442695
      %v3647 = vpow.pop %v3646
      %v3648 = vmul.f32 %v3639, 1.442695
      %v3649 = vpow.pop %v3648
      %v3650 = vmul.f32 %v3640, 1.442695
      %v3651 = vpow.pop %v3650
      %v3652 = vmul.f32 %v3641, 1.442695
      %v3653 = vpow.pop %v3652
      %v3654 = vmul.f32 %v3642, 1.442695
      %v3655 = vpow.pop %v3654
      %v3656 = vmul.f32 %v3643, 1.442695
      %v3657 = vpow.pop %v3656
      %v3658 = vmul.f32 %v3644, 1.442695
      %v3659 = vpow.pop %v3658
      %v3660 = vmul.f32 %v3645, 1.442695
      %v3661 = vpow.pop %v3660
      %v3662 = vsel %vm2968, %v3647, 0.0
      %3663 = vadd.xlane.f32.xlu0 %v3662
      %v3664 = vpop.xlane.xlu0 %3663
      %v3665 = vsel %vm2968, %v3649, 0.0
      %3666 = vadd.xlane.f32.xlu0 %v3665
      %v3667 = vpop.xlane.xlu0 %3666
      %v3668 = vsel %vm2968, %v3651, 0.0
      %3669 = vadd.xlane.f32.xlu0 %v3668
      %v3670 = vpop.xlane.xlu0 %3669
      %v3671 = vsel %vm2968, %v3653, 0.0
      %3672 = vadd.xlane.f32.xlu0 %v3671
      %v3673 = vpop.xlane.xlu0 %3672
      %v3674 = vsel %vm2968, %v3655, 0.0
      %3675 = vadd.xlane.f32.xlu0 %v3674
      %v3676 = vpop.xlane.xlu0 %3675
      %v3677 = vsel %vm2968, %v3657, 0.0
      %3678 = vadd.xlane.f32.xlu0 %v3677
      %v3679 = vpop.xlane.xlu0 %3678
      %v3680 = vsel %vm2968, %v3659, 0.0
      %3681 = vadd.xlane.f32.xlu0 %v3680
      %v3682 = vpop.xlane.xlu0 %3681
      %v3683 = vsel %vm2968, %v3661, 0.0
      %3684 = vadd.xlane.f32.xlu0 %v3683
      %v3685 = vpop.xlane.xlu0 %3684
      %v3686 = vrcp.pop %v3664
      %v3687 = vrcp.pop %v3667
      %v3688 = vrcp.pop %v3670
      %v3689 = vrcp.pop %v3673
      %v3690 = vrcp.pop %v3676
      %v3691 = vrcp.pop %v3679
      %v3692 = vrcp.pop %v3682
      %v3693 = vrcp.pop %v3685
      %v3694 = vmul.f32 %v3647, %v3686
      %v3695 = vmul.f32 %v3649, %v3687
      %v3696 = vmul.f32 %v3651, %v3688
      %v3697 = vmul.f32 %v3653, %v3689
      %v3698 = vmul.f32 %v3655, %v3690
      %v3699 = vmul.f32 %v3657, %v3691
      %v3700 = vmul.f32 %v3659, %v3692
      %v3701 = vmul.f32 %v3661, %v3693
      %v3702 = vpack.c.bf16 %v3695, %v3694
      %v3703 = vpack.c.bf16 %v3697, %v3696
      %v3704 = vpack.c.bf16 %v3699, %v3698
      %v3705 = vpack.c.bf16 %v3701, %v3700
      %3710 = vrot.lane.b32.xlu0 %v2782, 64
      %v3711 = vpop.permute.xlu0 %3710
      %3712 = vrot.lane.b32.xlu0 %v2791, 64
      %v3713 = vpop.permute.xlu0 %3712
      %3714 = vrot.lane.b32.xlu0 %v2800, 64
      %v3715 = vpop.permute.xlu0 %3714
      %3716 = vrot.lane.b32.xlu0 %v2809, 64
      %v3717 = vpop.permute.xlu0 %3716
      %v3723 = vsel %vm2968, %v3702, 0
      %v3726 = vsel %vm2968, %v3703, 0
      %v3729 = vsel %vm2968, %v3704, 0
      %v3732 = vsel %vm2968, %v3705, 0
      %3734 = vmatprep.subr.bf16.mxu0 0
      %3735 = vmatpush1.bf16.msra.mxu0 0
      %3736 = vmatprep.subr.bf16.mxu0 0
      %3737 = vmatpush1.bf16.msra.mxu0 0
      %3738 = vmatprep.subr.bf16.mxu0 0
      %3739 = vmatpush1.bf16.msra.mxu0 0
      %3740 = vmatprep.subr.bf16.mxu0 0
      %3741 = vmatpush1.bf16.msra.mxu0 0
      %3742 = vmatprep.subr.bf16.mxu0 0
      %3743 = vmatpush1.bf16.msra.mxu0 %v3717
      %3744 = vmatprep.subr.bf16.mxu0 0
      %3745 = vmatpush1.bf16.msra.mxu0 %v3715
      %3746 = vmatprep.subr.bf16.mxu0 0
      %3747 = vmatpush1.bf16.msra.mxu0 %v3713
      %3748 = vmatprep.subr.bf16.mxu0 0
      %3749 = vmatpush1.bf16.msra.mxu0 %v3711
      %3750 = vmatprep.subr.bf16.mxu0 0
      %3751 = vmatpush2.bf16.msra.mxu0 0
      %3752 = vmatprep.subr.bf16.mxu0 0
      %3753 = vmatpush2.bf16.msra.mxu0 0
      %3754 = vmatprep.subr.bf16.mxu0 0
      %3755 = vmatpush2.bf16.msra.mxu0 0
      %3756 = vmatprep.subr.bf16.mxu0 0
      %3757 = vmatpush2.bf16.msra.mxu0 0
      %3758 = vmatprep.subr.bf16.mxu0 0
      %3759 = vmatpush2.bf16.msra.mxu0 0
      %3760 = vmatprep.subr.bf16.mxu0 0
      %3761 = vmatpush2.bf16.msra.mxu0 0
      %3762 = vmatprep.subr.bf16.mxu0 0
      %3763 = vmatpush2.bf16.msra.mxu0 0
      %3764 = vmatprep.subr.bf16.mxu0 0
      %3765 = vmatpush2.bf16.msra.mxu0 0
      %3766 = vmatprep.mubr.bf16.mxu0 0
      %3767 = vmatmul.mubr.bf16.gmra.mxu0 %v3723
      %v3768 = vpop.f32.mrf.mxu0
      %v3769 = vadd.f32 0.0, %v3768
      %v3770 = vpop.f32.mrf.mxu0
      %v3771 = vpop.f32.mrf.mxu0
      %v3772 = vadd.f32 0.0, %v3771
      %v3773 = vpop.f32.mrf.mxu0
      %3774 = vmatprep.mubr.bf16.mxu0 0
      %3775 = vmatmul.mubr.bf16.gmra.mxu0 %v3726
      %v3776 = vpop.f32.mrf.mxu0
      %v3777 = vadd.f32 0.0, %v3776
      %v3778 = vpop.f32.mrf.mxu0
      %v3779 = vpop.f32.mrf.mxu0
      %v3780 = vadd.f32 0.0, %v3779
      %v3781 = vpop.f32.mrf.mxu0
      %3782 = vmatprep.mubr.bf16.mxu0 0
      %3783 = vmatmul.mubr.bf16.gmra.mxu0 %v3729
      %v3784 = vpop.f32.mrf.mxu0
      %v3785 = vadd.f32 0.0, %v3784
      %v3786 = vpop.f32.mrf.mxu0
      %v3787 = vpop.f32.mrf.mxu0
      %v3788 = vadd.f32 0.0, %v3787
      %v3789 = vpop.f32.mrf.mxu0
      %3790 = vmatprep.mubr.bf16.mxu0 0
      %3791 = vmatmul.mubr.bf16.gmra.mxu0 %v3732
      %v3792 = vpop.f32.mrf.mxu0
      %v3793 = vadd.f32 0.0, %v3792
      %v3794 = vpop.f32.mrf.mxu0
      %v3795 = vpop.f32.mrf.mxu0
      %v3796 = vadd.f32 0.0, %v3795
      %v3797 = vpop.f32.mrf.mxu0
      %3798 = vdwg.mxu0
      %v3799 = vpack.c.bf16 %v3772, %v3769
      %v3800 = vpack.c.bf16 %v3780, %v3777
      %v3801 = vpack.c.bf16 %v3788, %v3785
      %v3802 = vpack.c.bf16 %v3796, %v3793
      %v3819 = vunpack.c.l.b16 %v2847
      %v3820 = vunpack.c.h.b16 %v2847
      %v3821 = vunpack.c.l.b16 %v2848
      %v3822 = vunpack.c.l.b16 %v2849
      %v3823 = vunpack.c.h.b16 %v2849
      %v3824 = vunpack.c.l.b16 %v2850
      %v3825 = vunpack.c.l.b16 %v2851
      %v3826 = vunpack.c.h.b16 %v2851
      %v3827 = vunpack.c.l.b16 %v2852
      %v3828 = vunpack.c.l.b16 %v2853
      %v3829 = vunpack.c.h.b16 %v2853
      %v3830 = vunpack.c.l.b16 %v2854
      %v3831 = vunpack.c.l.b16 %v2855
      %v3832 = vunpack.c.h.b16 %v2855
      %v3833 = vunpack.c.l.b16 %v2856
      %v3834 = vunpack.c.l.b16 %v2857
      %v3835 = vunpack.c.h.b16 %v2857
      %v3836 = vunpack.c.l.b16 %v2858
      %v3837 = vunpack.c.l.b16 %v2859
      %v3838 = vunpack.c.h.b16 %v2859
      %v3839 = vunpack.c.l.b16 %v2860
      %v3840 = vunpack.c.l.b16 %v2861
      %v3841 = vunpack.c.h.b16 %v2861
      %v3842 = vunpack.c.l.b16 %v2862
      %v3843 = vpack.c.b16 %v3822, %v3819
      %v3844 = vpack.c.b16 %v3823, %v3820
      %v3845 = vpack.c.b16 %v3824, %v3821
      %v3846 = vpack.c.b16 %v3828, %v3825
      %v3847 = vpack.c.b16 %v3829, %v3826
      %v3848 = vpack.c.b16 %v3830, %v3827
      %v3849 = vpack.c.b16 %v3834, %v3831
      %v3850 = vpack.c.b16 %v3835, %v3832
      %v3851 = vpack.c.b16 %v3836, %v3833
      %v3852 = vpack.c.b16 %v3840, %v3837
      %v3853 = vpack.c.b16 %v3841, %v3838
      %v3854 = vpack.c.b16 %v3842, %v3839
      %v3868 = vsel %vm2968, %v3799, 0
      %v3871 = vsel %vm2968, %v3800, 0
      %v3874 = vsel %vm2968, %v3801, 0
      %v3877 = vsel %vm2968, %v3802, 0
      %3879 = vmatprep.subr.bf16.mxu0 0
      %3880 = vmatpush1.bf16.msra.mxu0 0
      %3881 = vmatprep.subr.bf16.mxu0 0
      %3882 = vmatpush1.bf16.msra.mxu0 0
      %3883 = vmatprep.subr.bf16.mxu0 0
      %3884 = vmatpush1.bf16.msra.mxu0 0
      %3885 = vmatprep.subr.bf16.mxu0 0
      %3886 = vmatpush1.bf16.msra.mxu0 0
      %3887 = vmatprep.subr.bf16.mxu0 %v3853
      %3888 = vmatpush1.bf16.msra.mxu0 %v3852
      %3889 = vmatprep.subr.bf16.mxu0 %v3850
      %3890 = vmatpush1.bf16.msra.mxu0 %v3849
      %3891 = vmatprep.subr.bf16.mxu0 %v3847
      %3892 = vmatpush1.bf16.msra.mxu0 %v3846
      %3893 = vmatprep.subr.bf16.mxu0 %v3844
      %3894 = vmatpush1.bf16.msra.mxu0 %v3843
      %3895 = vmatprep.subr.bf16.mxu0 0
      %3896 = vmatpush2.bf16.msra.mxu0 0
      %3897 = vmatprep.subr.bf16.mxu0 0
      %3898 = vmatpush2.bf16.msra.mxu0 0
      %3899 = vmatprep.subr.bf16.mxu0 0
      %3900 = vmatpush2.bf16.msra.mxu0 0
      %3901 = vmatprep.subr.bf16.mxu0 0
      %3902 = vmatpush2.bf16.msra.mxu0 0
      %3903 = vmatprep.subr.bf16.mxu0 0
      %3904 = vmatpush2.bf16.msra.mxu0 0
      %3905 = vmatprep.subr.bf16.mxu0 0
      %3906 = vmatpush2.bf16.msra.mxu0 0
      %3907 = vmatprep.subr.bf16.mxu0 0
      %3908 = vmatpush2.bf16.msra.mxu0 0
      %3909 = vmatprep.subr.bf16.mxu0 0
      %3910 = vmatpush2.bf16.msra.mxu0 0
      %3911 = vmatprep.mubr.bf16.mxu0 0
      %3912 = vmatmul.mubr.bf16.gmra.mxu0 %v3868
      %v3913 = vpop.f32.mrf.mxu0
      %v3914 = vadd.f32 0.0, %v3913
      %v3915 = vpop.f32.mrf.mxu0
      %v3916 = vadd.f32 0.0, %v3915
      %v3917 = vpop.f32.mrf.mxu0
      %v3918 = vadd.f32 0.0, %v3917
      %v3919 = vpop.f32.mrf.mxu0
      %v3920 = vadd.f32 0.0, %v3919
      %3921 = vmatprep.mubr.bf16.mxu0 0
      %3922 = vmatmul.mubr.bf16.gmra.mxu0 %v3871
      %v3923 = vpop.f32.mrf.mxu0
      %v3924 = vadd.f32 0.0, %v3923
      %v3925 = vpop.f32.mrf.mxu0
      %v3926 = vadd.f32 0.0, %v3925
      %v3927 = vpop.f32.mrf.mxu0
      %v3928 = vadd.f32 0.0, %v3927
      %v3929 = vpop.f32.mrf.mxu0
      %v3930 = vadd.f32 0.0, %v3929
      %3931 = vmatprep.mubr.bf16.mxu0 0
      %3932 = vmatmul.mubr.bf16.gmra.mxu0 %v3874
      %v3933 = vpop.f32.mrf.mxu0
      %v3934 = vadd.f32 0.0, %v3933
      %v3935 = vpop.f32.mrf.mxu0
      %v3936 = vadd.f32 0.0, %v3935
      %v3937 = vpop.f32.mrf.mxu0
      %v3938 = vadd.f32 0.0, %v3937
      %v3939 = vpop.f32.mrf.mxu0
      %v3940 = vadd.f32 0.0, %v3939
      %3941 = vmatprep.mubr.bf16.mxu0 0
      %3942 = vmatmul.mubr.bf16.gmra.mxu0 %v3877
      %v3943 = vpop.f32.mrf.mxu0
      %v3944 = vadd.f32 0.0, %v3943
      %v3945 = vpop.f32.mrf.mxu0
      %v3946 = vadd.f32 0.0, %v3945
      %v3947 = vpop.f32.mrf.mxu0
      %v3948 = vadd.f32 0.0, %v3947
      %v3949 = vpop.f32.mrf.mxu0
      %v3950 = vadd.f32 0.0, %v3949
      %3951 = vdwg.mxu0
      %3952 = vmatprep.subr.bf16.mxu0 0
      %3953 = vmatpush1.bf16.msra.mxu0 0
      %3954 = vmatprep.subr.bf16.mxu0 0
      %3955 = vmatpush1.bf16.msra.mxu0 0
      %3956 = vmatprep.subr.bf16.mxu0 0
      %3957 = vmatpush1.bf16.msra.mxu0 0
      %3958 = vmatprep.subr.bf16.mxu0 0
      %3959 = vmatpush1.bf16.msra.mxu0 0
      %3960 = vmatprep.subr.bf16.mxu0 0
      %3961 = vmatpush1.bf16.msra.mxu0 %v3854
      %3962 = vmatprep.subr.bf16.mxu0 0
      %3963 = vmatpush1.bf16.msra.mxu0 %v3851
      %3964 = vmatprep.subr.bf16.mxu0 0
      %3965 = vmatpush1.bf16.msra.mxu0 %v3848
      %3966 = vmatprep.subr.bf16.mxu0 0
      %3967 = vmatpush1.bf16.msra.mxu0 %v3845
      %3968 = vmatprep.subr.bf16.mxu0 0
      %3969 = vmatpush2.bf16.msra.mxu0 0
      %3970 = vmatprep.subr.bf16.mxu0 0
      %3971 = vmatpush2.bf16.msra.mxu0 0
      %3972 = vmatprep.subr.bf16.mxu0 0
      %3973 = vmatpush2.bf16.msra.mxu0 0
      %3974 = vmatprep.subr.bf16.mxu0 0
      %3975 = vmatpush2.bf16.msra.mxu0 0
      %3976 = vmatprep.subr.bf16.mxu0 0
      %3977 = vmatpush2.bf16.msra.mxu0 0
      %3978 = vmatprep.subr.bf16.mxu0 0
      %3979 = vmatpush2.bf16.msra.mxu0 0
      %3980 = vmatprep.subr.bf16.mxu0 0
      %3981 = vmatpush2.bf16.msra.mxu0 0
      %3982 = vmatprep.subr.bf16.mxu0 0
      %3983 = vmatpush2.bf16.msra.mxu0 0
      %3984 = vmatprep.mubr.bf16.mxu0 0
      %3985 = vmatmul.mubr.bf16.gmra.mxu0 %v3868
      %v3986 = vpop.f32.mrf.mxu0
      %v3987 = vadd.f32 0.0, %v3986
      %v3988 = vpop.f32.mrf.mxu0
      %v3989 = vpop.f32.mrf.mxu0
      %v3990 = vadd.f32 0.0, %v3989
      %v3991 = vpop.f32.mrf.mxu0
      %3992 = vmatprep.mubr.bf16.mxu0 0
      %3993 = vmatmul.mubr.bf16.gmra.mxu0 %v3871
      %v3994 = vpop.f32.mrf.mxu0
      %v3995 = vadd.f32 0.0, %v3994
      %v3996 = vpop.f32.mrf.mxu0
      %v3997 = vpop.f32.mrf.mxu0
      %v3998 = vadd.f32 0.0, %v3997
      %v3999 = vpop.f32.mrf.mxu0
      %4000 = vmatprep.mubr.bf16.mxu0 0
      %4001 = vmatmul.mubr.bf16.gmra.mxu0 %v3874
      %v4002 = vpop.f32.mrf.mxu0
      %v4003 = vadd.f32 0.0, %v4002
      %v4004 = vpop.f32.mrf.mxu0
      %v4005 = vpop.f32.mrf.mxu0
      %v4006 = vadd.f32 0.0, %v4005
      %v4007 = vpop.f32.mrf.mxu0
      %4008 = vmatprep.mubr.bf16.mxu0 0
      %4009 = vmatmul.mubr.bf16.gmra.mxu0 %v3877
      %v4010 = vpop.f32.mrf.mxu0
      %v4011 = vadd.f32 0.0, %v4010
      %v4012 = vpop.f32.mrf.mxu0
      %v4013 = vpop.f32.mrf.mxu0
      %v4014 = vadd.f32 0.0, %v4013
      %v4015 = vpop.f32.mrf.mxu0
      %4016 = vdwg.mxu0
      %v4017 = vadd.f32 %v3461, %v3914
      %v4018 = vadd.f32 %v3462, %v3916
      %v4019 = vadd.f32 %v3463, %v3987
      %v4020 = vadd.f32 %v3464, %v3918
      %v4021 = vadd.f32 %v3465, %v3920
      %v4022 = vadd.f32 %v3466, %v3990
      %v4023 = vadd.f32 %v3467, %v3924
      %v4024 = vadd.f32 %v3468, %v3926
      %v4025 = vadd.f32 %v3469, %v3995
      %v4026 = vadd.f32 %v3470, %v3928
      %v4027 = vadd.f32 %v3471, %v3930
      %v4028 = vadd.f32 %v3472, %v3998
      %v4029 = vadd.f32 %v3473, %v3934
      %v4030 = vadd.f32 %v3474, %v3936
      %v4031 = vadd.f32 %v3475, %v4003
      %v4032 = vadd.f32 %v3476, %v3938
      %v4033 = vadd.f32 %v3477, %v3940
      %v4034 = vadd.f32 %v3478, %v4006
      %v4035 = vadd.f32 %v3479, %v3944
      %v4036 = vadd.f32 %v3480, %v3946
      %v4037 = vadd.f32 %v3481, %v4011
      %v4038 = vadd.f32 %v3482, %v3948
      %v4039 = vadd.f32 %v3483, %v3950
      %v4040 = vadd.f32 %v3484, %v4014
      %v4042 = vsel %vm2968, %v2777, 0
      %v4045 = vsel %vm2968, %v2786, 0
      %v4048 = vsel %vm2968, %v2795, 0
      %v4051 = vsel %vm2968, %v2804, 0
      %v4054 = vsel %vm2968, %v2780, 0
      %v4057 = vsel %vm2968, %v2789, 0
      %v4060 = vsel %vm2968, %v2798, 0
      %v4063 = vsel %vm2968, %v2807, 0
      %4065 = vmatprep.subr.bf16.mxu0 0
      %4066 = vmatpush1.bf16.xpose.msra.mxu0 0
      %4067 = vmatprep.subr.bf16.mxu0 0
      %4068 = vmatpush1.bf16.xpose.msra.mxu0 0
      %4069 = vmatprep.subr.bf16.mxu0 0
      %4070 = vmatpush1.bf16.xpose.msra.mxu0 0
      %4071 = vmatprep.subr.bf16.mxu0 0
      %4072 = vmatpush1.bf16.xpose.msra.mxu0 0
      %4073 = vmatprep.subr.bf16.mxu0 0
      %4074 = vmatpush1.bf16.xpose.msra.mxu0 %v4063
      %4075 = vmatprep.subr.bf16.mxu0 0
      %4076 = vmatpush1.bf16.xpose.msra.mxu0 %v4060
      %4077 = vmatprep.subr.bf16.mxu0 0
      %4078 = vmatpush1.bf16.xpose.msra.mxu0 %v4057
      %4079 = vmatprep.subr.bf16.mxu0 0
      %4080 = vmatpush1.bf16.xpose.msra.mxu0 %v4054
      %4081 = vmatprep.subr.bf16.mxu0 0
      %4082 = vmatpush2.bf16.xpose.msra.mxu0 0
      %4083 = vmatprep.subr.bf16.mxu0 0
      %4084 = vmatpush2.bf16.xpose.msra.mxu0 0
      %4085 = vmatprep.subr.bf16.mxu0 0
      %4086 = vmatpush2.bf16.xpose.msra.mxu0 0
      %4087 = vmatprep.subr.bf16.mxu0 0
      %4088 = vmatpush2.bf16.xpose.msra.mxu0 0
      %4089 = vmatprep.subr.bf16.mxu0 0
      %4090 = vmatpush2.bf16.xpose.msra.mxu0 0
      %4091 = vmatprep.subr.bf16.mxu0 0
      %4092 = vmatpush2.bf16.xpose.msra.mxu0 0
      %4093 = vmatprep.subr.bf16.mxu0 0
      %4094 = vmatpush2.bf16.xpose.msra.mxu0 0
      %4095 = vmatprep.subr.bf16.mxu0 0
      %4096 = vmatpush2.bf16.xpose.msra.mxu0 0
      %4097 = vmatprep.mubr.bf16.mxu0 0
      %4098 = vmatmul.mubr.bf16.gmra.mxu0 %v4042
      %v4099 = vpop.f32.mrf.mxu0
      %v4100 = vadd.f32 0.0, %v4099
      %v4101 = vpop.f32.mrf.mxu0
      %v4102 = vpop.f32.mrf.mxu0
      %v4103 = vadd.f32 0.0, %v4102
      %v4104 = vpop.f32.mrf.mxu0
      %4105 = vmatprep.mubr.bf16.mxu0 0
      %4106 = vmatmul.mubr.bf16.gmra.mxu0 %v4045
      %v4107 = vpop.f32.mrf.mxu0
      %v4108 = vadd.f32 0.0, %v4107
      %v4109 = vpop.f32.mrf.mxu0
      %v4110 = vpop.f32.mrf.mxu0
      %v4111 = vadd.f32 0.0, %v4110
      %v4112 = vpop.f32.mrf.mxu0
      %4113 = vmatprep.mubr.bf16.mxu0 0
      %4114 = vmatmul.mubr.bf16.gmra.mxu0 %v4048
      %v4115 = vpop.f32.mrf.mxu0
      %v4116 = vadd.f32 0.0, %v4115
      %v4117 = vpop.f32.mrf.mxu0
      %v4118 = vpop.f32.mrf.mxu0
      %v4119 = vadd.f32 0.0, %v4118
      %v4120 = vpop.f32.mrf.mxu0
      %4121 = vmatprep.mubr.bf16.mxu0 0
      %4122 = vmatmul.mubr.bf16.gmra.mxu0 %v4051
      %v4123 = vpop.f32.mrf.mxu0
      %v4124 = vadd.f32 0.0, %v4123
      %v4125 = vpop.f32.mrf.mxu0
      %v4126 = vpop.f32.mrf.mxu0
      %v4127 = vadd.f32 0.0, %v4126
      %v4128 = vpop.f32.mrf.mxu0
      %4129 = vdwg.mxu0
      %v4130 = vmul.f32 %v4100, 0.05103104
      %v4131 = vmul.f32 %v4103, 0.05103104
      %v4132 = vmul.f32 %v4108, 0.05103104
      %v4133 = vmul.f32 %v4111, 0.05103104
      %v4134 = vmul.f32 %v4116, 0.05103104
      %v4135 = vmul.f32 %v4119, 0.05103104
      %v4136 = vmul.f32 %v4124, 0.05103104
      %v4137 = vmul.f32 %v4127, 0.05103104
      %v4138 = vsel %vm2823, %v4130, -inf
      %v4139 = vsel %vm2824, %v4131, -inf
      %v4140 = vsel %vm2825, %v4132, -inf
      %v4141 = vsel %vm2826, %v4133, -inf
      %v4142 = vsel %vm2827, %v4134, -inf
      %v4143 = vsel %vm2828, %v4135, -inf
      %v4144 = vsel %vm2829, %v4136, -inf
      %v4145 = vsel %vm2830, %v4137, -inf
      %v4146 = vsel %vm2968, %v4138, -inf
      %4147 = vmax.xlane.f32.xlu0 %v4146
      %v4148 = vpop.xlane.xlu0 %4147
      %v4149 = vsel %vm2968, %v4139, -inf
      %4150 = vmax.xlane.f32.xlu0 %v4149
      %v4151 = vpop.xlane.xlu0 %4150
      %v4152 = vsel %vm2968, %v4140, -inf
      %4153 = vmax.xlane.f32.xlu0 %v4152
      %v4154 = vpop.xlane.xlu0 %4153
      %v4155 = vsel %vm2968, %v4141, -inf
      %4156 = vmax.xlane.f32.xlu0 %v4155
      %v4157 = vpop.xlane.xlu0 %4156
      %v4158 = vsel %vm2968, %v4142, -inf
      %4159 = vmax.xlane.f32.xlu0 %v4158
      %v4160 = vpop.xlane.xlu0 %4159
      %v4161 = vsel %vm2968, %v4143, -inf
      %4162 = vmax.xlane.f32.xlu0 %v4161
      %v4163 = vpop.xlane.xlu0 %4162
      %v4164 = vsel %vm2968, %v4144, -inf
      %4165 = vmax.xlane.f32.xlu0 %v4164
      %v4166 = vpop.xlane.xlu0 %4165
      %v4167 = vsel %vm2968, %v4145, -inf
      %4168 = vmax.xlane.f32.xlu0 %v4167
      %v4169 = vpop.xlane.xlu0 %4168
      %v4170 = vsub.f32 %v4138, %v4148
      %v4171 = vsub.f32 %v4139, %v4151
      %v4172 = vsub.f32 %v4140, %v4154
      %v4173 = vsub.f32 %v4141, %v4157
      %v4174 = vsub.f32 %v4142, %v4160
      %v4175 = vsub.f32 %v4143, %v4163
      %v4176 = vsub.f32 %v4144, %v4166
      %v4177 = vsub.f32 %v4145, %v4169
      %v4178 = vmul.f32 %v4170, 1.442695
      %v4179 = vpow.pop %v4178
      %v4180 = vmul.f32 %v4171, 1.442695
      %v4181 = vpow.pop %v4180
      %v4182 = vmul.f32 %v4172, 1.442695
      %v4183 = vpow.pop %v4182
      %v4184 = vmul.f32 %v4173, 1.442695
      %v4185 = vpow.pop %v4184
      %v4186 = vmul.f32 %v4174, 1.442695
      %v4187 = vpow.pop %v4186
      %v4188 = vmul.f32 %v4175, 1.442695
      %v4189 = vpow.pop %v4188
      %v4190 = vmul.f32 %v4176, 1.442695
      %v4191 = vpow.pop %v4190
      %v4192 = vmul.f32 %v4177, 1.442695
      %v4193 = vpow.pop %v4192
      %v4194 = vsel %vm2968, %v4179, 0.0
      %4195 = vadd.xlane.f32.xlu0 %v4194
      %v4196 = vpop.xlane.xlu0 %4195
      %v4197 = vsel %vm2968, %v4181, 0.0
      %4198 = vadd.xlane.f32.xlu0 %v4197
      %v4199 = vpop.xlane.xlu0 %4198
      %v4200 = vsel %vm2968, %v4183, 0.0
      %4201 = vadd.xlane.f32.xlu0 %v4200
      %v4202 = vpop.xlane.xlu0 %4201
      %v4203 = vsel %vm2968, %v4185, 0.0
      %4204 = vadd.xlane.f32.xlu0 %v4203
      %v4205 = vpop.xlane.xlu0 %4204
      %v4206 = vsel %vm2968, %v4187, 0.0
      %4207 = vadd.xlane.f32.xlu0 %v4206
      %v4208 = vpop.xlane.xlu0 %4207
      %v4209 = vsel %vm2968, %v4189, 0.0
      %4210 = vadd.xlane.f32.xlu0 %v4209
      %v4211 = vpop.xlane.xlu0 %4210
      %v4212 = vsel %vm2968, %v4191, 0.0
      %4213 = vadd.xlane.f32.xlu0 %v4212
      %v4214 = vpop.xlane.xlu0 %4213
      %v4215 = vsel %vm2968, %v4193, 0.0
      %4216 = vadd.xlane.f32.xlu0 %v4215
      %v4217 = vpop.xlane.xlu0 %4216
      %v4218 = vrcp.pop %v4196
      %v4219 = vrcp.pop %v4199
      %v4220 = vrcp.pop %v4202
      %v4221 = vrcp.pop %v4205
      %v4222 = vrcp.pop %v4208
      %v4223 = vrcp.pop %v4211
      %v4224 = vrcp.pop %v4214
      %v4225 = vrcp.pop %v4217
      %v4226 = vmul.f32 %v4179, %v4218
      %v4227 = vmul.f32 %v4181, %v4219
      %v4228 = vmul.f32 %v4183, %v4220
      %v4229 = vmul.f32 %v4185, %v4221
      %v4230 = vmul.f32 %v4187, %v4222
      %v4231 = vmul.f32 %v4189, %v4223
      %v4232 = vmul.f32 %v4191, %v4224
      %v4233 = vmul.f32 %v4193, %v4225
      %v4234 = vpack.c.bf16 %v4227, %v4226
      %v4235 = vpack.c.bf16 %v4229, %v4228
      %v4236 = vpack.c.bf16 %v4231, %v4230
      %v4237 = vpack.c.bf16 %v4233, %v4232
      %v4239 = vsel %vm2968, %v4234, 0
      %v4242 = vsel %vm2968, %v4235, 0
      %v4245 = vsel %vm2968, %v4236, 0
      %v4248 = vsel %vm2968, %v4237, 0
      %4250 = vmatprep.subr.bf16.mxu0 0
      %4251 = vmatpush1.bf16.msra.mxu0 0
      %4252 = vmatprep.subr.bf16.mxu0 0
      %4253 = vmatpush1.bf16.msra.mxu0 0
      %4254 = vmatprep.subr.bf16.mxu0 0
      %4255 = vmatpush1.bf16.msra.mxu0 0
      %4256 = vmatprep.subr.bf16.mxu0 0
      %4257 = vmatpush1.bf16.msra.mxu0 0
      %4258 = vmatprep.subr.bf16.mxu0 0
      %4259 = vmatpush1.bf16.msra.mxu0 %v2810
      %4260 = vmatprep.subr.bf16.mxu0 0
      %4261 = vmatpush1.bf16.msra.mxu0 %v2801
      %4262 = vmatprep.subr.bf16.mxu0 0
      %4263 = vmatpush1.bf16.msra.mxu0 %v2792
      %4264 = vmatprep.subr.bf16.mxu0 0
      %4265 = vmatpush1.bf16.msra.mxu0 %v2783
      %4266 = vmatprep.subr.bf16.mxu0 0
      %4267 = vmatpush2.bf16.msra.mxu0 0
      %4268 = vmatprep.subr.bf16.mxu0 0
      %4269 = vmatpush2.bf16.msra.mxu0 0
      %4270 = vmatprep.subr.bf16.mxu0 0
      %4271 = vmatpush2.bf16.msra.mxu0 0
      %4272 = vmatprep.subr.bf16.mxu0 0
      %4273 = vmatpush2.bf16.msra.mxu0 0
      %4274 = vmatprep.subr.bf16.mxu0 0
      %4275 = vmatpush2.bf16.msra.mxu0 0
      %4276 = vmatprep.subr.bf16.mxu0 0
      %4277 = vmatpush2.bf16.msra.mxu0 0
      %4278 = vmatprep.subr.bf16.mxu0 0
      %4279 = vmatpush2.bf16.msra.mxu0 0
      %4280 = vmatprep.subr.bf16.mxu0 0
      %4281 = vmatpush2.bf16.msra.mxu0 0
      %4282 = vmatprep.mubr.bf16.mxu0 0
      %4283 = vmatmul.mubr.bf16.gmra.mxu0 %v4239
      %v4284 = vpop.f32.mrf.mxu0
      %v4285 = vadd.f32 0.0, %v4284
      %v4286 = vpop.f32.mrf.mxu0
      %v4287 = vpop.f32.mrf.mxu0
      %v4288 = vadd.f32 0.0, %v4287
      %v4289 = vpop.f32.mrf.mxu0
      %4290 = vmatprep.mubr.bf16.mxu0 0
      %4291 = vmatmul.mubr.bf16.gmra.mxu0 %v4242
      %v4292 = vpop.f32.mrf.mxu0
      %v4293 = vadd.f32 0.0, %v4292
      %v4294 = vpop.f32.mrf.mxu0
      %v4295 = vpop.f32.mrf.mxu0
      %v4296 = vadd.f32 0.0, %v4295
      %v4297 = vpop.f32.mrf.mxu0
      %4298 = vmatprep.mubr.bf16.mxu0 0
      %4299 = vmatmul.mubr.bf16.gmra.mxu0 %v4245
      %v4300 = vpop.f32.mrf.mxu0
      %v4301 = vadd.f32 0.0, %v4300
      %v4302 = vpop.f32.mrf.mxu0
      %v4303 = vpop.f32.mrf.mxu0
      %v4304 = vadd.f32 0.0, %v4303
      %v4305 = vpop.f32.mrf.mxu0
      %4306 = vmatprep.mubr.bf16.mxu0 0
      %4307 = vmatmul.mubr.bf16.gmra.mxu0 %v4248
      %v4308 = vpop.f32.mrf.mxu0
      %v4309 = vadd.f32 0.0, %v4308
      %v4310 = vpop.f32.mrf.mxu0
      %v4311 = vpop.f32.mrf.mxu0
      %v4312 = vadd.f32 0.0, %v4311
      %v4313 = vpop.f32.mrf.mxu0
      %4314 = vdwg.mxu0
      %v4315 = vpack.c.bf16 %v4288, %v4285
      %v4316 = vpack.c.bf16 %v4296, %v4293
      %v4317 = vpack.c.bf16 %v4304, %v4301
      %v4318 = vpack.c.bf16 %v4312, %v4309
      %v4335 = vunpack.c.l.b16 %v2863
      %v4336 = vunpack.c.h.b16 %v2863
      %v4337 = vunpack.c.l.b16 %v2864
      %v4338 = vunpack.c.l.b16 %v2865
      %v4339 = vunpack.c.h.b16 %v2865
      %v4340 = vunpack.c.l.b16 %v2866
      %v4341 = vunpack.c.l.b16 %v2867
      %v4342 = vunpack.c.h.b16 %v2867
      %v4343 = vunpack.c.l.b16 %v2868
      %v4344 = vunpack.c.l.b16 %v2869
      %v4345 = vunpack.c.h.b16 %v2869
      %v4346 = vunpack.c.l.b16 %v2870
      %v4347 = vunpack.c.l.b16 %v2871
      %v4348 = vunpack.c.h.b16 %v2871
      %v4349 = vunpack.c.l.b16 %v2872
      %v4350 = vunpack.c.l.b16 %v2873
      %v4351 = vunpack.c.h.b16 %v2873
      %v4352 = vunpack.c.l.b16 %v2874
      %v4353 = vunpack.c.l.b16 %v2875
      %v4354 = vunpack.c.h.b16 %v2875
      %v4355 = vunpack.c.l.b16 %v2876
      %v4356 = vunpack.c.l.b16 %v2877
      %v4357 = vunpack.c.h.b16 %v2877
      %v4358 = vunpack.c.l.b16 %v2878
      %v4359 = vpack.c.b16 %v4338, %v4335
      %v4360 = vpack.c.b16 %v4339, %v4336
      %v4361 = vpack.c.b16 %v4340, %v4337
      %v4362 = vpack.c.b16 %v4344, %v4341
      %v4363 = vpack.c.b16 %v4345, %v4342
      %v4364 = vpack.c.b16 %v4346, %v4343
      %v4365 = vpack.c.b16 %v4350, %v4347
      %v4366 = vpack.c.b16 %v4351, %v4348
      %v4367 = vpack.c.b16 %v4352, %v4349
      %v4368 = vpack.c.b16 %v4356, %v4353
      %v4369 = vpack.c.b16 %v4357, %v4354
      %v4370 = vpack.c.b16 %v4358, %v4355
      %v4384 = vsel %vm2968, %v4315, 0
      %v4387 = vsel %vm2968, %v4316, 0
      %v4390 = vsel %vm2968, %v4317, 0
      %v4393 = vsel %vm2968, %v4318, 0
      %4395 = vmatprep.subr.bf16.mxu0 0
      %4396 = vmatpush1.bf16.msra.mxu0 0
      %4397 = vmatprep.subr.bf16.mxu0 0
      %4398 = vmatpush1.bf16.msra.mxu0 0
      %4399 = vmatprep.subr.bf16.mxu0 0
      %4400 = vmatpush1.bf16.msra.mxu0 0
      %4401 = vmatprep.subr.bf16.mxu0 0
      %4402 = vmatpush1.bf16.msra.mxu0 0
      %4403 = vmatprep.subr.bf16.mxu0 %v4369
      %4404 = vmatpush1.bf16.msra.mxu0 %v4368
      %4405 = vmatprep.subr.bf16.mxu0 %v4366
      %4406 = vmatpush1.bf16.msra.mxu0 %v4365
      %4407 = vmatprep.subr.bf16.mxu0 %v4363
      %4408 = vmatpush1.bf16.msra.mxu0 %v4362
      %4409 = vmatprep.subr.bf16.mxu0 %v4360
      %4410 = vmatpush1.bf16.msra.mxu0 %v4359
      %4411 = vmatprep.subr.bf16.mxu0 0
      %4412 = vmatpush2.bf16.msra.mxu0 0
      %4413 = vmatprep.subr.bf16.mxu0 0
      %4414 = vmatpush2.bf16.msra.mxu0 0
      %4415 = vmatprep.subr.bf16.mxu0 0
      %4416 = vmatpush2.bf16.msra.mxu0 0
      %4417 = vmatprep.subr.bf16.mxu0 0
      %4418 = vmatpush2.bf16.msra.mxu0 0
      %4419 = vmatprep.subr.bf16.mxu0 0
      %4420 = vmatpush2.bf16.msra.mxu0 0
      %4421 = vmatprep.subr.bf16.mxu0 0
      %4422 = vmatpush2.bf16.msra.mxu0 0
      %4423 = vmatprep.subr.bf16.mxu0 0
      %4424 = vmatpush2.bf16.msra.mxu0 0
      %4425 = vmatprep.subr.bf16.mxu0 0
      %4426 = vmatpush2.bf16.msra.mxu0 0
      %4427 = vmatprep.mubr.bf16.mxu0 0
      %4428 = vmatmul.mubr.bf16.gmra.mxu0 %v4384
      %v4429 = vpop.f32.mrf.mxu0
      %v4430 = vadd.f32 0.0, %v4429
      %v4431 = vpop.f32.mrf.mxu0
      %v4432 = vadd.f32 0.0, %v4431
      %v4433 = vpop.f32.mrf.mxu0
      %v4434 = vadd.f32 0.0, %v4433
      %v4435 = vpop.f32.mrf.mxu0
      %v4436 = vadd.f32 0.0, %v4435
      %4437 = vmatprep.mubr.bf16.mxu0 0
      %4438 = vmatmul.mubr.bf16.gmra.mxu0 %v4387
      %v4439 = vpop.f32.mrf.mxu0
      %v4440 = vadd.f32 0.0, %v4439
      %v4441 = vpop.f32.mrf.mxu0
      %v4442 = vadd.f32 0.0, %v4441
      %v4443 = vpop.f32.mrf.mxu0
      %v4444 = vadd.f32 0.0, %v4443
      %v4445 = vpop.f32.mrf.mxu0
      %v4446 = vadd.f32 0.0, %v4445
      %4447 = vmatprep.mubr.bf16.mxu0 0
      %4448 = vmatmul.mubr.bf16.gmra.mxu0 %v4390
      %v4449 = vpop.f32.mrf.mxu0
      %v4450 = vadd.f32 0.0, %v4449
      %v4451 = vpop.f32.mrf.mxu0
      %v4452 = vadd.f32 0.0, %v4451
      %v4453 = vpop.f32.mrf.mxu0
      %v4454 = vadd.f32 0.0, %v4453
      %v4455 = vpop.f32.mrf.mxu0
      %v4456 = vadd.f32 0.0, %v4455
      %4457 = vmatprep.mubr.bf16.mxu0 0
      %4458 = vmatmul.mubr.bf16.gmra.mxu0 %v4393
      %v4459 = vpop.f32.mrf.mxu0
      %v4460 = vadd.f32 0.0, %v4459
      %v4461 = vpop.f32.mrf.mxu0
      %v4462 = vadd.f32 0.0, %v4461
      %v4463 = vpop.f32.mrf.mxu0
      %v4464 = vadd.f32 0.0, %v4463
      %v4465 = vpop.f32.mrf.mxu0
      %v4466 = vadd.f32 0.0, %v4465
      %4467 = vdwg.mxu0
      %4468 = vmatprep.subr.bf16.mxu0 0
      %4469 = vmatpush1.bf16.msra.mxu0 0
      %4470 = vmatprep.subr.bf16.mxu0 0
      %4471 = vmatpush1.bf16.msra.mxu0 0
      %4472 = vmatprep.subr.bf16.mxu0 0
      %4473 = vmatpush1.bf16.msra.mxu0 0
      %4474 = vmatprep.subr.bf16.mxu0 0
      %4475 = vmatpush1.bf16.msra.mxu0 0
      %4476 = vmatprep.subr.bf16.mxu0 0
      %4477 = vmatpush1.bf16.msra.mxu0 %v4370
      %4478 = vmatprep.subr.bf16.mxu0 0
      %4479 = vmatpush1.bf16.msra.mxu0 %v4367
      %4480 = vmatprep.subr.bf16.mxu0 0
      %4481 = vmatpush1.bf16.msra.mxu0 %v4364
      %4482 = vmatprep.subr.bf16.mxu0 0
      %4483 = vmatpush1.bf16.msra.mxu0 %v4361
      %4484 = vmatprep.subr.bf16.mxu0 0
      %4485 = vmatpush2.bf16.msra.mxu0 0
      %4486 = vmatprep.subr.bf16.mxu0 0
      %4487 = vmatpush2.bf16.msra.mxu0 0
      %4488 = vmatprep.subr.bf16.mxu0 0
      %4489 = vmatpush2.bf16.msra.mxu0 0
      %4490 = vmatprep.subr.bf16.mxu0 0
      %4491 = vmatpush2.bf16.msra.mxu0 0
      %4492 = vmatprep.subr.bf16.mxu0 0
      %4493 = vmatpush2.bf16.msra.mxu0 0
      %4494 = vmatprep.subr.bf16.mxu0 0
      %4495 = vmatpush2.bf16.msra.mxu0 0
      %4496 = vmatprep.subr.bf16.mxu0 0
      %4497 = vmatpush2.bf16.msra.mxu0 0
      %4498 = vmatprep.subr.bf16.mxu0 0
      %4499 = vmatpush2.bf16.msra.mxu0 0
      %4500 = vmatprep.mubr.bf16.mxu0 0
      %4501 = vmatmul.mubr.bf16.gmra.mxu0 %v4384
      %v4502 = vpop.f32.mrf.mxu0
      %v4503 = vadd.f32 0.0, %v4502
      %v4504 = vpop.f32.mrf.mxu0
      %v4505 = vpop.f32.mrf.mxu0
      %v4506 = vadd.f32 0.0, %v4505
      %v4507 = vpop.f32.mrf.mxu0
      %4508 = vmatprep.mubr.bf16.mxu0 0
      %4509 = vmatmul.mubr.bf16.gmra.mxu0 %v4387
      %v4510 = vpop.f32.mrf.mxu0
      %v4511 = vadd.f32 0.0, %v4510
      %v4512 = vpop.f32.mrf.mxu0
      %v4513 = vpop.f32.mrf.mxu0
      %v4514 = vadd.f32 0.0, %v4513
      %v4515 = vpop.f32.mrf.mxu0
      %4516 = vmatprep.mubr.bf16.mxu0 0
      %4517 = vmatmul.mubr.bf16.gmra.mxu0 %v4390
      %v4518 = vpop.f32.mrf.mxu0
      %v4519 = vadd.f32 0.0, %v4518
      %v4520 = vpop.f32.mrf.mxu0
      %v4521 = vpop.f32.mrf.mxu0
      %v4522 = vadd.f32 0.0, %v4521
      %v4523 = vpop.f32.mrf.mxu0
      %4524 = vmatprep.mubr.bf16.mxu0 0
      %4525 = vmatmul.mubr.bf16.gmra.mxu0 %v4393
      %v4526 = vpop.f32.mrf.mxu0
      %v4527 = vadd.f32 0.0, %v4526
      %v4528 = vpop.f32.mrf.mxu0
      %v4529 = vpop.f32.mrf.mxu0
      %v4530 = vadd.f32 0.0, %v4529
      %v4531 = vpop.f32.mrf.mxu0
      %4532 = vdwg.mxu0
      %v4533 = vadd.f32 %v4017, %v4430
      %v4534 = vadd.f32 %v4018, %v4432
      %v4535 = vadd.f32 %v4019, %v4503
      %v4536 = vadd.f32 %v4020, %v4434
      %v4537 = vadd.f32 %v4021, %v4436
      %v4538 = vadd.f32 %v4022, %v4506
      %v4539 = vadd.f32 %v4023, %v4440
      %v4540 = vadd.f32 %v4024, %v4442
      %v4541 = vadd.f32 %v4025, %v4511
      %v4542 = vadd.f32 %v4026, %v4444
      %v4543 = vadd.f32 %v4027, %v4446
      %v4544 = vadd.f32 %v4028, %v4514
      %v4545 = vadd.f32 %v4029, %v4450
      %v4546 = vadd.f32 %v4030, %v4452
      %v4547 = vadd.f32 %v4031, %v4519
      %v4548 = vadd.f32 %v4032, %v4454
      %v4549 = vadd.f32 %v4033, %v4456
      %v4550 = vadd.f32 %v4034, %v4522
      %v4551 = vadd.f32 %v4035, %v4460
      %v4552 = vadd.f32 %v4036, %v4462
      %v4553 = vadd.f32 %v4037, %v4527
      %v4554 = vadd.f32 %v4038, %v4464
      %v4555 = vadd.f32 %v4039, %v4466
      %v4556 = vadd.f32 %v4040, %v4530
      %4561 = vrot.lane.b32.xlu0 %v2777, 64
      %v4562 = vpop.permute.xlu0 %4561
      %4563 = vrot.lane.b32.xlu0 %v2786, 64
      %v4564 = vpop.permute.xlu0 %4563
      %4565 = vrot.lane.b32.xlu0 %v2795, 64
      %v4566 = vpop.permute.xlu0 %4565
      %4567 = vrot.lane.b32.xlu0 %v2804, 64
      %v4568 = vpop.permute.xlu0 %4567
      %4573 = vrot.lane.b32.xlu0 %v2780, 64
      %v4574 = vpop.permute.xlu0 %4573
      %4575 = vrot.lane.b32.xlu0 %v2789, 64
      %v4576 = vpop.permute.xlu0 %4575
      %4577 = vrot.lane.b32.xlu0 %v2798, 64
      %v4578 = vpop.permute.xlu0 %4577
      %4579 = vrot.lane.b32.xlu0 %v2807, 64
      %v4580 = vpop.permute.xlu0 %4579
      %v4582 = vsel %vm2968, %v4562, 0
      %v4585 = vsel %vm2968, %v4564, 0
      %v4588 = vsel %vm2968, %v4566, 0
      %v4591 = vsel %vm2968, %v4568, 0
      %v4594 = vsel %vm2968, %v4574, 0
      %v4597 = vsel %vm2968, %v4576, 0
      %v4600 = vsel %vm2968, %v4578, 0
      %v4603 = vsel %vm2968, %v4580, 0
      %4605 = vmatprep.subr.bf16.mxu0 0
      %4606 = vmatpush1.bf16.xpose.msra.mxu0 0
      %4607 = vmatprep.subr.bf16.mxu0 0
      %4608 = vmatpush1.bf16.xpose.msra.mxu0 0
      %4609 = vmatprep.subr.bf16.mxu0 0
      %4610 = vmatpush1.bf16.xpose.msra.mxu0 0
      %4611 = vmatprep.subr.bf16.mxu0 0
      %4612 = vmatpush1.bf16.xpose.msra.mxu0 0
      %4613 = vmatprep.subr.bf16.mxu0 0
      %4614 = vmatpush1.bf16.xpose.msra.mxu0 %v4603
      %4615 = vmatprep.subr.bf16.mxu0 0
      %4616 = vmatpush1.bf16.xpose.msra.mxu0 %v4600
      %4617 = vmatprep.subr.bf16.mxu0 0
      %4618 = vmatpush1.bf16.xpose.msra.mxu0 %v4597
      %4619 = vmatprep.subr.bf16.mxu0 0
      %4620 = vmatpush1.bf16.xpose.msra.mxu0 %v4594
      %4621 = vmatprep.subr.bf16.mxu0 0
      %4622 = vmatpush2.bf16.xpose.msra.mxu0 0
      %4623 = vmatprep.subr.bf16.mxu0 0
      %4624 = vmatpush2.bf16.xpose.msra.mxu0 0
      %4625 = vmatprep.subr.bf16.mxu0 0
      %4626 = vmatpush2.bf16.xpose.msra.mxu0 0
      %4627 = vmatprep.subr.bf16.mxu0 0
      %4628 = vmatpush2.bf16.xpose.msra.mxu0 0
      %4629 = vmatprep.subr.bf16.mxu0 0
      %4630 = vmatpush2.bf16.xpose.msra.mxu0 0
      %4631 = vmatprep.subr.bf16.mxu0 0
      %4632 = vmatpush2.bf16.xpose.msra.mxu0 0
      %4633 = vmatprep.subr.bf16.mxu0 0
      %4634 = vmatpush2.bf16.xpose.msra.mxu0 0
      %4635 = vmatprep.subr.bf16.mxu0 0
      %4636 = vmatpush2.bf16.xpose.msra.mxu0 0
      %4637 = vmatprep.mubr.bf16.mxu0 0
      %4638 = vmatmul.mubr.bf16.gmra.mxu0 %v4582
      %v4639 = vpop.f32.mrf.mxu0
      %v4640 = vadd.f32 0.0, %v4639
      %v4641 = vpop.f32.mrf.mxu0
      %v4642 = vpop.f32.mrf.mxu0
      %v4643 = vadd.f32 0.0, %v4642
      %v4644 = vpop.f32.mrf.mxu0
      %4645 = vmatprep.mubr.bf16.mxu0 0
      %4646 = vmatmul.mubr.bf16.gmra.mxu0 %v4585
      %v4647 = vpop.f32.mrf.mxu0
      %v4648 = vadd.f32 0.0, %v4647
      %v4649 = vpop.f32.mrf.mxu0
      %v4650 = vpop.f32.mrf.mxu0
      %v4651 = vadd.f32 0.0, %v4650
      %v4652 = vpop.f32.mrf.mxu0
      %4653 = vmatprep.mubr.bf16.mxu0 0
      %4654 = vmatmul.mubr.bf16.gmra.mxu0 %v4588
      %v4655 = vpop.f32.mrf.mxu0
      %v4656 = vadd.f32 0.0, %v4655
      %v4657 = vpop.f32.mrf.mxu0
      %v4658 = vpop.f32.mrf.mxu0
      %v4659 = vadd.f32 0.0, %v4658
      %v4660 = vpop.f32.mrf.mxu0
      %4661 = vmatprep.mubr.bf16.mxu0 0
      %4662 = vmatmul.mubr.bf16.gmra.mxu0 %v4591
      %v4663 = vpop.f32.mrf.mxu0
      %v4664 = vadd.f32 0.0, %v4663
      %v4665 = vpop.f32.mrf.mxu0
      %v4666 = vpop.f32.mrf.mxu0
      %v4667 = vadd.f32 0.0, %v4666
      %v4668 = vpop.f32.mrf.mxu0
      %4669 = vdwg.mxu0
      %v4670 = vmul.f32 %v4640, 0.05103104
      %v4671 = vmul.f32 %v4643, 0.05103104
      %v4672 = vmul.f32 %v4648, 0.05103104
      %v4673 = vmul.f32 %v4651, 0.05103104
      %v4674 = vmul.f32 %v4656, 0.05103104
      %v4675 = vmul.f32 %v4659, 0.05103104
      %v4676 = vmul.f32 %v4664, 0.05103104
      %v4677 = vmul.f32 %v4667, 0.05103104
      %v4678 = vsel %vm2823, %v4670, -inf
      %v4679 = vsel %vm2824, %v4671, -inf
      %v4680 = vsel %vm2825, %v4672, -inf
      %v4681 = vsel %vm2826, %v4673, -inf
      %v4682 = vsel %vm2827, %v4674, -inf
      %v4683 = vsel %vm2828, %v4675, -inf
      %v4684 = vsel %vm2829, %v4676, -inf
      %v4685 = vsel %vm2830, %v4677, -inf
      %v4686 = vsel %vm2968, %v4678, -inf
      %4687 = vmax.xlane.f32.xlu0 %v4686
      %v4688 = vpop.xlane.xlu0 %4687
      %v4689 = vsel %vm2968, %v4679, -inf
      %4690 = vmax.xlane.f32.xlu0 %v4689
      %v4691 = vpop.xlane.xlu0 %4690
      %v4692 = vsel %vm2968, %v4680, -inf
      %4693 = vmax.xlane.f32.xlu0 %v4692
      %v4694 = vpop.xlane.xlu0 %4693
      %v4695 = vsel %vm2968, %v4681, -inf
      %4696 = vmax.xlane.f32.xlu0 %v4695
      %v4697 = vpop.xlane.xlu0 %4696
      %v4698 = vsel %vm2968, %v4682, -inf
      %4699 = vmax.xlane.f32.xlu0 %v4698
      %v4700 = vpop.xlane.xlu0 %4699
      %v4701 = vsel %vm2968, %v4683, -inf
      %4702 = vmax.xlane.f32.xlu0 %v4701
      %v4703 = vpop.xlane.xlu0 %4702
      %v4704 = vsel %vm2968, %v4684, -inf
      %4705 = vmax.xlane.f32.xlu0 %v4704
      %v4706 = vpop.xlane.xlu0 %4705
      %v4707 = vsel %vm2968, %v4685, -inf
      %4708 = vmax.xlane.f32.xlu0 %v4707
      %v4709 = vpop.xlane.xlu0 %4708
      %v4710 = vsub.f32 %v4678, %v4688
      %v4711 = vsub.f32 %v4679, %v4691
      %v4712 = vsub.f32 %v4680, %v4694
      %v4713 = vsub.f32 %v4681, %v4697
      %v4714 = vsub.f32 %v4682, %v4700
      %v4715 = vsub.f32 %v4683, %v4703
      %v4716 = vsub.f32 %v4684, %v4706
      %v4717 = vsub.f32 %v4685, %v4709
      %v4718 = vmul.f32 %v4710, 1.442695
      %v4719 = vpow.pop %v4718
      %v4720 = vmul.f32 %v4711, 1.442695
      %v4721 = vpow.pop %v4720
      %v4722 = vmul.f32 %v4712, 1.442695
      %v4723 = vpow.pop %v4722
      %v4724 = vmul.f32 %v4713, 1.442695
      %v4725 = vpow.pop %v4724
      %v4726 = vmul.f32 %v4714, 1.442695
      %v4727 = vpow.pop %v4726
      %v4728 = vmul.f32 %v4715, 1.442695
      %v4729 = vpow.pop %v4728
      %v4730 = vmul.f32 %v4716, 1.442695
      %v4731 = vpow.pop %v4730
      %v4732 = vmul.f32 %v4717, 1.442695
      %v4733 = vpow.pop %v4732
      %v4734 = vsel %vm2968, %v4719, 0.0
      %4735 = vadd.xlane.f32.xlu0 %v4734
      %v4736 = vpop.xlane.xlu0 %4735
      %v4737 = vsel %vm2968, %v4721, 0.0
      %4738 = vadd.xlane.f32.xlu0 %v4737
      %v4739 = vpop.xlane.xlu0 %4738
      %v4740 = vsel %vm2968, %v4723, 0.0
      %4741 = vadd.xlane.f32.xlu0 %v4740
      %v4742 = vpop.xlane.xlu0 %4741
      %v4743 = vsel %vm2968, %v4725, 0.0
      %4744 = vadd.xlane.f32.xlu0 %v4743
      %v4745 = vpop.xlane.xlu0 %4744
      %v4746 = vsel %vm2968, %v4727, 0.0
      %4747 = vadd.xlane.f32.xlu0 %v4746
      %v4748 = vpop.xlane.xlu0 %4747
      %v4749 = vsel %vm2968, %v4729, 0.0
      %4750 = vadd.xlane.f32.xlu0 %v4749
      %v4751 = vpop.xlane.xlu0 %4750
      %v4752 = vsel %vm2968, %v4731, 0.0
      %4753 = vadd.xlane.f32.xlu0 %v4752
      %v4754 = vpop.xlane.xlu0 %4753
      %v4755 = vsel %vm2968, %v4733, 0.0
      %4756 = vadd.xlane.f32.xlu0 %v4755
      %v4757 = vpop.xlane.xlu0 %4756
      %v4758 = vrcp.pop %v4736
      %v4759 = vrcp.pop %v4739
      %v4760 = vrcp.pop %v4742
      %v4761 = vrcp.pop %v4745
      %v4762 = vrcp.pop %v4748
      %v4763 = vrcp.pop %v4751
      %v4764 = vrcp.pop %v4754
      %v4765 = vrcp.pop %v4757
      %v4766 = vmul.f32 %v4719, %v4758
      %v4767 = vmul.f32 %v4721, %v4759
      %v4768 = vmul.f32 %v4723, %v4760
      %v4769 = vmul.f32 %v4725, %v4761
      %v4770 = vmul.f32 %v4727, %v4762
      %v4771 = vmul.f32 %v4729, %v4763
      %v4772 = vmul.f32 %v4731, %v4764
      %v4773 = vmul.f32 %v4733, %v4765
      %v4774 = vpack.c.bf16 %v4767, %v4766
      %v4775 = vpack.c.bf16 %v4769, %v4768
      %v4776 = vpack.c.bf16 %v4771, %v4770
      %v4777 = vpack.c.bf16 %v4773, %v4772
      %4782 = vrot.lane.b32.xlu0 %v2783, 64
      %v4783 = vpop.permute.xlu0 %4782
      %4784 = vrot.lane.b32.xlu0 %v2792, 64
      %v4785 = vpop.permute.xlu0 %4784
      %4786 = vrot.lane.b32.xlu0 %v2801, 64
      %v4787 = vpop.permute.xlu0 %4786
      %4788 = vrot.lane.b32.xlu0 %v2810, 64
      %v4789 = vpop.permute.xlu0 %4788
      %v4795 = vsel %vm2968, %v4774, 0
      %v4798 = vsel %vm2968, %v4775, 0
      %v4801 = vsel %vm2968, %v4776, 0
      %v4804 = vsel %vm2968, %v4777, 0
      %4806 = vmatprep.subr.bf16.mxu0 0
      %4807 = vmatpush1.bf16.msra.mxu0 0
      %4808 = vmatprep.subr.bf16.mxu0 0
      %4809 = vmatpush1.bf16.msra.mxu0 0
      %4810 = vmatprep.subr.bf16.mxu0 0
      %4811 = vmatpush1.bf16.msra.mxu0 0
      %4812 = vmatprep.subr.bf16.mxu0 0
      %4813 = vmatpush1.bf16.msra.mxu0 0
      %4814 = vmatprep.subr.bf16.mxu0 0
      %4815 = vmatpush1.bf16.msra.mxu0 %v4789
      %4816 = vmatprep.subr.bf16.mxu0 0
      %4817 = vmatpush1.bf16.msra.mxu0 %v4787
      %4818 = vmatprep.subr.bf16.mxu0 0
      %4819 = vmatpush1.bf16.msra.mxu0 %v4785
      %4820 = vmatprep.subr.bf16.mxu0 0
      %4821 = vmatpush1.bf16.msra.mxu0 %v4783
      %4822 = vmatprep.subr.bf16.mxu0 0
      %4823 = vmatpush2.bf16.msra.mxu0 0
      %4824 = vmatprep.subr.bf16.mxu0 0
      %4825 = vmatpush2.bf16.msra.mxu0 0
      %4826 = vmatprep.subr.bf16.mxu0 0
      %4827 = vmatpush2.bf16.msra.mxu0 0
      %4828 = vmatprep.subr.bf16.mxu0 0
      %4829 = vmatpush2.bf16.msra.mxu0 0
      %4830 = vmatprep.subr.bf16.mxu0 0
      %4831 = vmatpush2.bf16.msra.mxu0 0
      %4832 = vmatprep.subr.bf16.mxu0 0
      %4833 = vmatpush2.bf16.msra.mxu0 0
      %4834 = vmatprep.subr.bf16.mxu0 0
      %4835 = vmatpush2.bf16.msra.mxu0 0
      %4836 = vmatprep.subr.bf16.mxu0 0
      %4837 = vmatpush2.bf16.msra.mxu0 0
      %4838 = vmatprep.mubr.bf16.mxu0 0
      %4839 = vmatmul.mubr.bf16.gmra.mxu0 %v4795
      %v4840 = vpop.f32.mrf.mxu0
      %v4841 = vadd.f32 0.0, %v4840
      %v4842 = vpop.f32.mrf.mxu0
      %v4843 = vpop.f32.mrf.mxu0
      %v4844 = vadd.f32 0.0, %v4843
      %v4845 = vpop.f32.mrf.mxu0
      %4846 = vmatprep.mubr.bf16.mxu0 0
      %4847 = vmatmul.mubr.bf16.gmra.mxu0 %v4798
      %v4848 = vpop.f32.mrf.mxu0
      %v4849 = vadd.f32 0.0, %v4848
      %v4850 = vpop.f32.mrf.mxu0
      %v4851 = vpop.f32.mrf.mxu0
      %v4852 = vadd.f32 0.0, %v4851
      %v4853 = vpop.f32.mrf.mxu0
      %4854 = vmatprep.mubr.bf16.mxu0 0
      %4855 = vmatmul.mubr.bf16.gmra.mxu0 %v4801
      %v4856 = vpop.f32.mrf.mxu0
      %v4857 = vadd.f32 0.0, %v4856
      %v4858 = vpop.f32.mrf.mxu0
      %v4859 = vpop.f32.mrf.mxu0
      %v4860 = vadd.f32 0.0, %v4859
      %v4861 = vpop.f32.mrf.mxu0
      %4862 = vmatprep.mubr.bf16.mxu0 0
      %4863 = vmatmul.mubr.bf16.gmra.mxu0 %v4804
      %v4864 = vpop.f32.mrf.mxu0
      %v4865 = vadd.f32 0.0, %v4864
      %v4866 = vpop.f32.mrf.mxu0
      %v4867 = vpop.f32.mrf.mxu0
      %v4868 = vadd.f32 0.0, %v4867
      %v4869 = vpop.f32.mrf.mxu0
      %4870 = vdwg.mxu0
      %v4871 = vpack.c.bf16 %v4844, %v4841
      %v4872 = vpack.c.bf16 %v4852, %v4849
      %v4873 = vpack.c.bf16 %v4860, %v4857
      %v4874 = vpack.c.bf16 %v4868, %v4865
      %v4891 = vunpack.c.l.b16 %v2879
      %v4892 = vunpack.c.h.b16 %v2879
      %v4893 = vunpack.c.l.b16 %v2880
      %v4894 = vunpack.c.l.b16 %v2881
      %v4895 = vunpack.c.h.b16 %v2881
      %v4896 = vunpack.c.l.b16 %v2882
      %v4897 = vunpack.c.l.b16 %v2883
      %v4898 = vunpack.c.h.b16 %v2883
      %v4899 = vunpack.c.l.b16 %v2884
      %v4900 = vunpack.c.l.b16 %v2885
      %v4901 = vunpack.c.h.b16 %v2885
      %v4902 = vunpack.c.l.b16 %v2886
      %v4903 = vunpack.c.l.b16 %v2887
      %v4904 = vunpack.c.h.b16 %v2887
      %v4905 = vunpack.c.l.b16 %v2888
      %v4906 = vunpack.c.l.b16 %v2889
      %v4907 = vunpack.c.h.b16 %v2889
      %v4908 = vunpack.c.l.b16 %v2890
      %v4909 = vunpack.c.l.b16 %v2891
      %v4910 = vunpack.c.h.b16 %v2891
      %v4911 = vunpack.c.l.b16 %v2892
      %v4912 = vunpack.c.l.b16 %v2893
      %v4913 = vunpack.c.h.b16 %v2893
      %v4914 = vunpack.c.l.b16 %v2894
      %v4915 = vpack.c.b16 %v4894, %v4891
      %v4916 = vpack.c.b16 %v4895, %v4892
      %v4917 = vpack.c.b16 %v4896, %v4893
      %v4918 = vpack.c.b16 %v4900, %v4897
      %v4919 = vpack.c.b16 %v4901, %v4898
      %v4920 = vpack.c.b16 %v4902, %v4899
      %v4921 = vpack.c.b16 %v4906, %v4903
      %v4922 = vpack.c.b16 %v4907, %v4904
      %v4923 = vpack.c.b16 %v4908, %v4905
      %v4924 = vpack.c.b16 %v4912, %v4909
      %v4925 = vpack.c.b16 %v4913, %v4910
      %v4926 = vpack.c.b16 %v4914, %v4911
      %v4940 = vsel %vm2968, %v4871, 0
      %v4943 = vsel %vm2968, %v4872, 0
      %v4946 = vsel %vm2968, %v4873, 0
      %v4949 = vsel %vm2968, %v4874, 0
      %4951 = vmatprep.subr.bf16.mxu0 0
      %4952 = vmatpush1.bf16.msra.mxu0 0
      %4953 = vmatprep.subr.bf16.mxu0 0
      %4954 = vmatpush1.bf16.msra.mxu0 0
      %4955 = vmatprep.subr.bf16.mxu0 0
      %4956 = vmatpush1.bf16.msra.mxu0 0
      %4957 = vmatprep.subr.bf16.mxu0 0
      %4958 = vmatpush1.bf16.msra.mxu0 0
      %4959 = vmatprep.subr.bf16.mxu0 %v4925
      %4960 = vmatpush1.bf16.msra.mxu0 %v4924
      %4961 = vmatprep.subr.bf16.mxu0 %v4922
      %4962 = vmatpush1.bf16.msra.mxu0 %v4921
      %4963 = vmatprep.subr.bf16.mxu0 %v4919
      %4964 = vmatpush1.bf16.msra.mxu0 %v4918
      %4965 = vmatprep.subr.bf16.mxu0 %v4916
      %4966 = vmatpush1.bf16.msra.mxu0 %v4915
      %4967 = vmatprep.subr.bf16.mxu0 0
      %4968 = vmatpush2.bf16.msra.mxu0 0
      %4969 = vmatprep.subr.bf16.mxu0 0
      %4970 = vmatpush2.bf16.msra.mxu0 0
      %4971 = vmatprep.subr.bf16.mxu0 0
      %4972 = vmatpush2.bf16.msra.mxu0 0
      %4973 = vmatprep.subr.bf16.mxu0 0
      %4974 = vmatpush2.bf16.msra.mxu0 0
      %4975 = vmatprep.subr.bf16.mxu0 0
      %4976 = vmatpush2.bf16.msra.mxu0 0
      %4977 = vmatprep.subr.bf16.mxu0 0
      %4978 = vmatpush2.bf16.msra.mxu0 0
      %4979 = vmatprep.subr.bf16.mxu0 0
      %4980 = vmatpush2.bf16.msra.mxu0 0
      %4981 = vmatprep.subr.bf16.mxu0 0
      %4982 = vmatpush2.bf16.msra.mxu0 0
      %4983 = vmatprep.mubr.bf16.mxu0 0
      %4984 = vmatmul.mubr.bf16.gmra.mxu0 %v4940
      %v4985 = vpop.f32.mrf.mxu0
      %v4986 = vadd.f32 0.0, %v4985
      %v4987 = vpop.f32.mrf.mxu0
      %v4988 = vadd.f32 0.0, %v4987
      %v4989 = vpop.f32.mrf.mxu0
      %v4990 = vadd.f32 0.0, %v4989
      %v4991 = vpop.f32.mrf.mxu0
      %v4992 = vadd.f32 0.0, %v4991
      %4993 = vmatprep.mubr.bf16.mxu0 0
      %4994 = vmatmul.mubr.bf16.gmra.mxu0 %v4943
      %v4995 = vpop.f32.mrf.mxu0
      %v4996 = vadd.f32 0.0, %v4995
      %v4997 = vpop.f32.mrf.mxu0
      %v4998 = vadd.f32 0.0, %v4997
      %v4999 = vpop.f32.mrf.mxu0
      %v5000 = vadd.f32 0.0, %v4999
      %v5001 = vpop.f32.mrf.mxu0
      %v5002 = vadd.f32 0.0, %v5001
      %5003 = vmatprep.mubr.bf16.mxu0 0
      %5004 = vmatmul.mubr.bf16.gmra.mxu0 %v4946
      %v5005 = vpop.f32.mrf.mxu0
      %v5006 = vadd.f32 0.0, %v5005
      %v5007 = vpop.f32.mrf.mxu0
      %v5008 = vadd.f32 0.0, %v5007
      %v5009 = vpop.f32.mrf.mxu0
      %v5010 = vadd.f32 0.0, %v5009
      %v5011 = vpop.f32.mrf.mxu0
      %v5012 = vadd.f32 0.0, %v5011
      %5013 = vmatprep.mubr.bf16.mxu0 0
      %5014 = vmatmul.mubr.bf16.gmra.mxu0 %v4949
      %v5015 = vpop.f32.mrf.mxu0
      %v5016 = vadd.f32 0.0, %v5015
      %v5017 = vpop.f32.mrf.mxu0
      %v5018 = vadd.f32 0.0, %v5017
      %v5019 = vpop.f32.mrf.mxu0
      %v5020 = vadd.f32 0.0, %v5019
      %v5021 = vpop.f32.mrf.mxu0
      %v5022 = vadd.f32 0.0, %v5021
      %5023 = vdwg.mxu0
      %5024 = vmatprep.subr.bf16.mxu0 0
      %5025 = vmatpush1.bf16.msra.mxu0 0
      %5026 = vmatprep.subr.bf16.mxu0 0
      %5027 = vmatpush1.bf16.msra.mxu0 0
      %5028 = vmatprep.subr.bf16.mxu0 0
      %5029 = vmatpush1.bf16.msra.mxu0 0
      %5030 = vmatprep.subr.bf16.mxu0 0
      %5031 = vmatpush1.bf16.msra.mxu0 0
      %5032 = vmatprep.subr.bf16.mxu0 0
      %5033 = vmatpush1.bf16.msra.mxu0 %v4926
      %5034 = vmatprep.subr.bf16.mxu0 0
      %5035 = vmatpush1.bf16.msra.mxu0 %v4923
      %5036 = vmatprep.subr.bf16.mxu0 0
      %5037 = vmatpush1.bf16.msra.mxu0 %v4920
      %5038 = vmatprep.subr.bf16.mxu0 0
      %5039 = vmatpush1.bf16.msra.mxu0 %v4917
      %5040 = vmatprep.subr.bf16.mxu0 0
      %5041 = vmatpush2.bf16.msra.mxu0 0
      %5042 = vmatprep.subr.bf16.mxu0 0
      %5043 = vmatpush2.bf16.msra.mxu0 0
      %5044 = vmatprep.subr.bf16.mxu0 0
      %5045 = vmatpush2.bf16.msra.mxu0 0
      %5046 = vmatprep.subr.bf16.mxu0 0
      %5047 = vmatpush2.bf16.msra.mxu0 0
      %5048 = vmatprep.subr.bf16.mxu0 0
      %5049 = vmatpush2.bf16.msra.mxu0 0
      %5050 = vmatprep.subr.bf16.mxu0 0
      %5051 = vmatpush2.bf16.msra.mxu0 0
      %5052 = vmatprep.subr.bf16.mxu0 0
      %5053 = vmatpush2.bf16.msra.mxu0 0
      %5054 = vmatprep.subr.bf16.mxu0 0
      %5055 = vmatpush2.bf16.msra.mxu0 0
      %5056 = vmatprep.mubr.bf16.mxu0 0
      %5057 = vmatmul.mubr.bf16.gmra.mxu0 %v4940
      %v5058 = vpop.f32.mrf.mxu0
      %v5059 = vadd.f32 0.0, %v5058
      %v5060 = vpop.f32.mrf.mxu0
      %v5061 = vpop.f32.mrf.mxu0
      %v5062 = vadd.f32 0.0, %v5061
      %v5063 = vpop.f32.mrf.mxu0
      %5064 = vmatprep.mubr.bf16.mxu0 0
      %5065 = vmatmul.mubr.bf16.gmra.mxu0 %v4943
      %v5066 = vpop.f32.mrf.mxu0
      %v5067 = vadd.f32 0.0, %v5066
      %v5068 = vpop.f32.mrf.mxu0
      %v5069 = vpop.f32.mrf.mxu0
      %v5070 = vadd.f32 0.0, %v5069
      %v5071 = vpop.f32.mrf.mxu0
      %5072 = vmatprep.mubr.bf16.mxu0 0
      %5073 = vmatmul.mubr.bf16.gmra.mxu0 %v4946
      %v5074 = vpop.f32.mrf.mxu0
      %v5075 = vadd.f32 0.0, %v5074
      %v5076 = vpop.f32.mrf.mxu0
      %v5077 = vpop.f32.mrf.mxu0
      %v5078 = vadd.f32 0.0, %v5077
      %v5079 = vpop.f32.mrf.mxu0
      %5080 = vmatprep.mubr.bf16.mxu0 0
      %5081 = vmatmul.mubr.bf16.gmra.mxu0 %v4949
      %v5082 = vpop.f32.mrf.mxu0
      %v5083 = vadd.f32 0.0, %v5082
      %v5084 = vpop.f32.mrf.mxu0
      %v5085 = vpop.f32.mrf.mxu0
      %v5086 = vadd.f32 0.0, %v5085
      %v5087 = vpop.f32.mrf.mxu0
      %5088 = vdwg.mxu0
      %v5089 = vadd.f32 %v4533, %v4986
      %v5090 = vadd.f32 %v4534, %v4988
      %v5091 = vadd.f32 %v4535, %v5059
      %v5092 = vadd.f32 %v4536, %v4990
      %v5093 = vadd.f32 %v4537, %v4992
      %v5094 = vadd.f32 %v4538, %v5062
      %v5095 = vadd.f32 %v4539, %v4996
      %v5096 = vadd.f32 %v4540, %v4998
      %v5097 = vadd.f32 %v4541, %v5067
      %v5098 = vadd.f32 %v4542, %v5000
      %v5099 = vadd.f32 %v4543, %v5002
      %v5100 = vadd.f32 %v4544, %v5070
      %v5101 = vadd.f32 %v4545, %v5006
      %v5102 = vadd.f32 %v4546, %v5008
      %v5103 = vadd.f32 %v4547, %v5075
      %v5104 = vadd.f32 %v4548, %v5010
      %v5105 = vadd.f32 %v4549, %v5012
      %v5106 = vadd.f32 %v4550, %v5078
      %v5107 = vadd.f32 %v4551, %v5016
      %v5108 = vadd.f32 %v4552, %v5018
      %v5109 = vadd.f32 %v4553, %v5083
      %v5110 = vadd.f32 %v4554, %v5020
      %v5111 = vadd.f32 %v4555, %v5022
      %v5112 = vadd.f32 %v4556, %v5086
      %v5114 = vsel %vm2968, %v2778, 0
      %v5117 = vsel %vm2968, %v2787, 0
      %v5120 = vsel %vm2968, %v2796, 0
      %v5123 = vsel %vm2968, %v2805, 0
      %v5126 = vsel %vm2968, %v2781, 0
      %v5129 = vsel %vm2968, %v2790, 0
      %v5132 = vsel %vm2968, %v2799, 0
      %v5135 = vsel %vm2968, %v2808, 0
      %5137 = vmatprep.subr.bf16.mxu0 0
      %5138 = vmatpush1.bf16.xpose.msra.mxu0 0
      %5139 = vmatprep.subr.bf16.mxu0 0
      %5140 = vmatpush1.bf16.xpose.msra.mxu0 0
      %5141 = vmatprep.subr.bf16.mxu0 0
      %5142 = vmatpush1.bf16.xpose.msra.mxu0 0
      %5143 = vmatprep.subr.bf16.mxu0 0
      %5144 = vmatpush1.bf16.xpose.msra.mxu0 0
      %5145 = vmatprep.subr.bf16.mxu0 0
      %5146 = vmatpush1.bf16.xpose.msra.mxu0 %v5135
      %5147 = vmatprep.subr.bf16.mxu0 0
      %5148 = vmatpush1.bf16.xpose.msra.mxu0 %v5132
      %5149 = vmatprep.subr.bf16.mxu0 0
      %5150 = vmatpush1.bf16.xpose.msra.mxu0 %v5129
      %5151 = vmatprep.subr.bf16.mxu0 0
      %5152 = vmatpush1.bf16.xpose.msra.mxu0 %v5126
      %5153 = vmatprep.subr.bf16.mxu0 0
      %5154 = vmatpush2.bf16.xpose.msra.mxu0 0
      %5155 = vmatprep.subr.bf16.mxu0 0
      %5156 = vmatpush2.bf16.xpose.msra.mxu0 0
      %5157 = vmatprep.subr.bf16.mxu0 0
      %5158 = vmatpush2.bf16.xpose.msra.mxu0 0
      %5159 = vmatprep.subr.bf16.mxu0 0
      %5160 = vmatpush2.bf16.xpose.msra.mxu0 0
      %5161 = vmatprep.subr.bf16.mxu0 0
      %5162 = vmatpush2.bf16.xpose.msra.mxu0 0
      %5163 = vmatprep.subr.bf16.mxu0 0
      %5164 = vmatpush2.bf16.xpose.msra.mxu0 0
      %5165 = vmatprep.subr.bf16.mxu0 0
      %5166 = vmatpush2.bf16.xpose.msra.mxu0 0
      %5167 = vmatprep.subr.bf16.mxu0 0
      %5168 = vmatpush2.bf16.xpose.msra.mxu0 0
      %5169 = vmatprep.mubr.bf16.mxu0 0
      %5170 = vmatmul.mubr.bf16.gmra.mxu0 %v5114
      %v5171 = vpop.f32.mrf.mxu0
      %v5172 = vadd.f32 0.0, %v5171
      %v5173 = vpop.f32.mrf.mxu0
      %v5174 = vpop.f32.mrf.mxu0
      %v5175 = vadd.f32 0.0, %v5174
      %v5176 = vpop.f32.mrf.mxu0
      %5177 = vmatprep.mubr.bf16.mxu0 0
      %5178 = vmatmul.mubr.bf16.gmra.mxu0 %v5117
      %v5179 = vpop.f32.mrf.mxu0
      %v5180 = vadd.f32 0.0, %v5179
      %v5181 = vpop.f32.mrf.mxu0
      %v5182 = vpop.f32.mrf.mxu0
      %v5183 = vadd.f32 0.0, %v5182
      %v5184 = vpop.f32.mrf.mxu0
      %5185 = vmatprep.mubr.bf16.mxu0 0
      %5186 = vmatmul.mubr.bf16.gmra.mxu0 %v5120
      %v5187 = vpop.f32.mrf.mxu0
      %v5188 = vadd.f32 0.0, %v5187
      %v5189 = vpop.f32.mrf.mxu0
      %v5190 = vpop.f32.mrf.mxu0
      %v5191 = vadd.f32 0.0, %v5190
      %v5192 = vpop.f32.mrf.mxu0
      %5193 = vmatprep.mubr.bf16.mxu0 0
      %5194 = vmatmul.mubr.bf16.gmra.mxu0 %v5123
      %v5195 = vpop.f32.mrf.mxu0
      %v5196 = vadd.f32 0.0, %v5195
      %v5197 = vpop.f32.mrf.mxu0
      %v5198 = vpop.f32.mrf.mxu0
      %v5199 = vadd.f32 0.0, %v5198
      %v5200 = vpop.f32.mrf.mxu0
      %5201 = vdwg.mxu0
      %v5202 = vmul.f32 %v5172, 0.05103104
      %v5203 = vmul.f32 %v5175, 0.05103104
      %v5204 = vmul.f32 %v5180, 0.05103104
      %v5205 = vmul.f32 %v5183, 0.05103104
      %v5206 = vmul.f32 %v5188, 0.05103104
      %v5207 = vmul.f32 %v5191, 0.05103104
      %v5208 = vmul.f32 %v5196, 0.05103104
      %v5209 = vmul.f32 %v5199, 0.05103104
      %v5210 = vsel %vm2823, %v5202, -inf
      %v5211 = vsel %vm2824, %v5203, -inf
      %v5212 = vsel %vm2825, %v5204, -inf
      %v5213 = vsel %vm2826, %v5205, -inf
      %v5214 = vsel %vm2827, %v5206, -inf
      %v5215 = vsel %vm2828, %v5207, -inf
      %v5216 = vsel %vm2829, %v5208, -inf
      %v5217 = vsel %vm2830, %v5209, -inf
      %v5218 = vsel %vm2968, %v5210, -inf
      %5219 = vmax.xlane.f32.xlu0 %v5218
      %v5220 = vpop.xlane.xlu0 %5219
      %v5221 = vsel %vm2968, %v5211, -inf
      %5222 = vmax.xlane.f32.xlu0 %v5221
      %v5223 = vpop.xlane.xlu0 %5222
      %v5224 = vsel %vm2968, %v5212, -inf
      %5225 = vmax.xlane.f32.xlu0 %v5224
      %v5226 = vpop.xlane.xlu0 %5225
      %v5227 = vsel %vm2968, %v5213, -inf
      %5228 = vmax.xlane.f32.xlu0 %v5227
      %v5229 = vpop.xlane.xlu0 %5228
      %v5230 = vsel %vm2968, %v5214, -inf
      %5231 = vmax.xlane.f32.xlu0 %v5230
      %v5232 = vpop.xlane.xlu0 %5231
      %v5233 = vsel %vm2968, %v5215, -inf
      %5234 = vmax.xlane.f32.xlu0 %v5233
      %v5235 = vpop.xlane.xlu0 %5234
      %v5236 = vsel %vm2968, %v5216, -inf
      %5237 = vmax.xlane.f32.xlu0 %v5236
      %v5238 = vpop.xlane.xlu0 %5237
      %v5239 = vsel %vm2968, %v5217, -inf
      %5240 = vmax.xlane.f32.xlu0 %v5239
      %v5241 = vpop.xlane.xlu0 %5240
      %v5242 = vsub.f32 %v5210, %v5220
      %v5243 = vsub.f32 %v5211, %v5223
      %v5244 = vsub.f32 %v5212, %v5226
      %v5245 = vsub.f32 %v5213, %v5229
      %v5246 = vsub.f32 %v5214, %v5232
      %v5247 = vsub.f32 %v5215, %v5235
      %v5248 = vsub.f32 %v5216, %v5238
      %v5249 = vsub.f32 %v5217, %v5241
      %v5250 = vmul.f32 %v5242, 1.442695
      %v5251 = vpow.pop %v5250
      %v5252 = vmul.f32 %v5243, 1.442695
      %v5253 = vpow.pop %v5252
      %v5254 = vmul.f32 %v5244, 1.442695
      %v5255 = vpow.pop %v5254
      %v5256 = vmul.f32 %v5245, 1.442695
      %v5257 = vpow.pop %v5256
      %v5258 = vmul.f32 %v5246, 1.442695
      %v5259 = vpow.pop %v5258
      %v5260 = vmul.f32 %v5247, 1.442695
      %v5261 = vpow.pop %v5260
      %v5262 = vmul.f32 %v5248, 1.442695
      %v5263 = vpow.pop %v5262
      %v5264 = vmul.f32 %v5249, 1.442695
      %v5265 = vpow.pop %v5264
      %v5266 = vsel %vm2968, %v5251, 0.0
      %5267 = vadd.xlane.f32.xlu0 %v5266
      %v5268 = vpop.xlane.xlu0 %5267
      %v5269 = vsel %vm2968, %v5253, 0.0
      %5270 = vadd.xlane.f32.xlu0 %v5269
      %v5271 = vpop.xlane.xlu0 %5270
      %v5272 = vsel %vm2968, %v5255, 0.0
      %5273 = vadd.xlane.f32.xlu0 %v5272
      %v5274 = vpop.xlane.xlu0 %5273
      %v5275 = vsel %vm2968, %v5257, 0.0
      %5276 = vadd.xlane.f32.xlu0 %v5275
      %v5277 = vpop.xlane.xlu0 %5276
      %v5278 = vsel %vm2968, %v5259, 0.0
      %5279 = vadd.xlane.f32.xlu0 %v5278
      %v5280 = vpop.xlane.xlu0 %5279
      %v5281 = vsel %vm2968, %v5261, 0.0
      %5282 = vadd.xlane.f32.xlu0 %v5281
      %v5283 = vpop.xlane.xlu0 %5282
      %v5284 = vsel %vm2968, %v5263, 0.0
      %5285 = vadd.xlane.f32.xlu0 %v5284
      %v5286 = vpop.xlane.xlu0 %5285
      %v5287 = vsel %vm2968, %v5265, 0.0
      %5288 = vadd.xlane.f32.xlu0 %v5287
      %v5289 = vpop.xlane.xlu0 %5288
      %v5290 = vrcp.pop %v5268
      %v5291 = vrcp.pop %v5271
      %v5292 = vrcp.pop %v5274
      %v5293 = vrcp.pop %v5277
      %v5294 = vrcp.pop %v5280
      %v5295 = vrcp.pop %v5283
      %v5296 = vrcp.pop %v5286
      %v5297 = vrcp.pop %v5289
      %v5298 = vmul.f32 %v5251, %v5290
      %v5299 = vmul.f32 %v5253, %v5291
      %v5300 = vmul.f32 %v5255, %v5292
      %v5301 = vmul.f32 %v5257, %v5293
      %v5302 = vmul.f32 %v5259, %v5294
      %v5303 = vmul.f32 %v5261, %v5295
      %v5304 = vmul.f32 %v5263, %v5296
      %v5305 = vmul.f32 %v5265, %v5297
      %v5306 = vpack.c.bf16 %v5299, %v5298
      %v5307 = vpack.c.bf16 %v5301, %v5300
      %v5308 = vpack.c.bf16 %v5303, %v5302
      %v5309 = vpack.c.bf16 %v5305, %v5304
      %v5311 = vsel %vm2968, %v5306, 0
      %v5314 = vsel %vm2968, %v5307, 0
      %v5317 = vsel %vm2968, %v5308, 0
      %v5320 = vsel %vm2968, %v5309, 0
      %5322 = vmatprep.subr.bf16.mxu0 0
      %5323 = vmatpush1.bf16.msra.mxu0 0
      %5324 = vmatprep.subr.bf16.mxu0 0
      %5325 = vmatpush1.bf16.msra.mxu0 0
      %5326 = vmatprep.subr.bf16.mxu0 0
      %5327 = vmatpush1.bf16.msra.mxu0 0
      %5328 = vmatprep.subr.bf16.mxu0 0
      %5329 = vmatpush1.bf16.msra.mxu0 0
      %5330 = vmatprep.subr.bf16.mxu0 0
      %5331 = vmatpush1.bf16.msra.mxu0 %v2811
      %5332 = vmatprep.subr.bf16.mxu0 0
      %5333 = vmatpush1.bf16.msra.mxu0 %v2802
      %5334 = vmatprep.subr.bf16.mxu0 0
      %5335 = vmatpush1.bf16.msra.mxu0 %v2793
      %5336 = vmatprep.subr.bf16.mxu0 0
      %5337 = vmatpush1.bf16.msra.mxu0 %v2784
      %5338 = vmatprep.subr.bf16.mxu0 0
      %5339 = vmatpush2.bf16.msra.mxu0 0
      %5340 = vmatprep.subr.bf16.mxu0 0
      %5341 = vmatpush2.bf16.msra.mxu0 0
      %5342 = vmatprep.subr.bf16.mxu0 0
      %5343 = vmatpush2.bf16.msra.mxu0 0
      %5344 = vmatprep.subr.bf16.mxu0 0
      %5345 = vmatpush2.bf16.msra.mxu0 0
      %5346 = vmatprep.subr.bf16.mxu0 0
      %5347 = vmatpush2.bf16.msra.mxu0 0
      %5348 = vmatprep.subr.bf16.mxu0 0
      %5349 = vmatpush2.bf16.msra.mxu0 0
      %5350 = vmatprep.subr.bf16.mxu0 0
      %5351 = vmatpush2.bf16.msra.mxu0 0
      %5352 = vmatprep.subr.bf16.mxu0 0
      %5353 = vmatpush2.bf16.msra.mxu0 0
      %5354 = vmatprep.mubr.bf16.mxu0 0
      %5355 = vmatmul.mubr.bf16.gmra.mxu0 %v5311
      %v5356 = vpop.f32.mrf.mxu0
      %v5357 = vadd.f32 0.0, %v5356
      %v5358 = vpop.f32.mrf.mxu0
      %v5359 = vpop.f32.mrf.mxu0
      %v5360 = vadd.f32 0.0, %v5359
      %v5361 = vpop.f32.mrf.mxu0
      %5362 = vmatprep.mubr.bf16.mxu0 0
      %5363 = vmatmul.mubr.bf16.gmra.mxu0 %v5314
      %v5364 = vpop.f32.mrf.mxu0
      %v5365 = vadd.f32 0.0, %v5364
      %v5366 = vpop.f32.mrf.mxu0
      %v5367 = vpop.f32.mrf.mxu0
      %v5368 = vadd.f32 0.0, %v5367
      %v5369 = vpop.f32.mrf.mxu0
      %5370 = vmatprep.mubr.bf16.mxu0 0
      %5371 = vmatmul.mubr.bf16.gmra.mxu0 %v5317
      %v5372 = vpop.f32.mrf.mxu0
      %v5373 = vadd.f32 0.0, %v5372
      %v5374 = vpop.f32.mrf.mxu0
      %v5375 = vpop.f32.mrf.mxu0
      %v5376 = vadd.f32 0.0, %v5375
      %v5377 = vpop.f32.mrf.mxu0
      %5378 = vmatprep.mubr.bf16.mxu0 0
      %5379 = vmatmul.mubr.bf16.gmra.mxu0 %v5320
      %v5380 = vpop.f32.mrf.mxu0
      %v5381 = vadd.f32 0.0, %v5380
      %v5382 = vpop.f32.mrf.mxu0
      %v5383 = vpop.f32.mrf.mxu0
      %v5384 = vadd.f32 0.0, %v5383
      %v5385 = vpop.f32.mrf.mxu0
      %5386 = vdwg.mxu0
      %v5387 = vpack.c.bf16 %v5360, %v5357
      %v5388 = vpack.c.bf16 %v5368, %v5365
      %v5389 = vpack.c.bf16 %v5376, %v5373
      %v5390 = vpack.c.bf16 %v5384, %v5381
      %v5407 = vunpack.c.l.b16 %v2895
      %v5408 = vunpack.c.h.b16 %v2895
      %v5409 = vunpack.c.l.b16 %v2896
      %v5410 = vunpack.c.l.b16 %v2897
      %v5411 = vunpack.c.h.b16 %v2897
      %v5412 = vunpack.c.l.b16 %v2898
      %v5413 = vunpack.c.l.b16 %v2899
      %v5414 = vunpack.c.h.b16 %v2899
      %v5415 = vunpack.c.l.b16 %v2900
      %v5416 = vunpack.c.l.b16 %v2901
      %v5417 = vunpack.c.h.b16 %v2901
      %v5418 = vunpack.c.l.b16 %v2902
      %v5419 = vunpack.c.l.b16 %v2903
      %v5420 = vunpack.c.h.b16 %v2903
      %v5421 = vunpack.c.l.b16 %v2904
      %v5422 = vunpack.c.l.b16 %v2905
      %v5423 = vunpack.c.h.b16 %v2905
      %v5424 = vunpack.c.l.b16 %v2906
      %v5425 = vunpack.c.l.b16 %v2907
      %v5426 = vunpack.c.h.b16 %v2907
      %v5427 = vunpack.c.l.b16 %v2908
      %v5428 = vunpack.c.l.b16 %v2909
      %v5429 = vunpack.c.h.b16 %v2909
      %v5430 = vunpack.c.l.b16 %v2910
      %v5431 = vpack.c.b16 %v5410, %v5407
      %v5432 = vpack.c.b16 %v5411, %v5408
      %v5433 = vpack.c.b16 %v5412, %v5409
      %v5434 = vpack.c.b16 %v5416, %v5413
      %v5435 = vpack.c.b16 %v5417, %v5414
      %v5436 = vpack.c.b16 %v5418, %v5415
      %v5437 = vpack.c.b16 %v5422, %v5419
      %v5438 = vpack.c.b16 %v5423, %v5420
      %v5439 = vpack.c.b16 %v5424, %v5421
      %v5440 = vpack.c.b16 %v5428, %v5425
      %v5441 = vpack.c.b16 %v5429, %v5426
      %v5442 = vpack.c.b16 %v5430, %v5427
      %v5456 = vsel %vm2968, %v5387, 0
      %v5459 = vsel %vm2968, %v5388, 0
      %v5462 = vsel %vm2968, %v5389, 0
      %v5465 = vsel %vm2968, %v5390, 0
      %5467 = vmatprep.subr.bf16.mxu0 0
      %5468 = vmatpush1.bf16.msra.mxu0 0
      %5469 = vmatprep.subr.bf16.mxu0 0
      %5470 = vmatpush1.bf16.msra.mxu0 0
      %5471 = vmatprep.subr.bf16.mxu0 0
      %5472 = vmatpush1.bf16.msra.mxu0 0
      %5473 = vmatprep.subr.bf16.mxu0 0
      %5474 = vmatpush1.bf16.msra.mxu0 0
      %5475 = vmatprep.subr.bf16.mxu0 %v5441
      %5476 = vmatpush1.bf16.msra.mxu0 %v5440
      %5477 = vmatprep.subr.bf16.mxu0 %v5438
      %5478 = vmatpush1.bf16.msra.mxu0 %v5437
      %5479 = vmatprep.subr.bf16.mxu0 %v5435
      %5480 = vmatpush1.bf16.msra.mxu0 %v5434
      %5481 = vmatprep.subr.bf16.mxu0 %v5432
      %5482 = vmatpush1.bf16.msra.mxu0 %v5431
      %5483 = vmatprep.subr.bf16.mxu0 0
      %5484 = vmatpush2.bf16.msra.mxu0 0
      %5485 = vmatprep.subr.bf16.mxu0 0
      %5486 = vmatpush2.bf16.msra.mxu0 0
      %5487 = vmatprep.subr.bf16.mxu0 0
      %5488 = vmatpush2.bf16.msra.mxu0 0
      %5489 = vmatprep.subr.bf16.mxu0 0
      %5490 = vmatpush2.bf16.msra.mxu0 0
      %5491 = vmatprep.subr.bf16.mxu0 0
      %5492 = vmatpush2.bf16.msra.mxu0 0
      %5493 = vmatprep.subr.bf16.mxu0 0
      %5494 = vmatpush2.bf16.msra.mxu0 0
      %5495 = vmatprep.subr.bf16.mxu0 0
      %5496 = vmatpush2.bf16.msra.mxu0 0
      %5497 = vmatprep.subr.bf16.mxu0 0
      %5498 = vmatpush2.bf16.msra.mxu0 0
      %5499 = vmatprep.mubr.bf16.mxu0 0
      %5500 = vmatmul.mubr.bf16.gmra.mxu0 %v5456
      %v5501 = vpop.f32.mrf.mxu0
      %v5502 = vadd.f32 0.0, %v5501
      %v5503 = vpop.f32.mrf.mxu0
      %v5504 = vadd.f32 0.0, %v5503
      %v5505 = vpop.f32.mrf.mxu0
      %v5506 = vadd.f32 0.0, %v5505
      %v5507 = vpop.f32.mrf.mxu0
      %v5508 = vadd.f32 0.0, %v5507
      %5509 = vmatprep.mubr.bf16.mxu0 0
      %5510 = vmatmul.mubr.bf16.gmra.mxu0 %v5459
      %v5511 = vpop.f32.mrf.mxu0
      %v5512 = vadd.f32 0.0, %v5511
      %v5513 = vpop.f32.mrf.mxu0
      %v5514 = vadd.f32 0.0, %v5513
      %v5515 = vpop.f32.mrf.mxu0
      %v5516 = vadd.f32 0.0, %v5515
      %v5517 = vpop.f32.mrf.mxu0
      %v5518 = vadd.f32 0.0, %v5517
      %5519 = vmatprep.mubr.bf16.mxu0 0
      %5520 = vmatmul.mubr.bf16.gmra.mxu0 %v5462
      %v5521 = vpop.f32.mrf.mxu0
      %v5522 = vadd.f32 0.0, %v5521
      %v5523 = vpop.f32.mrf.mxu0
      %v5524 = vadd.f32 0.0, %v5523
      %v5525 = vpop.f32.mrf.mxu0
      %v5526 = vadd.f32 0.0, %v5525
      %v5527 = vpop.f32.mrf.mxu0
      %v5528 = vadd.f32 0.0, %v5527
      %5529 = vmatprep.mubr.bf16.mxu0 0
      %5530 = vmatmul.mubr.bf16.gmra.mxu0 %v5465
      %v5531 = vpop.f32.mrf.mxu0
      %v5532 = vadd.f32 0.0, %v5531
      %v5533 = vpop.f32.mrf.mxu0
      %v5534 = vadd.f32 0.0, %v5533
      %v5535 = vpop.f32.mrf.mxu0
      %v5536 = vadd.f32 0.0, %v5535
      %v5537 = vpop.f32.mrf.mxu0
      %v5538 = vadd.f32 0.0, %v5537
      %5539 = vdwg.mxu0
      %5540 = vmatprep.subr.bf16.mxu0 0
      %5541 = vmatpush1.bf16.msra.mxu0 0
      %5542 = vmatprep.subr.bf16.mxu0 0
      %5543 = vmatpush1.bf16.msra.mxu0 0
      %5544 = vmatprep.subr.bf16.mxu0 0
      %5545 = vmatpush1.bf16.msra.mxu0 0
      %5546 = vmatprep.subr.bf16.mxu0 0
      %5547 = vmatpush1.bf16.msra.mxu0 0
      %5548 = vmatprep.subr.bf16.mxu0 0
      %5549 = vmatpush1.bf16.msra.mxu0 %v5442
      %5550 = vmatprep.subr.bf16.mxu0 0
      %5551 = vmatpush1.bf16.msra.mxu0 %v5439
      %5552 = vmatprep.subr.bf16.mxu0 0
      %5553 = vmatpush1.bf16.msra.mxu0 %v5436
      %5554 = vmatprep.subr.bf16.mxu0 0
      %5555 = vmatpush1.bf16.msra.mxu0 %v5433
      %5556 = vmatprep.subr.bf16.mxu0 0
      %5557 = vmatpush2.bf16.msra.mxu0 0
      %5558 = vmatprep.subr.bf16.mxu0 0
      %5559 = vmatpush2.bf16.msra.mxu0 0
      %5560 = vmatprep.subr.bf16.mxu0 0
      %5561 = vmatpush2.bf16.msra.mxu0 0
      %5562 = vmatprep.subr.bf16.mxu0 0
      %5563 = vmatpush2.bf16.msra.mxu0 0
      %5564 = vmatprep.subr.bf16.mxu0 0
      %5565 = vmatpush2.bf16.msra.mxu0 0
      %5566 = vmatprep.subr.bf16.mxu0 0
      %5567 = vmatpush2.bf16.msra.mxu0 0
      %5568 = vmatprep.subr.bf16.mxu0 0
      %5569 = vmatpush2.bf16.msra.mxu0 0
      %5570 = vmatprep.subr.bf16.mxu0 0
      %5571 = vmatpush2.bf16.msra.mxu0 0
      %5572 = vmatprep.mubr.bf16.mxu0 0
      %5573 = vmatmul.mubr.bf16.gmra.mxu0 %v5456
      %v5574 = vpop.f32.mrf.mxu0
      %v5575 = vadd.f32 0.0, %v5574
      %v5576 = vpop.f32.mrf.mxu0
      %v5577 = vpop.f32.mrf.mxu0
      %v5578 = vadd.f32 0.0, %v5577
      %v5579 = vpop.f32.mrf.mxu0
      %5580 = vmatprep.mubr.bf16.mxu0 0
      %5581 = vmatmul.mubr.bf16.gmra.mxu0 %v5459
      %v5582 = vpop.f32.mrf.mxu0
      %v5583 = vadd.f32 0.0, %v5582
      %v5584 = vpop.f32.mrf.mxu0
      %v5585 = vpop.f32.mrf.mxu0
      %v5586 = vadd.f32 0.0, %v5585
      %v5587 = vpop.f32.mrf.mxu0
      %5588 = vmatprep.mubr.bf16.mxu0 0
      %5589 = vmatmul.mubr.bf16.gmra.mxu0 %v5462
      %v5590 = vpop.f32.mrf.mxu0
      %v5591 = vadd.f32 0.0, %v5590
      %v5592 = vpop.f32.mrf.mxu0
      %v5593 = vpop.f32.mrf.mxu0
      %v5594 = vadd.f32 0.0, %v5593
      %v5595 = vpop.f32.mrf.mxu0
      %5596 = vmatprep.mubr.bf16.mxu0 0
      %5597 = vmatmul.mubr.bf16.gmra.mxu0 %v5465
      %v5598 = vpop.f32.mrf.mxu0
      %v5599 = vadd.f32 0.0, %v5598
      %v5600 = vpop.f32.mrf.mxu0
      %v5601 = vpop.f32.mrf.mxu0
      %v5602 = vadd.f32 0.0, %v5601
      %v5603 = vpop.f32.mrf.mxu0
      %5604 = vdwg.mxu0
      %v5605 = vadd.f32 %v5089, %v5502
      %v5606 = vadd.f32 %v5090, %v5504
      %v5607 = vadd.f32 %v5091, %v5575
      %v5608 = vadd.f32 %v5092, %v5506
      %v5609 = vadd.f32 %v5093, %v5508
      %v5610 = vadd.f32 %v5094, %v5578
      %v5611 = vadd.f32 %v5095, %v5512
      %v5612 = vadd.f32 %v5096, %v5514
      %v5613 = vadd.f32 %v5097, %v5583
      %v5614 = vadd.f32 %v5098, %v5516
      %v5615 = vadd.f32 %v5099, %v5518
      %v5616 = vadd.f32 %v5100, %v5586
      %v5617 = vadd.f32 %v5101, %v5522
      %v5618 = vadd.f32 %v5102, %v5524
      %v5619 = vadd.f32 %v5103, %v5591
      %v5620 = vadd.f32 %v5104, %v5526
      %v5621 = vadd.f32 %v5105, %v5528
      %v5622 = vadd.f32 %v5106, %v5594
      %v5623 = vadd.f32 %v5107, %v5532
      %v5624 = vadd.f32 %v5108, %v5534
      %v5625 = vadd.f32 %v5109, %v5599
      %v5626 = vadd.f32 %v5110, %v5536
      %v5627 = vadd.f32 %v5111, %v5538
      %v5628 = vadd.f32 %v5112, %v5602
      %5633 = vrot.lane.b32.xlu0 %v2778, 64
      %v5634 = vpop.permute.xlu0 %5633
      %5635 = vrot.lane.b32.xlu0 %v2787, 64
      %v5636 = vpop.permute.xlu0 %5635
      %5637 = vrot.lane.b32.xlu0 %v2796, 64
      %v5638 = vpop.permute.xlu0 %5637
      %5639 = vrot.lane.b32.xlu0 %v2805, 64
      %v5640 = vpop.permute.xlu0 %5639
      %5645 = vrot.lane.b32.xlu0 %v2781, 64
      %v5646 = vpop.permute.xlu0 %5645
      %5647 = vrot.lane.b32.xlu0 %v2790, 64
      %v5648 = vpop.permute.xlu0 %5647
      %5649 = vrot.lane.b32.xlu0 %v2799, 64
      %v5650 = vpop.permute.xlu0 %5649
      %5651 = vrot.lane.b32.xlu0 %v2808, 64
      %v5652 = vpop.permute.xlu0 %5651
      %v5654 = vsel %vm2968, %v5634, 0
      %v5657 = vsel %vm2968, %v5636, 0
      %v5660 = vsel %vm2968, %v5638, 0
      %v5663 = vsel %vm2968, %v5640, 0
      %v5666 = vsel %vm2968, %v5646, 0
      %v5669 = vsel %vm2968, %v5648, 0
      %v5672 = vsel %vm2968, %v5650, 0
      %v5675 = vsel %vm2968, %v5652, 0
      %5677 = vmatprep.subr.bf16.mxu0 0
      %5678 = vmatpush1.bf16.xpose.msra.mxu0 0
      %5679 = vmatprep.subr.bf16.mxu0 0
      %5680 = vmatpush1.bf16.xpose.msra.mxu0 0
      %5681 = vmatprep.subr.bf16.mxu0 0
      %5682 = vmatpush1.bf16.xpose.msra.mxu0 0
      %5683 = vmatprep.subr.bf16.mxu0 0
      %5684 = vmatpush1.bf16.xpose.msra.mxu0 0
      %5685 = vmatprep.subr.bf16.mxu0 0
      %5686 = vmatpush1.bf16.xpose.msra.mxu0 %v5675
      %5687 = vmatprep.subr.bf16.mxu0 0
      %5688 = vmatpush1.bf16.xpose.msra.mxu0 %v5672
      %5689 = vmatprep.subr.bf16.mxu0 0
      %5690 = vmatpush1.bf16.xpose.msra.mxu0 %v5669
      %5691 = vmatprep.subr.bf16.mxu0 0
      %5692 = vmatpush1.bf16.xpose.msra.mxu0 %v5666
      %5693 = vmatprep.subr.bf16.mxu0 0
      %5694 = vmatpush2.bf16.xpose.msra.mxu0 0
      %5695 = vmatprep.subr.bf16.mxu0 0
      %5696 = vmatpush2.bf16.xpose.msra.mxu0 0
      %5697 = vmatprep.subr.bf16.mxu0 0
      %5698 = vmatpush2.bf16.xpose.msra.mxu0 0
      %5699 = vmatprep.subr.bf16.mxu0 0
      %5700 = vmatpush2.bf16.xpose.msra.mxu0 0
      %5701 = vmatprep.subr.bf16.mxu0 0
      %5702 = vmatpush2.bf16.xpose.msra.mxu0 0
      %5703 = vmatprep.subr.bf16.mxu0 0
      %5704 = vmatpush2.bf16.xpose.msra.mxu0 0
      %5705 = vmatprep.subr.bf16.mxu0 0
      %5706 = vmatpush2.bf16.xpose.msra.mxu0 0
      %5707 = vmatprep.subr.bf16.mxu0 0
      %5708 = vmatpush2.bf16.xpose.msra.mxu0 0
      %5709 = vmatprep.mubr.bf16.mxu0 0
      %5710 = vmatmul.mubr.bf16.gmra.mxu0 %v5654
      %v5711 = vpop.f32.mrf.mxu0
      %v5712 = vadd.f32 0.0, %v5711
      %v5713 = vpop.f32.mrf.mxu0
      %v5714 = vpop.f32.mrf.mxu0
      %v5715 = vadd.f32 0.0, %v5714
      %v5716 = vpop.f32.mrf.mxu0
      %5717 = vmatprep.mubr.bf16.mxu0 0
      %5718 = vmatmul.mubr.bf16.gmra.mxu0 %v5657
      %v5719 = vpop.f32.mrf.mxu0
      %v5720 = vadd.f32 0.0, %v5719
      %v5721 = vpop.f32.mrf.mxu0
      %v5722 = vpop.f32.mrf.mxu0
      %v5723 = vadd.f32 0.0, %v5722
      %v5724 = vpop.f32.mrf.mxu0
      %5725 = vmatprep.mubr.bf16.mxu0 0
      %5726 = vmatmul.mubr.bf16.gmra.mxu0 %v5660
      %v5727 = vpop.f32.mrf.mxu0
      %v5728 = vadd.f32 0.0, %v5727
      %v5729 = vpop.f32.mrf.mxu0
      %v5730 = vpop.f32.mrf.mxu0
      %v5731 = vadd.f32 0.0, %v5730
      %v5732 = vpop.f32.mrf.mxu0
      %5733 = vmatprep.mubr.bf16.mxu0 0
      %5734 = vmatmul.mubr.bf16.gmra.mxu0 %v5663
      %v5735 = vpop.f32.mrf.mxu0
      %v5736 = vadd.f32 0.0, %v5735
      %v5737 = vpop.f32.mrf.mxu0
      %v5738 = vpop.f32.mrf.mxu0
      %v5739 = vadd.f32 0.0, %v5738
      %v5740 = vpop.f32.mrf.mxu0
      %5741 = vdwg.mxu0
      %v5742 = vmul.f32 %v5712, 0.05103104
      %v5743 = vmul.f32 %v5715, 0.05103104
      %v5744 = vmul.f32 %v5720, 0.05103104
      %v5745 = vmul.f32 %v5723, 0.05103104
      %v5746 = vmul.f32 %v5728, 0.05103104
      %v5747 = vmul.f32 %v5731, 0.05103104
      %v5748 = vmul.f32 %v5736, 0.05103104
      %v5749 = vmul.f32 %v5739, 0.05103104
      %v5750 = vsel %vm2823, %v5742, -inf
      %v5751 = vsel %vm2824, %v5743, -inf
      %v5752 = vsel %vm2825, %v5744, -inf
      %v5753 = vsel %vm2826, %v5745, -inf
      %v5754 = vsel %vm2827, %v5746, -inf
      %v5755 = vsel %vm2828, %v5747, -inf
      %v5756 = vsel %vm2829, %v5748, -inf
      %v5757 = vsel %vm2830, %v5749, -inf
      %v5758 = vsel %vm2968, %v5750, -inf
      %5759 = vmax.xlane.f32.xlu0 %v5758
      %v5760 = vpop.xlane.xlu0 %5759
      %v5761 = vsel %vm2968, %v5751, -inf
      %5762 = vmax.xlane.f32.xlu0 %v5761
      %v5763 = vpop.xlane.xlu0 %5762
      %v5764 = vsel %vm2968, %v5752, -inf
      %5765 = vmax.xlane.f32.xlu0 %v5764
      %v5766 = vpop.xlane.xlu0 %5765
      %v5767 = vsel %vm2968, %v5753, -inf
      %5768 = vmax.xlane.f32.xlu0 %v5767
      %v5769 = vpop.xlane.xlu0 %5768
      %v5770 = vsel %vm2968, %v5754, -inf
      %5771 = vmax.xlane.f32.xlu0 %v5770
      %v5772 = vpop.xlane.xlu0 %5771
      %v5773 = vsel %vm2968, %v5755, -inf
      %5774 = vmax.xlane.f32.xlu0 %v5773
      %v5775 = vpop.xlane.xlu0 %5774
      %v5776 = vsel %vm2968, %v5756, -inf
      %5777 = vmax.xlane.f32.xlu0 %v5776
      %v5778 = vpop.xlane.xlu0 %5777
      %v5779 = vsel %vm2968, %v5757, -inf
      %5780 = vmax.xlane.f32.xlu0 %v5779
      %v5781 = vpop.xlane.xlu0 %5780
      %v5782 = vsub.f32 %v5750, %v5760
      %v5783 = vsub.f32 %v5751, %v5763
      %v5784 = vsub.f32 %v5752, %v5766
      %v5785 = vsub.f32 %v5753, %v5769
      %v5786 = vsub.f32 %v5754, %v5772
      %v5787 = vsub.f32 %v5755, %v5775
      %v5788 = vsub.f32 %v5756, %v5778
      %v5789 = vsub.f32 %v5757, %v5781
      %v5790 = vmul.f32 %v5782, 1.442695
      %v5791 = vpow.pop %v5790
      %v5792 = vmul.f32 %v5783, 1.442695
      %v5793 = vpow.pop %v5792
      %v5794 = vmul.f32 %v5784, 1.442695
      %v5795 = vpow.pop %v5794
      %v5796 = vmul.f32 %v5785, 1.442695
      %v5797 = vpow.pop %v5796
      %v5798 = vmul.f32 %v5786, 1.442695
      %v5799 = vpow.pop %v5798
      %v5800 = vmul.f32 %v5787, 1.442695
      %v5801 = vpow.pop %v5800
      %v5802 = vmul.f32 %v5788, 1.442695
      %v5803 = vpow.pop %v5802
      %v5804 = vmul.f32 %v5789, 1.442695
      %v5805 = vpow.pop %v5804
      %v5806 = vsel %vm2968, %v5791, 0.0
      %5807 = vadd.xlane.f32.xlu0 %v5806
      %v5808 = vpop.xlane.xlu0 %5807
      %v5809 = vsel %vm2968, %v5793, 0.0
      %5810 = vadd.xlane.f32.xlu0 %v5809
      %v5811 = vpop.xlane.xlu0 %5810
      %v5812 = vsel %vm2968, %v5795, 0.0
      %5813 = vadd.xlane.f32.xlu0 %v5812
      %v5814 = vpop.xlane.xlu0 %5813
      %v5815 = vsel %vm2968, %v5797, 0.0
      %5816 = vadd.xlane.f32.xlu0 %v5815
      %v5817 = vpop.xlane.xlu0 %5816
      %v5818 = vsel %vm2968, %v5799, 0.0
      %5819 = vadd.xlane.f32.xlu0 %v5818
      %v5820 = vpop.xlane.xlu0 %5819
      %v5821 = vsel %vm2968, %v5801, 0.0
      %5822 = vadd.xlane.f32.xlu0 %v5821
      %v5823 = vpop.xlane.xlu0 %5822
      %v5824 = vsel %vm2968, %v5803, 0.0
      %5825 = vadd.xlane.f32.xlu0 %v5824
      %v5826 = vpop.xlane.xlu0 %5825
      %v5827 = vsel %vm2968, %v5805, 0.0
      %5828 = vadd.xlane.f32.xlu0 %v5827
      %v5829 = vpop.xlane.xlu0 %5828
      %v5830 = vrcp.pop %v5808
      %v5831 = vrcp.pop %v5811
      %v5832 = vrcp.pop %v5814
      %v5833 = vrcp.pop %v5817
      %v5834 = vrcp.pop %v5820
      %v5835 = vrcp.pop %v5823
      %v5836 = vrcp.pop %v5826
      %v5837 = vrcp.pop %v5829
      %v5838 = vmul.f32 %v5791, %v5830
      %v5839 = vmul.f32 %v5793, %v5831
      %v5840 = vmul.f32 %v5795, %v5832
      %v5841 = vmul.f32 %v5797, %v5833
      %v5842 = vmul.f32 %v5799, %v5834
      %v5843 = vmul.f32 %v5801, %v5835
      %v5844 = vmul.f32 %v5803, %v5836
      %v5845 = vmul.f32 %v5805, %v5837
      %v5846 = vpack.c.bf16 %v5839, %v5838
      %v5847 = vpack.c.bf16 %v5841, %v5840
      %v5848 = vpack.c.bf16 %v5843, %v5842
      %v5849 = vpack.c.bf16 %v5845, %v5844
      %5854 = vrot.lane.b32.xlu0 %v2784, 64
      %v5855 = vpop.permute.xlu0 %5854
      %5856 = vrot.lane.b32.xlu0 %v2793, 64
      %v5857 = vpop.permute.xlu0 %5856
      %5858 = vrot.lane.b32.xlu0 %v2802, 64
      %v5859 = vpop.permute.xlu0 %5858
      %5860 = vrot.lane.b32.xlu0 %v2811, 64
      %v5861 = vpop.permute.xlu0 %5860
      %v5867 = vsel %vm2968, %v5846, 0
      %v5870 = vsel %vm2968, %v5847, 0
      %v5873 = vsel %vm2968, %v5848, 0
      %v5876 = vsel %vm2968, %v5849, 0
      %5878 = vmatprep.subr.bf16.mxu0 0
      %5879 = vmatpush1.bf16.msra.mxu0 0
      %5880 = vmatprep.subr.bf16.mxu0 0
      %5881 = vmatpush1.bf16.msra.mxu0 0
      %5882 = vmatprep.subr.bf16.mxu0 0
      %5883 = vmatpush1.bf16.msra.mxu0 0
      %5884 = vmatprep.subr.bf16.mxu0 0
      %5885 = vmatpush1.bf16.msra.mxu0 0
      %5886 = vmatprep.subr.bf16.mxu0 0
      %5887 = vmatpush1.bf16.msra.mxu0 %v5861
      %5888 = vmatprep.subr.bf16.mxu0 0
      %5889 = vmatpush1.bf16.msra.mxu0 %v5859
      %5890 = vmatprep.subr.bf16.mxu0 0
      %5891 = vmatpush1.bf16.msra.mxu0 %v5857
      %5892 = vmatprep.subr.bf16.mxu0 0
      %5893 = vmatpush1.bf16.msra.mxu0 %v5855
      %5894 = vmatprep.subr.bf16.mxu0 0
      %5895 = vmatpush2.bf16.msra.mxu0 0
      %5896 = vmatprep.subr.bf16.mxu0 0
      %5897 = vmatpush2.bf16.msra.mxu0 0
      %5898 = vmatprep.subr.bf16.mxu0 0
      %5899 = vmatpush2.bf16.msra.mxu0 0
      %5900 = vmatprep.subr.bf16.mxu0 0
      %5901 = vmatpush2.bf16.msra.mxu0 0
      %5902 = vmatprep.subr.bf16.mxu0 0
      %5903 = vmatpush2.bf16.msra.mxu0 0
      %5904 = vmatprep.subr.bf16.mxu0 0
      %5905 = vmatpush2.bf16.msra.mxu0 0
      %5906 = vmatprep.subr.bf16.mxu0 0
      %5907 = vmatpush2.bf16.msra.mxu0 0
      %5908 = vmatprep.subr.bf16.mxu0 0
      %5909 = vmatpush2.bf16.msra.mxu0 0
      %5910 = vmatprep.mubr.bf16.mxu0 0
      %5911 = vmatmul.mubr.bf16.gmra.mxu0 %v5867
      %v5912 = vpop.f32.mrf.mxu0
      %v5913 = vadd.f32 0.0, %v5912
      %v5914 = vpop.f32.mrf.mxu0
      %v5915 = vpop.f32.mrf.mxu0
      %v5916 = vadd.f32 0.0, %v5915
      %v5917 = vpop.f32.mrf.mxu0
      %5918 = vmatprep.mubr.bf16.mxu0 0
      %5919 = vmatmul.mubr.bf16.gmra.mxu0 %v5870
      %v5920 = vpop.f32.mrf.mxu0
      %v5921 = vadd.f32 0.0, %v5920
      %v5922 = vpop.f32.mrf.mxu0
      %v5923 = vpop.f32.mrf.mxu0
      %v5924 = vadd.f32 0.0, %v5923
      %v5925 = vpop.f32.mrf.mxu0
      %5926 = vmatprep.mubr.bf16.mxu0 0
      %5927 = vmatmul.mubr.bf16.gmra.mxu0 %v5873
      %v5928 = vpop.f32.mrf.mxu0
      %v5929 = vadd.f32 0.0, %v5928
      %v5930 = vpop.f32.mrf.mxu0
      %v5931 = vpop.f32.mrf.mxu0
      %v5932 = vadd.f32 0.0, %v5931
      %v5933 = vpop.f32.mrf.mxu0
      %5934 = vmatprep.mubr.bf16.mxu0 0
      %5935 = vmatmul.mubr.bf16.gmra.mxu0 %v5876
      %v5936 = vpop.f32.mrf.mxu0
      %v5937 = vadd.f32 0.0, %v5936
      %v5938 = vpop.f32.mrf.mxu0
      %v5939 = vpop.f32.mrf.mxu0
      %v5940 = vadd.f32 0.0, %v5939
      %v5941 = vpop.f32.mrf.mxu0
      %5942 = vdwg.mxu0
      %v5943 = vpack.c.bf16 %v5916, %v5913
      %v5944 = vpack.c.bf16 %v5924, %v5921
      %v5945 = vpack.c.bf16 %v5932, %v5929
      %v5946 = vpack.c.bf16 %v5940, %v5937
      %v5963 = vunpack.c.l.b16 %v2911
      %v5964 = vunpack.c.h.b16 %v2911
      %v5965 = vunpack.c.l.b16 %v2912
      %v5966 = vunpack.c.l.b16 %v2913
      %v5967 = vunpack.c.h.b16 %v2913
      %v5968 = vunpack.c.l.b16 %v2914
      %v5969 = vunpack.c.l.b16 %v2915
      %v5970 = vunpack.c.h.b16 %v2915
      %v5971 = vunpack.c.l.b16 %v2916
      %v5972 = vunpack.c.l.b16 %v2917
      %v5973 = vunpack.c.h.b16 %v2917
      %v5974 = vunpack.c.l.b16 %v2918
      %v5975 = vunpack.c.l.b16 %v2919
      %v5976 = vunpack.c.h.b16 %v2919
      %v5977 = vunpack.c.l.b16 %v2920
      %v5978 = vunpack.c.l.b16 %v2921
      %v5979 = vunpack.c.h.b16 %v2921
      %v5980 = vunpack.c.l.b16 %v2922
      %v5981 = vunpack.c.l.b16 %v2923
      %v5982 = vunpack.c.h.b16 %v2923
      %v5983 = vunpack.c.l.b16 %v2924
      %v5984 = vunpack.c.l.b16 %v2925
      %v5985 = vunpack.c.h.b16 %v2925
      %v5986 = vunpack.c.l.b16 %v2926
      %v5987 = vpack.c.b16 %v5966, %v5963
      %v5988 = vpack.c.b16 %v5967, %v5964
      %v5989 = vpack.c.b16 %v5968, %v5965
      %v5990 = vpack.c.b16 %v5972, %v5969
      %v5991 = vpack.c.b16 %v5973, %v5970
      %v5992 = vpack.c.b16 %v5974, %v5971
      %v5993 = vpack.c.b16 %v5978, %v5975
      %v5994 = vpack.c.b16 %v5979, %v5976
      %v5995 = vpack.c.b16 %v5980, %v5977
      %v5996 = vpack.c.b16 %v5984, %v5981
      %v5997 = vpack.c.b16 %v5985, %v5982
      %v5998 = vpack.c.b16 %v5986, %v5983
      %v6012 = vsel %vm2968, %v5943, 0
      %v6015 = vsel %vm2968, %v5944, 0
      %v6018 = vsel %vm2968, %v5945, 0
      %v6021 = vsel %vm2968, %v5946, 0
      %6023 = vmatprep.subr.bf16.mxu0 0
      %6024 = vmatpush1.bf16.msra.mxu0 0
      %6025 = vmatprep.subr.bf16.mxu0 0
      %6026 = vmatpush1.bf16.msra.mxu0 0
      %6027 = vmatprep.subr.bf16.mxu0 0
      %6028 = vmatpush1.bf16.msra.mxu0 0
      %6029 = vmatprep.subr.bf16.mxu0 0
      %6030 = vmatpush1.bf16.msra.mxu0 0
      %6031 = vmatprep.subr.bf16.mxu0 %v5997
      %6032 = vmatpush1.bf16.msra.mxu0 %v5996
      %6033 = vmatprep.subr.bf16.mxu0 %v5994
      %6034 = vmatpush1.bf16.msra.mxu0 %v5993
      %6035 = vmatprep.subr.bf16.mxu0 %v5991
      %6036 = vmatpush1.bf16.msra.mxu0 %v5990
      %6037 = vmatprep.subr.bf16.mxu0 %v5988
      %6038 = vmatpush1.bf16.msra.mxu0 %v5987
      %6039 = vmatprep.subr.bf16.mxu0 0
      %6040 = vmatpush2.bf16.msra.mxu0 0
      %6041 = vmatprep.subr.bf16.mxu0 0
      %6042 = vmatpush2.bf16.msra.mxu0 0
      %6043 = vmatprep.subr.bf16.mxu0 0
      %6044 = vmatpush2.bf16.msra.mxu0 0
      %6045 = vmatprep.subr.bf16.mxu0 0
      %6046 = vmatpush2.bf16.msra.mxu0 0
      %6047 = vmatprep.subr.bf16.mxu0 0
      %6048 = vmatpush2.bf16.msra.mxu0 0
      %6049 = vmatprep.subr.bf16.mxu0 0
      %6050 = vmatpush2.bf16.msra.mxu0 0
      %6051 = vmatprep.subr.bf16.mxu0 0
      %6052 = vmatpush2.bf16.msra.mxu0 0
      %6053 = vmatprep.subr.bf16.mxu0 0
      %6054 = vmatpush2.bf16.msra.mxu0 0
      %6055 = vmatprep.mubr.bf16.mxu0 0
      %6056 = vmatmul.mubr.bf16.gmra.mxu0 %v6012
      %v6057 = vpop.f32.mrf.mxu0
      %v6058 = vadd.f32 0.0, %v6057
      %v6059 = vpop.f32.mrf.mxu0
      %v6060 = vadd.f32 0.0, %v6059
      %v6061 = vpop.f32.mrf.mxu0
      %v6062 = vadd.f32 0.0, %v6061
      %v6063 = vpop.f32.mrf.mxu0
      %v6064 = vadd.f32 0.0, %v6063
      %6065 = vmatprep.mubr.bf16.mxu0 0
      %6066 = vmatmul.mubr.bf16.gmra.mxu0 %v6015
      %v6067 = vpop.f32.mrf.mxu0
      %v6068 = vadd.f32 0.0, %v6067
      %v6069 = vpop.f32.mrf.mxu0
      %v6070 = vadd.f32 0.0, %v6069
      %v6071 = vpop.f32.mrf.mxu0
      %v6072 = vadd.f32 0.0, %v6071
      %v6073 = vpop.f32.mrf.mxu0
      %v6074 = vadd.f32 0.0, %v6073
      %6075 = vmatprep.mubr.bf16.mxu0 0
      %6076 = vmatmul.mubr.bf16.gmra.mxu0 %v6018
      %v6077 = vpop.f32.mrf.mxu0
      %v6078 = vadd.f32 0.0, %v6077
      %v6079 = vpop.f32.mrf.mxu0
      %v6080 = vadd.f32 0.0, %v6079
      %v6081 = vpop.f32.mrf.mxu0
      %v6082 = vadd.f32 0.0, %v6081
      %v6083 = vpop.f32.mrf.mxu0
      %v6084 = vadd.f32 0.0, %v6083
      %6085 = vmatprep.mubr.bf16.mxu0 0
      %6086 = vmatmul.mubr.bf16.gmra.mxu0 %v6021
      %v6087 = vpop.f32.mrf.mxu0
      %v6088 = vadd.f32 0.0, %v6087
      %v6089 = vpop.f32.mrf.mxu0
      %v6090 = vadd.f32 0.0, %v6089
      %v6091 = vpop.f32.mrf.mxu0
      %v6092 = vadd.f32 0.0, %v6091
      %v6093 = vpop.f32.mrf.mxu0
      %v6094 = vadd.f32 0.0, %v6093
      %6095 = vdwg.mxu0
      %6096 = vmatprep.subr.bf16.mxu0 0
      %6097 = vmatpush1.bf16.msra.mxu0 0
      %6098 = vmatprep.subr.bf16.mxu0 0
      %6099 = vmatpush1.bf16.msra.mxu0 0
      %6100 = vmatprep.subr.bf16.mxu0 0
      %6101 = vmatpush1.bf16.msra.mxu0 0
      %6102 = vmatprep.subr.bf16.mxu0 0
      %6103 = vmatpush1.bf16.msra.mxu0 0
      %6104 = vmatprep.subr.bf16.mxu0 0
      %6105 = vmatpush1.bf16.msra.mxu0 %v5998
      %6106 = vmatprep.subr.bf16.mxu0 0
      %6107 = vmatpush1.bf16.msra.mxu0 %v5995
      %6108 = vmatprep.subr.bf16.mxu0 0
      %6109 = vmatpush1.bf16.msra.mxu0 %v5992
      %6110 = vmatprep.subr.bf16.mxu0 0
      %6111 = vmatpush1.bf16.msra.mxu0 %v5989
      %6112 = vmatprep.subr.bf16.mxu0 0
      %6113 = vmatpush2.bf16.msra.mxu0 0
      %6114 = vmatprep.subr.bf16.mxu0 0
      %6115 = vmatpush2.bf16.msra.mxu0 0
      %6116 = vmatprep.subr.bf16.mxu0 0
      %6117 = vmatpush2.bf16.msra.mxu0 0
      %6118 = vmatprep.subr.bf16.mxu0 0
      %6119 = vmatpush2.bf16.msra.mxu0 0
      %6120 = vmatprep.subr.bf16.mxu0 0
      %6121 = vmatpush2.bf16.msra.mxu0 0
      %6122 = vmatprep.subr.bf16.mxu0 0
      %6123 = vmatpush2.bf16.msra.mxu0 0
      %6124 = vmatprep.subr.bf16.mxu0 0
      %6125 = vmatpush2.bf16.msra.mxu0 0
      %6126 = vmatprep.subr.bf16.mxu0 0
      %6127 = vmatpush2.bf16.msra.mxu0 0
      %6128 = vmatprep.mubr.bf16.mxu0 0
      %6129 = vmatmul.mubr.bf16.gmra.mxu0 %v6012
      %v6130 = vpop.f32.mrf.mxu0
      %v6131 = vadd.f32 0.0, %v6130
      %v6132 = vpop.f32.mrf.mxu0
      %v6133 = vpop.f32.mrf.mxu0
      %v6134 = vadd.f32 0.0, %v6133
      %v6135 = vpop.f32.mrf.mxu0
      %6136 = vmatprep.mubr.bf16.mxu0 0
      %6137 = vmatmul.mubr.bf16.gmra.mxu0 %v6015
      %v6138 = vpop.f32.mrf.mxu0
      %v6139 = vadd.f32 0.0, %v6138
      %v6140 = vpop.f32.mrf.mxu0
      %v6141 = vpop.f32.mrf.mxu0
      %v6142 = vadd.f32 0.0, %v6141
      %v6143 = vpop.f32.mrf.mxu0
      %6144 = vmatprep.mubr.bf16.mxu0 0
      %6145 = vmatmul.mubr.bf16.gmra.mxu0 %v6018
      %v6146 = vpop.f32.mrf.mxu0
      %v6147 = vadd.f32 0.0, %v6146
      %v6148 = vpop.f32.mrf.mxu0
      %v6149 = vpop.f32.mrf.mxu0
      %v6150 = vadd.f32 0.0, %v6149
      %v6151 = vpop.f32.mrf.mxu0
      %6152 = vmatprep.mubr.bf16.mxu0 0
      %6153 = vmatmul.mubr.bf16.gmra.mxu0 %v6021
      %v6154 = vpop.f32.mrf.mxu0
      %v6155 = vadd.f32 0.0, %v6154
      %v6156 = vpop.f32.mrf.mxu0
      %v6157 = vpop.f32.mrf.mxu0
      %v6158 = vadd.f32 0.0, %v6157
      %v6159 = vpop.f32.mrf.mxu0
      %6160 = vdwg.mxu0
      %v6161 = vadd.f32 %v5605, %v6058
      %v6162 = vadd.f32 %v5606, %v6060
      %v6163 = vadd.f32 %v5607, %v6131
      %v6164 = vadd.f32 %v5608, %v6062
      %v6165 = vadd.f32 %v5609, %v6064
      %v6166 = vadd.f32 %v5610, %v6134
      %v6167 = vadd.f32 %v5611, %v6068
      %v6168 = vadd.f32 %v5612, %v6070
      %v6169 = vadd.f32 %v5613, %v6139
      %v6170 = vadd.f32 %v5614, %v6072
      %v6171 = vadd.f32 %v5615, %v6074
      %v6172 = vadd.f32 %v5616, %v6142
      %v6173 = vadd.f32 %v5617, %v6078
      %v6174 = vadd.f32 %v5618, %v6080
      %v6175 = vadd.f32 %v5619, %v6147
      %v6176 = vadd.f32 %v5620, %v6082
      %v6177 = vadd.f32 %v5621, %v6084
      %v6178 = vadd.f32 %v5622, %v6150
      %v6179 = vadd.f32 %v5623, %v6088
      %v6180 = vadd.f32 %v5624, %v6090
      %v6181 = vadd.f32 %v5625, %v6155
      %v6182 = vadd.f32 %v5626, %v6092
      %v6183 = vadd.f32 %v5627, %v6094
      %v6184 = vadd.f32 %v5628, %v6158
      %v6185 = vld [vmem:[%s6] sm:$0x7]
      %v6186 = vld [vmem:[%s7] sm:$0x7]
      %v6187 = vadd.f32 %v6161, %v6162
      %v6188 = vadd.f32 %v6187, %v6163
      %6189 = vadd.xlane.f32.xlu0 %v6188
      %v6190 = vpop.xlane.xlu0 %6189
      %v6191 = vadd.f32 %v6164, %v6165
      %v6192 = vadd.f32 %v6191, %v6166
      %6193 = vadd.xlane.f32.xlu0 %v6192
      %v6194 = vpop.xlane.xlu0 %6193
      %v6195 = vadd.f32 %v6167, %v6168
      %v6196 = vadd.f32 %v6195, %v6169
      %6197 = vadd.xlane.f32.xlu0 %v6196
      %v6198 = vpop.xlane.xlu0 %6197
      %v6199 = vadd.f32 %v6170, %v6171
      %v6200 = vadd.f32 %v6199, %v6172
      %6201 = vadd.xlane.f32.xlu0 %v6200
      %v6202 = vpop.xlane.xlu0 %6201
      %v6203 = vadd.f32 %v6173, %v6174
      %v6204 = vadd.f32 %v6203, %v6175
      %6205 = vadd.xlane.f32.xlu0 %v6204
      %v6206 = vpop.xlane.xlu0 %6205
      %v6207 = vadd.f32 %v6176, %v6177
      %v6208 = vadd.f32 %v6207, %v6178
      %6209 = vadd.xlane.f32.xlu0 %v6208
      %v6210 = vpop.xlane.xlu0 %6209
      %v6211 = vadd.f32 %v6179, %v6180
      %v6212 = vadd.f32 %v6211, %v6181
      %6213 = vadd.xlane.f32.xlu0 %v6212
      %v6214 = vpop.xlane.xlu0 %6213
      %v6215 = vadd.f32 %v6182, %v6183
      %v6216 = vadd.f32 %v6215, %v6184
      %6217 = vadd.xlane.f32.xlu0 %v6216
      %v6218 = vpop.xlane.xlu0 %6217
      %v6219 = vmul.f32 %v6190, %v489
      %v6220 = vmul.f32 %v6194, %v489
      %v6221 = vmul.f32 %v6198, %v489
      %v6222 = vmul.f32 %v6202, %v489
      %v6223 = vmul.f32 %v6206, %v489
      %v6224 = vmul.f32 %v6210, %v489
      %v6225 = vmul.f32 %v6214, %v489
      %v6226 = vmul.f32 %v6218, %v489
      %v6227 = vsub.f32 %v6161, %v6219
      %v6228 = vsub.f32 %v6162, %v6219
      %v6229 = vsub.f32 %v6163, %v6219
      %v6230 = vsub.f32 %v6164, %v6220
      %v6231 = vsub.f32 %v6165, %v6220
      %v6232 = vsub.f32 %v6166, %v6220
      %v6233 = vsub.f32 %v6167, %v6221
      %v6234 = vsub.f32 %v6168, %v6221
      %v6235 = vsub.f32 %v6169, %v6221
      %v6236 = vsub.f32 %v6170, %v6222
      %v6237 = vsub.f32 %v6171, %v6222
      %v6238 = vsub.f32 %v6172, %v6222
      %v6239 = vsub.f32 %v6173, %v6223
      %v6240 = vsub.f32 %v6174, %v6223
      %v6241 = vsub.f32 %v6175, %v6223
      %v6242 = vsub.f32 %v6176, %v6224
      %v6243 = vsub.f32 %v6177, %v6224
      %v6244 = vsub.f32 %v6178, %v6224
      %v6245 = vsub.f32 %v6179, %v6225
      %v6246 = vsub.f32 %v6180, %v6225
      %v6247 = vsub.f32 %v6181, %v6225
      %v6248 = vsub.f32 %v6182, %v6226
      %v6249 = vsub.f32 %v6183, %v6226
      %v6250 = vsub.f32 %v6184, %v6226
      %v6251 = vmul.f32 %v6227, %v6227
      %v6252 = vmul.f32 %v6228, %v6228
      %v6253 = vmul.f32 %v6229, %v6229
      %v6254 = vmul.f32 %v6230, %v6230
      %v6255 = vmul.f32 %v6231, %v6231
      %v6256 = vmul.f32 %v6232, %v6232
      %v6257 = vmul.f32 %v6233, %v6233
      %v6258 = vmul.f32 %v6234, %v6234
      %v6259 = vmul.f32 %v6235, %v6235
      %v6260 = vmul.f32 %v6236, %v6236
      %v6261 = vmul.f32 %v6237, %v6237
      %v6262 = vmul.f32 %v6238, %v6238
      %v6263 = vmul.f32 %v6239, %v6239
      %v6264 = vmul.f32 %v6240, %v6240
      %v6265 = vmul.f32 %v6241, %v6241
      %v6266 = vmul.f32 %v6242, %v6242
      %v6267 = vmul.f32 %v6243, %v6243
      %v6268 = vmul.f32 %v6244, %v6244
      %v6269 = vmul.f32 %v6245, %v6245
      %v6270 = vmul.f32 %v6246, %v6246
      %v6271 = vmul.f32 %v6247, %v6247
      %v6272 = vmul.f32 %v6248, %v6248
      %v6273 = vmul.f32 %v6249, %v6249
      %v6274 = vmul.f32 %v6250, %v6250
      %v6275 = vadd.f32 %v6251, %v6252
      %v6276 = vadd.f32 %v6275, %v6253
      %6277 = vadd.xlane.f32.xlu0 %v6276
      %v6278 = vpop.xlane.xlu0 %6277
      %v6279 = vadd.f32 %v6254, %v6255
      %v6280 = vadd.f32 %v6279, %v6256
      %6281 = vadd.xlane.f32.xlu0 %v6280
      %v6282 = vpop.xlane.xlu0 %6281
      %v6283 = vadd.f32 %v6257, %v6258
      %v6284 = vadd.f32 %v6283, %v6259
      %6285 = vadd.xlane.f32.xlu0 %v6284
      %v6286 = vpop.xlane.xlu0 %6285
      %v6287 = vadd.f32 %v6260, %v6261
      %v6288 = vadd.f32 %v6287, %v6262
      %6289 = vadd.xlane.f32.xlu0 %v6288
      %v6290 = vpop.xlane.xlu0 %6289
      %v6291 = vadd.f32 %v6263, %v6264
      %v6292 = vadd.f32 %v6291, %v6265
      %6293 = vadd.xlane.f32.xlu0 %v6292
      %v6294 = vpop.xlane.xlu0 %6293
      %v6295 = vadd.f32 %v6266, %v6267
      %v6296 = vadd.f32 %v6295, %v6268
      %6297 = vadd.xlane.f32.xlu0 %v6296
      %v6298 = vpop.xlane.xlu0 %6297
      %v6299 = vadd.f32 %v6269, %v6270
      %v6300 = vadd.f32 %v6299, %v6271
      %6301 = vadd.xlane.f32.xlu0 %v6300
      %v6302 = vpop.xlane.xlu0 %6301
      %v6303 = vadd.f32 %v6272, %v6273
      %v6304 = vadd.f32 %v6303, %v6274
      %6305 = vadd.xlane.f32.xlu0 %v6304
      %v6306 = vpop.xlane.xlu0 %6305
      %v6307 = vmul.f32 %v6278, %v489
      %v6308 = vmul.f32 %v6282, %v489
      %v6309 = vmul.f32 %v6286, %v489
      %v6310 = vmul.f32 %v6290, %v489
      %v6311 = vmul.f32 %v6294, %v489
      %v6312 = vmul.f32 %v6298, %v489
      %v6313 = vmul.f32 %v6302, %v489
      %v6314 = vmul.f32 %v6306, %v489
      %v6315 = vadd.f32 %v6307, 1e-05
      %v6316 = vadd.f32 %v6308, 1e-05
      %v6317 = vadd.f32 %v6309, 1e-05
      %v6318 = vadd.f32 %v6310, 1e-05
      %v6319 = vadd.f32 %v6311, 1e-05
      %v6320 = vadd.f32 %v6312, 1e-05
      %v6321 = vadd.f32 %v6313, 1e-05
      %v6322 = vadd.f32 %v6314, 1e-05
      %v6323 = vrsqrt.pop %v6315
      %v6324 = vrsqrt.pop %v6316
      %v6325 = vrsqrt.pop %v6317
      %v6326 = vrsqrt.pop %v6318
      %v6327 = vrsqrt.pop %v6319
      %v6328 = vrsqrt.pop %v6320
      %v6329 = vrsqrt.pop %v6321
      %v6330 = vrsqrt.pop %v6322
      %v6331 = vmul.f32 %v6227, %v6323
      %v6332 = vmul.f32 %v6228, %v6323
      %v6333 = vmul.f32 %v6229, %v6323
      %v6334 = vmul.f32 %v6230, %v6324
      %v6335 = vmul.f32 %v6231, %v6324
      %v6336 = vmul.f32 %v6232, %v6324
      %v6337 = vmul.f32 %v6233, %v6325
      %v6338 = vmul.f32 %v6234, %v6325
      %v6339 = vmul.f32 %v6235, %v6325
      %v6340 = vmul.f32 %v6236, %v6326
      %v6341 = vmul.f32 %v6237, %v6326
      %v6342 = vmul.f32 %v6238, %v6326
      %v6343 = vmul.f32 %v6239, %v6327
      %v6344 = vmul.f32 %v6240, %v6327
      %v6345 = vmul.f32 %v6241, %v6327
      %v6346 = vmul.f32 %v6242, %v6328
      %v6347 = vmul.f32 %v6243, %v6328
      %v6348 = vmul.f32 %v6244, %v6328
      %v6349 = vmul.f32 %v6245, %v6329
      %v6350 = vmul.f32 %v6246, %v6329
      %v6351 = vmul.f32 %v6247, %v6329
      %v6352 = vmul.f32 %v6248, %v6330
      %v6353 = vmul.f32 %v6249, %v6330
      %v6354 = vmul.f32 %v6250, %v6330
      %v6356 = vlaneseq
      %v6357 = vshrl.u32 %v6356, 7
      %v6358 = vsub.s32 0, %v6357
      %v6359 = vrot.slane %v6185, %v6358
      %v6360 = vlaneseq
      %v6361 = vshrl.u32 %v6360, 7
      %v6362 = vsub.s32 1, %v6361
      %v6363 = vrot.slane %v6185, %v6362
      %v6364 = vlaneseq
      %v6365 = vshrl.u32 %v6364, 7
      %v6366 = vsub.s32 2, %v6365
      %v6367 = vrot.slane %v6185, %v6366
      %v6371 = vmul.f32 %v6331, %v6359
      %v6372 = vmul.f32 %v6332, %v6363
      %v6373 = vmul.f32 %v6333, %v6367
      %v6374 = vmul.f32 %v6334, %v6359
      %v6375 = vmul.f32 %v6335, %v6363
      %v6376 = vmul.f32 %v6336, %v6367
      %v6377 = vmul.f32 %v6337, %v6359
      %v6378 = vmul.f32 %v6338, %v6363
      %v6379 = vmul.f32 %v6339, %v6367
      %v6380 = vmul.f32 %v6340, %v6359
      %v6381 = vmul.f32 %v6341, %v6363
      %v6382 = vmul.f32 %v6342, %v6367
      %v6383 = vmul.f32 %v6343, %v6359
      %v6384 = vmul.f32 %v6344, %v6363
      %v6385 = vmul.f32 %v6345, %v6367
      %v6386 = vmul.f32 %v6346, %v6359
      %v6387 = vmul.f32 %v6347, %v6363
      %v6388 = vmul.f32 %v6348, %v6367
      %v6389 = vmul.f32 %v6349, %v6359
      %v6390 = vmul.f32 %v6350, %v6363
      %v6391 = vmul.f32 %v6351, %v6367
      %v6392 = vmul.f32 %v6352, %v6359
      %v6393 = vmul.f32 %v6353, %v6363
      %v6394 = vmul.f32 %v6354, %v6367
      %v6396 = vlaneseq
      %v6397 = vshrl.u32 %v6396, 7
      %v6398 = vsub.s32 0, %v6397
      %v6399 = vrot.slane %v6186, %v6398
      %v6400 = vlaneseq
      %v6401 = vshrl.u32 %v6400, 7
      %v6402 = vsub.s32 1, %v6401
      %v6403 = vrot.slane %v6186, %v6402
      %v6404 = vlaneseq
      %v6405 = vshrl.u32 %v6404, 7
      %v6406 = vsub.s32 2, %v6405
      %v6407 = vrot.slane %v6186, %v6406
      %v6411 = vadd.f32 %v6371, %v6399
      %v6412 = vadd.f32 %v6372, %v6403
      %v6413 = vadd.f32 %v6373, %v6407
      %v6414 = vadd.f32 %v6374, %v6399
      %v6415 = vadd.f32 %v6375, %v6403
      %v6416 = vadd.f32 %v6376, %v6407
      %v6417 = vadd.f32 %v6377, %v6399
      %v6418 = vadd.f32 %v6378, %v6403
      %v6419 = vadd.f32 %v6379, %v6407
      %v6420 = vadd.f32 %v6380, %v6399
      %v6421 = vadd.f32 %v6381, %v6403
      %v6422 = vadd.f32 %v6382, %v6407
      %v6423 = vadd.f32 %v6383, %v6399
      %v6424 = vadd.f32 %v6384, %v6403
      %v6425 = vadd.f32 %v6385, %v6407
      %v6426 = vadd.f32 %v6386, %v6399
      %v6427 = vadd.f32 %v6387, %v6403
      %v6428 = vadd.f32 %v6388, %v6407
      %v6429 = vadd.f32 %v6389, %v6399
      %v6430 = vadd.f32 %v6390, %v6403
      %v6431 = vadd.f32 %v6391, %v6407
      %v6432 = vadd.f32 %v6392, %v6399
      %v6433 = vadd.f32 %v6393, %v6403
      %v6434 = vadd.f32 %v6394, %v6407
      %v6435 = vpack.c.bf16 %v6414, %v6411
      %v6436 = vpack.c.bf16 %v6415, %v6412
      %v6437 = vpack.c.bf16 %v6416, %v6413
      %v6438 = vpack.c.bf16 %v6420, %v6417
      %v6439 = vpack.c.bf16 %v6421, %v6418
      %v6440 = vpack.c.bf16 %v6422, %v6419
      %v6441 = vpack.c.bf16 %v6426, %v6423
      %v6442 = vpack.c.bf16 %v6427, %v6424
      %v6443 = vpack.c.bf16 %v6428, %v6425
      %v6444 = vpack.c.bf16 %v6432, %v6429
      %v6445 = vpack.c.bf16 %v6433, %v6430
      %v6446 = vpack.c.bf16 %v6434, %v6431
      %v6447 = vld [vmem:[%s8] sm:$0xff]
      %v6448 = vld [vmem:[%s8 + $0x8] sm:$0xff]
      %v6449 = vld [vmem:[%s8 + $0x10] sm:$0xff]
      %v6450 = vld [vmem:[%s8 + $0x18] sm:$0xff]
      %v6451 = vld [vmem:[%s8 + $0x20] sm:$0xff]
      %v6452 = vld [vmem:[%s8 + $0x28] sm:$0xff]
      %v6453 = vld [vmem:[%s8 + $0x30] sm:$0xff]
      %v6454 = vld [vmem:[%s8 + $0x38] sm:$0xff]
      %v6455 = vld [vmem:[%s8 + $0x40] sm:$0xff]
      %v6456 = vld [vmem:[%s8 + $0x48] sm:$0xff]
      %v6457 = vld [vmem:[%s8 + $0x50] sm:$0xff]
      %v6458 = vld [vmem:[%s8 + $0x58] sm:$0xff]
      %v6459 = vld [vmem:[%s8 + $0x60] sm:$0xff]
      %v6460 = vld [vmem:[%s8 + $0x68] sm:$0xff]
      %v6461 = vld [vmem:[%s8 + $0x70] sm:$0xff]
      %v6462 = vld [vmem:[%s8 + $0x78] sm:$0xff]
      %v6463 = vld [vmem:[%s8 + $0x80] sm:$0xff]
      %v6464 = vld [vmem:[%s8 + $0x88] sm:$0xff]
      %v6465 = vld [vmem:[%s8 + $0x90] sm:$0xff]
      %v6466 = vld [vmem:[%s8 + $0x98] sm:$0xff]
      %v6467 = vld [vmem:[%s8 + $0xa0] sm:$0xff]
      %v6468 = vld [vmem:[%s8 + $0xa8] sm:$0xff]
      %v6469 = vld [vmem:[%s8 + $0xb0] sm:$0xff]
      %v6470 = vld [vmem:[%s8 + $0xb8] sm:$0xff]
      %v6471 = vld [vmem:[%s8 + $0xc0] sm:$0xff]
      %v6472 = vld [vmem:[%s8 + $0xc8] sm:$0xff]
      %v6473 = vld [vmem:[%s8 + $0xd0] sm:$0xff]
      %v6474 = vld [vmem:[%s8 + $0xd8] sm:$0xff]
      %v6475 = vld [vmem:[%s8 + $0xe0] sm:$0xff]
      %v6476 = vld [vmem:[%s8 + $0xe8] sm:$0xff]
      %v6477 = vld [vmem:[%s8 + $0xf0] sm:$0xff]
      %v6478 = vld [vmem:[%s8 + $0xf8] sm:$0xff]
      %v6479 = vld [vmem:[%s8 + $0x100] sm:$0xff]
      %v6480 = vld [vmem:[%s8 + $0x108] sm:$0xff]
      %v6481 = vld [vmem:[%s8 + $0x110] sm:$0xff]
      %v6482 = vld [vmem:[%s8 + $0x118] sm:$0xff]
      %v6483 = vld [vmem:[%s8 + $0x120] sm:$0xff]
      %v6484 = vld [vmem:[%s8 + $0x128] sm:$0xff]
      %v6485 = vld [vmem:[%s8 + $0x130] sm:$0xff]
      %v6486 = vld [vmem:[%s8 + $0x138] sm:$0xff]
      %v6487 = vld [vmem:[%s8 + $0x140] sm:$0xff]
      %v6488 = vld [vmem:[%s8 + $0x148] sm:$0xff]
      %v6489 = vld [vmem:[%s8 + $0x150] sm:$0xff]
      %v6490 = vld [vmem:[%s8 + $0x158] sm:$0xff]
      %v6491 = vld [vmem:[%s8 + $0x160] sm:$0xff]
      %v6492 = vld [vmem:[%s8 + $0x168] sm:$0xff]
      %v6493 = vld [vmem:[%s8 + $0x170] sm:$0xff]
      %v6494 = vld [vmem:[%s8 + $0x178] sm:$0xff]
      %v6495 = vld [vmem:[%s8 + $0x180] sm:$0xff]
      %v6496 = vld [vmem:[%s8 + $0x188] sm:$0xff]
      %v6497 = vld [vmem:[%s8 + $0x190] sm:$0xff]
      %v6498 = vld [vmem:[%s8 + $0x198] sm:$0xff]
      %v6499 = vld [vmem:[%s8 + $0x1a0] sm:$0xff]
      %v6500 = vld [vmem:[%s8 + $0x1a8] sm:$0xff]
      %v6501 = vld [vmem:[%s8 + $0x1b0] sm:$0xff]
      %v6502 = vld [vmem:[%s8 + $0x1b8] sm:$0xff]
      %v6503 = vld [vmem:[%s8 + $0x1c0] sm:$0xff]
      %v6504 = vld [vmem:[%s8 + $0x1c8] sm:$0xff]
      %v6505 = vld [vmem:[%s8 + $0x1d0] sm:$0xff]
      %v6506 = vld [vmem:[%s8 + $0x1d8] sm:$0xff]
      %v6507 = vld [vmem:[%s8 + $0x1e0] sm:$0xff]
      %v6508 = vld [vmem:[%s8 + $0x1e8] sm:$0xff]
      %v6509 = vld [vmem:[%s8 + $0x1f0] sm:$0xff]
      %v6510 = vld [vmem:[%s8 + $0x1f8] sm:$0xff]
      %v6511 = vld [vmem:[%s8 + $0x200] sm:$0xff]
      %v6512 = vld [vmem:[%s8 + $0x208] sm:$0xff]
      %v6513 = vld [vmem:[%s8 + $0x210] sm:$0xff]
      %v6514 = vld [vmem:[%s8 + $0x218] sm:$0xff]
      %v6515 = vld [vmem:[%s8 + $0x220] sm:$0xff]
      %v6516 = vld [vmem:[%s8 + $0x228] sm:$0xff]
      %v6517 = vld [vmem:[%s8 + $0x230] sm:$0xff]
      %v6518 = vld [vmem:[%s8 + $0x238] sm:$0xff]
      %v6519 = vld [vmem:[%s8 + $0x240] sm:$0xff]
      %v6520 = vld [vmem:[%s8 + $0x248] sm:$0xff]
      %v6521 = vld [vmem:[%s8 + $0x250] sm:$0xff]
      %v6522 = vld [vmem:[%s8 + $0x258] sm:$0xff]
      %v6523 = vld [vmem:[%s8 + $0x260] sm:$0xff]
      %v6524 = vld [vmem:[%s8 + $0x268] sm:$0xff]
      %v6525 = vld [vmem:[%s8 + $0x270] sm:$0xff]
      %v6526 = vld [vmem:[%s8 + $0x278] sm:$0xff]
      %v6527 = vld [vmem:[%s8 + $0x280] sm:$0xff]
      %v6528 = vld [vmem:[%s8 + $0x288] sm:$0xff]
      %v6529 = vld [vmem:[%s8 + $0x290] sm:$0xff]
      %v6530 = vld [vmem:[%s8 + $0x298] sm:$0xff]
      %v6531 = vld [vmem:[%s8 + $0x2a0] sm:$0xff]
      %v6532 = vld [vmem:[%s8 + $0x2a8] sm:$0xff]
      %v6533 = vld [vmem:[%s8 + $0x2b0] sm:$0xff]
      %v6534 = vld [vmem:[%s8 + $0x2b8] sm:$0xff]
      %v6535 = vld [vmem:[%s8 + $0x2c0] sm:$0xff]
      %v6536 = vld [vmem:[%s8 + $0x2c8] sm:$0xff]
      %v6537 = vld [vmem:[%s8 + $0x2d0] sm:$0xff]
      %v6538 = vld [vmem:[%s8 + $0x2d8] sm:$0xff]
      %v6539 = vld [vmem:[%s8 + $0x2e0] sm:$0xff]
      %v6540 = vld [vmem:[%s8 + $0x2e8] sm:$0xff]
      %v6541 = vld [vmem:[%s8 + $0x2f0] sm:$0xff]
      %v6542 = vld [vmem:[%s8 + $0x2f8] sm:$0xff]
      %v6543 = vld [vmem:[%s8 + $0x300] sm:$0xff]
      %v6544 = vld [vmem:[%s8 + $0x308] sm:$0xff]
      %v6545 = vld [vmem:[%s8 + $0x310] sm:$0xff]
      %v6546 = vld [vmem:[%s8 + $0x318] sm:$0xff]
      %v6547 = vld [vmem:[%s8 + $0x320] sm:$0xff]
      %v6548 = vld [vmem:[%s8 + $0x328] sm:$0xff]
      %v6549 = vld [vmem:[%s8 + $0x330] sm:$0xff]
      %v6550 = vld [vmem:[%s8 + $0x338] sm:$0xff]
      %v6551 = vld [vmem:[%s8 + $0x340] sm:$0xff]
      %v6552 = vld [vmem:[%s8 + $0x348] sm:$0xff]
      %v6553 = vld [vmem:[%s8 + $0x350] sm:$0xff]
      %v6554 = vld [vmem:[%s8 + $0x358] sm:$0xff]
      %v6555 = vld [vmem:[%s8 + $0x360] sm:$0xff]
      %v6556 = vld [vmem:[%s8 + $0x368] sm:$0xff]
      %v6557 = vld [vmem:[%s8 + $0x370] sm:$0xff]
      %v6558 = vld [vmem:[%s8 + $0x378] sm:$0xff]
      %v6559 = vld [vmem:[%s8 + $0x380] sm:$0xff]
      %v6560 = vld [vmem:[%s8 + $0x388] sm:$0xff]
      %v6561 = vld [vmem:[%s8 + $0x390] sm:$0xff]
      %v6562 = vld [vmem:[%s8 + $0x398] sm:$0xff]
      %v6563 = vld [vmem:[%s8 + $0x3a0] sm:$0xff]
      %v6564 = vld [vmem:[%s8 + $0x3a8] sm:$0xff]
      %v6565 = vld [vmem:[%s8 + $0x3b0] sm:$0xff]
      %v6566 = vld [vmem:[%s8 + $0x3b8] sm:$0xff]
      %v6567 = vld [vmem:[%s8 + $0x3c0] sm:$0xff]
      %v6568 = vld [vmem:[%s8 + $0x3c8] sm:$0xff]
      %v6569 = vld [vmem:[%s8 + $0x3d0] sm:$0xff]
      %v6570 = vld [vmem:[%s8 + $0x3d8] sm:$0xff]
      %v6571 = vld [vmem:[%s8 + $0x3e0] sm:$0xff]
      %v6572 = vld [vmem:[%s8 + $0x3e8] sm:$0xff]
      %v6573 = vld [vmem:[%s8 + $0x3f0] sm:$0xff]
      %v6574 = vld [vmem:[%s8 + $0x3f8] sm:$0xff]
      %v6575 = vld [vmem:[%s8 + $0x400] sm:$0xff]
      %v6576 = vld [vmem:[%s8 + $0x408] sm:$0xff]
      %v6577 = vld [vmem:[%s8 + $0x410] sm:$0xff]
      %v6578 = vld [vmem:[%s8 + $0x418] sm:$0xff]
      %v6579 = vld [vmem:[%s8 + $0x420] sm:$0xff]
      %v6580 = vld [vmem:[%s8 + $0x428] sm:$0xff]
      %v6581 = vld [vmem:[%s8 + $0x430] sm:$0xff]
      %v6582 = vld [vmem:[%s8 + $0x438] sm:$0xff]
      %v6583 = vld [vmem:[%s8 + $0x440] sm:$0xff]
      %v6584 = vld [vmem:[%s8 + $0x448] sm:$0xff]
      %v6585 = vld [vmem:[%s8 + $0x450] sm:$0xff]
      %v6586 = vld [vmem:[%s8 + $0x458] sm:$0xff]
      %v6587 = vld [vmem:[%s8 + $0x460] sm:$0xff]
      %v6588 = vld [vmem:[%s8 + $0x468] sm:$0xff]
      %v6589 = vld [vmem:[%s8 + $0x470] sm:$0xff]
      %v6590 = vld [vmem:[%s8 + $0x478] sm:$0xff]
      %v6591 = vld [vmem:[%s8 + $0x480] sm:$0xff]
      %v6592 = vld [vmem:[%s8 + $0x488] sm:$0xff]
      %v6593 = vld [vmem:[%s8 + $0x490] sm:$0xff]
      %v6594 = vld [vmem:[%s8 + $0x498] sm:$0xff]
      %v6595 = vld [vmem:[%s8 + $0x4a0] sm:$0xff]
      %v6596 = vld [vmem:[%s8 + $0x4a8] sm:$0xff]
      %v6597 = vld [vmem:[%s8 + $0x4b0] sm:$0xff]
      %v6598 = vld [vmem:[%s8 + $0x4b8] sm:$0xff]
      %v6599 = vld [vmem:[%s8 + $0x4c0] sm:$0xff]
      %v6600 = vld [vmem:[%s8 + $0x4c8] sm:$0xff]
      %v6601 = vld [vmem:[%s8 + $0x4d0] sm:$0xff]
      %v6602 = vld [vmem:[%s8 + $0x4d8] sm:$0xff]
      %v6603 = vld [vmem:[%s8 + $0x4e0] sm:$0xff]
      %v6604 = vld [vmem:[%s8 + $0x4e8] sm:$0xff]
      %v6605 = vld [vmem:[%s8 + $0x4f0] sm:$0xff]
      %v6606 = vld [vmem:[%s8 + $0x4f8] sm:$0xff]
      %v6607 = vld [vmem:[%s8 + $0x500] sm:$0xff]
      %v6608 = vld [vmem:[%s8 + $0x508] sm:$0xff]
      %v6609 = vld [vmem:[%s8 + $0x510] sm:$0xff]
      %v6610 = vld [vmem:[%s8 + $0x518] sm:$0xff]
      %v6611 = vld [vmem:[%s8 + $0x520] sm:$0xff]
      %v6612 = vld [vmem:[%s8 + $0x528] sm:$0xff]
      %v6613 = vld [vmem:[%s8 + $0x530] sm:$0xff]
      %v6614 = vld [vmem:[%s8 + $0x538] sm:$0xff]
      %v6615 = vld [vmem:[%s8 + $0x540] sm:$0xff]
      %v6616 = vld [vmem:[%s8 + $0x548] sm:$0xff]
      %v6617 = vld [vmem:[%s8 + $0x550] sm:$0xff]
      %v6618 = vld [vmem:[%s8 + $0x558] sm:$0xff]
      %v6619 = vld [vmem:[%s8 + $0x560] sm:$0xff]
      %v6620 = vld [vmem:[%s8 + $0x568] sm:$0xff]
      %v6621 = vld [vmem:[%s8 + $0x570] sm:$0xff]
      %v6622 = vld [vmem:[%s8 + $0x578] sm:$0xff]
      %v6623 = vld [vmem:[%s8 + $0x580] sm:$0xff]
      %v6624 = vld [vmem:[%s8 + $0x588] sm:$0xff]
      %v6625 = vld [vmem:[%s8 + $0x590] sm:$0xff]
      %v6626 = vld [vmem:[%s8 + $0x598] sm:$0xff]
      %v6627 = vld [vmem:[%s8 + $0x5a0] sm:$0xff]
      %v6628 = vld [vmem:[%s8 + $0x5a8] sm:$0xff]
      %v6629 = vld [vmem:[%s8 + $0x5b0] sm:$0xff]
      %v6630 = vld [vmem:[%s8 + $0x5b8] sm:$0xff]
      %v6631 = vld [vmem:[%s8 + $0x5c0] sm:$0xff]
      %v6632 = vld [vmem:[%s8 + $0x5c8] sm:$0xff]
      %v6633 = vld [vmem:[%s8 + $0x5d0] sm:$0xff]
      %v6634 = vld [vmem:[%s8 + $0x5d8] sm:$0xff]
      %v6635 = vld [vmem:[%s8 + $0x5e0] sm:$0xff]
      %v6636 = vld [vmem:[%s8 + $0x5e8] sm:$0xff]
      %v6637 = vld [vmem:[%s8 + $0x5f0] sm:$0xff]
      %v6638 = vld [vmem:[%s8 + $0x5f8] sm:$0xff]
      %v6639 = vld [vmem:[%s8 + $0x600] sm:$0xff]
      %v6640 = vld [vmem:[%s8 + $0x608] sm:$0xff]
      %v6641 = vld [vmem:[%s8 + $0x610] sm:$0xff]
      %v6642 = vld [vmem:[%s8 + $0x618] sm:$0xff]
      %v6643 = vld [vmem:[%s8 + $0x620] sm:$0xff]
      %v6644 = vld [vmem:[%s8 + $0x628] sm:$0xff]
      %v6645 = vld [vmem:[%s8 + $0x630] sm:$0xff]
      %v6646 = vld [vmem:[%s8 + $0x638] sm:$0xff]
      %v6647 = vld [vmem:[%s8 + $0x640] sm:$0xff]
      %v6648 = vld [vmem:[%s8 + $0x648] sm:$0xff]
      %v6649 = vld [vmem:[%s8 + $0x650] sm:$0xff]
      %v6650 = vld [vmem:[%s8 + $0x658] sm:$0xff]
      %v6651 = vld [vmem:[%s8 + $0x660] sm:$0xff]
      %v6652 = vld [vmem:[%s8 + $0x668] sm:$0xff]
      %v6653 = vld [vmem:[%s8 + $0x670] sm:$0xff]
      %v6654 = vld [vmem:[%s8 + $0x678] sm:$0xff]
      %v6655 = vld [vmem:[%s8 + $0x680] sm:$0xff]
      %v6656 = vld [vmem:[%s8 + $0x688] sm:$0xff]
      %v6657 = vld [vmem:[%s8 + $0x690] sm:$0xff]
      %v6658 = vld [vmem:[%s8 + $0x698] sm:$0xff]
      %v6659 = vld [vmem:[%s8 + $0x6a0] sm:$0xff]
      %v6660 = vld [vmem:[%s8 + $0x6a8] sm:$0xff]
      %v6661 = vld [vmem:[%s8 + $0x6b0] sm:$0xff]
      %v6662 = vld [vmem:[%s8 + $0x6b8] sm:$0xff]
      %v6663 = vld [vmem:[%s8 + $0x6c0] sm:$0xff]
      %v6664 = vld [vmem:[%s8 + $0x6c8] sm:$0xff]
      %v6665 = vld [vmem:[%s8 + $0x6d0] sm:$0xff]
      %v6666 = vld [vmem:[%s8 + $0x6d8] sm:$0xff]
      %v6667 = vld [vmem:[%s8 + $0x6e0] sm:$0xff]
      %v6668 = vld [vmem:[%s8 + $0x6e8] sm:$0xff]
      %v6669 = vld [vmem:[%s8 + $0x6f0] sm:$0xff]
      %v6670 = vld [vmem:[%s8 + $0x6f8] sm:$0xff]
      %v6671 = vld [vmem:[%s8 + $0x700] sm:$0xff]
      %v6672 = vld [vmem:[%s8 + $0x708] sm:$0xff]
      %v6673 = vld [vmem:[%s8 + $0x710] sm:$0xff]
      %v6674 = vld [vmem:[%s8 + $0x718] sm:$0xff]
      %v6675 = vld [vmem:[%s8 + $0x720] sm:$0xff]
      %v6676 = vld [vmem:[%s8 + $0x728] sm:$0xff]
      %v6677 = vld [vmem:[%s8 + $0x730] sm:$0xff]
      %v6678 = vld [vmem:[%s8 + $0x738] sm:$0xff]
      %v6679 = vld [vmem:[%s8 + $0x740] sm:$0xff]
      %v6680 = vld [vmem:[%s8 + $0x748] sm:$0xff]
      %v6681 = vld [vmem:[%s8 + $0x750] sm:$0xff]
      %v6682 = vld [vmem:[%s8 + $0x758] sm:$0xff]
      %v6683 = vld [vmem:[%s8 + $0x760] sm:$0xff]
      %v6684 = vld [vmem:[%s8 + $0x768] sm:$0xff]
      %v6685 = vld [vmem:[%s8 + $0x770] sm:$0xff]
      %v6686 = vld [vmem:[%s8 + $0x778] sm:$0xff]
      %v6687 = vld [vmem:[%s8 + $0x780] sm:$0xff]
      %v6688 = vld [vmem:[%s8 + $0x788] sm:$0xff]
      %v6689 = vld [vmem:[%s8 + $0x790] sm:$0xff]
      %v6690 = vld [vmem:[%s8 + $0x798] sm:$0xff]
      %v6691 = vld [vmem:[%s8 + $0x7a0] sm:$0xff]
      %v6692 = vld [vmem:[%s8 + $0x7a8] sm:$0xff]
      %v6693 = vld [vmem:[%s8 + $0x7b0] sm:$0xff]
      %v6694 = vld [vmem:[%s8 + $0x7b8] sm:$0xff]
      %v6695 = vld [vmem:[%s8 + $0x7c0] sm:$0xff]
      %v6696 = vld [vmem:[%s8 + $0x7c8] sm:$0xff]
      %v6697 = vld [vmem:[%s8 + $0x7d0] sm:$0xff]
      %v6698 = vld [vmem:[%s8 + $0x7d8] sm:$0xff]
      %v6699 = vld [vmem:[%s8 + $0x7e0] sm:$0xff]
      %v6700 = vld [vmem:[%s8 + $0x7e8] sm:$0xff]
      %v6701 = vld [vmem:[%s8 + $0x7f0] sm:$0xff]
      %v6702 = vld [vmem:[%s8 + $0x7f8] sm:$0xff]
      %v6703 = vld [vmem:[%s8 + $0x800] sm:$0xff]
      %v6704 = vld [vmem:[%s8 + $0x808] sm:$0xff]
      %v6705 = vld [vmem:[%s8 + $0x810] sm:$0xff]
      %v6706 = vld [vmem:[%s8 + $0x818] sm:$0xff]
      %v6707 = vld [vmem:[%s8 + $0x820] sm:$0xff]
      %v6708 = vld [vmem:[%s8 + $0x828] sm:$0xff]
      %v6709 = vld [vmem:[%s8 + $0x830] sm:$0xff]
      %v6710 = vld [vmem:[%s8 + $0x838] sm:$0xff]
      %v6711 = vld [vmem:[%s8 + $0x840] sm:$0xff]
      %v6712 = vld [vmem:[%s8 + $0x848] sm:$0xff]
      %v6713 = vld [vmem:[%s8 + $0x850] sm:$0xff]
      %v6714 = vld [vmem:[%s8 + $0x858] sm:$0xff]
      %v6715 = vld [vmem:[%s8 + $0x860] sm:$0xff]
      %v6716 = vld [vmem:[%s8 + $0x868] sm:$0xff]
      %v6717 = vld [vmem:[%s8 + $0x870] sm:$0xff]
      %v6718 = vld [vmem:[%s8 + $0x878] sm:$0xff]
      %v6719 = vld [vmem:[%s8 + $0x880] sm:$0xff]
      %v6720 = vld [vmem:[%s8 + $0x888] sm:$0xff]
      %v6721 = vld [vmem:[%s8 + $0x890] sm:$0xff]
      %v6722 = vld [vmem:[%s8 + $0x898] sm:$0xff]
      %v6723 = vld [vmem:[%s8 + $0x8a0] sm:$0xff]
      %v6724 = vld [vmem:[%s8 + $0x8a8] sm:$0xff]
      %v6725 = vld [vmem:[%s8 + $0x8b0] sm:$0xff]
      %v6726 = vld [vmem:[%s8 + $0x8b8] sm:$0xff]
      %v6727 = vld [vmem:[%s8 + $0x8c0] sm:$0xff]
      %v6728 = vld [vmem:[%s8 + $0x8c8] sm:$0xff]
      %v6729 = vld [vmem:[%s8 + $0x8d0] sm:$0xff]
      %v6730 = vld [vmem:[%s8 + $0x8d8] sm:$0xff]
      %v6731 = vld [vmem:[%s8 + $0x8e0] sm:$0xff]
      %v6732 = vld [vmem:[%s8 + $0x8e8] sm:$0xff]
      %v6733 = vld [vmem:[%s8 + $0x8f0] sm:$0xff]
      %v6734 = vld [vmem:[%s8 + $0x8f8] sm:$0xff]
      %v6735 = vld [vmem:[%s9] sm:$0xff]
      %v6736 = vld [vmem:[%s9 + $0x8] sm:$0xf]
      %v6739 = vlaneseq
      %v6740 = vshrl.u32 %v6739, 7
      %v6741 = vsub.s32 0, %v6740
      %v6742 = vrot.slane %v6735, %v6741
      %v6743 = vlaneseq
      %v6744 = vshrl.u32 %v6743, 7
      %v6745 = vsub.s32 1, %v6744
      %v6746 = vrot.slane %v6735, %v6745
      %v6747 = vlaneseq
      %v6748 = vshrl.u32 %v6747, 7
      %v6749 = vsub.s32 2, %v6748
      %v6750 = vrot.slane %v6735, %v6749
      %v6751 = vlaneseq
      %v6752 = vshrl.u32 %v6751, 7
      %v6753 = vsub.s32 3, %v6752
      %v6754 = vrot.slane %v6735, %v6753
      %v6755 = vlaneseq
      %v6756 = vshrl.u32 %v6755, 7
      %v6757 = vsub.s32 4, %v6756
      %v6758 = vrot.slane %v6735, %v6757
      %v6759 = vlaneseq
      %v6760 = vshrl.u32 %v6759, 7
      %v6761 = vsub.s32 5, %v6760
      %v6762 = vrot.slane %v6735, %v6761
      %v6763 = vlaneseq
      %v6764 = vshrl.u32 %v6763, 7
      %v6765 = vsub.s32 6, %v6764
      %v6766 = vrot.slane %v6735, %v6765
      %v6767 = vlaneseq
      %v6768 = vshrl.u32 %v6767, 7
      %v6769 = vsub.s32 7, %v6768
      %v6770 = vrot.slane %v6735, %v6769
      %v6771 = vlaneseq
      %v6772 = vshrl.u32 %v6771, 7
      %v6773 = vsub.s32 0, %v6772
      %v6774 = vrot.slane %v6736, %v6773
      %v6775 = vlaneseq
      %v6776 = vshrl.u32 %v6775, 7
      %v6777 = vsub.s32 1, %v6776
      %v6778 = vrot.slane %v6736, %v6777
      %v6779 = vlaneseq
      %v6780 = vshrl.u32 %v6779, 7
      %v6781 = vsub.s32 2, %v6780
      %v6782 = vrot.slane %v6736, %v6781
      %v6783 = vlaneseq
      %v6784 = vshrl.u32 %v6783, 7
      %v6785 = vsub.s32 3, %v6784
      %v6786 = vrot.slane %v6736, %v6785
      %v7087 = vunpack.c.l.b16 %v6447
      %v7088 = vunpack.c.h.b16 %v6447
      %v7089 = vunpack.c.l.b16 %v6448
      %v7090 = vunpack.c.h.b16 %v6448
      %v7091 = vunpack.c.l.b16 %v6449
      %v7092 = vunpack.c.h.b16 %v6449
      %v7093 = vunpack.c.l.b16 %v6450
      %v7094 = vunpack.c.h.b16 %v6450
      %v7095 = vunpack.c.l.b16 %v6451
      %v7096 = vunpack.c.h.b16 %v6451
      %v7097 = vunpack.c.l.b16 %v6452
      %v7098 = vunpack.c.h.b16 %v6452
      %v7099 = vunpack.c.l.b16 %v6453
      %v7100 = vunpack.c.h.b16 %v6453
      %v7101 = vunpack.c.l.b16 %v6454
      %v7102 = vunpack.c.h.b16 %v6454
      %v7103 = vunpack.c.l.b16 %v6455
      %v7104 = vunpack.c.h.b16 %v6455
      %v7105 = vunpack.c.l.b16 %v6456
      %v7106 = vunpack.c.h.b16 %v6456
      %v7107 = vunpack.c.l.b16 %v6457
      %v7108 = vunpack.c.h.b16 %v6457
      %v7109 = vunpack.c.l.b16 %v6458
      %v7110 = vunpack.c.h.b16 %v6458
      %v7111 = vunpack.c.l.b16 %v6459
      %v7112 = vunpack.c.h.b16 %v6459
      %v7113 = vunpack.c.l.b16 %v6460
      %v7114 = vunpack.c.h.b16 %v6460
      %v7115 = vunpack.c.l.b16 %v6461
      %v7116 = vunpack.c.h.b16 %v6461
      %v7117 = vunpack.c.l.b16 %v6462
      %v7118 = vunpack.c.h.b16 %v6462
      %v7119 = vunpack.c.l.b16 %v6463
      %v7120 = vunpack.c.h.b16 %v6463
      %v7121 = vunpack.c.l.b16 %v6464
      %v7122 = vunpack.c.h.b16 %v6464
      %v7123 = vunpack.c.l.b16 %v6465
      %v7124 = vunpack.c.h.b16 %v6465
      %v7125 = vunpack.c.l.b16 %v6466
      %v7126 = vunpack.c.h.b16 %v6466
      %v7127 = vunpack.c.l.b16 %v6467
      %v7128 = vunpack.c.h.b16 %v6467
      %v7129 = vunpack.c.l.b16 %v6468
      %v7130 = vunpack.c.h.b16 %v6468
      %v7131 = vunpack.c.l.b16 %v6469
      %v7132 = vunpack.c.h.b16 %v6469
      %v7133 = vunpack.c.l.b16 %v6470
      %v7134 = vunpack.c.h.b16 %v6470
      %v7135 = vunpack.c.l.b16 %v6471
      %v7136 = vunpack.c.h.b16 %v6471
      %v7137 = vunpack.c.l.b16 %v6472
      %v7138 = vunpack.c.h.b16 %v6472
      %v7139 = vunpack.c.l.b16 %v6473
      %v7140 = vunpack.c.h.b16 %v6473
      %v7141 = vunpack.c.l.b16 %v6474
      %v7142 = vunpack.c.h.b16 %v6474
      %v7143 = vunpack.c.l.b16 %v6475
      %v7144 = vunpack.c.h.b16 %v6475
      %v7145 = vunpack.c.l.b16 %v6476
      %v7146 = vunpack.c.h.b16 %v6476
      %v7147 = vunpack.c.l.b16 %v6477
      %v7148 = vunpack.c.h.b16 %v6477
      %v7149 = vunpack.c.l.b16 %v6478
      %v7150 = vunpack.c.h.b16 %v6478
      %v7151 = vunpack.c.l.b16 %v6479
      %v7152 = vunpack.c.h.b16 %v6479
      %v7153 = vunpack.c.l.b16 %v6480
      %v7154 = vunpack.c.h.b16 %v6480
      %v7155 = vunpack.c.l.b16 %v6481
      %v7156 = vunpack.c.h.b16 %v6481
      %v7157 = vunpack.c.l.b16 %v6482
      %v7158 = vunpack.c.h.b16 %v6482
      %v7159 = vunpack.c.l.b16 %v6483
      %v7160 = vunpack.c.h.b16 %v6483
      %v7161 = vunpack.c.l.b16 %v6484
      %v7162 = vunpack.c.h.b16 %v6484
      %v7163 = vunpack.c.l.b16 %v6485
      %v7164 = vunpack.c.h.b16 %v6485
      %v7165 = vunpack.c.l.b16 %v6486
      %v7166 = vunpack.c.h.b16 %v6486
      %v7167 = vunpack.c.l.b16 %v6487
      %v7168 = vunpack.c.h.b16 %v6487
      %v7169 = vunpack.c.l.b16 %v6488
      %v7170 = vunpack.c.h.b16 %v6488
      %v7171 = vunpack.c.l.b16 %v6489
      %v7172 = vunpack.c.h.b16 %v6489
      %v7173 = vunpack.c.l.b16 %v6490
      %v7174 = vunpack.c.h.b16 %v6490
      %v7175 = vunpack.c.l.b16 %v6491
      %v7176 = vunpack.c.h.b16 %v6491
      %v7177 = vunpack.c.l.b16 %v6492
      %v7178 = vunpack.c.h.b16 %v6492
      %v7179 = vunpack.c.l.b16 %v6493
      %v7180 = vunpack.c.h.b16 %v6493
      %v7181 = vunpack.c.l.b16 %v6494
      %v7182 = vunpack.c.h.b16 %v6494
      %v7183 = vunpack.c.l.b16 %v6495
      %v7184 = vunpack.c.h.b16 %v6495
      %v7185 = vunpack.c.l.b16 %v6496
      %v7186 = vunpack.c.h.b16 %v6496
      %v7187 = vunpack.c.l.b16 %v6497
      %v7188 = vunpack.c.h.b16 %v6497
      %v7189 = vunpack.c.l.b16 %v6498
      %v7190 = vunpack.c.h.b16 %v6498
      %v7191 = vunpack.c.l.b16 %v6499
      %v7192 = vunpack.c.h.b16 %v6499
      %v7193 = vunpack.c.l.b16 %v6500
      %v7194 = vunpack.c.h.b16 %v6500
      %v7195 = vunpack.c.l.b16 %v6501
      %v7196 = vunpack.c.h.b16 %v6501
      %v7197 = vunpack.c.l.b16 %v6502
      %v7198 = vunpack.c.h.b16 %v6502
      %v7199 = vunpack.c.l.b16 %v6503
      %v7200 = vunpack.c.h.b16 %v6503
      %v7201 = vunpack.c.l.b16 %v6504
      %v7202 = vunpack.c.h.b16 %v6504
      %v7203 = vunpack.c.l.b16 %v6505
      %v7204 = vunpack.c.h.b16 %v6505
      %v7205 = vunpack.c.l.b16 %v6506
      %v7206 = vunpack.c.h.b16 %v6506
      %v7207 = vunpack.c.l.b16 %v6507
      %v7208 = vunpack.c.h.b16 %v6507
      %v7209 = vunpack.c.l.b16 %v6508
      %v7210 = vunpack.c.h.b16 %v6508
      %v7211 = vunpack.c.l.b16 %v6509
      %v7212 = vunpack.c.h.b16 %v6509
      %v7213 = vunpack.c.l.b16 %v6510
      %v7214 = vunpack.c.h.b16 %v6510
      %v7215 = vunpack.c.l.b16 %v6511
      %v7216 = vunpack.c.h.b16 %v6511
      %v7217 = vunpack.c.l.b16 %v6512
      %v7218 = vunpack.c.h.b16 %v6512
      %v7219 = vunpack.c.l.b16 %v6513
      %v7220 = vunpack.c.h.b16 %v6513
      %v7221 = vunpack.c.l.b16 %v6514
      %v7222 = vunpack.c.h.b16 %v6514
      %v7223 = vunpack.c.l.b16 %v6515
      %v7224 = vunpack.c.h.b16 %v6515
      %v7225 = vunpack.c.l.b16 %v6516
      %v7226 = vunpack.c.h.b16 %v6516
      %v7227 = vunpack.c.l.b16 %v6517
      %v7228 = vunpack.c.h.b16 %v6517
      %v7229 = vunpack.c.l.b16 %v6518
      %v7230 = vunpack.c.h.b16 %v6518
      %v7231 = vunpack.c.l.b16 %v6519
      %v7232 = vunpack.c.h.b16 %v6519
      %v7233 = vunpack.c.l.b16 %v6520
      %v7234 = vunpack.c.h.b16 %v6520
      %v7235 = vunpack.c.l.b16 %v6521
      %v7236 = vunpack.c.h.b16 %v6521
      %v7237 = vunpack.c.l.b16 %v6522
      %v7238 = vunpack.c.h.b16 %v6522
      %v7239 = vunpack.c.l.b16 %v6523
      %v7240 = vunpack.c.h.b16 %v6523
      %v7241 = vunpack.c.l.b16 %v6524
      %v7242 = vunpack.c.h.b16 %v6524
      %v7243 = vunpack.c.l.b16 %v6525
      %v7244 = vunpack.c.h.b16 %v6525
      %v7245 = vunpack.c.l.b16 %v6526
      %v7246 = vunpack.c.h.b16 %v6526
      %v7247 = vunpack.c.l.b16 %v6527
      %v7248 = vunpack.c.h.b16 %v6527
      %v7249 = vunpack.c.l.b16 %v6528
      %v7250 = vunpack.c.h.b16 %v6528
      %v7251 = vunpack.c.l.b16 %v6529
      %v7252 = vunpack.c.h.b16 %v6529
      %v7253 = vunpack.c.l.b16 %v6530
      %v7254 = vunpack.c.h.b16 %v6530
      %v7255 = vunpack.c.l.b16 %v6531
      %v7256 = vunpack.c.h.b16 %v6531
      %v7257 = vunpack.c.l.b16 %v6532
      %v7258 = vunpack.c.h.b16 %v6532
      %v7259 = vunpack.c.l.b16 %v6533
      %v7260 = vunpack.c.h.b16 %v6533
      %v7261 = vunpack.c.l.b16 %v6534
      %v7262 = vunpack.c.h.b16 %v6534
      %v7263 = vunpack.c.l.b16 %v6535
      %v7264 = vunpack.c.h.b16 %v6535
      %v7265 = vunpack.c.l.b16 %v6536
      %v7266 = vunpack.c.h.b16 %v6536
      %v7267 = vunpack.c.l.b16 %v6537
      %v7268 = vunpack.c.h.b16 %v6537
      %v7269 = vunpack.c.l.b16 %v6538
      %v7270 = vunpack.c.h.b16 %v6538
      %v7271 = vunpack.c.l.b16 %v6539
      %v7272 = vunpack.c.h.b16 %v6539
      %v7273 = vunpack.c.l.b16 %v6540
      %v7274 = vunpack.c.h.b16 %v6540
      %v7275 = vunpack.c.l.b16 %v6541
      %v7276 = vunpack.c.h.b16 %v6541
      %v7277 = vunpack.c.l.b16 %v6542
      %v7278 = vunpack.c.h.b16 %v6542
      %v7279 = vunpack.c.l.b16 %v6543
      %v7280 = vunpack.c.h.b16 %v6543
      %v7281 = vunpack.c.l.b16 %v6544
      %v7282 = vunpack.c.h.b16 %v6544
      %v7283 = vunpack.c.l.b16 %v6545
      %v7284 = vunpack.c.h.b16 %v6545
      %v7285 = vunpack.c.l.b16 %v6546
      %v7286 = vunpack.c.h.b16 %v6546
      %v7287 = vunpack.c.l.b16 %v6547
      %v7288 = vunpack.c.h.b16 %v6547
      %v7289 = vunpack.c.l.b16 %v6548
      %v7290 = vunpack.c.h.b16 %v6548
      %v7291 = vunpack.c.l.b16 %v6549
      %v7292 = vunpack.c.h.b16 %v6549
      %v7293 = vunpack.c.l.b16 %v6550
      %v7294 = vunpack.c.h.b16 %v6550
      %v7295 = vunpack.c.l.b16 %v6551
      %v7296 = vunpack.c.h.b16 %v6551
      %v7297 = vunpack.c.l.b16 %v6552
      %v7298 = vunpack.c.h.b16 %v6552
      %v7299 = vunpack.c.l.b16 %v6553
      %v7300 = vunpack.c.h.b16 %v6553
      %v7301 = vunpack.c.l.b16 %v6554
      %v7302 = vunpack.c.h.b16 %v6554
      %v7303 = vunpack.c.l.b16 %v6555
      %v7304 = vunpack.c.h.b16 %v6555
      %v7305 = vunpack.c.l.b16 %v6556
      %v7306 = vunpack.c.h.b16 %v6556
      %v7307 = vunpack.c.l.b16 %v6557
      %v7308 = vunpack.c.h.b16 %v6557
      %v7309 = vunpack.c.l.b16 %v6558
      %v7310 = vunpack.c.h.b16 %v6558
      %v7311 = vunpack.c.l.b16 %v6559
      %v7312 = vunpack.c.h.b16 %v6559
      %v7313 = vunpack.c.l.b16 %v6560
      %v7314 = vunpack.c.h.b16 %v6560
      %v7315 = vunpack.c.l.b16 %v6561
      %v7316 = vunpack.c.h.b16 %v6561
      %v7317 = vunpack.c.l.b16 %v6562
      %v7318 = vunpack.c.h.b16 %v6562
      %v7319 = vunpack.c.l.b16 %v6563
      %v7320 = vunpack.c.h.b16 %v6563
      %v7321 = vunpack.c.l.b16 %v6564
      %v7322 = vunpack.c.h.b16 %v6564
      %v7323 = vunpack.c.l.b16 %v6565
      %v7324 = vunpack.c.h.b16 %v6565
      %v7325 = vunpack.c.l.b16 %v6566
      %v7326 = vunpack.c.h.b16 %v6566
      %v7327 = vunpack.c.l.b16 %v6567
      %v7328 = vunpack.c.h.b16 %v6567
      %v7329 = vunpack.c.l.b16 %v6568
      %v7330 = vunpack.c.h.b16 %v6568
      %v7331 = vunpack.c.l.b16 %v6569
      %v7332 = vunpack.c.h.b16 %v6569
      %v7333 = vunpack.c.l.b16 %v6570
      %v7334 = vunpack.c.h.b16 %v6570
      %v7335 = vunpack.c.l.b16 %v6571
      %v7336 = vunpack.c.h.b16 %v6571
      %v7337 = vunpack.c.l.b16 %v6572
      %v7338 = vunpack.c.h.b16 %v6572
      %v7339 = vunpack.c.l.b16 %v6573
      %v7340 = vunpack.c.h.b16 %v6573
      %v7341 = vunpack.c.l.b16 %v6574
      %v7342 = vunpack.c.h.b16 %v6574
      %v7343 = vunpack.c.l.b16 %v6575
      %v7344 = vunpack.c.h.b16 %v6575
      %v7345 = vunpack.c.l.b16 %v6576
      %v7346 = vunpack.c.h.b16 %v6576
      %v7347 = vunpack.c.l.b16 %v6577
      %v7348 = vunpack.c.h.b16 %v6577
      %v7349 = vunpack.c.l.b16 %v6578
      %v7350 = vunpack.c.h.b16 %v6578
      %v7351 = vunpack.c.l.b16 %v6579
      %v7352 = vunpack.c.h.b16 %v6579
      %v7353 = vunpack.c.l.b16 %v6580
      %v7354 = vunpack.c.h.b16 %v6580
      %v7355 = vunpack.c.l.b16 %v6581
      %v7356 = vunpack.c.h.b16 %v6581
      %v7357 = vunpack.c.l.b16 %v6582
      %v7358 = vunpack.c.h.b16 %v6582
      %v7359 = vunpack.c.l.b16 %v6583
      %v7360 = vunpack.c.h.b16 %v6583
      %v7361 = vunpack.c.l.b16 %v6584
      %v7362 = vunpack.c.h.b16 %v6584
      %v7363 = vunpack.c.l.b16 %v6585
      %v7364 = vunpack.c.h.b16 %v6585
      %v7365 = vunpack.c.l.b16 %v6586
      %v7366 = vunpack.c.h.b16 %v6586
      %v7367 = vunpack.c.l.b16 %v6587
      %v7368 = vunpack.c.h.b16 %v6587
      %v7369 = vunpack.c.l.b16 %v6588
      %v7370 = vunpack.c.h.b16 %v6588
      %v7371 = vunpack.c.l.b16 %v6589
      %v7372 = vunpack.c.h.b16 %v6589
      %v7373 = vunpack.c.l.b16 %v6590
      %v7374 = vunpack.c.h.b16 %v6590
      %v7375 = vunpack.c.l.b16 %v6591
      %v7376 = vunpack.c.h.b16 %v6591
      %v7377 = vunpack.c.l.b16 %v6592
      %v7378 = vunpack.c.h.b16 %v6592
      %v7379 = vunpack.c.l.b16 %v6593
      %v7380 = vunpack.c.h.b16 %v6593
      %v7381 = vunpack.c.l.b16 %v6594
      %v7382 = vunpack.c.h.b16 %v6594
      %v7383 = vunpack.c.l.b16 %v6595
      %v7384 = vunpack.c.h.b16 %v6595
      %v7385 = vunpack.c.l.b16 %v6596
      %v7386 = vunpack.c.h.b16 %v6596
      %v7387 = vunpack.c.l.b16 %v6597
      %v7388 = vunpack.c.h.b16 %v6597
      %v7389 = vunpack.c.l.b16 %v6598
      %v7390 = vunpack.c.h.b16 %v6598
      %v7391 = vunpack.c.l.b16 %v6599
      %v7392 = vunpack.c.h.b16 %v6599
      %v7393 = vunpack.c.l.b16 %v6600
      %v7394 = vunpack.c.h.b16 %v6600
      %v7395 = vunpack.c.l.b16 %v6601
      %v7396 = vunpack.c.h.b16 %v6601
      %v7397 = vunpack.c.l.b16 %v6602
      %v7398 = vunpack.c.h.b16 %v6602
      %v7399 = vunpack.c.l.b16 %v6603
      %v7400 = vunpack.c.h.b16 %v6603
      %v7401 = vunpack.c.l.b16 %v6604
      %v7402 = vunpack.c.h.b16 %v6604
      %v7403 = vunpack.c.l.b16 %v6605
      %v7404 = vunpack.c.h.b16 %v6605
      %v7405 = vunpack.c.l.b16 %v6606
      %v7406 = vunpack.c.h.b16 %v6606
      %v7407 = vunpack.c.l.b16 %v6607
      %v7408 = vunpack.c.h.b16 %v6607
      %v7409 = vunpack.c.l.b16 %v6608
      %v7410 = vunpack.c.h.b16 %v6608
      %v7411 = vunpack.c.l.b16 %v6609
      %v7412 = vunpack.c.h.b16 %v6609
      %v7413 = vunpack.c.l.b16 %v6610
      %v7414 = vunpack.c.h.b16 %v6610
      %v7415 = vunpack.c.l.b16 %v6611
      %v7416 = vunpack.c.h.b16 %v6611
      %v7417 = vunpack.c.l.b16 %v6612
      %v7418 = vunpack.c.h.b16 %v6612
      %v7419 = vunpack.c.l.b16 %v6613
      %v7420 = vunpack.c.h.b16 %v6613
      %v7421 = vunpack.c.l.b16 %v6614
      %v7422 = vunpack.c.h.b16 %v6614
      %v7423 = vunpack.c.l.b16 %v6615
      %v7424 = vunpack.c.h.b16 %v6615
      %v7425 = vunpack.c.l.b16 %v6616
      %v7426 = vunpack.c.h.b16 %v6616
      %v7427 = vunpack.c.l.b16 %v6617
      %v7428 = vunpack.c.h.b16 %v6617
      %v7429 = vunpack.c.l.b16 %v6618
      %v7430 = vunpack.c.h.b16 %v6618
      %v7431 = vunpack.c.l.b16 %v6619
      %v7432 = vunpack.c.h.b16 %v6619
      %v7433 = vunpack.c.l.b16 %v6620
      %v7434 = vunpack.c.h.b16 %v6620
      %v7435 = vunpack.c.l.b16 %v6621
      %v7436 = vunpack.c.h.b16 %v6621
      %v7437 = vunpack.c.l.b16 %v6622
      %v7438 = vunpack.c.h.b16 %v6622
      %v7439 = vunpack.c.l.b16 %v6623
      %v7440 = vunpack.c.h.b16 %v6623
      %v7441 = vunpack.c.l.b16 %v6624
      %v7442 = vunpack.c.h.b16 %v6624
      %v7443 = vunpack.c.l.b16 %v6625
      %v7444 = vunpack.c.h.b16 %v6625
      %v7445 = vunpack.c.l.b16 %v6626
      %v7446 = vunpack.c.h.b16 %v6626
      %v7447 = vunpack.c.l.b16 %v6627
      %v7448 = vunpack.c.h.b16 %v6627
      %v7449 = vunpack.c.l.b16 %v6628
      %v7450 = vunpack.c.h.b16 %v6628
      %v7451 = vunpack.c.l.b16 %v6629
      %v7452 = vunpack.c.h.b16 %v6629
      %v7453 = vunpack.c.l.b16 %v6630
      %v7454 = vunpack.c.h.b16 %v6630
      %v7455 = vunpack.c.l.b16 %v6631
      %v7456 = vunpack.c.h.b16 %v6631
      %v7457 = vunpack.c.l.b16 %v6632
      %v7458 = vunpack.c.h.b16 %v6632
      %v7459 = vunpack.c.l.b16 %v6633
      %v7460 = vunpack.c.h.b16 %v6633
      %v7461 = vunpack.c.l.b16 %v6634
      %v7462 = vunpack.c.h.b16 %v6634
      %v7463 = vunpack.c.l.b16 %v6635
      %v7464 = vunpack.c.h.b16 %v6635
      %v7465 = vunpack.c.l.b16 %v6636
      %v7466 = vunpack.c.h.b16 %v6636
      %v7467 = vunpack.c.l.b16 %v6637
      %v7468 = vunpack.c.h.b16 %v6637
      %v7469 = vunpack.c.l.b16 %v6638
      %v7470 = vunpack.c.h.b16 %v6638
      %v7471 = vunpack.c.l.b16 %v6639
      %v7472 = vunpack.c.h.b16 %v6639
      %v7473 = vunpack.c.l.b16 %v6640
      %v7474 = vunpack.c.h.b16 %v6640
      %v7475 = vunpack.c.l.b16 %v6641
      %v7476 = vunpack.c.h.b16 %v6641
      %v7477 = vunpack.c.l.b16 %v6642
      %v7478 = vunpack.c.h.b16 %v6642
      %v7479 = vunpack.c.l.b16 %v6643
      %v7480 = vunpack.c.h.b16 %v6643
      %v7481 = vunpack.c.l.b16 %v6644
      %v7482 = vunpack.c.h.b16 %v6644
      %v7483 = vunpack.c.l.b16 %v6645
      %v7484 = vunpack.c.h.b16 %v6645
      %v7485 = vunpack.c.l.b16 %v6646
      %v7486 = vunpack.c.h.b16 %v6646
      %v7487 = vunpack.c.l.b16 %v6647
      %v7488 = vunpack.c.h.b16 %v6647
      %v7489 = vunpack.c.l.b16 %v6648
      %v7490 = vunpack.c.h.b16 %v6648
      %v7491 = vunpack.c.l.b16 %v6649
      %v7492 = vunpack.c.h.b16 %v6649
      %v7493 = vunpack.c.l.b16 %v6650
      %v7494 = vunpack.c.h.b16 %v6650
      %v7495 = vunpack.c.l.b16 %v6651
      %v7496 = vunpack.c.h.b16 %v6651
      %v7497 = vunpack.c.l.b16 %v6652
      %v7498 = vunpack.c.h.b16 %v6652
      %v7499 = vunpack.c.l.b16 %v6653
      %v7500 = vunpack.c.h.b16 %v6653
      %v7501 = vunpack.c.l.b16 %v6654
      %v7502 = vunpack.c.h.b16 %v6654
      %v7503 = vunpack.c.l.b16 %v6655
      %v7504 = vunpack.c.h.b16 %v6655
      %v7505 = vunpack.c.l.b16 %v6656
      %v7506 = vunpack.c.h.b16 %v6656
      %v7507 = vunpack.c.l.b16 %v6657
      %v7508 = vunpack.c.h.b16 %v6657
      %v7509 = vunpack.c.l.b16 %v6658
      %v7510 = vunpack.c.h.b16 %v6658
      %v7511 = vunpack.c.l.b16 %v6659
      %v7512 = vunpack.c.h.b16 %v6659
      %v7513 = vunpack.c.l.b16 %v6660
      %v7514 = vunpack.c.h.b16 %v6660
      %v7515 = vunpack.c.l.b16 %v6661
      %v7516 = vunpack.c.h.b16 %v6661
      %v7517 = vunpack.c.l.b16 %v6662
      %v7518 = vunpack.c.h.b16 %v6662
      %v7519 = vunpack.c.l.b16 %v6663
      %v7520 = vunpack.c.h.b16 %v6663
      %v7521 = vunpack.c.l.b16 %v6664
      %v7522 = vunpack.c.h.b16 %v6664
      %v7523 = vunpack.c.l.b16 %v6665
      %v7524 = vunpack.c.h.b16 %v6665
      %v7525 = vunpack.c.l.b16 %v6666
      %v7526 = vunpack.c.h.b16 %v6666
      %v7527 = vunpack.c.l.b16 %v6667
      %v7528 = vunpack.c.h.b16 %v6667
      %v7529 = vunpack.c.l.b16 %v6668
      %v7530 = vunpack.c.h.b16 %v6668
      %v7531 = vunpack.c.l.b16 %v6669
      %v7532 = vunpack.c.h.b16 %v6669
      %v7533 = vunpack.c.l.b16 %v6670
      %v7534 = vunpack.c.h.b16 %v6670
      %v7535 = vunpack.c.l.b16 %v6671
      %v7536 = vunpack.c.h.b16 %v6671
      %v7537 = vunpack.c.l.b16 %v6672
      %v7538 = vunpack.c.h.b16 %v6672
      %v7539 = vunpack.c.l.b16 %v6673
      %v7540 = vunpack.c.h.b16 %v6673
      %v7541 = vunpack.c.l.b16 %v6674
      %v7542 = vunpack.c.h.b16 %v6674
      %v7543 = vunpack.c.l.b16 %v6675
      %v7544 = vunpack.c.h.b16 %v6675
      %v7545 = vunpack.c.l.b16 %v6676
      %v7546 = vunpack.c.h.b16 %v6676
      %v7547 = vunpack.c.l.b16 %v6677
      %v7548 = vunpack.c.h.b16 %v6677
      %v7549 = vunpack.c.l.b16 %v6678
      %v7550 = vunpack.c.h.b16 %v6678
      %v7551 = vunpack.c.l.b16 %v6679
      %v7552 = vunpack.c.h.b16 %v6679
      %v7553 = vunpack.c.l.b16 %v6680
      %v7554 = vunpack.c.h.b16 %v6680
      %v7555 = vunpack.c.l.b16 %v6681
      %v7556 = vunpack.c.h.b16 %v6681
      %v7557 = vunpack.c.l.b16 %v6682
      %v7558 = vunpack.c.h.b16 %v6682
      %v7559 = vunpack.c.l.b16 %v6683
      %v7560 = vunpack.c.h.b16 %v6683
      %v7561 = vunpack.c.l.b16 %v6684
      %v7562 = vunpack.c.h.b16 %v6684
      %v7563 = vunpack.c.l.b16 %v6685
      %v7564 = vunpack.c.h.b16 %v6685
      %v7565 = vunpack.c.l.b16 %v6686
      %v7566 = vunpack.c.h.b16 %v6686
      %v7567 = vunpack.c.l.b16 %v6687
      %v7568 = vunpack.c.h.b16 %v6687
      %v7569 = vunpack.c.l.b16 %v6688
      %v7570 = vunpack.c.h.b16 %v6688
      %v7571 = vunpack.c.l.b16 %v6689
      %v7572 = vunpack.c.h.b16 %v6689
      %v7573 = vunpack.c.l.b16 %v6690
      %v7574 = vunpack.c.h.b16 %v6690
      %v7575 = vunpack.c.l.b16 %v6691
      %v7576 = vunpack.c.h.b16 %v6691
      %v7577 = vunpack.c.l.b16 %v6692
      %v7578 = vunpack.c.h.b16 %v6692
      %v7579 = vunpack.c.l.b16 %v6693
      %v7580 = vunpack.c.h.b16 %v6693
      %v7581 = vunpack.c.l.b16 %v6694
      %v7582 = vunpack.c.h.b16 %v6694
      %v7583 = vunpack.c.l.b16 %v6695
      %v7584 = vunpack.c.h.b16 %v6695
      %v7585 = vunpack.c.l.b16 %v6696
      %v7586 = vunpack.c.h.b16 %v6696
      %v7587 = vunpack.c.l.b16 %v6697
      %v7588 = vunpack.c.h.b16 %v6697
      %v7589 = vunpack.c.l.b16 %v6698
      %v7590 = vunpack.c.h.b16 %v6698
      %v7591 = vunpack.c.l.b16 %v6699
      %v7592 = vunpack.c.h.b16 %v6699
      %v7593 = vunpack.c.l.b16 %v6700
      %v7594 = vunpack.c.h.b16 %v6700
      %v7595 = vunpack.c.l.b16 %v6701
      %v7596 = vunpack.c.h.b16 %v6701
      %v7597 = vunpack.c.l.b16 %v6702
      %v7598 = vunpack.c.h.b16 %v6702
      %v7599 = vunpack.c.l.b16 %v6703
      %v7600 = vunpack.c.h.b16 %v6703
      %v7601 = vunpack.c.l.b16 %v6704
      %v7602 = vunpack.c.h.b16 %v6704
      %v7603 = vunpack.c.l.b16 %v6705
      %v7604 = vunpack.c.h.b16 %v6705
      %v7605 = vunpack.c.l.b16 %v6706
      %v7606 = vunpack.c.h.b16 %v6706
      %v7607 = vunpack.c.l.b16 %v6707
      %v7608 = vunpack.c.h.b16 %v6707
      %v7609 = vunpack.c.l.b16 %v6708
      %v7610 = vunpack.c.h.b16 %v6708
      %v7611 = vunpack.c.l.b16 %v6709
      %v7612 = vunpack.c.h.b16 %v6709
      %v7613 = vunpack.c.l.b16 %v6710
      %v7614 = vunpack.c.h.b16 %v6710
      %v7615 = vunpack.c.l.b16 %v6711
      %v7616 = vunpack.c.h.b16 %v6711
      %v7617 = vunpack.c.l.b16 %v6712
      %v7618 = vunpack.c.h.b16 %v6712
      %v7619 = vunpack.c.l.b16 %v6713
      %v7620 = vunpack.c.h.b16 %v6713
      %v7621 = vunpack.c.l.b16 %v6714
      %v7622 = vunpack.c.h.b16 %v6714
      %v7623 = vunpack.c.l.b16 %v6715
      %v7624 = vunpack.c.h.b16 %v6715
      %v7625 = vunpack.c.l.b16 %v6716
      %v7626 = vunpack.c.h.b16 %v6716
      %v7627 = vunpack.c.l.b16 %v6717
      %v7628 = vunpack.c.h.b16 %v6717
      %v7629 = vunpack.c.l.b16 %v6718
      %v7630 = vunpack.c.h.b16 %v6718
      %v7631 = vunpack.c.l.b16 %v6719
      %v7632 = vunpack.c.h.b16 %v6719
      %v7633 = vunpack.c.l.b16 %v6720
      %v7634 = vunpack.c.h.b16 %v6720
      %v7635 = vunpack.c.l.b16 %v6721
      %v7636 = vunpack.c.h.b16 %v6721
      %v7637 = vunpack.c.l.b16 %v6722
      %v7638 = vunpack.c.h.b16 %v6722
      %v7639 = vunpack.c.l.b16 %v6723
      %v7640 = vunpack.c.h.b16 %v6723
      %v7641 = vunpack.c.l.b16 %v6724
      %v7642 = vunpack.c.h.b16 %v6724
      %v7643 = vunpack.c.l.b16 %v6725
      %v7644 = vunpack.c.h.b16 %v6725
      %v7645 = vunpack.c.l.b16 %v6726
      %v7646 = vunpack.c.h.b16 %v6726
      %v7647 = vunpack.c.l.b16 %v6727
      %v7648 = vunpack.c.h.b16 %v6727
      %v7649 = vunpack.c.l.b16 %v6728
      %v7650 = vunpack.c.h.b16 %v6728
      %v7651 = vunpack.c.l.b16 %v6729
      %v7652 = vunpack.c.h.b16 %v6729
      %v7653 = vunpack.c.l.b16 %v6730
      %v7654 = vunpack.c.h.b16 %v6730
      %v7655 = vunpack.c.l.b16 %v6731
      %v7656 = vunpack.c.h.b16 %v6731
      %v7657 = vunpack.c.l.b16 %v6732
      %v7658 = vunpack.c.h.b16 %v6732
      %v7659 = vunpack.c.l.b16 %v6733
      %v7660 = vunpack.c.h.b16 %v6733
      %v7661 = vunpack.c.l.b16 %v6734
      %v7662 = vunpack.c.h.b16 %v6734
      %v7663 = vpack.c.b16 %v7099, %v7087
      %v7664 = vpack.c.b16 %v7100, %v7088
      %v7665 = vpack.c.b16 %v7101, %v7089
      %v7666 = vpack.c.b16 %v7102, %v7090
      %v7667 = vpack.c.b16 %v7103, %v7091
      %v7668 = vpack.c.b16 %v7104, %v7092
      %v7669 = vpack.c.b16 %v7105, %v7093
      %v7670 = vpack.c.b16 %v7106, %v7094
      %v7671 = vpack.c.b16 %v7107, %v7095
      %v7672 = vpack.c.b16 %v7108, %v7096
      %v7673 = vpack.c.b16 %v7109, %v7097
      %v7674 = vpack.c.b16 %v7110, %v7098
      %v7675 = vpack.c.b16 %v7123, %v7111
      %v7676 = vpack.c.b16 %v7124, %v7112
      %v7677 = vpack.c.b16 %v7125, %v7113
      %v7678 = vpack.c.b16 %v7126, %v7114
      %v7679 = vpack.c.b16 %v7127, %v7115
      %v7680 = vpack.c.b16 %v7128, %v7116
      %v7681 = vpack.c.b16 %v7129, %v7117
      %v7682 = vpack.c.b16 %v7130, %v7118
      %v7683 = vpack.c.b16 %v7131, %v7119
      %v7684 = vpack.c.b16 %v7132, %v7120
      %v7685 = vpack.c.b16 %v7133, %v7121
      %v7686 = vpack.c.b16 %v7134, %v7122
      %v7687 = vpack.c.b16 %v7147, %v7135
      %v7688 = vpack.c.b16 %v7148, %v7136
      %v7689 = vpack.c.b16 %v7149, %v7137
      %v7690 = vpack.c.b16 %v7150, %v7138
      %v7691 = vpack.c.b16 %v7151, %v7139
      %v7692 = vpack.c.b16 %v7152, %v7140
      %v7693 = vpack.c.b16 %v7153, %v7141
      %v7694 = vpack.c.b16 %v7154, %v7142
      %v7695 = vpack.c.b16 %v7155, %v7143
      %v7696 = vpack.c.b16 %v7156, %v7144
      %v7697 = vpack.c.b16 %v7157, %v7145
      %v7698 = vpack.c.b16 %v7158, %v7146
      %v7699 = vpack.c.b16 %v7171, %v7159
      %v7700 = vpack.c.b16 %v7172, %v7160
      %v7701 = vpack.c.b16 %v7173, %v7161
      %v7702 = vpack.c.b16 %v7174, %v7162
      %v7703 = vpack.c.b16 %v7175, %v7163
      %v7704 = vpack.c.b16 %v7176, %v7164
      %v7705 = vpack.c.b16 %v7177, %v7165
      %v7706 = vpack.c.b16 %v7178, %v7166
      %v7707 = vpack.c.b16 %v7179, %v7167
      %v7708 = vpack.c.b16 %v7180, %v7168
      %v7709 = vpack.c.b16 %v7181, %v7169
      %v7710 = vpack.c.b16 %v7182, %v7170
      %v7711 = vpack.c.b16 %v7195, %v7183
      %v7712 = vpack.c.b16 %v7196, %v7184
      %v7713 = vpack.c.b16 %v7197, %v7185
      %v7714 = vpack.c.b16 %v7198, %v7186
      %v7715 = vpack.c.b16 %v7199, %v7187
      %v7716 = vpack.c.b16 %v7200, %v7188
      %v7717 = vpack.c.b16 %v7201, %v7189
      %v7718 = vpack.c.b16 %v7202, %v7190
      %v7719 = vpack.c.b16 %v7203, %v7191
      %v7720 = vpack.c.b16 %v7204, %v7192
      %v7721 = vpack.c.b16 %v7205, %v7193
      %v7722 = vpack.c.b16 %v7206, %v7194
      %v7723 = vpack.c.b16 %v7219, %v7207
      %v7724 = vpack.c.b16 %v7220, %v7208
      %v7725 = vpack.c.b16 %v7221, %v7209
      %v7726 = vpack.c.b16 %v7222, %v7210
      %v7727 = vpack.c.b16 %v7223, %v7211
      %v7728 = vpack.c.b16 %v7224, %v7212
      %v7729 = vpack.c.b16 %v7225, %v7213
      %v7730 = vpack.c.b16 %v7226, %v7214
      %v7731 = vpack.c.b16 %v7227, %v7215
      %v7732 = vpack.c.b16 %v7228, %v7216
      %v7733 = vpack.c.b16 %v7229, %v7217
      %v7734 = vpack.c.b16 %v7230, %v7218
      %v7735 = vpack.c.b16 %v7243, %v7231
      %v7736 = vpack.c.b16 %v7244, %v7232
      %v7737 = vpack.c.b16 %v7245, %v7233
      %v7738 = vpack.c.b16 %v7246, %v7234
      %v7739 = vpack.c.b16 %v7247, %v7235
      %v7740 = vpack.c.b16 %v7248, %v7236
      %v7741 = vpack.c.b16 %v7249, %v7237
      %v7742 = vpack.c.b16 %v7250, %v7238
      %v7743 = vpack.c.b16 %v7251, %v7239
      %v7744 = vpack.c.b16 %v7252, %v7240
      %v7745 = vpack.c.b16 %v7253, %v7241
      %v7746 = vpack.c.b16 %v7254, %v7242
      %v7747 = vpack.c.b16 %v7267, %v7255
      %v7748 = vpack.c.b16 %v7268, %v7256
      %v7749 = vpack.c.b16 %v7269, %v7257
      %v7750 = vpack.c.b16 %v7270, %v7258
      %v7751 = vpack.c.b16 %v7271, %v7259
      %v7752 = vpack.c.b16 %v7272, %v7260
      %v7753 = vpack.c.b16 %v7273, %v7261
      %v7754 = vpack.c.b16 %v7274, %v7262
      %v7755 = vpack.c.b16 %v7275, %v7263
      %v7756 = vpack.c.b16 %v7276, %v7264
      %v7757 = vpack.c.b16 %v7277, %v7265
      %v7758 = vpack.c.b16 %v7278, %v7266
      %v7759 = vpack.c.b16 %v7291, %v7279
      %v7760 = vpack.c.b16 %v7292, %v7280
      %v7761 = vpack.c.b16 %v7293, %v7281
      %v7762 = vpack.c.b16 %v7294, %v7282
      %v7763 = vpack.c.b16 %v7295, %v7283
      %v7764 = vpack.c.b16 %v7296, %v7284
      %v7765 = vpack.c.b16 %v7297, %v7285
      %v7766 = vpack.c.b16 %v7298, %v7286
      %v7767 = vpack.c.b16 %v7299, %v7287
      %v7768 = vpack.c.b16 %v7300, %v7288
      %v7769 = vpack.c.b16 %v7301, %v7289
      %v7770 = vpack.c.b16 %v7302, %v7290
      %v7771 = vpack.c.b16 %v7315, %v7303
      %v7772 = vpack.c.b16 %v7316, %v7304
      %v7773 = vpack.c.b16 %v7317, %v7305
      %v7774 = vpack.c.b16 %v7318, %v7306
      %v7775 = vpack.c.b16 %v7319, %v7307
      %v7776 = vpack.c.b16 %v7320, %v7308
      %v7777 = vpack.c.b16 %v7321, %v7309
      %v7778 = vpack.c.b16 %v7322, %v7310
      %v7779 = vpack.c.b16 %v7323, %v7311
      %v7780 = vpack.c.b16 %v7324, %v7312
      %v7781 = vpack.c.b16 %v7325, %v7313
      %v7782 = vpack.c.b16 %v7326, %v7314
      %v7783 = vpack.c.b16 %v7339, %v7327
      %v7784 = vpack.c.b16 %v7340, %v7328
      %v7785 = vpack.c.b16 %v7341, %v7329
      %v7786 = vpack.c.b16 %v7342, %v7330
      %v7787 = vpack.c.b16 %v7343, %v7331
      %v7788 = vpack.c.b16 %v7344, %v7332
      %v7789 = vpack.c.b16 %v7345, %v7333
      %v7790 = vpack.c.b16 %v7346, %v7334
      %v7791 = vpack.c.b16 %v7347, %v7335
      %v7792 = vpack.c.b16 %v7348, %v7336
      %v7793 = vpack.c.b16 %v7349, %v7337
      %v7794 = vpack.c.b16 %v7350, %v7338
      %v7795 = vpack.c.b16 %v7363, %v7351
      %v7796 = vpack.c.b16 %v7364, %v7352
      %v7797 = vpack.c.b16 %v7365, %v7353
      %v7798 = vpack.c.b16 %v7366, %v7354
      %v7799 = vpack.c.b16 %v7367, %v7355
      %v7800 = vpack.c.b16 %v7368, %v7356
      %v7801 = vpack.c.b16 %v7369, %v7357
      %v7802 = vpack.c.b16 %v7370, %v7358
      %v7803 = vpack.c.b16 %v7371, %v7359
      %v7804 = vpack.c.b16 %v7372, %v7360
      %v7805 = vpack.c.b16 %v7373, %v7361
      %v7806 = vpack.c.b16 %v7374, %v7362
      %v7807 = vpack.c.b16 %v7387, %v7375
      %v7808 = vpack.c.b16 %v7388, %v7376
      %v7809 = vpack.c.b16 %v7389, %v7377
      %v7810 = vpack.c.b16 %v7390, %v7378
      %v7811 = vpack.c.b16 %v7391, %v7379
      %v7812 = vpack.c.b16 %v7392, %v7380
      %v7813 = vpack.c.b16 %v7393, %v7381
      %v7814 = vpack.c.b16 %v7394, %v7382
      %v7815 = vpack.c.b16 %v7395, %v7383
      %v7816 = vpack.c.b16 %v7396, %v7384
      %v7817 = vpack.c.b16 %v7397, %v7385
      %v7818 = vpack.c.b16 %v7398, %v7386
      %v7819 = vpack.c.b16 %v7411, %v7399
      %v7820 = vpack.c.b16 %v7412, %v7400
      %v7821 = vpack.c.b16 %v7413, %v7401
      %v7822 = vpack.c.b16 %v7414, %v7402
      %v7823 = vpack.c.b16 %v7415, %v7403
      %v7824 = vpack.c.b16 %v7416, %v7404
      %v7825 = vpack.c.b16 %v7417, %v7405
      %v7826 = vpack.c.b16 %v7418, %v7406
      %v7827 = vpack.c.b16 %v7419, %v7407
      %v7828 = vpack.c.b16 %v7420, %v7408
      %v7829 = vpack.c.b16 %v7421, %v7409
      %v7830 = vpack.c.b16 %v7422, %v7410
      %v7831 = vpack.c.b16 %v7435, %v7423
      %v7832 = vpack.c.b16 %v7436, %v7424
      %v7833 = vpack.c.b16 %v7437, %v7425
      %v7834 = vpack.c.b16 %v7438, %v7426
      %v7835 = vpack.c.b16 %v7439, %v7427
      %v7836 = vpack.c.b16 %v7440, %v7428
      %v7837 = vpack.c.b16 %v7441, %v7429
      %v7838 = vpack.c.b16 %v7442, %v7430
      %v7839 = vpack.c.b16 %v7443, %v7431
      %v7840 = vpack.c.b16 %v7444, %v7432
      %v7841 = vpack.c.b16 %v7445, %v7433
      %v7842 = vpack.c.b16 %v7446, %v7434
      %v7843 = vpack.c.b16 %v7459, %v7447
      %v7844 = vpack.c.b16 %v7460, %v7448
      %v7845 = vpack.c.b16 %v7461, %v7449
      %v7846 = vpack.c.b16 %v7462, %v7450
      %v7847 = vpack.c.b16 %v7463, %v7451
      %v7848 = vpack.c.b16 %v7464, %v7452
      %v7849 = vpack.c.b16 %v7465, %v7453
      %v7850 = vpack.c.b16 %v7466, %v7454
      %v7851 = vpack.c.b16 %v7467, %v7455
      %v7852 = vpack.c.b16 %v7468, %v7456
      %v7853 = vpack.c.b16 %v7469, %v7457
      %v7854 = vpack.c.b16 %v7470, %v7458
      %v7855 = vpack.c.b16 %v7483, %v7471
      %v7856 = vpack.c.b16 %v7484, %v7472
      %v7857 = vpack.c.b16 %v7485, %v7473
      %v7858 = vpack.c.b16 %v7486, %v7474
      %v7859 = vpack.c.b16 %v7487, %v7475
      %v7860 = vpack.c.b16 %v7488, %v7476
      %v7861 = vpack.c.b16 %v7489, %v7477
      %v7862 = vpack.c.b16 %v7490, %v7478
      %v7863 = vpack.c.b16 %v7491, %v7479
      %v7864 = vpack.c.b16 %v7492, %v7480
      %v7865 = vpack.c.b16 %v7493, %v7481
      %v7866 = vpack.c.b16 %v7494, %v7482
      %v7867 = vpack.c.b16 %v7507, %v7495
      %v7868 = vpack.c.b16 %v7508, %v7496
      %v7869 = vpack.c.b16 %v7509, %v7497
      %v7870 = vpack.c.b16 %v7510, %v7498
      %v7871 = vpack.c.b16 %v7511, %v7499
      %v7872 = vpack.c.b16 %v7512, %v7500
      %v7873 = vpack.c.b16 %v7513, %v7501
      %v7874 = vpack.c.b16 %v7514, %v7502
      %v7875 = vpack.c.b16 %v7515, %v7503
      %v7876 = vpack.c.b16 %v7516, %v7504
      %v7877 = vpack.c.b16 %v7517, %v7505
      %v7878 = vpack.c.b16 %v7518, %v7506
      %v7879 = vpack.c.b16 %v7531, %v7519
      %v7880 = vpack.c.b16 %v7532, %v7520
      %v7881 = vpack.c.b16 %v7533, %v7521
      %v7882 = vpack.c.b16 %v7534, %v7522
      %v7883 = vpack.c.b16 %v7535, %v7523
      %v7884 = vpack.c.b16 %v7536, %v7524
      %v7885 = vpack.c.b16 %v7537, %v7525
      %v7886 = vpack.c.b16 %v7538, %v7526
      %v7887 = vpack.c.b16 %v7539, %v7527
      %v7888 = vpack.c.b16 %v7540, %v7528
      %v7889 = vpack.c.b16 %v7541, %v7529
      %v7890 = vpack.c.b16 %v7542, %v7530
      %v7891 = vpack.c.b16 %v7555, %v7543
      %v7892 = vpack.c.b16 %v7556, %v7544
      %v7893 = vpack.c.b16 %v7557, %v7545
      %v7894 = vpack.c.b16 %v7558, %v7546
      %v7895 = vpack.c.b16 %v7559, %v7547
      %v7896 = vpack.c.b16 %v7560, %v7548
      %v7897 = vpack.c.b16 %v7561, %v7549
      %v7898 = vpack.c.b16 %v7562, %v7550
      %v7899 = vpack.c.b16 %v7563, %v7551
      %v7900 = vpack.c.b16 %v7564, %v7552
      %v7901 = vpack.c.b16 %v7565, %v7553
      %v7902 = vpack.c.b16 %v7566, %v7554
      %v7903 = vpack.c.b16 %v7579, %v7567
      %v7904 = vpack.c.b16 %v7580, %v7568
      %v7905 = vpack.c.b16 %v7581, %v7569
      %v7906 = vpack.c.b16 %v7582, %v7570
      %v7907 = vpack.c.b16 %v7583, %v7571
      %v7908 = vpack.c.b16 %v7584, %v7572
      %v7909 = vpack.c.b16 %v7585, %v7573
      %v7910 = vpack.c.b16 %v7586, %v7574
      %v7911 = vpack.c.b16 %v7587, %v7575
      %v7912 = vpack.c.b16 %v7588, %v7576
      %v7913 = vpack.c.b16 %v7589, %v7577
      %v7914 = vpack.c.b16 %v7590, %v7578
      %v7915 = vpack.c.b16 %v7603, %v7591
      %v7916 = vpack.c.b16 %v7604, %v7592
      %v7917 = vpack.c.b16 %v7605, %v7593
      %v7918 = vpack.c.b16 %v7606, %v7594
      %v7919 = vpack.c.b16 %v7607, %v7595
      %v7920 = vpack.c.b16 %v7608, %v7596
      %v7921 = vpack.c.b16 %v7609, %v7597
      %v7922 = vpack.c.b16 %v7610, %v7598
      %v7923 = vpack.c.b16 %v7611, %v7599
      %v7924 = vpack.c.b16 %v7612, %v7600
      %v7925 = vpack.c.b16 %v7613, %v7601
      %v7926 = vpack.c.b16 %v7614, %v7602
      %v7927 = vpack.c.b16 %v7627, %v7615
      %v7928 = vpack.c.b16 %v7628, %v7616
      %v7929 = vpack.c.b16 %v7629, %v7617
      %v7930 = vpack.c.b16 %v7630, %v7618
      %v7931 = vpack.c.b16 %v7631, %v7619
      %v7932 = vpack.c.b16 %v7632, %v7620
      %v7933 = vpack.c.b16 %v7633, %v7621
      %v7934 = vpack.c.b16 %v7634, %v7622
      %v7935 = vpack.c.b16 %v7635, %v7623
      %v7936 = vpack.c.b16 %v7636, %v7624
      %v7937 = vpack.c.b16 %v7637, %v7625
      %v7938 = vpack.c.b16 %v7638, %v7626
      %v7939 = vpack.c.b16 %v7651, %v7639
      %v7940 = vpack.c.b16 %v7652, %v7640
      %v7941 = vpack.c.b16 %v7653, %v7641
      %v7942 = vpack.c.b16 %v7654, %v7642
      %v7943 = vpack.c.b16 %v7655, %v7643
      %v7944 = vpack.c.b16 %v7656, %v7644
      %v7945 = vpack.c.b16 %v7657, %v7645
      %v7946 = vpack.c.b16 %v7658, %v7646
      %v7947 = vpack.c.b16 %v7659, %v7647
      %v7948 = vpack.c.b16 %v7660, %v7648
      %v7949 = vpack.c.b16 %v7661, %v7649
      %v7950 = vpack.c.b16 %v7662, %v7650
      %8239 = vmatprep.subr.bf16.mxu0 %v7748
      %8240 = vmatpush1.bf16.msra.mxu0 %v7747
      %8241 = vmatprep.subr.bf16.mxu0 %v7736
      %8242 = vmatpush1.bf16.msra.mxu0 %v7735
      %8243 = vmatprep.subr.bf16.mxu0 %v7724
      %8244 = vmatpush1.bf16.msra.mxu0 %v7723
      %8245 = vmatprep.subr.bf16.mxu0 %v7712
      %8246 = vmatpush1.bf16.msra.mxu0 %v7711
      %8247 = vmatprep.subr.bf16.mxu0 %v7700
      %8248 = vmatpush1.bf16.msra.mxu0 %v7699
      %8249 = vmatprep.subr.bf16.mxu0 %v7688
      %8250 = vmatpush1.bf16.msra.mxu0 %v7687
      %8251 = vmatprep.subr.bf16.mxu0 %v7676
      %8252 = vmatpush1.bf16.msra.mxu0 %v7675
      %8253 = vmatprep.subr.bf16.mxu0 %v7664
      %8254 = vmatpush1.bf16.msra.mxu0 %v7663
      %8255 = vmatprep.subr.bf16.mxu0 %v7844
      %8256 = vmatpush2.bf16.msra.mxu0 %v7843
      %8257 = vmatprep.subr.bf16.mxu0 %v7832
      %8258 = vmatpush2.bf16.msra.mxu0 %v7831
      %8259 = vmatprep.subr.bf16.mxu0 %v7820
      %8260 = vmatpush2.bf16.msra.mxu0 %v7819
      %8261 = vmatprep.subr.bf16.mxu0 %v7808
      %8262 = vmatpush2.bf16.msra.mxu0 %v7807
      %8263 = vmatprep.subr.bf16.mxu0 %v7796
      %8264 = vmatpush2.bf16.msra.mxu0 %v7795
      %8265 = vmatprep.subr.bf16.mxu0 %v7784
      %8266 = vmatpush2.bf16.msra.mxu0 %v7783
      %8267 = vmatprep.subr.bf16.mxu0 %v7772
      %8268 = vmatpush2.bf16.msra.mxu0 %v7771
      %8269 = vmatprep.subr.bf16.mxu0 %v7760
      %8270 = vmatpush2.bf16.msra.mxu0 %v7759
      %8271 = vmatprep.mubr.bf16.mxu0 %v6436
      %8272 = vmatmul.mubr.bf16.gmra.mxu0 %v6435
      %v8273 = vpop.f32.mrf.mxu0
      %v8274 = vadd.f32 %v6742, %v8273
      %v8275 = vpop.f32.mrf.mxu0
      %v8276 = vadd.f32 %v6746, %v8275
      %v8277 = vpop.f32.mrf.mxu0
      %v8278 = vadd.f32 %v6742, %v8277
      %v8279 = vpop.f32.mrf.mxu0
      %v8280 = vadd.f32 %v6746, %v8279
      %8281 = vmatprep.mubr.bf16.mxu0 %v6439
      %8282 = vmatmul.mubr.bf16.gmra.mxu0 %v6438
      %v8283 = vpop.f32.mrf.mxu0
      %v8284 = vadd.f32 %v6742, %v8283
      %v8285 = vpop.f32.mrf.mxu0
      %v8286 = vadd.f32 %v6746, %v8285
      %v8287 = vpop.f32.mrf.mxu0
      %v8288 = vadd.f32 %v6742, %v8287
      %v8289 = vpop.f32.mrf.mxu0
      %v8290 = vadd.f32 %v6746, %v8289
      %8291 = vmatprep.mubr.bf16.mxu0 %v6442
      %8292 = vmatmul.mubr.bf16.gmra.mxu0 %v6441
      %v8293 = vpop.f32.mrf.mxu0
      %v8294 = vadd.f32 %v6742, %v8293
      %v8295 = vpop.f32.mrf.mxu0
      %v8296 = vadd.f32 %v6746, %v8295
      %v8297 = vpop.f32.mrf.mxu0
      %v8298 = vadd.f32 %v6742, %v8297
      %v8299 = vpop.f32.mrf.mxu0
      %v8300 = vadd.f32 %v6746, %v8299
      %8301 = vmatprep.mubr.bf16.mxu0 %v6445
      %8302 = vmatmul.mubr.bf16.gmra.mxu0 %v6444
      %v8303 = vpop.f32.mrf.mxu0
      %v8304 = vadd.f32 %v6742, %v8303
      %v8305 = vpop.f32.mrf.mxu0
      %v8306 = vadd.f32 %v6746, %v8305
      %v8307 = vpop.f32.mrf.mxu0
      %v8308 = vadd.f32 %v6742, %v8307
      %v8309 = vpop.f32.mrf.mxu0
      %v8310 = vadd.f32 %v6746, %v8309
      %8311 = vdwg.mxu0
      %8312 = vmatprep.subr.bf16.mxu0 %v7940
      %8313 = vmatpush1.bf16.msra.mxu0 %v7939
      %8314 = vmatprep.subr.bf16.mxu0 %v7928
      %8315 = vmatpush1.bf16.msra.mxu0 %v7927
      %8316 = vmatprep.subr.bf16.mxu0 %v7916
      %8317 = vmatpush1.bf16.msra.mxu0 %v7915
      %8318 = vmatprep.subr.bf16.mxu0 %v7904
      %8319 = vmatpush1.bf16.msra.mxu0 %v7903
      %8320 = vmatprep.subr.bf16.mxu0 %v7892
      %8321 = vmatpush1.bf16.msra.mxu0 %v7891
      %8322 = vmatprep.subr.bf16.mxu0 %v7880
      %8323 = vmatpush1.bf16.msra.mxu0 %v7879
      %8324 = vmatprep.subr.bf16.mxu0 %v7868
      %8325 = vmatpush1.bf16.msra.mxu0 %v7867
      %8326 = vmatprep.subr.bf16.mxu0 %v7856
      %8327 = vmatpush1.bf16.msra.mxu0 %v7855
      %8328 = vmatprep.subr.bf16.mxu0 0
      %8329 = vmatpush2.bf16.msra.mxu0 0
      %8330 = vmatprep.subr.bf16.mxu0 0
      %8331 = vmatpush2.bf16.msra.mxu0 0
      %8332 = vmatprep.subr.bf16.mxu0 0
      %8333 = vmatpush2.bf16.msra.mxu0 0
      %8334 = vmatprep.subr.bf16.mxu0 0
      %8335 = vmatpush2.bf16.msra.mxu0 0
      %8336 = vmatprep.subr.bf16.mxu0 0
      %8337 = vmatpush2.bf16.msra.mxu0 0
      %8338 = vmatprep.subr.bf16.mxu0 0
      %8339 = vmatpush2.bf16.msra.mxu0 0
      %8340 = vmatprep.subr.bf16.mxu0 0
      %8341 = vmatpush2.bf16.msra.mxu0 0
      %8342 = vmatprep.subr.bf16.mxu0 0
      %8343 = vmatpush2.bf16.msra.mxu0 0
      %8344 = vmatprep.mubr.bf16.mxu0 0
      %8345 = vmatmul.mubr.bf16.gmra.mxu0 %v6437
      %v8346 = vpop.f32.mrf.mxu0
      %v8347 = vadd.f32 %v8274, %v8346
      %v8348 = vpop.f32.mrf.mxu0
      %v8349 = vadd.f32 %v8276, %v8348
      %v8350 = vpop.f32.mrf.mxu0
      %v8351 = vadd.f32 %v8278, %v8350
      %v8352 = vpop.f32.mrf.mxu0
      %v8353 = vadd.f32 %v8280, %v8352
      %8354 = vmatprep.mubr.bf16.mxu0 0
      %8355 = vmatmul.mubr.bf16.gmra.mxu0 %v6440
      %v8356 = vpop.f32.mrf.mxu0
      %v8357 = vadd.f32 %v8284, %v8356
      %v8358 = vpop.f32.mrf.mxu0
      %v8359 = vadd.f32 %v8286, %v8358
      %v8360 = vpop.f32.mrf.mxu0
      %v8361 = vadd.f32 %v8288, %v8360
      %v8362 = vpop.f32.mrf.mxu0
      %v8363 = vadd.f32 %v8290, %v8362
      %8364 = vmatprep.mubr.bf16.mxu0 0
      %8365 = vmatmul.mubr.bf16.gmra.mxu0 %v6443
      %v8366 = vpop.f32.mrf.mxu0
      %v8367 = vadd.f32 %v8294, %v8366
      %v8368 = vpop.f32.mrf.mxu0
      %v8369 = vadd.f32 %v8296, %v8368
      %v8370 = vpop.f32.mrf.mxu0
      %v8371 = vadd.f32 %v8298, %v8370
      %v8372 = vpop.f32.mrf.mxu0
      %v8373 = vadd.f32 %v8300, %v8372
      %8374 = vmatprep.mubr.bf16.mxu0 0
      %8375 = vmatmul.mubr.bf16.gmra.mxu0 %v6446
      %v8376 = vpop.f32.mrf.mxu0
      %v8377 = vadd.f32 %v8304, %v8376
      %v8378 = vpop.f32.mrf.mxu0
      %v8379 = vadd.f32 %v8306, %v8378
      %v8380 = vpop.f32.mrf.mxu0
      %v8381 = vadd.f32 %v8308, %v8380
      %v8382 = vpop.f32.mrf.mxu0
      %v8383 = vadd.f32 %v8310, %v8382
      %8384 = vdwg.mxu0
      %8385 = vmatprep.subr.bf16.mxu0 %v7750
      %8386 = vmatpush1.bf16.msra.mxu0 %v7749
      %8387 = vmatprep.subr.bf16.mxu0 %v7738
      %8388 = vmatpush1.bf16.msra.mxu0 %v7737
      %8389 = vmatprep.subr.bf16.mxu0 %v7726
      %8390 = vmatpush1.bf16.msra.mxu0 %v7725
      %8391 = vmatprep.subr.bf16.mxu0 %v7714
      %8392 = vmatpush1.bf16.msra.mxu0 %v7713
      %8393 = vmatprep.subr.bf16.mxu0 %v7702
      %8394 = vmatpush1.bf16.msra.mxu0 %v7701
      %8395 = vmatprep.subr.bf16.mxu0 %v7690
      %8396 = vmatpush1.bf16.msra.mxu0 %v7689
      %8397 = vmatprep.subr.bf16.mxu0 %v7678
      %8398 = vmatpush1.bf16.msra.mxu0 %v7677
      %8399 = vmatprep.subr.bf16.mxu0 %v7666
      %8400 = vmatpush1.bf16.msra.mxu0 %v7665
      %8401 = vmatprep.subr.bf16.mxu0 %v7846
      %8402 = vmatpush2.bf16.msra.mxu0 %v7845
      %8403 = vmatprep.subr.bf16.mxu0 %v7834
      %8404 = vmatpush2.bf16.msra.mxu0 %v7833
      %8405 = vmatprep.subr.bf16.mxu0 %v7822
      %8406 = vmatpush2.bf16.msra.mxu0 %v7821
      %8407 = vmatprep.subr.bf16.mxu0 %v7810
      %8408 = vmatpush2.bf16.msra.mxu0 %v7809
      %8409 = vmatprep.subr.bf16.mxu0 %v7798
      %8410 = vmatpush2.bf16.msra.mxu0 %v7797
      %8411 = vmatprep.subr.bf16.mxu0 %v7786
      %8412 = vmatpush2.bf16.msra.mxu0 %v7785
      %8413 = vmatprep.subr.bf16.mxu0 %v7774
      %8414 = vmatpush2.bf16.msra.mxu0 %v7773
      %8415 = vmatprep.subr.bf16.mxu0 %v7762
      %8416 = vmatpush2.bf16.msra.mxu0 %v7761
      %8417 = vmatprep.mubr.bf16.mxu0 %v6436
      %8418 = vmatmul.mubr.bf16.gmra.mxu0 %v6435
      %v8419 = vpop.f32.mrf.mxu0
      %v8420 = vadd.f32 %v6750, %v8419
      %v8421 = vpop.f32.mrf.mxu0
      %v8422 = vadd.f32 %v6754, %v8421
      %v8423 = vpop.f32.mrf.mxu0
      %v8424 = vadd.f32 %v6750, %v8423
      %v8425 = vpop.f32.mrf.mxu0
      %v8426 = vadd.f32 %v6754, %v8425
      %8427 = vmatprep.mubr.bf16.mxu0 %v6439
      %8428 = vmatmul.mubr.bf16.gmra.mxu0 %v6438
      %v8429 = vpop.f32.mrf.mxu0
      %v8430 = vadd.f32 %v6750, %v8429
      %v8431 = vpop.f32.mrf.mxu0
      %v8432 = vadd.f32 %v6754, %v8431
      %v8433 = vpop.f32.mrf.mxu0
      %v8434 = vadd.f32 %v6750, %v8433
      %v8435 = vpop.f32.mrf.mxu0
      %v8436 = vadd.f32 %v6754, %v8435
      %8437 = vmatprep.mubr.bf16.mxu0 %v6442
      %8438 = vmatmul.mubr.bf16.gmra.mxu0 %v6441
      %v8439 = vpop.f32.mrf.mxu0
      %v8440 = vadd.f32 %v6750, %v8439
      %v8441 = vpop.f32.mrf.mxu0
      %v8442 = vadd.f32 %v6754, %v8441
      %v8443 = vpop.f32.mrf.mxu0
      %v8444 = vadd.f32 %v6750, %v8443
      %v8445 = vpop.f32.mrf.mxu0
      %v8446 = vadd.f32 %v6754, %v8445
      %8447 = vmatprep.mubr.bf16.mxu0 %v6445
      %8448 = vmatmul.mubr.bf16.gmra.mxu0 %v6444
      %v8449 = vpop.f32.mrf.mxu0
      %v8450 = vadd.f32 %v6750, %v8449
      %v8451 = vpop.f32.mrf.mxu0
      %v8452 = vadd.f32 %v6754, %v8451
      %v8453 = vpop.f32.mrf.mxu0
      %v8454 = vadd.f32 %v6750, %v8453
      %v8455 = vpop.f32.mrf.mxu0
      %v8456 = vadd.f32 %v6754, %v8455
      %8457 = vdwg.mxu0
      %8458 = vmatprep.subr.bf16.mxu0 %v7942
      %8459 = vmatpush1.bf16.msra.mxu0 %v7941
      %8460 = vmatprep.subr.bf16.mxu0 %v7930
      %8461 = vmatpush1.bf16.msra.mxu0 %v7929
      %8462 = vmatprep.subr.bf16.mxu0 %v7918
      %8463 = vmatpush1.bf16.msra.mxu0 %v7917
      %8464 = vmatprep.subr.bf16.mxu0 %v7906
      %8465 = vmatpush1.bf16.msra.mxu0 %v7905
      %8466 = vmatprep.subr.bf16.mxu0 %v7894
      %8467 = vmatpush1.bf16.msra.mxu0 %v7893
      %8468 = vmatprep.subr.bf16.mxu0 %v7882
      %8469 = vmatpush1.bf16.msra.mxu0 %v7881
      %8470 = vmatprep.subr.bf16.mxu0 %v7870
      %8471 = vmatpush1.bf16.msra.mxu0 %v7869
      %8472 = vmatprep.subr.bf16.mxu0 %v7858
      %8473 = vmatpush1.bf16.msra.mxu0 %v7857
      %8474 = vmatprep.subr.bf16.mxu0 0
      %8475 = vmatpush2.bf16.msra.mxu0 0
      %8476 = vmatprep.subr.bf16.mxu0 0
      %8477 = vmatpush2.bf16.msra.mxu0 0
      %8478 = vmatprep.subr.bf16.mxu0 0
      %8479 = vmatpush2.bf16.msra.mxu0 0
      %8480 = vmatprep.subr.bf16.mxu0 0
      %8481 = vmatpush2.bf16.msra.mxu0 0
      %8482 = vmatprep.subr.bf16.mxu0 0
      %8483 = vmatpush2.bf16.msra.mxu0 0
      %8484 = vmatprep.subr.bf16.mxu0 0
      %8485 = vmatpush2.bf16.msra.mxu0 0
      %8486 = vmatprep.subr.bf16.mxu0 0
      %8487 = vmatpush2.bf16.msra.mxu0 0
      %8488 = vmatprep.subr.bf16.mxu0 0
      %8489 = vmatpush2.bf16.msra.mxu0 0
      %8490 = vmatprep.mubr.bf16.mxu0 0
      %8491 = vmatmul.mubr.bf16.gmra.mxu0 %v6437
      %v8492 = vpop.f32.mrf.mxu0
      %v8493 = vadd.f32 %v8420, %v8492
      %v8494 = vpop.f32.mrf.mxu0
      %v8495 = vadd.f32 %v8422, %v8494
      %v8496 = vpop.f32.mrf.mxu0
      %v8497 = vadd.f32 %v8424, %v8496
      %v8498 = vpop.f32.mrf.mxu0
      %v8499 = vadd.f32 %v8426, %v8498
      %8500 = vmatprep.mubr.bf16.mxu0 0
      %8501 = vmatmul.mubr.bf16.gmra.mxu0 %v6440
      %v8502 = vpop.f32.mrf.mxu0
      %v8503 = vadd.f32 %v8430, %v8502
      %v8504 = vpop.f32.mrf.mxu0
      %v8505 = vadd.f32 %v8432, %v8504
      %v8506 = vpop.f32.mrf.mxu0
      %v8507 = vadd.f32 %v8434, %v8506
      %v8508 = vpop.f32.mrf.mxu0
      %v8509 = vadd.f32 %v8436, %v8508
      %8510 = vmatprep.mubr.bf16.mxu0 0
      %8511 = vmatmul.mubr.bf16.gmra.mxu0 %v6443
      %v8512 = vpop.f32.mrf.mxu0
      %v8513 = vadd.f32 %v8440, %v8512
      %v8514 = vpop.f32.mrf.mxu0
      %v8515 = vadd.f32 %v8442, %v8514
      %v8516 = vpop.f32.mrf.mxu0
      %v8517 = vadd.f32 %v8444, %v8516
      %v8518 = vpop.f32.mrf.mxu0
      %v8519 = vadd.f32 %v8446, %v8518
      %8520 = vmatprep.mubr.bf16.mxu0 0
      %8521 = vmatmul.mubr.bf16.gmra.mxu0 %v6446
      %v8522 = vpop.f32.mrf.mxu0
      %v8523 = vadd.f32 %v8450, %v8522
      %v8524 = vpop.f32.mrf.mxu0
      %v8525 = vadd.f32 %v8452, %v8524
      %v8526 = vpop.f32.mrf.mxu0
      %v8527 = vadd.f32 %v8454, %v8526
      %v8528 = vpop.f32.mrf.mxu0
      %v8529 = vadd.f32 %v8456, %v8528
      %8530 = vdwg.mxu0
      %8531 = vmatprep.subr.bf16.mxu0 %v7752
      %8532 = vmatpush1.bf16.msra.mxu0 %v7751
      %8533 = vmatprep.subr.bf16.mxu0 %v7740
      %8534 = vmatpush1.bf16.msra.mxu0 %v7739
      %8535 = vmatprep.subr.bf16.mxu0 %v7728
      %8536 = vmatpush1.bf16.msra.mxu0 %v7727
      %8537 = vmatprep.subr.bf16.mxu0 %v7716
      %8538 = vmatpush1.bf16.msra.mxu0 %v7715
      %8539 = vmatprep.subr.bf16.mxu0 %v7704
      %8540 = vmatpush1.bf16.msra.mxu0 %v7703
      %8541 = vmatprep.subr.bf16.mxu0 %v7692
      %8542 = vmatpush1.bf16.msra.mxu0 %v7691
      %8543 = vmatprep.subr.bf16.mxu0 %v7680
      %8544 = vmatpush1.bf16.msra.mxu0 %v7679
      %8545 = vmatprep.subr.bf16.mxu0 %v7668
      %8546 = vmatpush1.bf16.msra.mxu0 %v7667
      %8547 = vmatprep.subr.bf16.mxu0 %v7848
      %8548 = vmatpush2.bf16.msra.mxu0 %v7847
      %8549 = vmatprep.subr.bf16.mxu0 %v7836
      %8550 = vmatpush2.bf16.msra.mxu0 %v7835
      %8551 = vmatprep.subr.bf16.mxu0 %v7824
      %8552 = vmatpush2.bf16.msra.mxu0 %v7823
      %8553 = vmatprep.subr.bf16.mxu0 %v7812
      %8554 = vmatpush2.bf16.msra.mxu0 %v7811
      %8555 = vmatprep.subr.bf16.mxu0 %v7800
      %8556 = vmatpush2.bf16.msra.mxu0 %v7799
      %8557 = vmatprep.subr.bf16.mxu0 %v7788
      %8558 = vmatpush2.bf16.msra.mxu0 %v7787
      %8559 = vmatprep.subr.bf16.mxu0 %v7776
      %8560 = vmatpush2.bf16.msra.mxu0 %v7775
      %8561 = vmatprep.subr.bf16.mxu0 %v7764
      %8562 = vmatpush2.bf16.msra.mxu0 %v7763
      %8563 = vmatprep.mubr.bf16.mxu0 %v6436
      %8564 = vmatmul.mubr.bf16.gmra.mxu0 %v6435
      %v8565 = vpop.f32.mrf.mxu0
      %v8566 = vadd.f32 %v6758, %v8565
      %v8567 = vpop.f32.mrf.mxu0
      %v8568 = vadd.f32 %v6762, %v8567
      %v8569 = vpop.f32.mrf.mxu0
      %v8570 = vadd.f32 %v6758, %v8569
      %v8571 = vpop.f32.mrf.mxu0
      %v8572 = vadd.f32 %v6762, %v8571
      %8573 = vmatprep.mubr.bf16.mxu0 %v6439
      %8574 = vmatmul.mubr.bf16.gmra.mxu0 %v6438
      %v8575 = vpop.f32.mrf.mxu0
      %v8576 = vadd.f32 %v6758, %v8575
      %v8577 = vpop.f32.mrf.mxu0
      %v8578 = vadd.f32 %v6762, %v8577
      %v8579 = vpop.f32.mrf.mxu0
      %v8580 = vadd.f32 %v6758, %v8579
      %v8581 = vpop.f32.mrf.mxu0
      %v8582 = vadd.f32 %v6762, %v8581
      %8583 = vmatprep.mubr.bf16.mxu0 %v6442
      %8584 = vmatmul.mubr.bf16.gmra.mxu0 %v6441
      %v8585 = vpop.f32.mrf.mxu0
      %v8586 = vadd.f32 %v6758, %v8585
      %v8587 = vpop.f32.mrf.mxu0
      %v8588 = vadd.f32 %v6762, %v8587
      %v8589 = vpop.f32.mrf.mxu0
      %v8590 = vadd.f32 %v6758, %v8589
      %v8591 = vpop.f32.mrf.mxu0
      %v8592 = vadd.f32 %v6762, %v8591
      %8593 = vmatprep.mubr.bf16.mxu0 %v6445
      %8594 = vmatmul.mubr.bf16.gmra.mxu0 %v6444
      %v8595 = vpop.f32.mrf.mxu0
      %v8596 = vadd.f32 %v6758, %v8595
      %v8597 = vpop.f32.mrf.mxu0
      %v8598 = vadd.f32 %v6762, %v8597
      %v8599 = vpop.f32.mrf.mxu0
      %v8600 = vadd.f32 %v6758, %v8599
      %v8601 = vpop.f32.mrf.mxu0
      %v8602 = vadd.f32 %v6762, %v8601
      %8603 = vdwg.mxu0
      %8604 = vmatprep.subr.bf16.mxu0 %v7944
      %8605 = vmatpush1.bf16.msra.mxu0 %v7943
      %8606 = vmatprep.subr.bf16.mxu0 %v7932
      %8607 = vmatpush1.bf16.msra.mxu0 %v7931
      %8608 = vmatprep.subr.bf16.mxu0 %v7920
      %8609 = vmatpush1.bf16.msra.mxu0 %v7919
      %8610 = vmatprep.subr.bf16.mxu0 %v7908
      %8611 = vmatpush1.bf16.msra.mxu0 %v7907
      %8612 = vmatprep.subr.bf16.mxu0 %v7896
      %8613 = vmatpush1.bf16.msra.mxu0 %v7895
      %8614 = vmatprep.subr.bf16.mxu0 %v7884
      %8615 = vmatpush1.bf16.msra.mxu0 %v7883
      %8616 = vmatprep.subr.bf16.mxu0 %v7872
      %8617 = vmatpush1.bf16.msra.mxu0 %v7871
      %8618 = vmatprep.subr.bf16.mxu0 %v7860
      %8619 = vmatpush1.bf16.msra.mxu0 %v7859
      %8620 = vmatprep.subr.bf16.mxu0 0
      %8621 = vmatpush2.bf16.msra.mxu0 0
      %8622 = vmatprep.subr.bf16.mxu0 0
      %8623 = vmatpush2.bf16.msra.mxu0 0
      %8624 = vmatprep.subr.bf16.mxu0 0
      %8625 = vmatpush2.bf16.msra.mxu0 0
      %8626 = vmatprep.subr.bf16.mxu0 0
      %8627 = vmatpush2.bf16.msra.mxu0 0
      %8628 = vmatprep.subr.bf16.mxu0 0
      %8629 = vmatpush2.bf16.msra.mxu0 0
      %8630 = vmatprep.subr.bf16.mxu0 0
      %8631 = vmatpush2.bf16.msra.mxu0 0
      %8632 = vmatprep.subr.bf16.mxu0 0
      %8633 = vmatpush2.bf16.msra.mxu0 0
      %8634 = vmatprep.subr.bf16.mxu0 0
      %8635 = vmatpush2.bf16.msra.mxu0 0
      %8636 = vmatprep.mubr.bf16.mxu0 0
      %8637 = vmatmul.mubr.bf16.gmra.mxu0 %v6437
      %v8638 = vpop.f32.mrf.mxu0
      %v8639 = vadd.f32 %v8566, %v8638
      %v8640 = vpop.f32.mrf.mxu0
      %v8641 = vadd.f32 %v8568, %v8640
      %v8642 = vpop.f32.mrf.mxu0
      %v8643 = vadd.f32 %v8570, %v8642
      %v8644 = vpop.f32.mrf.mxu0
      %v8645 = vadd.f32 %v8572, %v8644
      %8646 = vmatprep.mubr.bf16.mxu0 0
      %8647 = vmatmul.mubr.bf16.gmra.mxu0 %v6440
      %v8648 = vpop.f32.mrf.mxu0
      %v8649 = vadd.f32 %v8576, %v8648
      %v8650 = vpop.f32.mrf.mxu0
      %v8651 = vadd.f32 %v8578, %v8650
      %v8652 = vpop.f32.mrf.mxu0
      %v8653 = vadd.f32 %v8580, %v8652
      %v8654 = vpop.f32.mrf.mxu0
      %v8655 = vadd.f32 %v8582, %v8654
      %8656 = vmatprep.mubr.bf16.mxu0 0
      %8657 = vmatmul.mubr.bf16.gmra.mxu0 %v6443
      %v8658 = vpop.f32.mrf.mxu0
      %v8659 = vadd.f32 %v8586, %v8658
      %v8660 = vpop.f32.mrf.mxu0
      %v8661 = vadd.f32 %v8588, %v8660
      %v8662 = vpop.f32.mrf.mxu0
      %v8663 = vadd.f32 %v8590, %v8662
      %v8664 = vpop.f32.mrf.mxu0
      %v8665 = vadd.f32 %v8592, %v8664
      %8666 = vmatprep.mubr.bf16.mxu0 0
      %8667 = vmatmul.mubr.bf16.gmra.mxu0 %v6446
      %v8668 = vpop.f32.mrf.mxu0
      %v8669 = vadd.f32 %v8596, %v8668
      %v8670 = vpop.f32.mrf.mxu0
      %v8671 = vadd.f32 %v8598, %v8670
      %v8672 = vpop.f32.mrf.mxu0
      %v8673 = vadd.f32 %v8600, %v8672
      %v8674 = vpop.f32.mrf.mxu0
      %v8675 = vadd.f32 %v8602, %v8674
      %8676 = vdwg.mxu0
      %8677 = vmatprep.subr.bf16.mxu0 %v7754
      %8678 = vmatpush1.bf16.msra.mxu0 %v7753
      %8679 = vmatprep.subr.bf16.mxu0 %v7742
      %8680 = vmatpush1.bf16.msra.mxu0 %v7741
      %8681 = vmatprep.subr.bf16.mxu0 %v7730
      %8682 = vmatpush1.bf16.msra.mxu0 %v7729
      %8683 = vmatprep.subr.bf16.mxu0 %v7718
      %8684 = vmatpush1.bf16.msra.mxu0 %v7717
      %8685 = vmatprep.subr.bf16.mxu0 %v7706
      %8686 = vmatpush1.bf16.msra.mxu0 %v7705
      %8687 = vmatprep.subr.bf16.mxu0 %v7694
      %8688 = vmatpush1.bf16.msra.mxu0 %v7693
      %8689 = vmatprep.subr.bf16.mxu0 %v7682
      %8690 = vmatpush1.bf16.msra.mxu0 %v7681
      %8691 = vmatprep.subr.bf16.mxu0 %v7670
      %8692 = vmatpush1.bf16.msra.mxu0 %v7669
      %8693 = vmatprep.subr.bf16.mxu0 %v7850
      %8694 = vmatpush2.bf16.msra.mxu0 %v7849
      %8695 = vmatprep.subr.bf16.mxu0 %v7838
      %8696 = vmatpush2.bf16.msra.mxu0 %v7837
      %8697 = vmatprep.subr.bf16.mxu0 %v7826
      %8698 = vmatpush2.bf16.msra.mxu0 %v7825
      %8699 = vmatprep.subr.bf16.mxu0 %v7814
      %8700 = vmatpush2.bf16.msra.mxu0 %v7813
      %8701 = vmatprep.subr.bf16.mxu0 %v7802
      %8702 = vmatpush2.bf16.msra.mxu0 %v7801
      %8703 = vmatprep.subr.bf16.mxu0 %v7790
      %8704 = vmatpush2.bf16.msra.mxu0 %v7789
      %8705 = vmatprep.subr.bf16.mxu0 %v7778
      %8706 = vmatpush2.bf16.msra.mxu0 %v7777
      %8707 = vmatprep.subr.bf16.mxu0 %v7766
      %8708 = vmatpush2.bf16.msra.mxu0 %v7765
      %8709 = vmatprep.mubr.bf16.mxu0 %v6436
      %8710 = vmatmul.mubr.bf16.gmra.mxu0 %v6435
      %v8711 = vpop.f32.mrf.mxu0
      %v8712 = vadd.f32 %v6766, %v8711
      %v8713 = vpop.f32.mrf.mxu0
      %v8714 = vadd.f32 %v6770, %v8713
      %v8715 = vpop.f32.mrf.mxu0
      %v8716 = vadd.f32 %v6766, %v8715
      %v8717 = vpop.f32.mrf.mxu0
      %v8718 = vadd.f32 %v6770, %v8717
      %8719 = vmatprep.mubr.bf16.mxu0 %v6439
      %8720 = vmatmul.mubr.bf16.gmra.mxu0 %v6438
      %v8721 = vpop.f32.mrf.mxu0
      %v8722 = vadd.f32 %v6766, %v8721
      %v8723 = vpop.f32.mrf.mxu0
      %v8724 = vadd.f32 %v6770, %v8723
      %v8725 = vpop.f32.mrf.mxu0
      %v8726 = vadd.f32 %v6766, %v8725
      %v8727 = vpop.f32.mrf.mxu0
      %v8728 = vadd.f32 %v6770, %v8727
      %8729 = vmatprep.mubr.bf16.mxu0 %v6442
      %8730 = vmatmul.mubr.bf16.gmra.mxu0 %v6441
      %v8731 = vpop.f32.mrf.mxu0
      %v8732 = vadd.f32 %v6766, %v8731
      %v8733 = vpop.f32.mrf.mxu0
      %v8734 = vadd.f32 %v6770, %v8733
      %v8735 = vpop.f32.mrf.mxu0
      %v8736 = vadd.f32 %v6766, %v8735
      %v8737 = vpop.f32.mrf.mxu0
      %v8738 = vadd.f32 %v6770, %v8737
      %8739 = vmatprep.mubr.bf16.mxu0 %v6445
      %8740 = vmatmul.mubr.bf16.gmra.mxu0 %v6444
      %v8741 = vpop.f32.mrf.mxu0
      %v8742 = vadd.f32 %v6766, %v8741
      %v8743 = vpop.f32.mrf.mxu0
      %v8744 = vadd.f32 %v6770, %v8743
      %v8745 = vpop.f32.mrf.mxu0
      %v8746 = vadd.f32 %v6766, %v8745
      %v8747 = vpop.f32.mrf.mxu0
      %v8748 = vadd.f32 %v6770, %v8747
      %8749 = vdwg.mxu0
      %8750 = vmatprep.subr.bf16.mxu0 %v7946
      %8751 = vmatpush1.bf16.msra.mxu0 %v7945
      %8752 = vmatprep.subr.bf16.mxu0 %v7934
      %8753 = vmatpush1.bf16.msra.mxu0 %v7933
      %8754 = vmatprep.subr.bf16.mxu0 %v7922
      %8755 = vmatpush1.bf16.msra.mxu0 %v7921
      %8756 = vmatprep.subr.bf16.mxu0 %v7910
      %8757 = vmatpush1.bf16.msra.mxu0 %v7909
      %8758 = vmatprep.subr.bf16.mxu0 %v7898
      %8759 = vmatpush1.bf16.msra.mxu0 %v7897
      %8760 = vmatprep.subr.bf16.mxu0 %v7886
      %8761 = vmatpush1.bf16.msra.mxu0 %v7885
      %8762 = vmatprep.subr.bf16.mxu0 %v7874
      %8763 = vmatpush1.bf16.msra.mxu0 %v7873
      %8764 = vmatprep.subr.bf16.mxu0 %v7862
      %8765 = vmatpush1.bf16.msra.mxu0 %v7861
      %8766 = vmatprep.subr.bf16.mxu0 0
      %8767 = vmatpush2.bf16.msra.mxu0 0
      %8768 = vmatprep.subr.bf16.mxu0 0
      %8769 = vmatpush2.bf16.msra.mxu0 0
      %8770 = vmatprep.subr.bf16.mxu0 0
      %8771 = vmatpush2.bf16.msra.mxu0 0
      %8772 = vmatprep.subr.bf16.mxu0 0
      %8773 = vmatpush2.bf16.msra.mxu0 0
      %8774 = vmatprep.subr.bf16.mxu0 0
      %8775 = vmatpush2.bf16.msra.mxu0 0
      %8776 = vmatprep.subr.bf16.mxu0 0
      %8777 = vmatpush2.bf16.msra.mxu0 0
      %8778 = vmatprep.subr.bf16.mxu0 0
      %8779 = vmatpush2.bf16.msra.mxu0 0
      %8780 = vmatprep.subr.bf16.mxu0 0
      %8781 = vmatpush2.bf16.msra.mxu0 0
      %8782 = vmatprep.mubr.bf16.mxu0 0
      %8783 = vmatmul.mubr.bf16.gmra.mxu0 %v6437
      %v8784 = vpop.f32.mrf.mxu0
      %v8785 = vadd.f32 %v8712, %v8784
      %v8786 = vpop.f32.mrf.mxu0
      %v8787 = vadd.f32 %v8714, %v8786
      %v8788 = vpop.f32.mrf.mxu0
      %v8789 = vadd.f32 %v8716, %v8788
      %v8790 = vpop.f32.mrf.mxu0
      %v8791 = vadd.f32 %v8718, %v8790
      %8792 = vmatprep.mubr.bf16.mxu0 0
      %8793 = vmatmul.mubr.bf16.gmra.mxu0 %v6440
      %v8794 = vpop.f32.mrf.mxu0
      %v8795 = vadd.f32 %v8722, %v8794
      %v8796 = vpop.f32.mrf.mxu0
      %v8797 = vadd.f32 %v8724, %v8796
      %v8798 = vpop.f32.mrf.mxu0
      %v8799 = vadd.f32 %v8726, %v8798
      %v8800 = vpop.f32.mrf.mxu0
      %v8801 = vadd.f32 %v8728, %v8800
      %8802 = vmatprep.mubr.bf16.mxu0 0
      %8803 = vmatmul.mubr.bf16.gmra.mxu0 %v6443
      %v8804 = vpop.f32.mrf.mxu0
      %v8805 = vadd.f32 %v8732, %v8804
      %v8806 = vpop.f32.mrf.mxu0
      %v8807 = vadd.f32 %v8734, %v8806
      %v8808 = vpop.f32.mrf.mxu0
      %v8809 = vadd.f32 %v8736, %v8808
      %v8810 = vpop.f32.mrf.mxu0
      %v8811 = vadd.f32 %v8738, %v8810
      %8812 = vmatprep.mubr.bf16.mxu0 0
      %8813 = vmatmul.mubr.bf16.gmra.mxu0 %v6446
      %v8814 = vpop.f32.mrf.mxu0
      %v8815 = vadd.f32 %v8742, %v8814
      %v8816 = vpop.f32.mrf.mxu0
      %v8817 = vadd.f32 %v8744, %v8816
      %v8818 = vpop.f32.mrf.mxu0
      %v8819 = vadd.f32 %v8746, %v8818
      %v8820 = vpop.f32.mrf.mxu0
      %v8821 = vadd.f32 %v8748, %v8820
      %8822 = vdwg.mxu0
      %8823 = vmatprep.subr.bf16.mxu0 %v7756
      %8824 = vmatpush1.bf16.msra.mxu0 %v7755
      %8825 = vmatprep.subr.bf16.mxu0 %v7744
      %8826 = vmatpush1.bf16.msra.mxu0 %v7743
      %8827 = vmatprep.subr.bf16.mxu0 %v7732
      %8828 = vmatpush1.bf16.msra.mxu0 %v7731
      %8829 = vmatprep.subr.bf16.mxu0 %v7720
      %8830 = vmatpush1.bf16.msra.mxu0 %v7719
      %8831 = vmatprep.subr.bf16.mxu0 %v7708
      %8832 = vmatpush1.bf16.msra.mxu0 %v7707
      %8833 = vmatprep.subr.bf16.mxu0 %v7696
      %8834 = vmatpush1.bf16.msra.mxu0 %v7695
      %8835 = vmatprep.subr.bf16.mxu0 %v7684
      %8836 = vmatpush1.bf16.msra.mxu0 %v7683
      %8837 = vmatprep.subr.bf16.mxu0 %v7672
      %8838 = vmatpush1.bf16.msra.mxu0 %v7671
      %8839 = vmatprep.subr.bf16.mxu0 %v7852
      %8840 = vmatpush2.bf16.msra.mxu0 %v7851
      %8841 = vmatprep.subr.bf16.mxu0 %v7840
      %8842 = vmatpush2.bf16.msra.mxu0 %v7839
      %8843 = vmatprep.subr.bf16.mxu0 %v7828
      %8844 = vmatpush2.bf16.msra.mxu0 %v7827
      %8845 = vmatprep.subr.bf16.mxu0 %v7816
      %8846 = vmatpush2.bf16.msra.mxu0 %v7815
      %8847 = vmatprep.subr.bf16.mxu0 %v7804
      %8848 = vmatpush2.bf16.msra.mxu0 %v7803
      %8849 = vmatprep.subr.bf16.mxu0 %v7792
      %8850 = vmatpush2.bf16.msra.mxu0 %v7791
      %8851 = vmatprep.subr.bf16.mxu0 %v7780
      %8852 = vmatpush2.bf16.msra.mxu0 %v7779
      %8853 = vmatprep.subr.bf16.mxu0 %v7768
      %8854 = vmatpush2.bf16.msra.mxu0 %v7767
      %8855 = vmatprep.mubr.bf16.mxu0 %v6436
      %8856 = vmatmul.mubr.bf16.gmra.mxu0 %v6435
      %v8857 = vpop.f32.mrf.mxu0
      %v8858 = vadd.f32 %v6774, %v8857
      %v8859 = vpop.f32.mrf.mxu0
      %v8860 = vadd.f32 %v6778, %v8859
      %v8861 = vpop.f32.mrf.mxu0
      %v8862 = vadd.f32 %v6774, %v8861
      %v8863 = vpop.f32.mrf.mxu0
      %v8864 = vadd.f32 %v6778, %v8863
      %8865 = vmatprep.mubr.bf16.mxu0 %v6439
      %8866 = vmatmul.mubr.bf16.gmra.mxu0 %v6438
      %v8867 = vpop.f32.mrf.mxu0
      %v8868 = vadd.f32 %v6774, %v8867
      %v8869 = vpop.f32.mrf.mxu0
      %v8870 = vadd.f32 %v6778, %v8869
      %v8871 = vpop.f32.mrf.mxu0
      %v8872 = vadd.f32 %v6774, %v8871
      %v8873 = vpop.f32.mrf.mxu0
      %v8874 = vadd.f32 %v6778, %v8873
      %8875 = vmatprep.mubr.bf16.mxu0 %v6442
      %8876 = vmatmul.mubr.bf16.gmra.mxu0 %v6441
      %v8877 = vpop.f32.mrf.mxu0
      %v8878 = vadd.f32 %v6774, %v8877
      %v8879 = vpop.f32.mrf.mxu0
      %v8880 = vadd.f32 %v6778, %v8879
      %v8881 = vpop.f32.mrf.mxu0
      %v8882 = vadd.f32 %v6774, %v8881
      %v8883 = vpop.f32.mrf.mxu0
      %v8884 = vadd.f32 %v6778, %v8883
      %8885 = vmatprep.mubr.bf16.mxu0 %v6445
      %8886 = vmatmul.mubr.bf16.gmra.mxu0 %v6444
      %v8887 = vpop.f32.mrf.mxu0
      %v8888 = vadd.f32 %v6774, %v8887
      %v8889 = vpop.f32.mrf.mxu0
      %v8890 = vadd.f32 %v6778, %v8889
      %v8891 = vpop.f32.mrf.mxu0
      %v8892 = vadd.f32 %v6774, %v8891
      %v8893 = vpop.f32.mrf.mxu0
      %v8894 = vadd.f32 %v6778, %v8893
      %8895 = vdwg.mxu0
      %8896 = vmatprep.subr.bf16.mxu0 %v7948
      %8897 = vmatpush1.bf16.msra.mxu0 %v7947
      %8898 = vmatprep.subr.bf16.mxu0 %v7936
      %8899 = vmatpush1.bf16.msra.mxu0 %v7935
      %8900 = vmatprep.subr.bf16.mxu0 %v7924
      %8901 = vmatpush1.bf16.msra.mxu0 %v7923
      %8902 = vmatprep.subr.bf16.mxu0 %v7912
      %8903 = vmatpush1.bf16.msra.mxu0 %v7911
      %8904 = vmatprep.subr.bf16.mxu0 %v7900
      %8905 = vmatpush1.bf16.msra.mxu0 %v7899
      %8906 = vmatprep.subr.bf16.mxu0 %v7888
      %8907 = vmatpush1.bf16.msra.mxu0 %v7887
      %8908 = vmatprep.subr.bf16.mxu0 %v7876
      %8909 = vmatpush1.bf16.msra.mxu0 %v7875
      %8910 = vmatprep.subr.bf16.mxu0 %v7864
      %8911 = vmatpush1.bf16.msra.mxu0 %v7863
      %8912 = vmatprep.subr.bf16.mxu0 0
      %8913 = vmatpush2.bf16.msra.mxu0 0
      %8914 = vmatprep.subr.bf16.mxu0 0
      %8915 = vmatpush2.bf16.msra.mxu0 0
      %8916 = vmatprep.subr.bf16.mxu0 0
      %8917 = vmatpush2.bf16.msra.mxu0 0
      %8918 = vmatprep.subr.bf16.mxu0 0
      %8919 = vmatpush2.bf16.msra.mxu0 0
      %8920 = vmatprep.subr.bf16.mxu0 0
      %8921 = vmatpush2.bf16.msra.mxu0 0
      %8922 = vmatprep.subr.bf16.mxu0 0
      %8923 = vmatpush2.bf16.msra.mxu0 0
      %8924 = vmatprep.subr.bf16.mxu0 0
      %8925 = vmatpush2.bf16.msra.mxu0 0
      %8926 = vmatprep.subr.bf16.mxu0 0
      %8927 = vmatpush2.bf16.msra.mxu0 0
      %8928 = vmatprep.mubr.bf16.mxu0 0
      %8929 = vmatmul.mubr.bf16.gmra.mxu0 %v6437
      %v8930 = vpop.f32.mrf.mxu0
      %v8931 = vadd.f32 %v8858, %v8930
      %v8932 = vpop.f32.mrf.mxu0
      %v8933 = vadd.f32 %v8860, %v8932
      %v8934 = vpop.f32.mrf.mxu0
      %v8935 = vadd.f32 %v8862, %v8934
      %v8936 = vpop.f32.mrf.mxu0
      %v8937 = vadd.f32 %v8864, %v8936
      %8938 = vmatprep.mubr.bf16.mxu0 0
      %8939 = vmatmul.mubr.bf16.gmra.mxu0 %v6440
      %v8940 = vpop.f32.mrf.mxu0
      %v8941 = vadd.f32 %v8868, %v8940
      %v8942 = vpop.f32.mrf.mxu0
      %v8943 = vadd.f32 %v8870, %v8942
      %v8944 = vpop.f32.mrf.mxu0
      %v8945 = vadd.f32 %v8872, %v8944
      %v8946 = vpop.f32.mrf.mxu0
      %v8947 = vadd.f32 %v8874, %v8946
      %8948 = vmatprep.mubr.bf16.mxu0 0
      %8949 = vmatmul.mubr.bf16.gmra.mxu0 %v6443
      %v8950 = vpop.f32.mrf.mxu0
      %v8951 = vadd.f32 %v8878, %v8950
      %v8952 = vpop.f32.mrf.mxu0
      %v8953 = vadd.f32 %v8880, %v8952
      %v8954 = vpop.f32.mrf.mxu0
      %v8955 = vadd.f32 %v8882, %v8954
      %v8956 = vpop.f32.mrf.mxu0
      %v8957 = vadd.f32 %v8884, %v8956
      %8958 = vmatprep.mubr.bf16.mxu0 0
      %8959 = vmatmul.mubr.bf16.gmra.mxu0 %v6446
      %v8960 = vpop.f32.mrf.mxu0
      %v8961 = vadd.f32 %v8888, %v8960
      %v8962 = vpop.f32.mrf.mxu0
      %v8963 = vadd.f32 %v8890, %v8962
      %v8964 = vpop.f32.mrf.mxu0
      %v8965 = vadd.f32 %v8892, %v8964
      %v8966 = vpop.f32.mrf.mxu0
      %v8967 = vadd.f32 %v8894, %v8966
      %8968 = vdwg.mxu0
      %8969 = vmatprep.subr.bf16.mxu0 %v7758
      %8970 = vmatpush1.bf16.msra.mxu0 %v7757
      %8971 = vmatprep.subr.bf16.mxu0 %v7746
      %8972 = vmatpush1.bf16.msra.mxu0 %v7745
      %8973 = vmatprep.subr.bf16.mxu0 %v7734
      %8974 = vmatpush1.bf16.msra.mxu0 %v7733
      %8975 = vmatprep.subr.bf16.mxu0 %v7722
      %8976 = vmatpush1.bf16.msra.mxu0 %v7721
      %8977 = vmatprep.subr.bf16.mxu0 %v7710
      %8978 = vmatpush1.bf16.msra.mxu0 %v7709
      %8979 = vmatprep.subr.bf16.mxu0 %v7698
      %8980 = vmatpush1.bf16.msra.mxu0 %v7697
      %8981 = vmatprep.subr.bf16.mxu0 %v7686
      %8982 = vmatpush1.bf16.msra.mxu0 %v7685
      %8983 = vmatprep.subr.bf16.mxu0 %v7674
      %8984 = vmatpush1.bf16.msra.mxu0 %v7673
      %8985 = vmatprep.subr.bf16.mxu0 %v7854
      %8986 = vmatpush2.bf16.msra.mxu0 %v7853
      %8987 = vmatprep.subr.bf16.mxu0 %v7842
      %8988 = vmatpush2.bf16.msra.mxu0 %v7841
      %8989 = vmatprep.subr.bf16.mxu0 %v7830
      %8990 = vmatpush2.bf16.msra.mxu0 %v7829
      %8991 = vmatprep.subr.bf16.mxu0 %v7818
      %8992 = vmatpush2.bf16.msra.mxu0 %v7817
      %8993 = vmatprep.subr.bf16.mxu0 %v7806
      %8994 = vmatpush2.bf16.msra.mxu0 %v7805
      %8995 = vmatprep.subr.bf16.mxu0 %v7794
      %8996 = vmatpush2.bf16.msra.mxu0 %v7793
      %8997 = vmatprep.subr.bf16.mxu0 %v7782
      %8998 = vmatpush2.bf16.msra.mxu0 %v7781
      %8999 = vmatprep.subr.bf16.mxu0 %v7770
      %9000 = vmatpush2.bf16.msra.mxu0 %v7769
      %9001 = vmatprep.mubr.bf16.mxu0 %v6436
      %9002 = vmatmul.mubr.bf16.gmra.mxu0 %v6435
      %v9003 = vpop.f32.mrf.mxu0
      %v9004 = vadd.f32 %v6782, %v9003
      %v9005 = vpop.f32.mrf.mxu0
      %v9006 = vadd.f32 %v6786, %v9005
      %v9007 = vpop.f32.mrf.mxu0
      %v9008 = vadd.f32 %v6782, %v9007
      %v9009 = vpop.f32.mrf.mxu0
      %v9010 = vadd.f32 %v6786, %v9009
      %9011 = vmatprep.mubr.bf16.mxu0 %v6439
      %9012 = vmatmul.mubr.bf16.gmra.mxu0 %v6438
      %v9013 = vpop.f32.mrf.mxu0
      %v9014 = vadd.f32 %v6782, %v9013
      %v9015 = vpop.f32.mrf.mxu0
      %v9016 = vadd.f32 %v6786, %v9015
      %v9017 = vpop.f32.mrf.mxu0
      %v9018 = vadd.f32 %v6782, %v9017
      %v9019 = vpop.f32.mrf.mxu0
      %v9020 = vadd.f32 %v6786, %v9019
      %9021 = vmatprep.mubr.bf16.mxu0 %v6442
      %9022 = vmatmul.mubr.bf16.gmra.mxu0 %v6441
      %v9023 = vpop.f32.mrf.mxu0
      %v9024 = vadd.f32 %v6782, %v9023
      %v9025 = vpop.f32.mrf.mxu0
      %v9026 = vadd.f32 %v6786, %v9025
      %v9027 = vpop.f32.mrf.mxu0
      %v9028 = vadd.f32 %v6782, %v9027
      %v9029 = vpop.f32.mrf.mxu0
      %v9030 = vadd.f32 %v6786, %v9029
      %9031 = vmatprep.mubr.bf16.mxu0 %v6445
      %9032 = vmatmul.mubr.bf16.gmra.mxu0 %v6444
      %v9033 = vpop.f32.mrf.mxu0
      %v9034 = vadd.f32 %v6782, %v9033
      %v9035 = vpop.f32.mrf.mxu0
      %v9036 = vadd.f32 %v6786, %v9035
      %v9037 = vpop.f32.mrf.mxu0
      %v9038 = vadd.f32 %v6782, %v9037
      %v9039 = vpop.f32.mrf.mxu0
      %v9040 = vadd.f32 %v6786, %v9039
      %9041 = vdwg.mxu0
      %9042 = vmatprep.subr.bf16.mxu0 %v7950
      %9043 = vmatpush1.bf16.msra.mxu0 %v7949
      %9044 = vmatprep.subr.bf16.mxu0 %v7938
      %9045 = vmatpush1.bf16.msra.mxu0 %v7937
      %9046 = vmatprep.subr.bf16.mxu0 %v7926
      %9047 = vmatpush1.bf16.msra.mxu0 %v7925
      %9048 = vmatprep.subr.bf16.mxu0 %v7914
      %9049 = vmatpush1.bf16.msra.mxu0 %v7913
      %9050 = vmatprep.subr.bf16.mxu0 %v7902
      %9051 = vmatpush1.bf16.msra.mxu0 %v7901
      %9052 = vmatprep.subr.bf16.mxu0 %v7890
      %9053 = vmatpush1.bf16.msra.mxu0 %v7889
      %9054 = vmatprep.subr.bf16.mxu0 %v7878
      %9055 = vmatpush1.bf16.msra.mxu0 %v7877
      %9056 = vmatprep.subr.bf16.mxu0 %v7866
      %9057 = vmatpush1.bf16.msra.mxu0 %v7865
      %9058 = vmatprep.subr.bf16.mxu0 0
      %9059 = vmatpush2.bf16.msra.mxu0 0
      %9060 = vmatprep.subr.bf16.mxu0 0
      %9061 = vmatpush2.bf16.msra.mxu0 0
      %9062 = vmatprep.subr.bf16.mxu0 0
      %9063 = vmatpush2.bf16.msra.mxu0 0
      %9064 = vmatprep.subr.bf16.mxu0 0
      %9065 = vmatpush2.bf16.msra.mxu0 0
      %9066 = vmatprep.subr.bf16.mxu0 0
      %9067 = vmatpush2.bf16.msra.mxu0 0
      %9068 = vmatprep.subr.bf16.mxu0 0
      %9069 = vmatpush2.bf16.msra.mxu0 0
      %9070 = vmatprep.subr.bf16.mxu0 0
      %9071 = vmatpush2.bf16.msra.mxu0 0
      %9072 = vmatprep.subr.bf16.mxu0 0
      %9073 = vmatpush2.bf16.msra.mxu0 0
      %9074 = vmatprep.mubr.bf16.mxu0 0
      %9075 = vmatmul.mubr.bf16.gmra.mxu0 %v6437
      %v9076 = vpop.f32.mrf.mxu0
      %v9077 = vadd.f32 %v9004, %v9076
      %v9078 = vpop.f32.mrf.mxu0
      %v9079 = vadd.f32 %v9006, %v9078
      %v9080 = vpop.f32.mrf.mxu0
      %v9081 = vadd.f32 %v9008, %v9080
      %v9082 = vpop.f32.mrf.mxu0
      %v9083 = vadd.f32 %v9010, %v9082
      %9084 = vmatprep.mubr.bf16.mxu0 0
      %9085 = vmatmul.mubr.bf16.gmra.mxu0 %v6440
      %v9086 = vpop.f32.mrf.mxu0
      %v9087 = vadd.f32 %v9014, %v9086
      %v9088 = vpop.f32.mrf.mxu0
      %v9089 = vadd.f32 %v9016, %v9088
      %v9090 = vpop.f32.mrf.mxu0
      %v9091 = vadd.f32 %v9018, %v9090
      %v9092 = vpop.f32.mrf.mxu0
      %v9093 = vadd.f32 %v9020, %v9092
      %9094 = vmatprep.mubr.bf16.mxu0 0
      %9095 = vmatmul.mubr.bf16.gmra.mxu0 %v6443
      %v9096 = vpop.f32.mrf.mxu0
      %v9097 = vadd.f32 %v9024, %v9096
      %v9098 = vpop.f32.mrf.mxu0
      %v9099 = vadd.f32 %v9026, %v9098
      %v9100 = vpop.f32.mrf.mxu0
      %v9101 = vadd.f32 %v9028, %v9100
      %v9102 = vpop.f32.mrf.mxu0
      %v9103 = vadd.f32 %v9030, %v9102
      %9104 = vmatprep.mubr.bf16.mxu0 0
      %9105 = vmatmul.mubr.bf16.gmra.mxu0 %v6446
      %v9106 = vpop.f32.mrf.mxu0
      %v9107 = vadd.f32 %v9034, %v9106
      %v9108 = vpop.f32.mrf.mxu0
      %v9109 = vadd.f32 %v9036, %v9108
      %v9110 = vpop.f32.mrf.mxu0
      %v9111 = vadd.f32 %v9038, %v9110
      %v9112 = vpop.f32.mrf.mxu0
      %v9113 = vadd.f32 %v9040, %v9112
      %9114 = vdwg.mxu0
      %v9115 = vmax.f32 %v8347, 0.0
      %v9116 = vmax.f32 %v8349, 0.0
      %v9117 = vmax.f32 %v8493, 0.0
      %v9118 = vmax.f32 %v8495, 0.0
      %v9119 = vmax.f32 %v8639, 0.0
      %v9120 = vmax.f32 %v8641, 0.0
      %v9121 = vmax.f32 %v8785, 0.0
      %v9122 = vmax.f32 %v8787, 0.0
      %v9123 = vmax.f32 %v8931, 0.0
      %v9124 = vmax.f32 %v8933, 0.0
      %v9125 = vmax.f32 %v9077, 0.0
      %v9126 = vmax.f32 %v9079, 0.0
      %v9127 = vmax.f32 %v8351, 0.0
      %v9128 = vmax.f32 %v8353, 0.0
      %v9129 = vmax.f32 %v8497, 0.0
      %v9130 = vmax.f32 %v8499, 0.0
      %v9131 = vmax.f32 %v8643, 0.0
      %v9132 = vmax.f32 %v8645, 0.0
      %v9133 = vmax.f32 %v8789, 0.0
      %v9134 = vmax.f32 %v8791, 0.0
      %v9135 = vmax.f32 %v8935, 0.0
      %v9136 = vmax.f32 %v8937, 0.0
      %v9137 = vmax.f32 %v9081, 0.0
      %v9138 = vmax.f32 %v9083, 0.0
      %v9139 = vmax.f32 %v8357, 0.0
      %v9140 = vmax.f32 %v8359, 0.0
      %v9141 = vmax.f32 %v8503, 0.0
      %v9142 = vmax.f32 %v8505, 0.0
      %v9143 = vmax.f32 %v8649, 0.0
      %v9144 = vmax.f32 %v8651, 0.0
      %v9145 = vmax.f32 %v8795, 0.0
      %v9146 = vmax.f32 %v8797, 0.0
      %v9147 = vmax.f32 %v8941, 0.0
      %v9148 = vmax.f32 %v8943, 0.0
      %v9149 = vmax.f32 %v9087, 0.0
      %v9150 = vmax.f32 %v9089, 0.0
      %v9151 = vmax.f32 %v8361, 0.0
      %v9152 = vmax.f32 %v8363, 0.0
      %v9153 = vmax.f32 %v8507, 0.0
      %v9154 = vmax.f32 %v8509, 0.0
      %v9155 = vmax.f32 %v8653, 0.0
      %v9156 = vmax.f32 %v8655, 0.0
      %v9157 = vmax.f32 %v8799, 0.0
      %v9158 = vmax.f32 %v8801, 0.0
      %v9159 = vmax.f32 %v8945, 0.0
      %v9160 = vmax.f32 %v8947, 0.0
      %v9161 = vmax.f32 %v9091, 0.0
      %v9162 = vmax.f32 %v9093, 0.0
      %v9163 = vmax.f32 %v8367, 0.0
      %v9164 = vmax.f32 %v8369, 0.0
      %v9165 = vmax.f32 %v8513, 0.0
      %v9166 = vmax.f32 %v8515, 0.0
      %v9167 = vmax.f32 %v8659, 0.0
      %v9168 = vmax.f32 %v8661, 0.0
      %v9169 = vmax.f32 %v8805, 0.0
      %v9170 = vmax.f32 %v8807, 0.0
      %v9171 = vmax.f32 %v8951, 0.0
      %v9172 = vmax.f32 %v8953, 0.0
      %v9173 = vmax.f32 %v9097, 0.0
      %v9174 = vmax.f32 %v9099, 0.0
      %v9175 = vmax.f32 %v8371, 0.0
      %v9176 = vmax.f32 %v8373, 0.0
      %v9177 = vmax.f32 %v8517, 0.0
      %v9178 = vmax.f32 %v8519, 0.0
      %v9179 = vmax.f32 %v8663, 0.0
      %v9180 = vmax.f32 %v8665, 0.0
      %v9181 = vmax.f32 %v8809, 0.0
      %v9182 = vmax.f32 %v8811, 0.0
      %v9183 = vmax.f32 %v8955, 0.0
      %v9184 = vmax.f32 %v8957, 0.0
      %v9185 = vmax.f32 %v9101, 0.0
      %v9186 = vmax.f32 %v9103, 0.0
      %v9187 = vmax.f32 %v8377, 0.0
      %v9188 = vmax.f32 %v8379, 0.0
      %v9189 = vmax.f32 %v8523, 0.0
      %v9190 = vmax.f32 %v8525, 0.0
      %v9191 = vmax.f32 %v8669, 0.0
      %v9192 = vmax.f32 %v8671, 0.0
      %v9193 = vmax.f32 %v8815, 0.0
      %v9194 = vmax.f32 %v8817, 0.0
      %v9195 = vmax.f32 %v8961, 0.0
      %v9196 = vmax.f32 %v8963, 0.0
      %v9197 = vmax.f32 %v9107, 0.0
      %v9198 = vmax.f32 %v9109, 0.0
      %v9199 = vmax.f32 %v8381, 0.0
      %v9200 = vmax.f32 %v8383, 0.0
      %v9201 = vmax.f32 %v8527, 0.0
      %v9202 = vmax.f32 %v8529, 0.0
      %v9203 = vmax.f32 %v8673, 0.0
      %v9204 = vmax.f32 %v8675, 0.0
      %v9205 = vmax.f32 %v8819, 0.0
      %v9206 = vmax.f32 %v8821, 0.0
      %v9207 = vmax.f32 %v8965, 0.0
      %v9208 = vmax.f32 %v8967, 0.0
      %v9209 = vmax.f32 %v9111, 0.0
      %v9210 = vmax.f32 %v9113, 0.0
      %v9211 = vpack.c.bf16 %v9127, %v9115
      %v9212 = vpack.c.bf16 %v9128, %v9116
      %v9213 = vpack.c.bf16 %v9129, %v9117
      %v9214 = vpack.c.bf16 %v9130, %v9118
      %v9215 = vpack.c.bf16 %v9131, %v9119
      %v9216 = vpack.c.bf16 %v9132, %v9120
      %v9217 = vpack.c.bf16 %v9133, %v9121
      %v9218 = vpack.c.bf16 %v9134, %v9122
      %v9219 = vpack.c.bf16 %v9135, %v9123
      %v9220 = vpack.c.bf16 %v9136, %v9124
      %v9221 = vpack.c.bf16 %v9137, %v9125
      %v9222 = vpack.c.bf16 %v9138, %v9126
      %v9223 = vpack.c.bf16 %v9151, %v9139
      %v9224 = vpack.c.bf16 %v9152, %v9140
      %v9225 = vpack.c.bf16 %v9153, %v9141
      %v9226 = vpack.c.bf16 %v9154, %v9142
      %v9227 = vpack.c.bf16 %v9155, %v9143
      %v9228 = vpack.c.bf16 %v9156, %v9144
      %v9229 = vpack.c.bf16 %v9157, %v9145
      %v9230 = vpack.c.bf16 %v9158, %v9146
      %v9231 = vpack.c.bf16 %v9159, %v9147
      %v9232 = vpack.c.bf16 %v9160, %v9148
      %v9233 = vpack.c.bf16 %v9161, %v9149
      %v9234 = vpack.c.bf16 %v9162, %v9150
      %v9235 = vpack.c.bf16 %v9175, %v9163
      %v9236 = vpack.c.bf16 %v9176, %v9164
      %v9237 = vpack.c.bf16 %v9177, %v9165
      %v9238 = vpack.c.bf16 %v9178, %v9166
      %v9239 = vpack.c.bf16 %v9179, %v9167
      %v9240 = vpack.c.bf16 %v9180, %v9168
      %v9241 = vpack.c.bf16 %v9181, %v9169
      %v9242 = vpack.c.bf16 %v9182, %v9170
      %v9243 = vpack.c.bf16 %v9183, %v9171
      %v9244 = vpack.c.bf16 %v9184, %v9172
      %v9245 = vpack.c.bf16 %v9185, %v9173
      %v9246 = vpack.c.bf16 %v9186, %v9174
      %v9247 = vpack.c.bf16 %v9199, %v9187
      %v9248 = vpack.c.bf16 %v9200, %v9188
      %v9249 = vpack.c.bf16 %v9201, %v9189
      %v9250 = vpack.c.bf16 %v9202, %v9190
      %v9251 = vpack.c.bf16 %v9203, %v9191
      %v9252 = vpack.c.bf16 %v9204, %v9192
      %v9253 = vpack.c.bf16 %v9205, %v9193
      %v9254 = vpack.c.bf16 %v9206, %v9194
      %v9255 = vpack.c.bf16 %v9207, %v9195
      %v9256 = vpack.c.bf16 %v9208, %v9196
      %v9257 = vpack.c.bf16 %v9209, %v9197
      %v9258 = vpack.c.bf16 %v9210, %v9198
      %v9259 = vld [vmem:[%s10] sm:$0xff]
      %v9260 = vld [vmem:[%s10 + $0x8] sm:$0xf]
      %v9261 = vld [vmem:[%s10 + $0xc] sm:$0xff]
      %v9262 = vld [vmem:[%s10 + $0x14] sm:$0xf]
      %v9263 = vld [vmem:[%s10 + $0x18] sm:$0xff]
      %v9264 = vld [vmem:[%s10 + $0x20] sm:$0xf]
      %v9265 = vld [vmem:[%s10 + $0x24] sm:$0xff]
      %v9266 = vld [vmem:[%s10 + $0x2c] sm:$0xf]
      %v9267 = vld [vmem:[%s10 + $0x30] sm:$0xff]
      %v9268 = vld [vmem:[%s10 + $0x38] sm:$0xf]
      %v9269 = vld [vmem:[%s10 + $0x3c] sm:$0xff]
      %v9270 = vld [vmem:[%s10 + $0x44] sm:$0xf]
      %v9271 = vld [vmem:[%s10 + $0x48] sm:$0xff]
      %v9272 = vld [vmem:[%s10 + $0x50] sm:$0xf]
      %v9273 = vld [vmem:[%s10 + $0x54] sm:$0xff]
      %v9274 = vld [vmem:[%s10 + $0x5c] sm:$0xf]
      %v9275 = vld [vmem:[%s10 + $0x60] sm:$0xff]
      %v9276 = vld [vmem:[%s10 + $0x68] sm:$0xf]
      %v9277 = vld [vmem:[%s10 + $0x6c] sm:$0xff]
      %v9278 = vld [vmem:[%s10 + $0x74] sm:$0xf]
      %v9279 = vld [vmem:[%s10 + $0x78] sm:$0xff]
      %v9280 = vld [vmem:[%s10 + $0x80] sm:$0xf]
      %v9281 = vld [vmem:[%s10 + $0x84] sm:$0xff]
      %v9282 = vld [vmem:[%s10 + $0x8c] sm:$0xf]
      %v9283 = vld [vmem:[%s10 + $0x90] sm:$0xff]
      %v9284 = vld [vmem:[%s10 + $0x98] sm:$0xf]
      %v9285 = vld [vmem:[%s10 + $0x9c] sm:$0xff]
      %v9286 = vld [vmem:[%s10 + $0xa4] sm:$0xf]
      %v9287 = vld [vmem:[%s10 + $0xa8] sm:$0xff]
      %v9288 = vld [vmem:[%s10 + $0xb0] sm:$0xf]
      %v9289 = vld [vmem:[%s10 + $0xb4] sm:$0xff]
      %v9290 = vld [vmem:[%s10 + $0xbc] sm:$0xf]
      %v9291 = vld [vmem:[%s10 + $0xc0] sm:$0xff]
      %v9292 = vld [vmem:[%s10 + $0xc8] sm:$0xf]
      %v9293 = vld [vmem:[%s10 + $0xcc] sm:$0xff]
      %v9294 = vld [vmem:[%s10 + $0xd4] sm:$0xf]
      %v9295 = vld [vmem:[%s10 + $0xd8] sm:$0xff]
      %v9296 = vld [vmem:[%s10 + $0xe0] sm:$0xf]
      %v9297 = vld [vmem:[%s10 + $0xe4] sm:$0xff]
      %v9298 = vld [vmem:[%s10 + $0xec] sm:$0xf]
      %v9299 = vld [vmem:[%s10 + $0xf0] sm:$0xff]
      %v9300 = vld [vmem:[%s10 + $0xf8] sm:$0xf]
      %v9301 = vld [vmem:[%s10 + $0xfc] sm:$0xff]
      %v9302 = vld [vmem:[%s10 + $0x104] sm:$0xf]
      %v9303 = vld [vmem:[%s10 + $0x108] sm:$0xff]
      %v9304 = vld [vmem:[%s10 + $0x110] sm:$0xf]
      %v9305 = vld [vmem:[%s10 + $0x114] sm:$0xff]
      %v9306 = vld [vmem:[%s10 + $0x11c] sm:$0xf]
      %v9307 = vld [vmem:[%s10 + $0x120] sm:$0xff]
      %v9308 = vld [vmem:[%s10 + $0x128] sm:$0xf]
      %v9309 = vld [vmem:[%s10 + $0x12c] sm:$0xff]
      %v9310 = vld [vmem:[%s10 + $0x134] sm:$0xf]
      %v9311 = vld [vmem:[%s10 + $0x138] sm:$0xff]
      %v9312 = vld [vmem:[%s10 + $0x140] sm:$0xf]
      %v9313 = vld [vmem:[%s10 + $0x144] sm:$0xff]
      %v9314 = vld [vmem:[%s10 + $0x14c] sm:$0xf]
      %v9315 = vld [vmem:[%s10 + $0x150] sm:$0xff]
      %v9316 = vld [vmem:[%s10 + $0x158] sm:$0xf]
      %v9317 = vld [vmem:[%s10 + $0x15c] sm:$0xff]
      %v9318 = vld [vmem:[%s10 + $0x164] sm:$0xf]
      %v9319 = vld [vmem:[%s10 + $0x168] sm:$0xff]
      %v9320 = vld [vmem:[%s10 + $0x170] sm:$0xf]
      %v9321 = vld [vmem:[%s10 + $0x174] sm:$0xff]
      %v9322 = vld [vmem:[%s10 + $0x17c] sm:$0xf]
      %v9323 = vld [vmem:[%s10 + $0x180] sm:$0xff]
      %v9324 = vld [vmem:[%s10 + $0x188] sm:$0xf]
      %v9325 = vld [vmem:[%s10 + $0x18c] sm:$0xff]
      %v9326 = vld [vmem:[%s10 + $0x194] sm:$0xf]
      %v9327 = vld [vmem:[%s10 + $0x198] sm:$0xff]
      %v9328 = vld [vmem:[%s10 + $0x1a0] sm:$0xf]
      %v9329 = vld [vmem:[%s10 + $0x1a4] sm:$0xff]
      %v9330 = vld [vmem:[%s10 + $0x1ac] sm:$0xf]
      %v9331 = vld [vmem:[%s10 + $0x1b0] sm:$0xff]
      %v9332 = vld [vmem:[%s10 + $0x1b8] sm:$0xf]
      %v9333 = vld [vmem:[%s10 + $0x1bc] sm:$0xff]
      %v9334 = vld [vmem:[%s10 + $0x1c4] sm:$0xf]
      %v9335 = vld [vmem:[%s10 + $0x1c8] sm:$0xff]
      %v9336 = vld [vmem:[%s10 + $0x1d0] sm:$0xf]
      %v9337 = vld [vmem:[%s10 + $0x1d4] sm:$0xff]
      %v9338 = vld [vmem:[%s10 + $0x1dc] sm:$0xf]
      %v9339 = vld [vmem:[%s10 + $0x1e0] sm:$0xff]
      %v9340 = vld [vmem:[%s10 + $0x1e8] sm:$0xf]
      %v9341 = vld [vmem:[%s10 + $0x1ec] sm:$0xff]
      %v9342 = vld [vmem:[%s10 + $0x1f4] sm:$0xf]
      %v9343 = vld [vmem:[%s10 + $0x1f8] sm:$0xff]
      %v9344 = vld [vmem:[%s10 + $0x200] sm:$0xf]
      %v9345 = vld [vmem:[%s10 + $0x204] sm:$0xff]
      %v9346 = vld [vmem:[%s10 + $0x20c] sm:$0xf]
      %v9347 = vld [vmem:[%s10 + $0x210] sm:$0xff]
      %v9348 = vld [vmem:[%s10 + $0x218] sm:$0xf]
      %v9349 = vld [vmem:[%s10 + $0x21c] sm:$0xff]
      %v9350 = vld [vmem:[%s10 + $0x224] sm:$0xf]
      %v9351 = vld [vmem:[%s10 + $0x228] sm:$0xff]
      %v9352 = vld [vmem:[%s10 + $0x230] sm:$0xf]
      %v9353 = vld [vmem:[%s10 + $0x234] sm:$0xff]
      %v9354 = vld [vmem:[%s10 + $0x23c] sm:$0xf]
      %v9355 = vld [vmem:[%s10 + $0x240] sm:$0xff]
      %v9356 = vld [vmem:[%s10 + $0x248] sm:$0xf]
      %v9357 = vld [vmem:[%s10 + $0x24c] sm:$0xff]
      %v9358 = vld [vmem:[%s10 + $0x254] sm:$0xf]
      %v9359 = vld [vmem:[%s10 + $0x258] sm:$0xff]
      %v9360 = vld [vmem:[%s10 + $0x260] sm:$0xf]
      %v9361 = vld [vmem:[%s10 + $0x264] sm:$0xff]
      %v9362 = vld [vmem:[%s10 + $0x26c] sm:$0xf]
      %v9363 = vld [vmem:[%s10 + $0x270] sm:$0xff]
      %v9364 = vld [vmem:[%s10 + $0x278] sm:$0xf]
      %v9365 = vld [vmem:[%s10 + $0x27c] sm:$0xff]
      %v9366 = vld [vmem:[%s10 + $0x284] sm:$0xf]
      %v9367 = vld [vmem:[%s10 + $0x288] sm:$0xff]
      %v9368 = vld [vmem:[%s10 + $0x290] sm:$0xf]
      %v9369 = vld [vmem:[%s10 + $0x294] sm:$0xff]
      %v9370 = vld [vmem:[%s10 + $0x29c] sm:$0xf]
      %v9371 = vld [vmem:[%s10 + $0x2a0] sm:$0xff]
      %v9372 = vld [vmem:[%s10 + $0x2a8] sm:$0xf]
      %v9373 = vld [vmem:[%s10 + $0x2ac] sm:$0xff]
      %v9374 = vld [vmem:[%s10 + $0x2b4] sm:$0xf]
      %v9375 = vld [vmem:[%s10 + $0x2b8] sm:$0xff]
      %v9376 = vld [vmem:[%s10 + $0x2c0] sm:$0xf]
      %v9377 = vld [vmem:[%s10 + $0x2c4] sm:$0xff]
      %v9378 = vld [vmem:[%s10 + $0x2cc] sm:$0xf]
      %v9379 = vld [vmem:[%s10 + $0x2d0] sm:$0xff]
      %v9380 = vld [vmem:[%s10 + $0x2d8] sm:$0xf]
      %v9381 = vld [vmem:[%s10 + $0x2dc] sm:$0xff]
      %v9382 = vld [vmem:[%s10 + $0x2e4] sm:$0xf]
      %v9383 = vld [vmem:[%s10 + $0x2e8] sm:$0xff]
      %v9384 = vld [vmem:[%s10 + $0x2f0] sm:$0xf]
      %v9385 = vld [vmem:[%s10 + $0x2f4] sm:$0xff]
      %v9386 = vld [vmem:[%s10 + $0x2fc] sm:$0xf]
      %v9387 = vld [vmem:[%s10 + $0x300] sm:$0xff]
      %v9388 = vld [vmem:[%s10 + $0x308] sm:$0xf]
      %v9389 = vld [vmem:[%s10 + $0x30c] sm:$0xff]
      %v9390 = vld [vmem:[%s10 + $0x314] sm:$0xf]
      %v9391 = vld [vmem:[%s10 + $0x318] sm:$0xff]
      %v9392 = vld [vmem:[%s10 + $0x320] sm:$0xf]
      %v9393 = vld [vmem:[%s10 + $0x324] sm:$0xff]
      %v9394 = vld [vmem:[%s10 + $0x32c] sm:$0xf]
      %v9395 = vld [vmem:[%s10 + $0x330] sm:$0xff]
      %v9396 = vld [vmem:[%s10 + $0x338] sm:$0xf]
      %v9397 = vld [vmem:[%s10 + $0x33c] sm:$0xff]
      %v9398 = vld [vmem:[%s10 + $0x344] sm:$0xf]
      %v9399 = vld [vmem:[%s10 + $0x348] sm:$0xff]
      %v9400 = vld [vmem:[%s10 + $0x350] sm:$0xf]
      %v9401 = vld [vmem:[%s10 + $0x354] sm:$0xff]
      %v9402 = vld [vmem:[%s10 + $0x35c] sm:$0xf]
      %v9403 = vld [vmem:[%s10 + $0x360] sm:$0xff]
      %v9404 = vld [vmem:[%s10 + $0x368] sm:$0xf]
      %v9405 = vld [vmem:[%s10 + $0x36c] sm:$0xff]
      %v9406 = vld [vmem:[%s10 + $0x374] sm:$0xf]
      %v9407 = vld [vmem:[%s10 + $0x378] sm:$0xff]
      %v9408 = vld [vmem:[%s10 + $0x380] sm:$0xf]
      %v9409 = vld [vmem:[%s10 + $0x384] sm:$0xff]
      %v9410 = vld [vmem:[%s10 + $0x38c] sm:$0xf]
      %v9411 = vld [vmem:[%s10 + $0x390] sm:$0xff]
      %v9412 = vld [vmem:[%s10 + $0x398] sm:$0xf]
      %v9413 = vld [vmem:[%s10 + $0x39c] sm:$0xff]
      %v9414 = vld [vmem:[%s10 + $0x3a4] sm:$0xf]
      %v9415 = vld [vmem:[%s10 + $0x3a8] sm:$0xff]
      %v9416 = vld [vmem:[%s10 + $0x3b0] sm:$0xf]
      %v9417 = vld [vmem:[%s10 + $0x3b4] sm:$0xff]
      %v9418 = vld [vmem:[%s10 + $0x3bc] sm:$0xf]
      %v9419 = vld [vmem:[%s10 + $0x3c0] sm:$0xff]
      %v9420 = vld [vmem:[%s10 + $0x3c8] sm:$0xf]
      %v9421 = vld [vmem:[%s10 + $0x3cc] sm:$0xff]
      %v9422 = vld [vmem:[%s10 + $0x3d4] sm:$0xf]
      %v9423 = vld [vmem:[%s10 + $0x3d8] sm:$0xff]
      %v9424 = vld [vmem:[%s10 + $0x3e0] sm:$0xf]
      %v9425 = vld [vmem:[%s10 + $0x3e4] sm:$0xff]
      %v9426 = vld [vmem:[%s10 + $0x3ec] sm:$0xf]
      %v9427 = vld [vmem:[%s10 + $0x3f0] sm:$0xff]
      %v9428 = vld [vmem:[%s10 + $0x3f8] sm:$0xf]
      %v9429 = vld [vmem:[%s10 + $0x3fc] sm:$0xff]
      %v9430 = vld [vmem:[%s10 + $0x404] sm:$0xf]
      %v9431 = vld [vmem:[%s10 + $0x408] sm:$0xff]
      %v9432 = vld [vmem:[%s10 + $0x410] sm:$0xf]
      %v9433 = vld [vmem:[%s10 + $0x414] sm:$0xff]
      %v9434 = vld [vmem:[%s10 + $0x41c] sm:$0xf]
      %v9435 = vld [vmem:[%s10 + $0x420] sm:$0xff]
      %v9436 = vld [vmem:[%s10 + $0x428] sm:$0xf]
      %v9437 = vld [vmem:[%s10 + $0x42c] sm:$0xff]
      %v9438 = vld [vmem:[%s10 + $0x434] sm:$0xf]
      %v9439 = vld [vmem:[%s10 + $0x438] sm:$0xff]
      %v9440 = vld [vmem:[%s10 + $0x440] sm:$0xf]
      %v9441 = vld [vmem:[%s10 + $0x444] sm:$0xff]
      %v9442 = vld [vmem:[%s10 + $0x44c] sm:$0xf]
      %v9443 = vld [vmem:[%s10 + $0x450] sm:$0xff]
      %v9444 = vld [vmem:[%s10 + $0x458] sm:$0xf]
      %v9445 = vld [vmem:[%s10 + $0x45c] sm:$0xff]
      %v9446 = vld [vmem:[%s10 + $0x464] sm:$0xf]
      %v9447 = vld [vmem:[%s10 + $0x468] sm:$0xff]
      %v9448 = vld [vmem:[%s10 + $0x470] sm:$0xf]
      %v9449 = vld [vmem:[%s10 + $0x474] sm:$0xff]
      %v9450 = vld [vmem:[%s10 + $0x47c] sm:$0xf]
      %v9451 = vld [vmem:[%s10 + $0x480] sm:$0xff]
      %v9452 = vld [vmem:[%s10 + $0x488] sm:$0xf]
      %v9453 = vld [vmem:[%s10 + $0x48c] sm:$0xff]
      %v9454 = vld [vmem:[%s10 + $0x494] sm:$0xf]
      %v9455 = vld [vmem:[%s10 + $0x498] sm:$0xff]
      %v9456 = vld [vmem:[%s10 + $0x4a0] sm:$0xf]
      %v9457 = vld [vmem:[%s10 + $0x4a4] sm:$0xff]
      %v9458 = vld [vmem:[%s10 + $0x4ac] sm:$0xf]
      %v9459 = vld [vmem:[%s10 + $0x4b0] sm:$0xff]
      %v9460 = vld [vmem:[%s10 + $0x4b8] sm:$0xf]
      %v9461 = vld [vmem:[%s10 + $0x4bc] sm:$0xff]
      %v9462 = vld [vmem:[%s10 + $0x4c4] sm:$0xf]
      %v9463 = vld [vmem:[%s10 + $0x4c8] sm:$0xff]
      %v9464 = vld [vmem:[%s10 + $0x4d0] sm:$0xf]
      %v9465 = vld [vmem:[%s10 + $0x4d4] sm:$0xff]
      %v9466 = vld [vmem:[%s10 + $0x4dc] sm:$0xf]
      %v9467 = vld [vmem:[%s10 + $0x4e0] sm:$0xff]
      %v9468 = vld [vmem:[%s10 + $0x4e8] sm:$0xf]
      %v9469 = vld [vmem:[%s10 + $0x4ec] sm:$0xff]
      %v9470 = vld [vmem:[%s10 + $0x4f4] sm:$0xf]
      %v9471 = vld [vmem:[%s10 + $0x4f8] sm:$0xff]
      %v9472 = vld [vmem:[%s10 + $0x500] sm:$0xf]
      %v9473 = vld [vmem:[%s10 + $0x504] sm:$0xff]
      %v9474 = vld [vmem:[%s10 + $0x50c] sm:$0xf]
      %v9475 = vld [vmem:[%s10 + $0x510] sm:$0xff]
      %v9476 = vld [vmem:[%s10 + $0x518] sm:$0xf]
      %v9477 = vld [vmem:[%s10 + $0x51c] sm:$0xff]
      %v9478 = vld [vmem:[%s10 + $0x524] sm:$0xf]
      %v9479 = vld [vmem:[%s10 + $0x528] sm:$0xff]
      %v9480 = vld [vmem:[%s10 + $0x530] sm:$0xf]
      %v9481 = vld [vmem:[%s10 + $0x534] sm:$0xff]
      %v9482 = vld [vmem:[%s10 + $0x53c] sm:$0xf]
      %v9483 = vld [vmem:[%s10 + $0x540] sm:$0xff]
      %v9484 = vld [vmem:[%s10 + $0x548] sm:$0xf]
      %v9485 = vld [vmem:[%s10 + $0x54c] sm:$0xff]
      %v9486 = vld [vmem:[%s10 + $0x554] sm:$0xf]
      %v9487 = vld [vmem:[%s10 + $0x558] sm:$0xff]
      %v9488 = vld [vmem:[%s10 + $0x560] sm:$0xf]
      %v9489 = vld [vmem:[%s10 + $0x564] sm:$0xff]
      %v9490 = vld [vmem:[%s10 + $0x56c] sm:$0xf]
      %v9491 = vld [vmem:[%s10 + $0x570] sm:$0xff]
      %v9492 = vld [vmem:[%s10 + $0x578] sm:$0xf]
      %v9493 = vld [vmem:[%s10 + $0x57c] sm:$0xff]
      %v9494 = vld [vmem:[%s10 + $0x584] sm:$0xf]
      %v9495 = vld [vmem:[%s10 + $0x588] sm:$0xff]
      %v9496 = vld [vmem:[%s10 + $0x590] sm:$0xf]
      %v9497 = vld [vmem:[%s10 + $0x594] sm:$0xff]
      %v9498 = vld [vmem:[%s10 + $0x59c] sm:$0xf]
      %v9499 = vld [vmem:[%s10 + $0x5a0] sm:$0xff]
      %v9500 = vld [vmem:[%s10 + $0x5a8] sm:$0xf]
      %v9501 = vld [vmem:[%s10 + $0x5ac] sm:$0xff]
      %v9502 = vld [vmem:[%s10 + $0x5b4] sm:$0xf]
      %v9503 = vld [vmem:[%s10 + $0x5b8] sm:$0xff]
      %v9504 = vld [vmem:[%s10 + $0x5c0] sm:$0xf]
      %v9505 = vld [vmem:[%s10 + $0x5c4] sm:$0xff]
      %v9506 = vld [vmem:[%s10 + $0x5cc] sm:$0xf]
      %v9507 = vld [vmem:[%s10 + $0x5d0] sm:$0xff]
      %v9508 = vld [vmem:[%s10 + $0x5d8] sm:$0xf]
      %v9509 = vld [vmem:[%s10 + $0x5dc] sm:$0xff]
      %v9510 = vld [vmem:[%s10 + $0x5e4] sm:$0xf]
      %v9511 = vld [vmem:[%s10 + $0x5e8] sm:$0xff]
      %v9512 = vld [vmem:[%s10 + $0x5f0] sm:$0xf]
      %v9513 = vld [vmem:[%s10 + $0x5f4] sm:$0xff]
      %v9514 = vld [vmem:[%s10 + $0x5fc] sm:$0xf]
      %v9515 = vld [vmem:[%s10 + $0x600] sm:$0xff]
      %v9516 = vld [vmem:[%s10 + $0x608] sm:$0xf]
      %v9517 = vld [vmem:[%s10 + $0x60c] sm:$0xff]
      %v9518 = vld [vmem:[%s10 + $0x614] sm:$0xf]
      %v9519 = vld [vmem:[%s10 + $0x618] sm:$0xff]
      %v9520 = vld [vmem:[%s10 + $0x620] sm:$0xf]
      %v9521 = vld [vmem:[%s10 + $0x624] sm:$0xff]
      %v9522 = vld [vmem:[%s10 + $0x62c] sm:$0xf]
      %v9523 = vld [vmem:[%s10 + $0x630] sm:$0xff]
      %v9524 = vld [vmem:[%s10 + $0x638] sm:$0xf]
      %v9525 = vld [vmem:[%s10 + $0x63c] sm:$0xff]
      %v9526 = vld [vmem:[%s10 + $0x644] sm:$0xf]
      %v9527 = vld [vmem:[%s10 + $0x648] sm:$0xff]
      %v9528 = vld [vmem:[%s10 + $0x650] sm:$0xf]
      %v9529 = vld [vmem:[%s10 + $0x654] sm:$0xff]
      %v9530 = vld [vmem:[%s10 + $0x65c] sm:$0xf]
      %v9531 = vld [vmem:[%s10 + $0x660] sm:$0xff]
      %v9532 = vld [vmem:[%s10 + $0x668] sm:$0xf]
      %v9533 = vld [vmem:[%s10 + $0x66c] sm:$0xff]
      %v9534 = vld [vmem:[%s10 + $0x674] sm:$0xf]
      %v9535 = vld [vmem:[%s10 + $0x678] sm:$0xff]
      %v9536 = vld [vmem:[%s10 + $0x680] sm:$0xf]
      %v9537 = vld [vmem:[%s10 + $0x684] sm:$0xff]
      %v9538 = vld [vmem:[%s10 + $0x68c] sm:$0xf]
      %v9539 = vld [vmem:[%s10 + $0x690] sm:$0xff]
      %v9540 = vld [vmem:[%s10 + $0x698] sm:$0xf]
      %v9541 = vld [vmem:[%s10 + $0x69c] sm:$0xff]
      %v9542 = vld [vmem:[%s10 + $0x6a4] sm:$0xf]
      %v9543 = vld [vmem:[%s10 + $0x6a8] sm:$0xff]
      %v9544 = vld [vmem:[%s10 + $0x6b0] sm:$0xf]
      %v9545 = vld [vmem:[%s10 + $0x6b4] sm:$0xff]
      %v9546 = vld [vmem:[%s10 + $0x6bc] sm:$0xf]
      %v9547 = vld [vmem:[%s10 + $0x6c0] sm:$0xff]
      %v9548 = vld [vmem:[%s10 + $0x6c8] sm:$0xf]
      %v9549 = vld [vmem:[%s10 + $0x6cc] sm:$0xff]
      %v9550 = vld [vmem:[%s10 + $0x6d4] sm:$0xf]
      %v9551 = vld [vmem:[%s10 + $0x6d8] sm:$0xff]
      %v9552 = vld [vmem:[%s10 + $0x6e0] sm:$0xf]
      %v9553 = vld [vmem:[%s10 + $0x6e4] sm:$0xff]
      %v9554 = vld [vmem:[%s10 + $0x6ec] sm:$0xf]
      %v9555 = vld [vmem:[%s10 + $0x6f0] sm:$0xff]
      %v9556 = vld [vmem:[%s10 + $0x6f8] sm:$0xf]
      %v9557 = vld [vmem:[%s10 + $0x6fc] sm:$0xff]
      %v9558 = vld [vmem:[%s10 + $0x704] sm:$0xf]
      %v9559 = vld [vmem:[%s10 + $0x708] sm:$0xff]
      %v9560 = vld [vmem:[%s10 + $0x710] sm:$0xf]
      %v9561 = vld [vmem:[%s10 + $0x714] sm:$0xff]
      %v9562 = vld [vmem:[%s10 + $0x71c] sm:$0xf]
      %v9563 = vld [vmem:[%s10 + $0x720] sm:$0xff]
      %v9564 = vld [vmem:[%s10 + $0x728] sm:$0xf]
      %v9565 = vld [vmem:[%s10 + $0x72c] sm:$0xff]
      %v9566 = vld [vmem:[%s10 + $0x734] sm:$0xf]
      %v9567 = vld [vmem:[%s10 + $0x738] sm:$0xff]
      %v9568 = vld [vmem:[%s10 + $0x740] sm:$0xf]
      %v9569 = vld [vmem:[%s10 + $0x744] sm:$0xff]
      %v9570 = vld [vmem:[%s10 + $0x74c] sm:$0xf]
      %v9571 = vld [vmem:[%s10 + $0x750] sm:$0xff]
      %v9572 = vld [vmem:[%s10 + $0x758] sm:$0xf]
      %v9573 = vld [vmem:[%s10 + $0x75c] sm:$0xff]
      %v9574 = vld [vmem:[%s10 + $0x764] sm:$0xf]
      %v9575 = vld [vmem:[%s10 + $0x768] sm:$0xff]
      %v9576 = vld [vmem:[%s10 + $0x770] sm:$0xf]
      %v9577 = vld [vmem:[%s10 + $0x774] sm:$0xff]
      %v9578 = vld [vmem:[%s10 + $0x77c] sm:$0xf]
      %v9579 = vld [vmem:[%s10 + $0x780] sm:$0xff]
      %v9580 = vld [vmem:[%s10 + $0x788] sm:$0xf]
      %v9581 = vld [vmem:[%s10 + $0x78c] sm:$0xff]
      %v9582 = vld [vmem:[%s10 + $0x794] sm:$0xf]
      %v9583 = vld [vmem:[%s10 + $0x798] sm:$0xff]
      %v9584 = vld [vmem:[%s10 + $0x7a0] sm:$0xf]
      %v9585 = vld [vmem:[%s10 + $0x7a4] sm:$0xff]
      %v9586 = vld [vmem:[%s10 + $0x7ac] sm:$0xf]
      %v9587 = vld [vmem:[%s10 + $0x7b0] sm:$0xff]
      %v9588 = vld [vmem:[%s10 + $0x7b8] sm:$0xf]
      %v9589 = vld [vmem:[%s10 + $0x7bc] sm:$0xff]
      %v9590 = vld [vmem:[%s10 + $0x7c4] sm:$0xf]
      %v9591 = vld [vmem:[%s10 + $0x7c8] sm:$0xff]
      %v9592 = vld [vmem:[%s10 + $0x7d0] sm:$0xf]
      %v9593 = vld [vmem:[%s10 + $0x7d4] sm:$0xff]
      %v9594 = vld [vmem:[%s10 + $0x7dc] sm:$0xf]
      %v9595 = vld [vmem:[%s10 + $0x7e0] sm:$0xff]
      %v9596 = vld [vmem:[%s10 + $0x7e8] sm:$0xf]
      %v9597 = vld [vmem:[%s10 + $0x7ec] sm:$0xff]
      %v9598 = vld [vmem:[%s10 + $0x7f4] sm:$0xf]
      %v9599 = vld [vmem:[%s10 + $0x7f8] sm:$0xff]
      %v9600 = vld [vmem:[%s10 + $0x800] sm:$0xf]
      %v9601 = vld [vmem:[%s10 + $0x804] sm:$0xff]
      %v9602 = vld [vmem:[%s10 + $0x80c] sm:$0xf]
      %v9603 = vld [vmem:[%s10 + $0x810] sm:$0xff]
      %v9604 = vld [vmem:[%s10 + $0x818] sm:$0xf]
      %v9605 = vld [vmem:[%s10 + $0x81c] sm:$0xff]
      %v9606 = vld [vmem:[%s10 + $0x824] sm:$0xf]
      %v9607 = vld [vmem:[%s10 + $0x828] sm:$0xff]
      %v9608 = vld [vmem:[%s10 + $0x830] sm:$0xf]
      %v9609 = vld [vmem:[%s10 + $0x834] sm:$0xff]
      %v9610 = vld [vmem:[%s10 + $0x83c] sm:$0xf]
      %v9611 = vld [vmem:[%s10 + $0x840] sm:$0xff]
      %v9612 = vld [vmem:[%s10 + $0x848] sm:$0xf]
      %v9613 = vld [vmem:[%s10 + $0x84c] sm:$0xff]
      %v9614 = vld [vmem:[%s10 + $0x854] sm:$0xf]
      %v9615 = vld [vmem:[%s10 + $0x858] sm:$0xff]
      %v9616 = vld [vmem:[%s10 + $0x860] sm:$0xf]
      %v9617 = vld [vmem:[%s10 + $0x864] sm:$0xff]
      %v9618 = vld [vmem:[%s10 + $0x86c] sm:$0xf]
      %v9619 = vld [vmem:[%s10 + $0x870] sm:$0xff]
      %v9620 = vld [vmem:[%s10 + $0x878] sm:$0xf]
      %v9621 = vld [vmem:[%s10 + $0x87c] sm:$0xff]
      %v9622 = vld [vmem:[%s10 + $0x884] sm:$0xf]
      %v9623 = vld [vmem:[%s10 + $0x888] sm:$0xff]
      %v9624 = vld [vmem:[%s10 + $0x890] sm:$0xf]
      %v9625 = vld [vmem:[%s10 + $0x894] sm:$0xff]
      %v9626 = vld [vmem:[%s10 + $0x89c] sm:$0xf]
      %v9627 = vld [vmem:[%s10 + $0x8a0] sm:$0xff]
      %v9628 = vld [vmem:[%s10 + $0x8a8] sm:$0xf]
      %v9629 = vld [vmem:[%s10 + $0x8ac] sm:$0xff]
      %v9630 = vld [vmem:[%s10 + $0x8b4] sm:$0xf]
      %v9631 = vld [vmem:[%s10 + $0x8b8] sm:$0xff]
      %v9632 = vld [vmem:[%s10 + $0x8c0] sm:$0xf]
      %v9633 = vld [vmem:[%s10 + $0x8c4] sm:$0xff]
      %v9634 = vld [vmem:[%s10 + $0x8cc] sm:$0xf]
      %v9635 = vld [vmem:[%s10 + $0x8d0] sm:$0xff]
      %v9636 = vld [vmem:[%s10 + $0x8d8] sm:$0xf]
      %v9637 = vld [vmem:[%s10 + $0x8dc] sm:$0xff]
      %v9638 = vld [vmem:[%s10 + $0x8e4] sm:$0xf]
      %v9639 = vld [vmem:[%s10 + $0x8e8] sm:$0xff]
      %v9640 = vld [vmem:[%s10 + $0x8f0] sm:$0xf]
      %v9641 = vld [vmem:[%s10 + $0x8f4] sm:$0xff]
      %v9642 = vld [vmem:[%s10 + $0x8fc] sm:$0xf]
      %v9643 = vld [vmem:[%s11] sm:$0x7]
      %v9645 = vlaneseq
      %v9646 = vshrl.u32 %v9645, 7
      %v9647 = vsub.s32 0, %v9646
      %v9648 = vrot.slane %v9643, %v9647
      %v9649 = vlaneseq
      %v9650 = vshrl.u32 %v9649, 7
      %v9651 = vsub.s32 1, %v9650
      %v9652 = vrot.slane %v9643, %v9651
      %v9653 = vlaneseq
      %v9654 = vshrl.u32 %v9653, 7
      %v9655 = vsub.s32 2, %v9654
      %v9656 = vrot.slane %v9643, %v9655
      %v10044 = vunpack.c.l.b16 %v9259
      %v10045 = vunpack.c.h.b16 %v9259
      %v10046 = vunpack.c.l.b16 %v9260
      %v10047 = vunpack.c.l.b16 %v9261
      %v10048 = vunpack.c.h.b16 %v9261
      %v10049 = vunpack.c.l.b16 %v9262
      %v10050 = vunpack.c.l.b16 %v9263
      %v10051 = vunpack.c.h.b16 %v9263
      %v10052 = vunpack.c.l.b16 %v9264
      %v10053 = vunpack.c.l.b16 %v9265
      %v10054 = vunpack.c.h.b16 %v9265
      %v10055 = vunpack.c.l.b16 %v9266
      %v10056 = vunpack.c.l.b16 %v9267
      %v10057 = vunpack.c.h.b16 %v9267
      %v10058 = vunpack.c.l.b16 %v9268
      %v10059 = vunpack.c.l.b16 %v9269
      %v10060 = vunpack.c.h.b16 %v9269
      %v10061 = vunpack.c.l.b16 %v9270
      %v10062 = vunpack.c.l.b16 %v9271
      %v10063 = vunpack.c.h.b16 %v9271
      %v10064 = vunpack.c.l.b16 %v9272
      %v10065 = vunpack.c.l.b16 %v9273
      %v10066 = vunpack.c.h.b16 %v9273
      %v10067 = vunpack.c.l.b16 %v9274
      %v10068 = vunpack.c.l.b16 %v9275
      %v10069 = vunpack.c.h.b16 %v9275
      %v10070 = vunpack.c.l.b16 %v9276
      %v10071 = vunpack.c.l.b16 %v9277
      %v10072 = vunpack.c.h.b16 %v9277
      %v10073 = vunpack.c.l.b16 %v9278
      %v10074 = vunpack.c.l.b16 %v9279
      %v10075 = vunpack.c.h.b16 %v9279
      %v10076 = vunpack.c.l.b16 %v9280
      %v10077 = vunpack.c.l.b16 %v9281
      %v10078 = vunpack.c.h.b16 %v9281
      %v10079 = vunpack.c.l.b16 %v9282
      %v10080 = vunpack.c.l.b16 %v9283
      %v10081 = vunpack.c.h.b16 %v9283
      %v10082 = vunpack.c.l.b16 %v9284
      %v10083 = vunpack.c.l.b16 %v9285
      %v10084 = vunpack.c.h.b16 %v9285
      %v10085 = vunpack.c.l.b16 %v9286
      %v10086 = vunpack.c.l.b16 %v9287
      %v10087 = vunpack.c.h.b16 %v9287
      %v10088 = vunpack.c.l.b16 %v9288
      %v10089 = vunpack.c.l.b16 %v9289
      %v10090 = vunpack.c.h.b16 %v9289
      %v10091 = vunpack.c.l.b16 %v9290
      %v10092 = vunpack.c.l.b16 %v9291
      %v10093 = vunpack.c.h.b16 %v9291
      %v10094 = vunpack.c.l.b16 %v9292
      %v10095 = vunpack.c.l.b16 %v9293
      %v10096 = vunpack.c.h.b16 %v9293
      %v10097 = vunpack.c.l.b16 %v9294
      %v10098 = vunpack.c.l.b16 %v9295
      %v10099 = vunpack.c.h.b16 %v9295
      %v10100 = vunpack.c.l.b16 %v9296
      %v10101 = vunpack.c.l.b16 %v9297
      %v10102 = vunpack.c.h.b16 %v9297
      %v10103 = vunpack.c.l.b16 %v9298
      %v10104 = vunpack.c.l.b16 %v9299
      %v10105 = vunpack.c.h.b16 %v9299
      %v10106 = vunpack.c.l.b16 %v9300
      %v10107 = vunpack.c.l.b16 %v9301
      %v10108 = vunpack.c.h.b16 %v9301
      %v10109 = vunpack.c.l.b16 %v9302
      %v10110 = vunpack.c.l.b16 %v9303
      %v10111 = vunpack.c.h.b16 %v9303
      %v10112 = vunpack.c.l.b16 %v9304
      %v10113 = vunpack.c.l.b16 %v9305
      %v10114 = vunpack.c.h.b16 %v9305
      %v10115 = vunpack.c.l.b16 %v9306
      %v10116 = vunpack.c.l.b16 %v9307
      %v10117 = vunpack.c.h.b16 %v9307
      %v10118 = vunpack.c.l.b16 %v9308
      %v10119 = vunpack.c.l.b16 %v9309
      %v10120 = vunpack.c.h.b16 %v9309
      %v10121 = vunpack.c.l.b16 %v9310
      %v10122 = vunpack.c.l.b16 %v9311
      %v10123 = vunpack.c.h.b16 %v9311
      %v10124 = vunpack.c.l.b16 %v9312
      %v10125 = vunpack.c.l.b16 %v9313
      %v10126 = vunpack.c.h.b16 %v9313
      %v10127 = vunpack.c.l.b16 %v9314
      %v10128 = vunpack.c.l.b16 %v9315
      %v10129 = vunpack.c.h.b16 %v9315
      %v10130 = vunpack.c.l.b16 %v9316
      %v10131 = vunpack.c.l.b16 %v9317
      %v10132 = vunpack.c.h.b16 %v9317
      %v10133 = vunpack.c.l.b16 %v9318
      %v10134 = vunpack.c.l.b16 %v9319
      %v10135 = vunpack.c.h.b16 %v9319
      %v10136 = vunpack.c.l.b16 %v9320
      %v10137 = vunpack.c.l.b16 %v9321
      %v10138 = vunpack.c.h.b16 %v9321
      %v10139 = vunpack.c.l.b16 %v9322
      %v10140 = vunpack.c.l.b16 %v9323
      %v10141 = vunpack.c.h.b16 %v9323
      %v10142 = vunpack.c.l.b16 %v9324
      %v10143 = vunpack.c.l.b16 %v9325
      %v10144 = vunpack.c.h.b16 %v9325
      %v10145 = vunpack.c.l.b16 %v9326
      %v10146 = vunpack.c.l.b16 %v9327
      %v10147 = vunpack.c.h.b16 %v9327
      %v10148 = vunpack.c.l.b16 %v9328
      %v10149 = vunpack.c.l.b16 %v9329
      %v10150 = vunpack.c.h.b16 %v9329
      %v10151 = vunpack.c.l.b16 %v9330
      %v10152 = vunpack.c.l.b16 %v9331
      %v10153 = vunpack.c.h.b16 %v9331
      %v10154 = vunpack.c.l.b16 %v9332
      %v10155 = vunpack.c.l.b16 %v9333
      %v10156 = vunpack.c.h.b16 %v9333
      %v10157 = vunpack.c.l.b16 %v9334
      %v10158 = vunpack.c.l.b16 %v9335
      %v10159 = vunpack.c.h.b16 %v9335
      %v10160 = vunpack.c.l.b16 %v9336
      %v10161 = vunpack.c.l.b16 %v9337
      %v10162 = vunpack.c.h.b16 %v9337
      %v10163 = vunpack.c.l.b16 %v9338
      %v10164 = vunpack.c.l.b16 %v9339
      %v10165 = vunpack.c.h.b16 %v9339
      %v10166 = vunpack.c.l.b16 %v9340
      %v10167 = vunpack.c.l.b16 %v9341
      %v10168 = vunpack.c.h.b16 %v9341
      %v10169 = vunpack.c.l.b16 %v9342
      %v10170 = vunpack.c.l.b16 %v9343
      %v10171 = vunpack.c.h.b16 %v9343
      %v10172 = vunpack.c.l.b16 %v9344
      %v10173 = vunpack.c.l.b16 %v9345
      %v10174 = vunpack.c.h.b16 %v9345
      %v10175 = vunpack.c.l.b16 %v9346
      %v10176 = vunpack.c.l.b16 %v9347
      %v10177 = vunpack.c.h.b16 %v9347
      %v10178 = vunpack.c.l.b16 %v9348
      %v10179 = vunpack.c.l.b16 %v9349
      %v10180 = vunpack.c.h.b16 %v9349
      %v10181 = vunpack.c.l.b16 %v9350
      %v10182 = vunpack.c.l.b16 %v9351
      %v10183 = vunpack.c.h.b16 %v9351
      %v10184 = vunpack.c.l.b16 %v9352
      %v10185 = vunpack.c.l.b16 %v9353
      %v10186 = vunpack.c.h.b16 %v9353
      %v10187 = vunpack.c.l.b16 %v9354
      %v10188 = vunpack.c.l.b16 %v9355
      %v10189 = vunpack.c.h.b16 %v9355
      %v10190 = vunpack.c.l.b16 %v9356
      %v10191 = vunpack.c.l.b16 %v9357
      %v10192 = vunpack.c.h.b16 %v9357
      %v10193 = vunpack.c.l.b16 %v9358
      %v10194 = vunpack.c.l.b16 %v9359
      %v10195 = vunpack.c.h.b16 %v9359
      %v10196 = vunpack.c.l.b16 %v9360
      %v10197 = vunpack.c.l.b16 %v9361
      %v10198 = vunpack.c.h.b16 %v9361
      %v10199 = vunpack.c.l.b16 %v9362
      %v10200 = vunpack.c.l.b16 %v9363
      %v10201 = vunpack.c.h.b16 %v9363
      %v10202 = vunpack.c.l.b16 %v9364
      %v10203 = vunpack.c.l.b16 %v9365
      %v10204 = vunpack.c.h.b16 %v9365
      %v10205 = vunpack.c.l.b16 %v9366
      %v10206 = vunpack.c.l.b16 %v9367
      %v10207 = vunpack.c.h.b16 %v9367
      %v10208 = vunpack.c.l.b16 %v9368
      %v10209 = vunpack.c.l.b16 %v9369
      %v10210 = vunpack.c.h.b16 %v9369
      %v10211 = vunpack.c.l.b16 %v9370
      %v10212 = vunpack.c.l.b16 %v9371
      %v10213 = vunpack.c.h.b16 %v9371
      %v10214 = vunpack.c.l.b16 %v9372
      %v10215 = vunpack.c.l.b16 %v9373
      %v10216 = vunpack.c.h.b16 %v9373
      %v10217 = vunpack.c.l.b16 %v9374
      %v10218 = vunpack.c.l.b16 %v9375
      %v10219 = vunpack.c.h.b16 %v9375
      %v10220 = vunpack.c.l.b16 %v9376
      %v10221 = vunpack.c.l.b16 %v9377
      %v10222 = vunpack.c.h.b16 %v9377
      %v10223 = vunpack.c.l.b16 %v9378
      %v10224 = vunpack.c.l.b16 %v9379
      %v10225 = vunpack.c.h.b16 %v9379
      %v10226 = vunpack.c.l.b16 %v9380
      %v10227 = vunpack.c.l.b16 %v9381
      %v10228 = vunpack.c.h.b16 %v9381
      %v10229 = vunpack.c.l.b16 %v9382
      %v10230 = vunpack.c.l.b16 %v9383
      %v10231 = vunpack.c.h.b16 %v9383
      %v10232 = vunpack.c.l.b16 %v9384
      %v10233 = vunpack.c.l.b16 %v9385
      %v10234 = vunpack.c.h.b16 %v9385
      %v10235 = vunpack.c.l.b16 %v9386
      %v10236 = vunpack.c.l.b16 %v9387
      %v10237 = vunpack.c.h.b16 %v9387
      %v10238 = vunpack.c.l.b16 %v9388
      %v10239 = vunpack.c.l.b16 %v9389
      %v10240 = vunpack.c.h.b16 %v9389
      %v10241 = vunpack.c.l.b16 %v9390
      %v10242 = vunpack.c.l.b16 %v9391
      %v10243 = vunpack.c.h.b16 %v9391
      %v10244 = vunpack.c.l.b16 %v9392
      %v10245 = vunpack.c.l.b16 %v9393
      %v10246 = vunpack.c.h.b16 %v9393
      %v10247 = vunpack.c.l.b16 %v9394
      %v10248 = vunpack.c.l.b16 %v9395
      %v10249 = vunpack.c.h.b16 %v9395
      %v10250 = vunpack.c.l.b16 %v9396
      %v10251 = vunpack.c.l.b16 %v9397
      %v10252 = vunpack.c.h.b16 %v9397
      %v10253 = vunpack.c.l.b16 %v9398
      %v10254 = vunpack.c.l.b16 %v9399
      %v10255 = vunpack.c.h.b16 %v9399
      %v10256 = vunpack.c.l.b16 %v9400
      %v10257 = vunpack.c.l.b16 %v9401
      %v10258 = vunpack.c.h.b16 %v9401
      %v10259 = vunpack.c.l.b16 %v9402
      %v10260 = vunpack.c.l.b16 %v9403
      %v10261 = vunpack.c.h.b16 %v9403
      %v10262 = vunpack.c.l.b16 %v9404
      %v10263 = vunpack.c.l.b16 %v9405
      %v10264 = vunpack.c.h.b16 %v9405
      %v10265 = vunpack.c.l.b16 %v9406
      %v10266 = vunpack.c.l.b16 %v9407
      %v10267 = vunpack.c.h.b16 %v9407
      %v10268 = vunpack.c.l.b16 %v9408
      %v10269 = vunpack.c.l.b16 %v9409
      %v10270 = vunpack.c.h.b16 %v9409
      %v10271 = vunpack.c.l.b16 %v9410
      %v10272 = vunpack.c.l.b16 %v9411
      %v10273 = vunpack.c.h.b16 %v9411
      %v10274 = vunpack.c.l.b16 %v9412
      %v10275 = vunpack.c.l.b16 %v9413
      %v10276 = vunpack.c.h.b16 %v9413
      %v10277 = vunpack.c.l.b16 %v9414
      %v10278 = vunpack.c.l.b16 %v9415
      %v10279 = vunpack.c.h.b16 %v9415
      %v10280 = vunpack.c.l.b16 %v9416
      %v10281 = vunpack.c.l.b16 %v9417
      %v10282 = vunpack.c.h.b16 %v9417
      %v10283 = vunpack.c.l.b16 %v9418
      %v10284 = vunpack.c.l.b16 %v9419
      %v10285 = vunpack.c.h.b16 %v9419
      %v10286 = vunpack.c.l.b16 %v9420
      %v10287 = vunpack.c.l.b16 %v9421
      %v10288 = vunpack.c.h.b16 %v9421
      %v10289 = vunpack.c.l.b16 %v9422
      %v10290 = vunpack.c.l.b16 %v9423
      %v10291 = vunpack.c.h.b16 %v9423
      %v10292 = vunpack.c.l.b16 %v9424
      %v10293 = vunpack.c.l.b16 %v9425
      %v10294 = vunpack.c.h.b16 %v9425
      %v10295 = vunpack.c.l.b16 %v9426
      %v10296 = vunpack.c.l.b16 %v9427
      %v10297 = vunpack.c.h.b16 %v9427
      %v10298 = vunpack.c.l.b16 %v9428
      %v10299 = vunpack.c.l.b16 %v9429
      %v10300 = vunpack.c.h.b16 %v9429
      %v10301 = vunpack.c.l.b16 %v9430
      %v10302 = vunpack.c.l.b16 %v9431
      %v10303 = vunpack.c.h.b16 %v9431
      %v10304 = vunpack.c.l.b16 %v9432
      %v10305 = vunpack.c.l.b16 %v9433
      %v10306 = vunpack.c.h.b16 %v9433
      %v10307 = vunpack.c.l.b16 %v9434
      %v10308 = vunpack.c.l.b16 %v9435
      %v10309 = vunpack.c.h.b16 %v9435
      %v10310 = vunpack.c.l.b16 %v9436
      %v10311 = vunpack.c.l.b16 %v9437
      %v10312 = vunpack.c.h.b16 %v9437
      %v10313 = vunpack.c.l.b16 %v9438
      %v10314 = vunpack.c.l.b16 %v9439
      %v10315 = vunpack.c.h.b16 %v9439
      %v10316 = vunpack.c.l.b16 %v9440
      %v10317 = vunpack.c.l.b16 %v9441
      %v10318 = vunpack.c.h.b16 %v9441
      %v10319 = vunpack.c.l.b16 %v9442
      %v10320 = vunpack.c.l.b16 %v9443
      %v10321 = vunpack.c.h.b16 %v9443
      %v10322 = vunpack.c.l.b16 %v9444
      %v10323 = vunpack.c.l.b16 %v9445
      %v10324 = vunpack.c.h.b16 %v9445
      %v10325 = vunpack.c.l.b16 %v9446
      %v10326 = vunpack.c.l.b16 %v9447
      %v10327 = vunpack.c.h.b16 %v9447
      %v10328 = vunpack.c.l.b16 %v9448
      %v10329 = vunpack.c.l.b16 %v9449
      %v10330 = vunpack.c.h.b16 %v9449
      %v10331 = vunpack.c.l.b16 %v9450
      %v10332 = vunpack.c.l.b16 %v9451
      %v10333 = vunpack.c.h.b16 %v9451
      %v10334 = vunpack.c.l.b16 %v9452
      %v10335 = vunpack.c.l.b16 %v9453
      %v10336 = vunpack.c.h.b16 %v9453
      %v10337 = vunpack.c.l.b16 %v9454
      %v10338 = vunpack.c.l.b16 %v9455
      %v10339 = vunpack.c.h.b16 %v9455
      %v10340 = vunpack.c.l.b16 %v9456
      %v10341 = vunpack.c.l.b16 %v9457
      %v10342 = vunpack.c.h.b16 %v9457
      %v10343 = vunpack.c.l.b16 %v9458
      %v10344 = vunpack.c.l.b16 %v9459
      %v10345 = vunpack.c.h.b16 %v9459
      %v10346 = vunpack.c.l.b16 %v9460
      %v10347 = vunpack.c.l.b16 %v9461
      %v10348 = vunpack.c.h.b16 %v9461
      %v10349 = vunpack.c.l.b16 %v9462
      %v10350 = vunpack.c.l.b16 %v9463
      %v10351 = vunpack.c.h.b16 %v9463
      %v10352 = vunpack.c.l.b16 %v9464
      %v10353 = vunpack.c.l.b16 %v9465
      %v10354 = vunpack.c.h.b16 %v9465
      %v10355 = vunpack.c.l.b16 %v9466
      %v10356 = vunpack.c.l.b16 %v9467
      %v10357 = vunpack.c.h.b16 %v9467
      %v10358 = vunpack.c.l.b16 %v9468
      %v10359 = vunpack.c.l.b16 %v9469
      %v10360 = vunpack.c.h.b16 %v9469
      %v10361 = vunpack.c.l.b16 %v9470
      %v10362 = vunpack.c.l.b16 %v9471
      %v10363 = vunpack.c.h.b16 %v9471
      %v10364 = vunpack.c.l.b16 %v9472
      %v10365 = vunpack.c.l.b16 %v9473
      %v10366 = vunpack.c.h.b16 %v9473
      %v10367 = vunpack.c.l.b16 %v9474
      %v10368 = vunpack.c.l.b16 %v9475
      %v10369 = vunpack.c.h.b16 %v9475
      %v10370 = vunpack.c.l.b16 %v9476
      %v10371 = vunpack.c.l.b16 %v9477
      %v10372 = vunpack.c.h.b16 %v9477
      %v10373 = vunpack.c.l.b16 %v9478
      %v10374 = vunpack.c.l.b16 %v9479
      %v10375 = vunpack.c.h.b16 %v9479
      %v10376 = vunpack.c.l.b16 %v9480
      %v10377 = vunpack.c.l.b16 %v9481
      %v10378 = vunpack.c.h.b16 %v9481
      %v10379 = vunpack.c.l.b16 %v9482
      %v10380 = vunpack.c.l.b16 %v9483
      %v10381 = vunpack.c.h.b16 %v9483
      %v10382 = vunpack.c.l.b16 %v9484
      %v10383 = vunpack.c.l.b16 %v9485
      %v10384 = vunpack.c.h.b16 %v9485
      %v10385 = vunpack.c.l.b16 %v9486
      %v10386 = vunpack.c.l.b16 %v9487
      %v10387 = vunpack.c.h.b16 %v9487
      %v10388 = vunpack.c.l.b16 %v9488
      %v10389 = vunpack.c.l.b16 %v9489
      %v10390 = vunpack.c.h.b16 %v9489
      %v10391 = vunpack.c.l.b16 %v9490
      %v10392 = vunpack.c.l.b16 %v9491
      %v10393 = vunpack.c.h.b16 %v9491
      %v10394 = vunpack.c.l.b16 %v9492
      %v10395 = vunpack.c.l.b16 %v9493
      %v10396 = vunpack.c.h.b16 %v9493
      %v10397 = vunpack.c.l.b16 %v9494
      %v10398 = vunpack.c.l.b16 %v9495
      %v10399 = vunpack.c.h.b16 %v9495
      %v10400 = vunpack.c.l.b16 %v9496
      %v10401 = vunpack.c.l.b16 %v9497
      %v10402 = vunpack.c.h.b16 %v9497
      %v10403 = vunpack.c.l.b16 %v9498
      %v10404 = vunpack.c.l.b16 %v9499
      %v10405 = vunpack.c.h.b16 %v9499
      %v10406 = vunpack.c.l.b16 %v9500
      %v10407 = vunpack.c.l.b16 %v9501
      %v10408 = vunpack.c.h.b16 %v9501
      %v10409 = vunpack.c.l.b16 %v9502
      %v10410 = vunpack.c.l.b16 %v9503
      %v10411 = vunpack.c.h.b16 %v9503
      %v10412 = vunpack.c.l.b16 %v9504
      %v10413 = vunpack.c.l.b16 %v9505
      %v10414 = vunpack.c.h.b16 %v9505
      %v10415 = vunpack.c.l.b16 %v9506
      %v10416 = vunpack.c.l.b16 %v9507
      %v10417 = vunpack.c.h.b16 %v9507
      %v10418 = vunpack.c.l.b16 %v9508
      %v10419 = vunpack.c.l.b16 %v9509
      %v10420 = vunpack.c.h.b16 %v9509
      %v10421 = vunpack.c.l.b16 %v9510
      %v10422 = vunpack.c.l.b16 %v9511
      %v10423 = vunpack.c.h.b16 %v9511
      %v10424 = vunpack.c.l.b16 %v9512
      %v10425 = vunpack.c.l.b16 %v9513
      %v10426 = vunpack.c.h.b16 %v9513
      %v10427 = vunpack.c.l.b16 %v9514
      %v10428 = vunpack.c.l.b16 %v9515
      %v10429 = vunpack.c.h.b16 %v9515
      %v10430 = vunpack.c.l.b16 %v9516
      %v10431 = vunpack.c.l.b16 %v9517
      %v10432 = vunpack.c.h.b16 %v9517
      %v10433 = vunpack.c.l.b16 %v9518
      %v10434 = vunpack.c.l.b16 %v9519
      %v10435 = vunpack.c.h.b16 %v9519
      %v10436 = vunpack.c.l.b16 %v9520
      %v10437 = vunpack.c.l.b16 %v9521
      %v10438 = vunpack.c.h.b16 %v9521
      %v10439 = vunpack.c.l.b16 %v9522
      %v10440 = vunpack.c.l.b16 %v9523
      %v10441 = vunpack.c.h.b16 %v9523
      %v10442 = vunpack.c.l.b16 %v9524
      %v10443 = vunpack.c.l.b16 %v9525
      %v10444 = vunpack.c.h.b16 %v9525
      %v10445 = vunpack.c.l.b16 %v9526
      %v10446 = vunpack.c.l.b16 %v9527
      %v10447 = vunpack.c.h.b16 %v9527
      %v10448 = vunpack.c.l.b16 %v9528
      %v10449 = vunpack.c.l.b16 %v9529
      %v10450 = vunpack.c.h.b16 %v9529
      %v10451 = vunpack.c.l.b16 %v9530
      %v10452 = vunpack.c.l.b16 %v9531
      %v10453 = vunpack.c.h.b16 %v9531
      %v10454 = vunpack.c.l.b16 %v9532
      %v10455 = vunpack.c.l.b16 %v9533
      %v10456 = vunpack.c.h.b16 %v9533
      %v10457 = vunpack.c.l.b16 %v9534
      %v10458 = vunpack.c.l.b16 %v9535
      %v10459 = vunpack.c.h.b16 %v9535
      %v10460 = vunpack.c.l.b16 %v9536
      %v10461 = vunpack.c.l.b16 %v9537
      %v10462 = vunpack.c.h.b16 %v9537
      %v10463 = vunpack.c.l.b16 %v9538
      %v10464 = vunpack.c.l.b16 %v9539
      %v10465 = vunpack.c.h.b16 %v9539
      %v10466 = vunpack.c.l.b16 %v9540
      %v10467 = vunpack.c.l.b16 %v9541
      %v10468 = vunpack.c.h.b16 %v9541
      %v10469 = vunpack.c.l.b16 %v9542
      %v10470 = vunpack.c.l.b16 %v9543
      %v10471 = vunpack.c.h.b16 %v9543
      %v10472 = vunpack.c.l.b16 %v9544
      %v10473 = vunpack.c.l.b16 %v9545
      %v10474 = vunpack.c.h.b16 %v9545
      %v10475 = vunpack.c.l.b16 %v9546
      %v10476 = vunpack.c.l.b16 %v9547
      %v10477 = vunpack.c.h.b16 %v9547
      %v10478 = vunpack.c.l.b16 %v9548
      %v10479 = vunpack.c.l.b16 %v9549
      %v10480 = vunpack.c.h.b16 %v9549
      %v10481 = vunpack.c.l.b16 %v9550
      %v10482 = vunpack.c.l.b16 %v9551
      %v10483 = vunpack.c.h.b16 %v9551
      %v10484 = vunpack.c.l.b16 %v9552
      %v10485 = vunpack.c.l.b16 %v9553
      %v10486 = vunpack.c.h.b16 %v9553
      %v10487 = vunpack.c.l.b16 %v9554
      %v10488 = vunpack.c.l.b16 %v9555
      %v10489 = vunpack.c.h.b16 %v9555
      %v10490 = vunpack.c.l.b16 %v9556
      %v10491 = vunpack.c.l.b16 %v9557
      %v10492 = vunpack.c.h.b16 %v9557
      %v10493 = vunpack.c.l.b16 %v9558
      %v10494 = vunpack.c.l.b16 %v9559
      %v10495 = vunpack.c.h.b16 %v9559
      %v10496 = vunpack.c.l.b16 %v9560
      %v10497 = vunpack.c.l.b16 %v9561
      %v10498 = vunpack.c.h.b16 %v9561
      %v10499 = vunpack.c.l.b16 %v9562
      %v10500 = vunpack.c.l.b16 %v9563
      %v10501 = vunpack.c.h.b16 %v9563
      %v10502 = vunpack.c.l.b16 %v9564
      %v10503 = vunpack.c.l.b16 %v9565
      %v10504 = vunpack.c.h.b16 %v9565
      %v10505 = vunpack.c.l.b16 %v9566
      %v10506 = vunpack.c.l.b16 %v9567
      %v10507 = vunpack.c.h.b16 %v9567
      %v10508 = vunpack.c.l.b16 %v9568
      %v10509 = vunpack.c.l.b16 %v9569
      %v10510 = vunpack.c.h.b16 %v9569
      %v10511 = vunpack.c.l.b16 %v9570
      %v10512 = vunpack.c.l.b16 %v9571
      %v10513 = vunpack.c.h.b16 %v9571
      %v10514 = vunpack.c.l.b16 %v9572
      %v10515 = vunpack.c.l.b16 %v9573
      %v10516 = vunpack.c.h.b16 %v9573
      %v10517 = vunpack.c.l.b16 %v9574
      %v10518 = vunpack.c.l.b16 %v9575
      %v10519 = vunpack.c.h.b16 %v9575
      %v10520 = vunpack.c.l.b16 %v9576
      %v10521 = vunpack.c.l.b16 %v9577
      %v10522 = vunpack.c.h.b16 %v9577
      %v10523 = vunpack.c.l.b16 %v9578
      %v10524 = vunpack.c.l.b16 %v9579
      %v10525 = vunpack.c.h.b16 %v9579
      %v10526 = vunpack.c.l.b16 %v9580
      %v10527 = vunpack.c.l.b16 %v9581
      %v10528 = vunpack.c.h.b16 %v9581
      %v10529 = vunpack.c.l.b16 %v9582
      %v10530 = vunpack.c.l.b16 %v9583
      %v10531 = vunpack.c.h.b16 %v9583
      %v10532 = vunpack.c.l.b16 %v9584
      %v10533 = vunpack.c.l.b16 %v9585
      %v10534 = vunpack.c.h.b16 %v9585
      %v10535 = vunpack.c.l.b16 %v9586
      %v10536 = vunpack.c.l.b16 %v9587
      %v10537 = vunpack.c.h.b16 %v9587
      %v10538 = vunpack.c.l.b16 %v9588
      %v10539 = vunpack.c.l.b16 %v9589
      %v10540 = vunpack.c.h.b16 %v9589
      %v10541 = vunpack.c.l.b16 %v9590
      %v10542 = vunpack.c.l.b16 %v9591
      %v10543 = vunpack.c.h.b16 %v9591
      %v10544 = vunpack.c.l.b16 %v9592
      %v10545 = vunpack.c.l.b16 %v9593
      %v10546 = vunpack.c.h.b16 %v9593
      %v10547 = vunpack.c.l.b16 %v9594
      %v10548 = vunpack.c.l.b16 %v9595
      %v10549 = vunpack.c.h.b16 %v9595
      %v10550 = vunpack.c.l.b16 %v9596
      %v10551 = vunpack.c.l.b16 %v9597
      %v10552 = vunpack.c.h.b16 %v9597
      %v10553 = vunpack.c.l.b16 %v9598
      %v10554 = vunpack.c.l.b16 %v9599
      %v10555 = vunpack.c.h.b16 %v9599
      %v10556 = vunpack.c.l.b16 %v9600
      %v10557 = vunpack.c.l.b16 %v9601
      %v10558 = vunpack.c.h.b16 %v9601
      %v10559 = vunpack.c.l.b16 %v9602
      %v10560 = vunpack.c.l.b16 %v9603
      %v10561 = vunpack.c.h.b16 %v9603
      %v10562 = vunpack.c.l.b16 %v9604
      %v10563 = vunpack.c.l.b16 %v9605
      %v10564 = vunpack.c.h.b16 %v9605
      %v10565 = vunpack.c.l.b16 %v9606
      %v10566 = vunpack.c.l.b16 %v9607
      %v10567 = vunpack.c.h.b16 %v9607
      %v10568 = vunpack.c.l.b16 %v9608
      %v10569 = vunpack.c.l.b16 %v9609
      %v10570 = vunpack.c.h.b16 %v9609
      %v10571 = vunpack.c.l.b16 %v9610
      %v10572 = vunpack.c.l.b16 %v9611
      %v10573 = vunpack.c.h.b16 %v9611
      %v10574 = vunpack.c.l.b16 %v9612
      %v10575 = vunpack.c.l.b16 %v9613
      %v10576 = vunpack.c.h.b16 %v9613
      %v10577 = vunpack.c.l.b16 %v9614
      %v10578 = vunpack.c.l.b16 %v9615
      %v10579 = vunpack.c.h.b16 %v9615
      %v10580 = vunpack.c.l.b16 %v9616
      %v10581 = vunpack.c.l.b16 %v9617
      %v10582 = vunpack.c.h.b16 %v9617
      %v10583 = vunpack.c.l.b16 %v9618
      %v10584 = vunpack.c.l.b16 %v9619
      %v10585 = vunpack.c.h.b16 %v9619
      %v10586 = vunpack.c.l.b16 %v9620
      %v10587 = vunpack.c.l.b16 %v9621
      %v10588 = vunpack.c.h.b16 %v9621
      %v10589 = vunpack.c.l.b16 %v9622
      %v10590 = vunpack.c.l.b16 %v9623
      %v10591 = vunpack.c.h.b16 %v9623
      %v10592 = vunpack.c.l.b16 %v9624
      %v10593 = vunpack.c.l.b16 %v9625
      %v10594 = vunpack.c.h.b16 %v9625
      %v10595 = vunpack.c.l.b16 %v9626
      %v10596 = vunpack.c.l.b16 %v9627
      %v10597 = vunpack.c.h.b16 %v9627
      %v10598 = vunpack.c.l.b16 %v9628
      %v10599 = vunpack.c.l.b16 %v9629
      %v10600 = vunpack.c.h.b16 %v9629
      %v10601 = vunpack.c.l.b16 %v9630
      %v10602 = vunpack.c.l.b16 %v9631
      %v10603 = vunpack.c.h.b16 %v9631
      %v10604 = vunpack.c.l.b16 %v9632
      %v10605 = vunpack.c.l.b16 %v9633
      %v10606 = vunpack.c.h.b16 %v9633
      %v10607 = vunpack.c.l.b16 %v9634
      %v10608 = vunpack.c.l.b16 %v9635
      %v10609 = vunpack.c.h.b16 %v9635
      %v10610 = vunpack.c.l.b16 %v9636
      %v10611 = vunpack.c.l.b16 %v9637
      %v10612 = vunpack.c.h.b16 %v9637
      %v10613 = vunpack.c.l.b16 %v9638
      %v10614 = vunpack.c.l.b16 %v9639
      %v10615 = vunpack.c.h.b16 %v9639
      %v10616 = vunpack.c.l.b16 %v9640
      %v10617 = vunpack.c.l.b16 %v9641
      %v10618 = vunpack.c.h.b16 %v9641
      %v10619 = vunpack.c.l.b16 %v9642
      %v10620 = vpack.c.b16 %v10047, %v10044
      %v10621 = vpack.c.b16 %v10048, %v10045
      %v10622 = vpack.c.b16 %v10049, %v10046
      %v10623 = vpack.c.b16 %v10053, %v10050
      %v10624 = vpack.c.b16 %v10054, %v10051
      %v10625 = vpack.c.b16 %v10055, %v10052
      %v10626 = vpack.c.b16 %v10059, %v10056
      %v10627 = vpack.c.b16 %v10060, %v10057
      %v10628 = vpack.c.b16 %v10061, %v10058
      %v10629 = vpack.c.b16 %v10065, %v10062
      %v10630 = vpack.c.b16 %v10066, %v10063
      %v10631 = vpack.c.b16 %v10067, %v10064
      %v10632 = vpack.c.b16 %v10071, %v10068
      %v10633 = vpack.c.b16 %v10072, %v10069
      %v10634 = vpack.c.b16 %v10073, %v10070
      %v10635 = vpack.c.b16 %v10077, %v10074
      %v10636 = vpack.c.b16 %v10078, %v10075
      %v10637 = vpack.c.b16 %v10079, %v10076
      %v10638 = vpack.c.b16 %v10083, %v10080
      %v10639 = vpack.c.b16 %v10084, %v10081
      %v10640 = vpack.c.b16 %v10085, %v10082
      %v10641 = vpack.c.b16 %v10089, %v10086
      %v10642 = vpack.c.b16 %v10090, %v10087
      %v10643 = vpack.c.b16 %v10091, %v10088
      %v10644 = vpack.c.b16 %v10095, %v10092
      %v10645 = vpack.c.b16 %v10096, %v10093
      %v10646 = vpack.c.b16 %v10097, %v10094
      %v10647 = vpack.c.b16 %v10101, %v10098
      %v10648 = vpack.c.b16 %v10102, %v10099
      %v10649 = vpack.c.b16 %v10103, %v10100
      %v10650 = vpack.c.b16 %v10107, %v10104
      %v10651 = vpack.c.b16 %v10108, %v10105
      %v10652 = vpack.c.b16 %v10109, %v10106
      %v10653 = vpack.c.b16 %v10113, %v10110
      %v10654 = vpack.c.b16 %v10114, %v10111
      %v10655 = vpack.c.b16 %v10115, %v10112
      %v10656 = vpack.c.b16 %v10119, %v10116
      %v10657 = vpack.c.b16 %v10120, %v10117
      %v10658 = vpack.c.b16 %v10121, %v10118
      %v10659 = vpack.c.b16 %v10125, %v10122
      %v10660 = vpack.c.b16 %v10126, %v10123
      %v10661 = vpack.c.b16 %v10127, %v10124
      %v10662 = vpack.c.b16 %v10131, %v10128
      %v10663 = vpack.c.b16 %v10132, %v10129
      %v10664 = vpack.c.b16 %v10133, %v10130
      %v10665 = vpack.c.b16 %v10137, %v10134
      %v10666 = vpack.c.b16 %v10138, %v10135
      %v10667 = vpack.c.b16 %v10139, %v10136
      %v10668 = vpack.c.b16 %v10143, %v10140
      %v10669 = vpack.c.b16 %v10144, %v10141
      %v10670 = vpack.c.b16 %v10145, %v10142
      %v10671 = vpack.c.b16 %v10149, %v10146
      %v10672 = vpack.c.b16 %v10150, %v10147
      %v10673 = vpack.c.b16 %v10151, %v10148
      %v10674 = vpack.c.b16 %v10155, %v10152
      %v10675 = vpack.c.b16 %v10156, %v10153
      %v10676 = vpack.c.b16 %v10157, %v10154
      %v10677 = vpack.c.b16 %v10161, %v10158
      %v10678 = vpack.c.b16 %v10162, %v10159
      %v10679 = vpack.c.b16 %v10163, %v10160
      %v10680 = vpack.c.b16 %v10167, %v10164
      %v10681 = vpack.c.b16 %v10168, %v10165
      %v10682 = vpack.c.b16 %v10169, %v10166
      %v10683 = vpack.c.b16 %v10173, %v10170
      %v10684 = vpack.c.b16 %v10174, %v10171
      %v10685 = vpack.c.b16 %v10175, %v10172
      %v10686 = vpack.c.b16 %v10179, %v10176
      %v10687 = vpack.c.b16 %v10180, %v10177
      %v10688 = vpack.c.b16 %v10181, %v10178
      %v10689 = vpack.c.b16 %v10185, %v10182
      %v10690 = vpack.c.b16 %v10186, %v10183
      %v10691 = vpack.c.b16 %v10187, %v10184
      %v10692 = vpack.c.b16 %v10191, %v10188
      %v10693 = vpack.c.b16 %v10192, %v10189
      %v10694 = vpack.c.b16 %v10193, %v10190
      %v10695 = vpack.c.b16 %v10197, %v10194
      %v10696 = vpack.c.b16 %v10198, %v10195
      %v10697 = vpack.c.b16 %v10199, %v10196
      %v10698 = vpack.c.b16 %v10203, %v10200
      %v10699 = vpack.c.b16 %v10204, %v10201
      %v10700 = vpack.c.b16 %v10205, %v10202
      %v10701 = vpack.c.b16 %v10209, %v10206
      %v10702 = vpack.c.b16 %v10210, %v10207
      %v10703 = vpack.c.b16 %v10211, %v10208
      %v10704 = vpack.c.b16 %v10215, %v10212
      %v10705 = vpack.c.b16 %v10216, %v10213
      %v10706 = vpack.c.b16 %v10217, %v10214
      %v10707 = vpack.c.b16 %v10221, %v10218
      %v10708 = vpack.c.b16 %v10222, %v10219
      %v10709 = vpack.c.b16 %v10223, %v10220
      %v10710 = vpack.c.b16 %v10227, %v10224
      %v10711 = vpack.c.b16 %v10228, %v10225
      %v10712 = vpack.c.b16 %v10229, %v10226
      %v10713 = vpack.c.b16 %v10233, %v10230
      %v10714 = vpack.c.b16 %v10234, %v10231
      %v10715 = vpack.c.b16 %v10235, %v10232
      %v10716 = vpack.c.b16 %v10239, %v10236
      %v10717 = vpack.c.b16 %v10240, %v10237
      %v10718 = vpack.c.b16 %v10241, %v10238
      %v10719 = vpack.c.b16 %v10245, %v10242
      %v10720 = vpack.c.b16 %v10246, %v10243
      %v10721 = vpack.c.b16 %v10247, %v10244
      %v10722 = vpack.c.b16 %v10251, %v10248
      %v10723 = vpack.c.b16 %v10252, %v10249
      %v10724 = vpack.c.b16 %v10253, %v10250
      %v10725 = vpack.c.b16 %v10257, %v10254
      %v10726 = vpack.c.b16 %v10258, %v10255
      %v10727 = vpack.c.b16 %v10259, %v10256
      %v10728 = vpack.c.b16 %v10263, %v10260
      %v10729 = vpack.c.b16 %v10264, %v10261
      %v10730 = vpack.c.b16 %v10265, %v10262
      %v10731 = vpack.c.b16 %v10269, %v10266
      %v10732 = vpack.c.b16 %v10270, %v10267
      %v10733 = vpack.c.b16 %v10271, %v10268
      %v10734 = vpack.c.b16 %v10275, %v10272
      %v10735 = vpack.c.b16 %v10276, %v10273
      %v10736 = vpack.c.b16 %v10277, %v10274
      %v10737 = vpack.c.b16 %v10281, %v10278
      %v10738 = vpack.c.b16 %v10282, %v10279
      %v10739 = vpack.c.b16 %v10283, %v10280
      %v10740 = vpack.c.b16 %v10287, %v10284
      %v10741 = vpack.c.b16 %v10288, %v10285
      %v10742 = vpack.c.b16 %v10289, %v10286
      %v10743 = vpack.c.b16 %v10293, %v10290
      %v10744 = vpack.c.b16 %v10294, %v10291
      %v10745 = vpack.c.b16 %v10295, %v10292
      %v10746 = vpack.c.b16 %v10299, %v10296
      %v10747 = vpack.c.b16 %v10300, %v10297
      %v10748 = vpack.c.b16 %v10301, %v10298
      %v10749 = vpack.c.b16 %v10305, %v10302
      %v10750 = vpack.c.b16 %v10306, %v10303
      %v10751 = vpack.c.b16 %v10307, %v10304
      %v10752 = vpack.c.b16 %v10311, %v10308
      %v10753 = vpack.c.b16 %v10312, %v10309
      %v10754 = vpack.c.b16 %v10313, %v10310
      %v10755 = vpack.c.b16 %v10317, %v10314
      %v10756 = vpack.c.b16 %v10318, %v10315
      %v10757 = vpack.c.b16 %v10319, %v10316
      %v10758 = vpack.c.b16 %v10323, %v10320
      %v10759 = vpack.c.b16 %v10324, %v10321
      %v10760 = vpack.c.b16 %v10325, %v10322
      %v10761 = vpack.c.b16 %v10329, %v10326
      %v10762 = vpack.c.b16 %v10330, %v10327
      %v10763 = vpack.c.b16 %v10331, %v10328
      %v10764 = vpack.c.b16 %v10335, %v10332
      %v10765 = vpack.c.b16 %v10336, %v10333
      %v10766 = vpack.c.b16 %v10337, %v10334
      %v10767 = vpack.c.b16 %v10341, %v10338
      %v10768 = vpack.c.b16 %v10342, %v10339
      %v10769 = vpack.c.b16 %v10343, %v10340
      %v10770 = vpack.c.b16 %v10347, %v10344
      %v10771 = vpack.c.b16 %v10348, %v10345
      %v10772 = vpack.c.b16 %v10349, %v10346
      %v10773 = vpack.c.b16 %v10353, %v10350
      %v10774 = vpack.c.b16 %v10354, %v10351
      %v10775 = vpack.c.b16 %v10355, %v10352
      %v10776 = vpack.c.b16 %v10359, %v10356
      %v10777 = vpack.c.b16 %v10360, %v10357
      %v10778 = vpack.c.b16 %v10361, %v10358
      %v10779 = vpack.c.b16 %v10365, %v10362
      %v10780 = vpack.c.b16 %v10366, %v10363
      %v10781 = vpack.c.b16 %v10367, %v10364
      %v10782 = vpack.c.b16 %v10371, %v10368
      %v10783 = vpack.c.b16 %v10372, %v10369
      %v10784 = vpack.c.b16 %v10373, %v10370
      %v10785 = vpack.c.b16 %v10377, %v10374
      %v10786 = vpack.c.b16 %v10378, %v10375
      %v10787 = vpack.c.b16 %v10379, %v10376
      %v10788 = vpack.c.b16 %v10383, %v10380
      %v10789 = vpack.c.b16 %v10384, %v10381
      %v10790 = vpack.c.b16 %v10385, %v10382
      %v10791 = vpack.c.b16 %v10389, %v10386
      %v10792 = vpack.c.b16 %v10390, %v10387
      %v10793 = vpack.c.b16 %v10391, %v10388
      %v10794 = vpack.c.b16 %v10395, %v10392
      %v10795 = vpack.c.b16 %v10396, %v10393
      %v10796 = vpack.c.b16 %v10397, %v10394
      %v10797 = vpack.c.b16 %v10401, %v10398
      %v10798 = vpack.c.b16 %v10402, %v10399
      %v10799 = vpack.c.b16 %v10403, %v10400
      %v10800 = vpack.c.b16 %v10407, %v10404
      %v10801 = vpack.c.b16 %v10408, %v10405
      %v10802 = vpack.c.b16 %v10409, %v10406
      %v10803 = vpack.c.b16 %v10413, %v10410
      %v10804 = vpack.c.b16 %v10414, %v10411
      %v10805 = vpack.c.b16 %v10415, %v10412
      %v10806 = vpack.c.b16 %v10419, %v10416
      %v10807 = vpack.c.b16 %v10420, %v10417
      %v10808 = vpack.c.b16 %v10421, %v10418
      %v10809 = vpack.c.b16 %v10425, %v10422
      %v10810 = vpack.c.b16 %v10426, %v10423
      %v10811 = vpack.c.b16 %v10427, %v10424
      %v10812 = vpack.c.b16 %v10431, %v10428
      %v10813 = vpack.c.b16 %v10432, %v10429
      %v10814 = vpack.c.b16 %v10433, %v10430
      %v10815 = vpack.c.b16 %v10437, %v10434
      %v10816 = vpack.c.b16 %v10438, %v10435
      %v10817 = vpack.c.b16 %v10439, %v10436
      %v10818 = vpack.c.b16 %v10443, %v10440
      %v10819 = vpack.c.b16 %v10444, %v10441
      %v10820 = vpack.c.b16 %v10445, %v10442
      %v10821 = vpack.c.b16 %v10449, %v10446
      %v10822 = vpack.c.b16 %v10450, %v10447
      %v10823 = vpack.c.b16 %v10451, %v10448
      %v10824 = vpack.c.b16 %v10455, %v10452
      %v10825 = vpack.c.b16 %v10456, %v10453
      %v10826 = vpack.c.b16 %v10457, %v10454
      %v10827 = vpack.c.b16 %v10461, %v10458
      %v10828 = vpack.c.b16 %v10462, %v10459
      %v10829 = vpack.c.b16 %v10463, %v10460
      %v10830 = vpack.c.b16 %v10467, %v10464
      %v10831 = vpack.c.b16 %v10468, %v10465
      %v10832 = vpack.c.b16 %v10469, %v10466
      %v10833 = vpack.c.b16 %v10473, %v10470
      %v10834 = vpack.c.b16 %v10474, %v10471
      %v10835 = vpack.c.b16 %v10475, %v10472
      %v10836 = vpack.c.b16 %v10479, %v10476
      %v10837 = vpack.c.b16 %v10480, %v10477
      %v10838 = vpack.c.b16 %v10481, %v10478
      %v10839 = vpack.c.b16 %v10485, %v10482
      %v10840 = vpack.c.b16 %v10486, %v10483
      %v10841 = vpack.c.b16 %v10487, %v10484
      %v10842 = vpack.c.b16 %v10491, %v10488
      %v10843 = vpack.c.b16 %v10492, %v10489
      %v10844 = vpack.c.b16 %v10493, %v10490
      %v10845 = vpack.c.b16 %v10497, %v10494
      %v10846 = vpack.c.b16 %v10498, %v10495
      %v10847 = vpack.c.b16 %v10499, %v10496
      %v10848 = vpack.c.b16 %v10503, %v10500
      %v10849 = vpack.c.b16 %v10504, %v10501
      %v10850 = vpack.c.b16 %v10505, %v10502
      %v10851 = vpack.c.b16 %v10509, %v10506
      %v10852 = vpack.c.b16 %v10510, %v10507
      %v10853 = vpack.c.b16 %v10511, %v10508
      %v10854 = vpack.c.b16 %v10515, %v10512
      %v10855 = vpack.c.b16 %v10516, %v10513
      %v10856 = vpack.c.b16 %v10517, %v10514
      %v10857 = vpack.c.b16 %v10521, %v10518
      %v10858 = vpack.c.b16 %v10522, %v10519
      %v10859 = vpack.c.b16 %v10523, %v10520
      %v10860 = vpack.c.b16 %v10527, %v10524
      %v10861 = vpack.c.b16 %v10528, %v10525
      %v10862 = vpack.c.b16 %v10529, %v10526
      %v10863 = vpack.c.b16 %v10533, %v10530
      %v10864 = vpack.c.b16 %v10534, %v10531
      %v10865 = vpack.c.b16 %v10535, %v10532
      %v10866 = vpack.c.b16 %v10539, %v10536
      %v10867 = vpack.c.b16 %v10540, %v10537
      %v10868 = vpack.c.b16 %v10541, %v10538
      %v10869 = vpack.c.b16 %v10545, %v10542
      %v10870 = vpack.c.b16 %v10546, %v10543
      %v10871 = vpack.c.b16 %v10547, %v10544
      %v10872 = vpack.c.b16 %v10551, %v10548
      %v10873 = vpack.c.b16 %v10552, %v10549
      %v10874 = vpack.c.b16 %v10553, %v10550
      %v10875 = vpack.c.b16 %v10557, %v10554
      %v10876 = vpack.c.b16 %v10558, %v10555
      %v10877 = vpack.c.b16 %v10559, %v10556
      %v10878 = vpack.c.b16 %v10563, %v10560
      %v10879 = vpack.c.b16 %v10564, %v10561
      %v10880 = vpack.c.b16 %v10565, %v10562
      %v10881 = vpack.c.b16 %v10569, %v10566
      %v10882 = vpack.c.b16 %v10570, %v10567
      %v10883 = vpack.c.b16 %v10571, %v10568
      %v10884 = vpack.c.b16 %v10575, %v10572
      %v10885 = vpack.c.b16 %v10576, %v10573
      %v10886 = vpack.c.b16 %v10577, %v10574
      %v10887 = vpack.c.b16 %v10581, %v10578
      %v10888 = vpack.c.b16 %v10582, %v10579
      %v10889 = vpack.c.b16 %v10583, %v10580
      %v10890 = vpack.c.b16 %v10587, %v10584
      %v10891 = vpack.c.b16 %v10588, %v10585
      %v10892 = vpack.c.b16 %v10589, %v10586
      %v10893 = vpack.c.b16 %v10593, %v10590
      %v10894 = vpack.c.b16 %v10594, %v10591
      %v10895 = vpack.c.b16 %v10595, %v10592
      %v10896 = vpack.c.b16 %v10599, %v10596
      %v10897 = vpack.c.b16 %v10600, %v10597
      %v10898 = vpack.c.b16 %v10601, %v10598
      %v10899 = vpack.c.b16 %v10605, %v10602
      %v10900 = vpack.c.b16 %v10606, %v10603
      %v10901 = vpack.c.b16 %v10607, %v10604
      %v10902 = vpack.c.b16 %v10611, %v10608
      %v10903 = vpack.c.b16 %v10612, %v10609
      %v10904 = vpack.c.b16 %v10613, %v10610
      %v10905 = vpack.c.b16 %v10617, %v10614
      %v10906 = vpack.c.b16 %v10618, %v10615
      %v10907 = vpack.c.b16 %v10619, %v10616
      %11196 = vmatprep.subr.bf16.mxu0 %v10642
      %11197 = vmatpush1.bf16.msra.mxu0 %v10641
      %11198 = vmatprep.subr.bf16.mxu0 %v10639
      %11199 = vmatpush1.bf16.msra.mxu0 %v10638
      %11200 = vmatprep.subr.bf16.mxu0 %v10636
      %11201 = vmatpush1.bf16.msra.mxu0 %v10635
      %11202 = vmatprep.subr.bf16.mxu0 %v10633
      %11203 = vmatpush1.bf16.msra.mxu0 %v10632
      %11204 = vmatprep.subr.bf16.mxu0 %v10630
      %11205 = vmatpush1.bf16.msra.mxu0 %v10629
      %11206 = vmatprep.subr.bf16.mxu0 %v10627
      %11207 = vmatpush1.bf16.msra.mxu0 %v10626
      %11208 = vmatprep.subr.bf16.mxu0 %v10624
      %11209 = vmatpush1.bf16.msra.mxu0 %v10623
      %11210 = vmatprep.subr.bf16.mxu0 %v10621
      %11211 = vmatpush1.bf16.msra.mxu0 %v10620
      %11212 = vmatprep.subr.bf16.mxu0 %v10666
      %11213 = vmatpush2.bf16.msra.mxu0 %v10665
      %11214 = vmatprep.subr.bf16.mxu0 %v10663
      %11215 = vmatpush2.bf16.msra.mxu0 %v10662
      %11216 = vmatprep.subr.bf16.mxu0 %v10660
      %11217 = vmatpush2.bf16.msra.mxu0 %v10659
      %11218 = vmatprep.subr.bf16.mxu0 %v10657
      %11219 = vmatpush2.bf16.msra.mxu0 %v10656
      %11220 = vmatprep.subr.bf16.mxu0 %v10654
      %11221 = vmatpush2.bf16.msra.mxu0 %v10653
      %11222 = vmatprep.subr.bf16.mxu0 %v10651
      %11223 = vmatpush2.bf16.msra.mxu0 %v10650
      %11224 = vmatprep.subr.bf16.mxu0 %v10648
      %11225 = vmatpush2.bf16.msra.mxu0 %v10647
      %11226 = vmatprep.subr.bf16.mxu0 %v10645
      %11227 = vmatpush2.bf16.msra.mxu0 %v10644
      %11228 = vmatprep.mubr.bf16.mxu0 %v9212
      %11229 = vmatmul.mubr.bf16.gmra.mxu0 %v9211
      %v11230 = vpop.f32.mrf.mxu0
      %v11231 = vadd.f32 %v9648, %v11230
      %v11232 = vpop.f32.mrf.mxu0
      %v11233 = vadd.f32 %v9652, %v11232
      %v11234 = vpop.f32.mrf.mxu0
      %v11235 = vadd.f32 %v9648, %v11234
      %v11236 = vpop.f32.mrf.mxu0
      %v11237 = vadd.f32 %v9652, %v11236
      %11238 = vmatprep.mubr.bf16.mxu0 %v9224
      %11239 = vmatmul.mubr.bf16.gmra.mxu0 %v9223
      %v11240 = vpop.f32.mrf.mxu0
      %v11241 = vadd.f32 %v9648, %v11240
      %v11242 = vpop.f32.mrf.mxu0
      %v11243 = vadd.f32 %v9652, %v11242
      %v11244 = vpop.f32.mrf.mxu0
      %v11245 = vadd.f32 %v9648, %v11244
      %v11246 = vpop.f32.mrf.mxu0
      %v11247 = vadd.f32 %v9652, %v11246
      %11248 = vmatprep.mubr.bf16.mxu0 %v9236
      %11249 = vmatmul.mubr.bf16.gmra.mxu0 %v9235
      %v11250 = vpop.f32.mrf.mxu0
      %v11251 = vadd.f32 %v9648, %v11250
      %v11252 = vpop.f32.mrf.mxu0
      %v11253 = vadd.f32 %v9652, %v11252
      %v11254 = vpop.f32.mrf.mxu0
      %v11255 = vadd.f32 %v9648, %v11254
      %v11256 = vpop.f32.mrf.mxu0
      %v11257 = vadd.f32 %v9652, %v11256
      %11258 = vmatprep.mubr.bf16.mxu0 %v9248
      %11259 = vmatmul.mubr.bf16.gmra.mxu0 %v9247
      %v11260 = vpop.f32.mrf.mxu0
      %v11261 = vadd.f32 %v9648, %v11260
      %v11262 = vpop.f32.mrf.mxu0
      %v11263 = vadd.f32 %v9652, %v11262
      %v11264 = vpop.f32.mrf.mxu0
      %v11265 = vadd.f32 %v9648, %v11264
      %v11266 = vpop.f32.mrf.mxu0
      %v11267 = vadd.f32 %v9652, %v11266
      %11268 = vdwg.mxu0
      %11269 = vmatprep.subr.bf16.mxu0 %v10690
      %11270 = vmatpush1.bf16.msra.mxu0 %v10689
      %11271 = vmatprep.subr.bf16.mxu0 %v10687
      %11272 = vmatpush1.bf16.msra.mxu0 %v10686
      %11273 = vmatprep.subr.bf16.mxu0 %v10684
      %11274 = vmatpush1.bf16.msra.mxu0 %v10683
      %11275 = vmatprep.subr.bf16.mxu0 %v10681
      %11276 = vmatpush1.bf16.msra.mxu0 %v10680
      %11277 = vmatprep.subr.bf16.mxu0 %v10678
      %11278 = vmatpush1.bf16.msra.mxu0 %v10677
      %11279 = vmatprep.subr.bf16.mxu0 %v10675
      %11280 = vmatpush1.bf16.msra.mxu0 %v10674
      %11281 = vmatprep.subr.bf16.mxu0 %v10672
      %11282 = vmatpush1.bf16.msra.mxu0 %v10671
      %11283 = vmatprep.subr.bf16.mxu0 %v10669
      %11284 = vmatpush1.bf16.msra.mxu0 %v10668
      %11285 = vmatprep.subr.bf16.mxu0 %v10714
      %11286 = vmatpush2.bf16.msra.mxu0 %v10713
      %11287 = vmatprep.subr.bf16.mxu0 %v10711
      %11288 = vmatpush2.bf16.msra.mxu0 %v10710
      %11289 = vmatprep.subr.bf16.mxu0 %v10708
      %11290 = vmatpush2.bf16.msra.mxu0 %v10707
      %11291 = vmatprep.subr.bf16.mxu0 %v10705
      %11292 = vmatpush2.bf16.msra.mxu0 %v10704
      %11293 = vmatprep.subr.bf16.mxu0 %v10702
      %11294 = vmatpush2.bf16.msra.mxu0 %v10701
      %11295 = vmatprep.subr.bf16.mxu0 %v10699
      %11296 = vmatpush2.bf16.msra.mxu0 %v10698
      %11297 = vmatprep.subr.bf16.mxu0 %v10696
      %11298 = vmatpush2.bf16.msra.mxu0 %v10695
      %11299 = vmatprep.subr.bf16.mxu0 %v10693
      %11300 = vmatpush2.bf16.msra.mxu0 %v10692
      %11301 = vmatprep.mubr.bf16.mxu0 %v9214
      %11302 = vmatmul.mubr.bf16.gmra.mxu0 %v9213
      %v11303 = vpop.f32.mrf.mxu0
      %v11304 = vadd.f32 %v11231, %v11303
      %v11305 = vpop.f32.mrf.mxu0
      %v11306 = vadd.f32 %v11233, %v11305
      %v11307 = vpop.f32.mrf.mxu0
      %v11308 = vadd.f32 %v11235, %v11307
      %v11309 = vpop.f32.mrf.mxu0
      %v11310 = vadd.f32 %v11237, %v11309
      %11311 = vmatprep.mubr.bf16.mxu0 %v9226
      %11312 = vmatmul.mubr.bf16.gmra.mxu0 %v9225
      %v11313 = vpop.f32.mrf.mxu0
      %v11314 = vadd.f32 %v11241, %v11313
      %v11315 = vpop.f32.mrf.mxu0
      %v11316 = vadd.f32 %v11243, %v11315
      %v11317 = vpop.f32.mrf.mxu0
      %v11318 = vadd.f32 %v11245, %v11317
      %v11319 = vpop.f32.mrf.mxu0
      %v11320 = vadd.f32 %v11247, %v11319
      %11321 = vmatprep.mubr.bf16.mxu0 %v9238
      %11322 = vmatmul.mubr.bf16.gmra.mxu0 %v9237
      %v11323 = vpop.f32.mrf.mxu0
      %v11324 = vadd.f32 %v11251, %v11323
      %v11325 = vpop.f32.mrf.mxu0
      %v11326 = vadd.f32 %v11253, %v11325
      %v11327 = vpop.f32.mrf.mxu0
      %v11328 = vadd.f32 %v11255, %v11327
      %v11329 = vpop.f32.mrf.mxu0
      %v11330 = vadd.f32 %v11257, %v11329
      %11331 = vmatprep.mubr.bf16.mxu0 %v9250
      %11332 = vmatmul.mubr.bf16.gmra.mxu0 %v9249
      %v11333 = vpop.f32.mrf.mxu0
      %v11334 = vadd.f32 %v11261, %v11333
      %v11335 = vpop.f32.mrf.mxu0
      %v11336 = vadd.f32 %v11263, %v11335
      %v11337 = vpop.f32.mrf.mxu0
      %v11338 = vadd.f32 %v11265, %v11337
      %v11339 = vpop.f32.mrf.mxu0
      %v11340 = vadd.f32 %v11267, %v11339
      %11341 = vdwg.mxu0
      %11342 = vmatprep.subr.bf16.mxu0 %v10738
      %11343 = vmatpush1.bf16.msra.mxu0 %v10737
      %11344 = vmatprep.subr.bf16.mxu0 %v10735
      %11345 = vmatpush1.bf16.msra.mxu0 %v10734
      %11346 = vmatprep.subr.bf16.mxu0 %v10732
      %11347 = vmatpush1.bf16.msra.mxu0 %v10731
      %11348 = vmatprep.subr.bf16.mxu0 %v10729
      %11349 = vmatpush1.bf16.msra.mxu0 %v10728
      %11350 = vmatprep.subr.bf16.mxu0 %v10726
      %11351 = vmatpush1.bf16.msra.mxu0 %v10725
      %11352 = vmatprep.subr.bf16.mxu0 %v10723
      %11353 = vmatpush1.bf16.msra.mxu0 %v10722
      %11354 = vmatprep.subr.bf16.mxu0 %v10720
      %11355 = vmatpush1.bf16.msra.mxu0 %v10719
      %11356 = vmatprep.subr.bf16.mxu0 %v10717
      %11357 = vmatpush1.bf16.msra.mxu0 %v10716
      %11358 = vmatprep.subr.bf16.mxu0 %v10762
      %11359 = vmatpush2.bf16.msra.mxu0 %v10761
      %11360 = vmatprep.subr.bf16.mxu0 %v10759
      %11361 = vmatpush2.bf16.msra.mxu0 %v10758
      %11362 = vmatprep.subr.bf16.mxu0 %v10756
      %11363 = vmatpush2.bf16.msra.mxu0 %v10755
      %11364 = vmatprep.subr.bf16.mxu0 %v10753
      %11365 = vmatpush2.bf16.msra.mxu0 %v10752
      %11366 = vmatprep.subr.bf16.mxu0 %v10750
      %11367 = vmatpush2.bf16.msra.mxu0 %v10749
      %11368 = vmatprep.subr.bf16.mxu0 %v10747
      %11369 = vmatpush2.bf16.msra.mxu0 %v10746
      %11370 = vmatprep.subr.bf16.mxu0 %v10744
      %11371 = vmatpush2.bf16.msra.mxu0 %v10743
      %11372 = vmatprep.subr.bf16.mxu0 %v10741
      %11373 = vmatpush2.bf16.msra.mxu0 %v10740
      %11374 = vmatprep.mubr.bf16.mxu0 %v9216
      %11375 = vmatmul.mubr.bf16.gmra.mxu0 %v9215
      %v11376 = vpop.f32.mrf.mxu0
      %v11377 = vadd.f32 %v11304, %v11376
      %v11378 = vpop.f32.mrf.mxu0
      %v11379 = vadd.f32 %v11306, %v11378
      %v11380 = vpop.f32.mrf.mxu0
      %v11381 = vadd.f32 %v11308, %v11380
      %v11382 = vpop.f32.mrf.mxu0
      %v11383 = vadd.f32 %v11310, %v11382
      %11384 = vmatprep.mubr.bf16.mxu0 %v9228
      %11385 = vmatmul.mubr.bf16.gmra.mxu0 %v9227
      %v11386 = vpop.f32.mrf.mxu0
      %v11387 = vadd.f32 %v11314, %v11386
      %v11388 = vpop.f32.mrf.mxu0
      %v11389 = vadd.f32 %v11316, %v11388
      %v11390 = vpop.f32.mrf.mxu0
      %v11391 = vadd.f32 %v11318, %v11390
      %v11392 = vpop.f32.mrf.mxu0
      %v11393 = vadd.f32 %v11320, %v11392
      %11394 = vmatprep.mubr.bf16.mxu0 %v9240
      %11395 = vmatmul.mubr.bf16.gmra.mxu0 %v9239
      %v11396 = vpop.f32.mrf.mxu0
      %v11397 = vadd.f32 %v11324, %v11396
      %v11398 = vpop.f32.mrf.mxu0
      %v11399 = vadd.f32 %v11326, %v11398
      %v11400 = vpop.f32.mrf.mxu0
      %v11401 = vadd.f32 %v11328, %v11400
      %v11402 = vpop.f32.mrf.mxu0
      %v11403 = vadd.f32 %v11330, %v11402
      %11404 = vmatprep.mubr.bf16.mxu0 %v9252
      %11405 = vmatmul.mubr.bf16.gmra.mxu0 %v9251
      %v11406 = vpop.f32.mrf.mxu0
      %v11407 = vadd.f32 %v11334, %v11406
      %v11408 = vpop.f32.mrf.mxu0
      %v11409 = vadd.f32 %v11336, %v11408
      %v11410 = vpop.f32.mrf.mxu0
      %v11411 = vadd.f32 %v11338, %v11410
      %v11412 = vpop.f32.mrf.mxu0
      %v11413 = vadd.f32 %v11340, %v11412
      %11414 = vdwg.mxu0
      %11415 = vmatprep.subr.bf16.mxu0 %v10786
      %11416 = vmatpush1.bf16.msra.mxu0 %v10785
      %11417 = vmatprep.subr.bf16.mxu0 %v10783
      %11418 = vmatpush1.bf16.msra.mxu0 %v10782
      %11419 = vmatprep.subr.bf16.mxu0 %v10780
      %11420 = vmatpush1.bf16.msra.mxu0 %v10779
      %11421 = vmatprep.subr.bf16.mxu0 %v10777
      %11422 = vmatpush1.bf16.msra.mxu0 %v10776
      %11423 = vmatprep.subr.bf16.mxu0 %v10774
      %11424 = vmatpush1.bf16.msra.mxu0 %v10773
      %11425 = vmatprep.subr.bf16.mxu0 %v10771
      %11426 = vmatpush1.bf16.msra.mxu0 %v10770
      %11427 = vmatprep.subr.bf16.mxu0 %v10768
      %11428 = vmatpush1.bf16.msra.mxu0 %v10767
      %11429 = vmatprep.subr.bf16.mxu0 %v10765
      %11430 = vmatpush1.bf16.msra.mxu0 %v10764
      %11431 = vmatprep.subr.bf16.mxu0 %v10810
      %11432 = vmatpush2.bf16.msra.mxu0 %v10809
      %11433 = vmatprep.subr.bf16.mxu0 %v10807
      %11434 = vmatpush2.bf16.msra.mxu0 %v10806
      %11435 = vmatprep.subr.bf16.mxu0 %v10804
      %11436 = vmatpush2.bf16.msra.mxu0 %v10803
      %11437 = vmatprep.subr.bf16.mxu0 %v10801
      %11438 = vmatpush2.bf16.msra.mxu0 %v10800
      %11439 = vmatprep.subr.bf16.mxu0 %v10798
      %11440 = vmatpush2.bf16.msra.mxu0 %v10797
      %11441 = vmatprep.subr.bf16.mxu0 %v10795
      %11442 = vmatpush2.bf16.msra.mxu0 %v10794
      %11443 = vmatprep.subr.bf16.mxu0 %v10792
      %11444 = vmatpush2.bf16.msra.mxu0 %v10791
      %11445 = vmatprep.subr.bf16.mxu0 %v10789
      %11446 = vmatpush2.bf16.msra.mxu0 %v10788
      %11447 = vmatprep.mubr.bf16.mxu0 %v9218
      %11448 = vmatmul.mubr.bf16.gmra.mxu0 %v9217
      %v11449 = vpop.f32.mrf.mxu0
      %v11450 = vadd.f32 %v11377, %v11449
      %v11451 = vpop.f32.mrf.mxu0
      %v11452 = vadd.f32 %v11379, %v11451
      %v11453 = vpop.f32.mrf.mxu0
      %v11454 = vadd.f32 %v11381, %v11453
      %v11455 = vpop.f32.mrf.mxu0
      %v11456 = vadd.f32 %v11383, %v11455
      %11457 = vmatprep.mubr.bf16.mxu0 %v9230
      %11458 = vmatmul.mubr.bf16.gmra.mxu0 %v9229
      %v11459 = vpop.f32.mrf.mxu0
      %v11460 = vadd.f32 %v11387, %v11459
      %v11461 = vpop.f32.mrf.mxu0
      %v11462 = vadd.f32 %v11389, %v11461
      %v11463 = vpop.f32.mrf.mxu0
      %v11464 = vadd.f32 %v11391, %v11463
      %v11465 = vpop.f32.mrf.mxu0
      %v11466 = vadd.f32 %v11393, %v11465
      %11467 = vmatprep.mubr.bf16.mxu0 %v9242
      %11468 = vmatmul.mubr.bf16.gmra.mxu0 %v9241
      %v11469 = vpop.f32.mrf.mxu0
      %v11470 = vadd.f32 %v11397, %v11469
      %v11471 = vpop.f32.mrf.mxu0
      %v11472 = vadd.f32 %v11399, %v11471
      %v11473 = vpop.f32.mrf.mxu0
      %v11474 = vadd.f32 %v11401, %v11473
      %v11475 = vpop.f32.mrf.mxu0
      %v11476 = vadd.f32 %v11403, %v11475
      %11477 = vmatprep.mubr.bf16.mxu0 %v9254
      %11478 = vmatmul.mubr.bf16.gmra.mxu0 %v9253
      %v11479 = vpop.f32.mrf.mxu0
      %v11480 = vadd.f32 %v11407, %v11479
      %v11481 = vpop.f32.mrf.mxu0
      %v11482 = vadd.f32 %v11409, %v11481
      %v11483 = vpop.f32.mrf.mxu0
      %v11484 = vadd.f32 %v11411, %v11483
      %v11485 = vpop.f32.mrf.mxu0
      %v11486 = vadd.f32 %v11413, %v11485
      %11487 = vdwg.mxu0
      %11488 = vmatprep.subr.bf16.mxu0 %v10834
      %11489 = vmatpush1.bf16.msra.mxu0 %v10833
      %11490 = vmatprep.subr.bf16.mxu0 %v10831
      %11491 = vmatpush1.bf16.msra.mxu0 %v10830
      %11492 = vmatprep.subr.bf16.mxu0 %v10828
      %11493 = vmatpush1.bf16.msra.mxu0 %v10827
      %11494 = vmatprep.subr.bf16.mxu0 %v10825
      %11495 = vmatpush1.bf16.msra.mxu0 %v10824
      %11496 = vmatprep.subr.bf16.mxu0 %v10822
      %11497 = vmatpush1.bf16.msra.mxu0 %v10821
      %11498 = vmatprep.subr.bf16.mxu0 %v10819
      %11499 = vmatpush1.bf16.msra.mxu0 %v10818
      %11500 = vmatprep.subr.bf16.mxu0 %v10816
      %11501 = vmatpush1.bf16.msra.mxu0 %v10815
      %11502 = vmatprep.subr.bf16.mxu0 %v10813
      %11503 = vmatpush1.bf16.msra.mxu0 %v10812
      %11504 = vmatprep.subr.bf16.mxu0 %v10858
      %11505 = vmatpush2.bf16.msra.mxu0 %v10857
      %11506 = vmatprep.subr.bf16.mxu0 %v10855
      %11507 = vmatpush2.bf16.msra.mxu0 %v10854
      %11508 = vmatprep.subr.bf16.mxu0 %v10852
      %11509 = vmatpush2.bf16.msra.mxu0 %v10851
      %11510 = vmatprep.subr.bf16.mxu0 %v10849
      %11511 = vmatpush2.bf16.msra.mxu0 %v10848
      %11512 = vmatprep.subr.bf16.mxu0 %v10846
      %11513 = vmatpush2.bf16.msra.mxu0 %v10845
      %11514 = vmatprep.subr.bf16.mxu0 %v10843
      %11515 = vmatpush2.bf16.msra.mxu0 %v10842
      %11516 = vmatprep.subr.bf16.mxu0 %v10840
      %11517 = vmatpush2.bf16.msra.mxu0 %v10839
      %11518 = vmatprep.subr.bf16.mxu0 %v10837
      %11519 = vmatpush2.bf16.msra.mxu0 %v10836
      %11520 = vmatprep.mubr.bf16.mxu0 %v9220
      %11521 = vmatmul.mubr.bf16.gmra.mxu0 %v9219
      %v11522 = vpop.f32.mrf.mxu0
      %v11523 = vadd.f32 %v11450, %v11522
      %v11524 = vpop.f32.mrf.mxu0
      %v11525 = vadd.f32 %v11452, %v11524
      %v11526 = vpop.f32.mrf.mxu0
      %v11527 = vadd.f32 %v11454, %v11526
      %v11528 = vpop.f32.mrf.mxu0
      %v11529 = vadd.f32 %v11456, %v11528
      %11530 = vmatprep.mubr.bf16.mxu0 %v9232
      %11531 = vmatmul.mubr.bf16.gmra.mxu0 %v9231
      %v11532 = vpop.f32.mrf.mxu0
      %v11533 = vadd.f32 %v11460, %v11532
      %v11534 = vpop.f32.mrf.mxu0
      %v11535 = vadd.f32 %v11462, %v11534
      %v11536 = vpop.f32.mrf.mxu0
      %v11537 = vadd.f32 %v11464, %v11536
      %v11538 = vpop.f32.mrf.mxu0
      %v11539 = vadd.f32 %v11466, %v11538
      %11540 = vmatprep.mubr.bf16.mxu0 %v9244
      %11541 = vmatmul.mubr.bf16.gmra.mxu0 %v9243
      %v11542 = vpop.f32.mrf.mxu0
      %v11543 = vadd.f32 %v11470, %v11542
      %v11544 = vpop.f32.mrf.mxu0
      %v11545 = vadd.f32 %v11472, %v11544
      %v11546 = vpop.f32.mrf.mxu0
      %v11547 = vadd.f32 %v11474, %v11546
      %v11548 = vpop.f32.mrf.mxu0
      %v11549 = vadd.f32 %v11476, %v11548
      %11550 = vmatprep.mubr.bf16.mxu0 %v9256
      %11551 = vmatmul.mubr.bf16.gmra.mxu0 %v9255
      %v11552 = vpop.f32.mrf.mxu0
      %v11553 = vadd.f32 %v11480, %v11552
      %v11554 = vpop.f32.mrf.mxu0
      %v11555 = vadd.f32 %v11482, %v11554
      %v11556 = vpop.f32.mrf.mxu0
      %v11557 = vadd.f32 %v11484, %v11556
      %v11558 = vpop.f32.mrf.mxu0
      %v11559 = vadd.f32 %v11486, %v11558
      %11560 = vdwg.mxu0
      %11561 = vmatprep.subr.bf16.mxu0 %v10882
      %11562 = vmatpush1.bf16.msra.mxu0 %v10881
      %11563 = vmatprep.subr.bf16.mxu0 %v10879
      %11564 = vmatpush1.bf16.msra.mxu0 %v10878
      %11565 = vmatprep.subr.bf16.mxu0 %v10876
      %11566 = vmatpush1.bf16.msra.mxu0 %v10875
      %11567 = vmatprep.subr.bf16.mxu0 %v10873
      %11568 = vmatpush1.bf16.msra.mxu0 %v10872
      %11569 = vmatprep.subr.bf16.mxu0 %v10870
      %11570 = vmatpush1.bf16.msra.mxu0 %v10869
      %11571 = vmatprep.subr.bf16.mxu0 %v10867
      %11572 = vmatpush1.bf16.msra.mxu0 %v10866
      %11573 = vmatprep.subr.bf16.mxu0 %v10864
      %11574 = vmatpush1.bf16.msra.mxu0 %v10863
      %11575 = vmatprep.subr.bf16.mxu0 %v10861
      %11576 = vmatpush1.bf16.msra.mxu0 %v10860
      %11577 = vmatprep.subr.bf16.mxu0 %v10906
      %11578 = vmatpush2.bf16.msra.mxu0 %v10905
      %11579 = vmatprep.subr.bf16.mxu0 %v10903
      %11580 = vmatpush2.bf16.msra.mxu0 %v10902
      %11581 = vmatprep.subr.bf16.mxu0 %v10900
      %11582 = vmatpush2.bf16.msra.mxu0 %v10899
      %11583 = vmatprep.subr.bf16.mxu0 %v10897
      %11584 = vmatpush2.bf16.msra.mxu0 %v10896
      %11585 = vmatprep.subr.bf16.mxu0 %v10894
      %11586 = vmatpush2.bf16.msra.mxu0 %v10893
      %11587 = vmatprep.subr.bf16.mxu0 %v10891
      %11588 = vmatpush2.bf16.msra.mxu0 %v10890
      %11589 = vmatprep.subr.bf16.mxu0 %v10888
      %11590 = vmatpush2.bf16.msra.mxu0 %v10887
      %11591 = vmatprep.subr.bf16.mxu0 %v10885
      %11592 = vmatpush2.bf16.msra.mxu0 %v10884
      %11593 = vmatprep.mubr.bf16.mxu0 %v9222
      %11594 = vmatmul.mubr.bf16.gmra.mxu0 %v9221
      %v11595 = vpop.f32.mrf.mxu0
      %v11596 = vadd.f32 %v11523, %v11595
      %v11597 = vpop.f32.mrf.mxu0
      %v11598 = vadd.f32 %v11525, %v11597
      %v11599 = vpop.f32.mrf.mxu0
      %v11600 = vadd.f32 %v11527, %v11599
      %v11601 = vpop.f32.mrf.mxu0
      %v11602 = vadd.f32 %v11529, %v11601
      %11603 = vmatprep.mubr.bf16.mxu0 %v9234
      %11604 = vmatmul.mubr.bf16.gmra.mxu0 %v9233
      %v11605 = vpop.f32.mrf.mxu0
      %v11606 = vadd.f32 %v11533, %v11605
      %v11607 = vpop.f32.mrf.mxu0
      %v11608 = vadd.f32 %v11535, %v11607
      %v11609 = vpop.f32.mrf.mxu0
      %v11610 = vadd.f32 %v11537, %v11609
      %v11611 = vpop.f32.mrf.mxu0
      %v11612 = vadd.f32 %v11539, %v11611
      %11613 = vmatprep.mubr.bf16.mxu0 %v9246
      %11614 = vmatmul.mubr.bf16.gmra.mxu0 %v9245
      %v11615 = vpop.f32.mrf.mxu0
      %v11616 = vadd.f32 %v11543, %v11615
      %v11617 = vpop.f32.mrf.mxu0
      %v11618 = vadd.f32 %v11545, %v11617
      %v11619 = vpop.f32.mrf.mxu0
      %v11620 = vadd.f32 %v11547, %v11619
      %v11621 = vpop.f32.mrf.mxu0
      %v11622 = vadd.f32 %v11549, %v11621
      %11623 = vmatprep.mubr.bf16.mxu0 %v9258
      %11624 = vmatmul.mubr.bf16.gmra.mxu0 %v9257
      %v11625 = vpop.f32.mrf.mxu0
      %v11626 = vadd.f32 %v11553, %v11625
      %v11627 = vpop.f32.mrf.mxu0
      %v11628 = vadd.f32 %v11555, %v11627
      %v11629 = vpop.f32.mrf.mxu0
      %v11630 = vadd.f32 %v11557, %v11629
      %v11631 = vpop.f32.mrf.mxu0
      %v11632 = vadd.f32 %v11559, %v11631
      %11633 = vdwg.mxu0
      %11634 = vmatprep.subr.bf16.mxu0 0
      %11635 = vmatpush1.bf16.msra.mxu0 %v10643
      %11636 = vmatprep.subr.bf16.mxu0 0
      %11637 = vmatpush1.bf16.msra.mxu0 %v10640
      %11638 = vmatprep.subr.bf16.mxu0 0
      %11639 = vmatpush1.bf16.msra.mxu0 %v10637
      %11640 = vmatprep.subr.bf16.mxu0 0
      %11641 = vmatpush1.bf16.msra.mxu0 %v10634
      %11642 = vmatprep.subr.bf16.mxu0 0
      %11643 = vmatpush1.bf16.msra.mxu0 %v10631
      %11644 = vmatprep.subr.bf16.mxu0 0
      %11645 = vmatpush1.bf16.msra.mxu0 %v10628
      %11646 = vmatprep.subr.bf16.mxu0 0
      %11647 = vmatpush1.bf16.msra.mxu0 %v10625
      %11648 = vmatprep.subr.bf16.mxu0 0
      %11649 = vmatpush1.bf16.msra.mxu0 %v10622
      %11650 = vmatprep.subr.bf16.mxu0 0
      %11651 = vmatpush2.bf16.msra.mxu0 %v10667
      %11652 = vmatprep.subr.bf16.mxu0 0
      %11653 = vmatpush2.bf16.msra.mxu0 %v10664
      %11654 = vmatprep.subr.bf16.mxu0 0
      %11655 = vmatpush2.bf16.msra.mxu0 %v10661
      %11656 = vmatprep.subr.bf16.mxu0 0
      %11657 = vmatpush2.bf16.msra.mxu0 %v10658
      %11658 = vmatprep.subr.bf16.mxu0 0
      %11659 = vmatpush2.bf16.msra.mxu0 %v10655
      %11660 = vmatprep.subr.bf16.mxu0 0
      %11661 = vmatpush2.bf16.msra.mxu0 %v10652
      %11662 = vmatprep.subr.bf16.mxu0 0
      %11663 = vmatpush2.bf16.msra.mxu0 %v10649
      %11664 = vmatprep.subr.bf16.mxu0 0
      %11665 = vmatpush2.bf16.msra.mxu0 %v10646
      %11666 = vmatprep.mubr.bf16.mxu0 %v9212
      %11667 = vmatmul.mubr.bf16.gmra.mxu0 %v9211
      %v11668 = vpop.f32.mrf.mxu0
      %v11669 = vadd.f32 %v9656, %v11668
      %v11670 = vpop.f32.mrf.mxu0
      %v11671 = vpop.f32.mrf.mxu0
      %v11672 = vadd.f32 %v9656, %v11671
      %v11673 = vpop.f32.mrf.mxu0
      %11674 = vmatprep.mubr.bf16.mxu0 %v9224
      %11675 = vmatmul.mubr.bf16.gmra.mxu0 %v9223
      %v11676 = vpop.f32.mrf.mxu0
      %v11677 = vadd.f32 %v9656, %v11676
      %v11678 = vpop.f32.mrf.mxu0
      %v11679 = vpop.f32.mrf.mxu0
      %v11680 = vadd.f32 %v9656, %v11679
      %v11681 = vpop.f32.mrf.mxu0
      %11682 = vmatprep.mubr.bf16.mxu0 %v9236
      %11683 = vmatmul.mubr.bf16.gmra.mxu0 %v9235
      %v11684 = vpop.f32.mrf.mxu0
      %v11685 = vadd.f32 %v9656, %v11684
      %v11686 = vpop.f32.mrf.mxu0
      %v11687 = vpop.f32.mrf.mxu0
      %v11688 = vadd.f32 %v9656, %v11687
      %v11689 = vpop.f32.mrf.mxu0
      %11690 = vmatprep.mubr.bf16.mxu0 %v9248
      %11691 = vmatmul.mubr.bf16.gmra.mxu0 %v9247
      %v11692 = vpop.f32.mrf.mxu0
      %v11693 = vadd.f32 %v9656, %v11692
      %v11694 = vpop.f32.mrf.mxu0
      %v11695 = vpop.f32.mrf.mxu0
      %v11696 = vadd.f32 %v9656, %v11695
      %v11697 = vpop.f32.mrf.mxu0
      %11698 = vdwg.mxu0
      %11699 = vmatprep.subr.bf16.mxu0 0
      %11700 = vmatpush1.bf16.msra.mxu0 %v10691
      %11701 = vmatprep.subr.bf16.mxu0 0
      %11702 = vmatpush1.bf16.msra.mxu0 %v10688
      %11703 = vmatprep.subr.bf16.mxu0 0
      %11704 = vmatpush1.bf16.msra.mxu0 %v10685
      %11705 = vmatprep.subr.bf16.mxu0 0
      %11706 = vmatpush1.bf16.msra.mxu0 %v10682
      %11707 = vmatprep.subr.bf16.mxu0 0
      %11708 = vmatpush1.bf16.msra.mxu0 %v10679
      %11709 = vmatprep.subr.bf16.mxu0 0
      %11710 = vmatpush1.bf16.msra.mxu0 %v10676
      %11711 = vmatprep.subr.bf16.mxu0 0
      %11712 = vmatpush1.bf16.msra.mxu0 %v10673
      %11713 = vmatprep.subr.bf16.mxu0 0
      %11714 = vmatpush1.bf16.msra.mxu0 %v10670
      %11715 = vmatprep.subr.bf16.mxu0 0
      %11716 = vmatpush2.bf16.msra.mxu0 %v10715
      %11717 = vmatprep.subr.bf16.mxu0 0
      %11718 = vmatpush2.bf16.msra.mxu0 %v10712
      %11719 = vmatprep.subr.bf16.mxu0 0
      %11720 = vmatpush2.bf16.msra.mxu0 %v10709
      %11721 = vmatprep.subr.bf16.mxu0 0
      %11722 = vmatpush2.bf16.msra.mxu0 %v10706
      %11723 = vmatprep.subr.bf16.mxu0 0
      %11724 = vmatpush2.bf16.msra.mxu0 %v10703
      %11725 = vmatprep.subr.bf16.mxu0 0
      %11726 = vmatpush2.bf16.msra.mxu0 %v10700
      %11727 = vmatprep.subr.bf16.mxu0 0
      %11728 = vmatpush2.bf16.msra.mxu0 %v10697
      %11729 = vmatprep.subr.bf16.mxu0 0
      %11730 = vmatpush2.bf16.msra.mxu0 %v10694
      %11731 = vmatprep.mubr.bf16.mxu0 %v9214
      %11732 = vmatmul.mubr.bf16.gmra.mxu0 %v9213
      %v11733 = vpop.f32.mrf.mxu0
      %v11734 = vadd.f32 %v11669, %v11733
      %v11735 = vpop.f32.mrf.mxu0
      %v11736 = vpop.f32.mrf.mxu0
      %v11737 = vadd.f32 %v11672, %v11736
      %v11738 = vpop.f32.mrf.mxu0
      %11739 = vmatprep.mubr.bf16.mxu0 %v9226
      %11740 = vmatmul.mubr.bf16.gmra.mxu0 %v9225
      %v11741 = vpop.f32.mrf.mxu0
      %v11742 = vadd.f32 %v11677, %v11741
      %v11743 = vpop.f32.mrf.mxu0
      %v11744 = vpop.f32.mrf.mxu0
      %v11745 = vadd.f32 %v11680, %v11744
      %v11746 = vpop.f32.mrf.mxu0
      %11747 = vmatprep.mubr.bf16.mxu0 %v9238
      %11748 = vmatmul.mubr.bf16.gmra.mxu0 %v9237
      %v11749 = vpop.f32.mrf.mxu0
      %v11750 = vadd.f32 %v11685, %v11749
      %v11751 = vpop.f32.mrf.mxu0
      %v11752 = vpop.f32.mrf.mxu0
      %v11753 = vadd.f32 %v11688, %v11752
      %v11754 = vpop.f32.mrf.mxu0
      %11755 = vmatprep.mubr.bf16.mxu0 %v9250
      %11756 = vmatmul.mubr.bf16.gmra.mxu0 %v9249
      %v11757 = vpop.f32.mrf.mxu0
      %v11758 = vadd.f32 %v11693, %v11757
      %v11759 = vpop.f32.mrf.mxu0
      %v11760 = vpop.f32.mrf.mxu0
      %v11761 = vadd.f32 %v11696, %v11760
      %v11762 = vpop.f32.mrf.mxu0
      %11763 = vdwg.mxu0
      %11764 = vmatprep.subr.bf16.mxu0 0
      %11765 = vmatpush1.bf16.msra.mxu0 %v10739
      %11766 = vmatprep.subr.bf16.mxu0 0
      %11767 = vmatpush1.bf16.msra.mxu0 %v10736
      %11768 = vmatprep.subr.bf16.mxu0 0
      %11769 = vmatpush1.bf16.msra.mxu0 %v10733
      %11770 = vmatprep.subr.bf16.mxu0 0
      %11771 = vmatpush1.bf16.msra.mxu0 %v10730
      %11772 = vmatprep.subr.bf16.mxu0 0
      %11773 = vmatpush1.bf16.msra.mxu0 %v10727
      %11774 = vmatprep.subr.bf16.mxu0 0
      %11775 = vmatpush1.bf16.msra.mxu0 %v10724
      %11776 = vmatprep.subr.bf16.mxu0 0
      %11777 = vmatpush1.bf16.msra.mxu0 %v10721
      %11778 = vmatprep.subr.bf16.mxu0 0
      %11779 = vmatpush1.bf16.msra.mxu0 %v10718
      %11780 = vmatprep.subr.bf16.mxu0 0
      %11781 = vmatpush2.bf16.msra.mxu0 %v10763
      %11782 = vmatprep.subr.bf16.mxu0 0
      %11783 = vmatpush2.bf16.msra.mxu0 %v10760
      %11784 = vmatprep.subr.bf16.mxu0 0
      %11785 = vmatpush2.bf16.msra.mxu0 %v10757
      %11786 = vmatprep.subr.bf16.mxu0 0
      %11787 = vmatpush2.bf16.msra.mxu0 %v10754
      %11788 = vmatprep.subr.bf16.mxu0 0
      %11789 = vmatpush2.bf16.msra.mxu0 %v10751
      %11790 = vmatprep.subr.bf16.mxu0 0
      %11791 = vmatpush2.bf16.msra.mxu0 %v10748
      %11792 = vmatprep.subr.bf16.mxu0 0
      %11793 = vmatpush2.bf16.msra.mxu0 %v10745
      %11794 = vmatprep.subr.bf16.mxu0 0
      %11795 = vmatpush2.bf16.msra.mxu0 %v10742
      %11796 = vmatprep.mubr.bf16.mxu0 %v9216
      %11797 = vmatmul.mubr.bf16.gmra.mxu0 %v9215
      %v11798 = vpop.f32.mrf.mxu0
      %v11799 = vadd.f32 %v11734, %v11798
      %v11800 = vpop.f32.mrf.mxu0
      %v11801 = vpop.f32.mrf.mxu0
      %v11802 = vadd.f32 %v11737, %v11801
      %v11803 = vpop.f32.mrf.mxu0
      %11804 = vmatprep.mubr.bf16.mxu0 %v9228
      %11805 = vmatmul.mubr.bf16.gmra.mxu0 %v9227
      %v11806 = vpop.f32.mrf.mxu0
      %v11807 = vadd.f32 %v11742, %v11806
      %v11808 = vpop.f32.mrf.mxu0
      %v11809 = vpop.f32.mrf.mxu0
      %v11810 = vadd.f32 %v11745, %v11809
      %v11811 = vpop.f32.mrf.mxu0
      %11812 = vmatprep.mubr.bf16.mxu0 %v9240
      %11813 = vmatmul.mubr.bf16.gmra.mxu0 %v9239
      %v11814 = vpop.f32.mrf.mxu0
      %v11815 = vadd.f32 %v11750, %v11814
      %v11816 = vpop.f32.mrf.mxu0
      %v11817 = vpop.f32.mrf.mxu0
      %v11818 = vadd.f32 %v11753, %v11817
      %v11819 = vpop.f32.mrf.mxu0
      %11820 = vmatprep.mubr.bf16.mxu0 %v9252
      %11821 = vmatmul.mubr.bf16.gmra.mxu0 %v9251
      %v11822 = vpop.f32.mrf.mxu0
      %v11823 = vadd.f32 %v11758, %v11822
      %v11824 = vpop.f32.mrf.mxu0
      %v11825 = vpop.f32.mrf.mxu0
      %v11826 = vadd.f32 %v11761, %v11825
      %v11827 = vpop.f32.mrf.mxu0
      %11828 = vdwg.mxu0
      %11829 = vmatprep.subr.bf16.mxu0 0
      %11830 = vmatpush1.bf16.msra.mxu0 %v10787
      %11831 = vmatprep.subr.bf16.mxu0 0
      %11832 = vmatpush1.bf16.msra.mxu0 %v10784
      %11833 = vmatprep.subr.bf16.mxu0 0
      %11834 = vmatpush1.bf16.msra.mxu0 %v10781
      %11835 = vmatprep.subr.bf16.mxu0 0
      %11836 = vmatpush1.bf16.msra.mxu0 %v10778
      %11837 = vmatprep.subr.bf16.mxu0 0
      %11838 = vmatpush1.bf16.msra.mxu0 %v10775
      %11839 = vmatprep.subr.bf16.mxu0 0
      %11840 = vmatpush1.bf16.msra.mxu0 %v10772
      %11841 = vmatprep.subr.bf16.mxu0 0
      %11842 = vmatpush1.bf16.msra.mxu0 %v10769
      %11843 = vmatprep.subr.bf16.mxu0 0
      %11844 = vmatpush1.bf16.msra.mxu0 %v10766
      %11845 = vmatprep.subr.bf16.mxu0 0
      %11846 = vmatpush2.bf16.msra.mxu0 %v10811
      %11847 = vmatprep.subr.bf16.mxu0 0
      %11848 = vmatpush2.bf16.msra.mxu0 %v10808
      %11849 = vmatprep.subr.bf16.mxu0 0
      %11850 = vmatpush2.bf16.msra.mxu0 %v10805
      %11851 = vmatprep.subr.bf16.mxu0 0
      %11852 = vmatpush2.bf16.msra.mxu0 %v10802
      %11853 = vmatprep.subr.bf16.mxu0 0
      %11854 = vmatpush2.bf16.msra.mxu0 %v10799
      %11855 = vmatprep.subr.bf16.mxu0 0
      %11856 = vmatpush2.bf16.msra.mxu0 %v10796
      %11857 = vmatprep.subr.bf16.mxu0 0
      %11858 = vmatpush2.bf16.msra.mxu0 %v10793
      %11859 = vmatprep.subr.bf16.mxu0 0
      %11860 = vmatpush2.bf16.msra.mxu0 %v10790
      %11861 = vmatprep.mubr.bf16.mxu0 %v9218
      %11862 = vmatmul.mubr.bf16.gmra.mxu0 %v9217
      %v11863 = vpop.f32.mrf.mxu0
      %v11864 = vadd.f32 %v11799, %v11863
      %v11865 = vpop.f32.mrf.mxu0
      %v11866 = vpop.f32.mrf.mxu0
      %v11867 = vadd.f32 %v11802, %v11866
      %v11868 = vpop.f32.mrf.mxu0
      %11869 = vmatprep.mubr.bf16.mxu0 %v9230
      %11870 = vmatmul.mubr.bf16.gmra.mxu0 %v9229
      %v11871 = vpop.f32.mrf.mxu0
      %v11872 = vadd.f32 %v11807, %v11871
      %v11873 = vpop.f32.mrf.mxu0
      %v11874 = vpop.f32.mrf.mxu0
      %v11875 = vadd.f32 %v11810, %v11874
      %v11876 = vpop.f32.mrf.mxu0
      %11877 = vmatprep.mubr.bf16.mxu0 %v9242
      %11878 = vmatmul.mubr.bf16.gmra.mxu0 %v9241
      %v11879 = vpop.f32.mrf.mxu0
      %v11880 = vadd.f32 %v11815, %v11879
      %v11881 = vpop.f32.mrf.mxu0
      %v11882 = vpop.f32.mrf.mxu0
      %v11883 = vadd.f32 %v11818, %v11882
      %v11884 = vpop.f32.mrf.mxu0
      %11885 = vmatprep.mubr.bf16.mxu0 %v9254
      %11886 = vmatmul.mubr.bf16.gmra.mxu0 %v9253
      %v11887 = vpop.f32.mrf.mxu0
      %v11888 = vadd.f32 %v11823, %v11887
      %v11889 = vpop.f32.mrf.mxu0
      %v11890 = vpop.f32.mrf.mxu0
      %v11891 = vadd.f32 %v11826, %v11890
      %v11892 = vpop.f32.mrf.mxu0
      %11893 = vdwg.mxu0
      %11894 = vmatprep.subr.bf16.mxu0 0
      %11895 = vmatpush1.bf16.msra.mxu0 %v10835
      %11896 = vmatprep.subr.bf16.mxu0 0
      %11897 = vmatpush1.bf16.msra.mxu0 %v10832
      %11898 = vmatprep.subr.bf16.mxu0 0
      %11899 = vmatpush1.bf16.msra.mxu0 %v10829
      %11900 = vmatprep.subr.bf16.mxu0 0
      %11901 = vmatpush1.bf16.msra.mxu0 %v10826
      %11902 = vmatprep.subr.bf16.mxu0 0
      %11903 = vmatpush1.bf16.msra.mxu0 %v10823
      %11904 = vmatprep.subr.bf16.mxu0 0
      %11905 = vmatpush1.bf16.msra.mxu0 %v10820
      %11906 = vmatprep.subr.bf16.mxu0 0
      %11907 = vmatpush1.bf16.msra.mxu0 %v10817
      %11908 = vmatprep.subr.bf16.mxu0 0
      %11909 = vmatpush1.bf16.msra.mxu0 %v10814
      %11910 = vmatprep.subr.bf16.mxu0 0
      %11911 = vmatpush2.bf16.msra.mxu0 %v10859
      %11912 = vmatprep.subr.bf16.mxu0 0
      %11913 = vmatpush2.bf16.msra.mxu0 %v10856
      %11914 = vmatprep.subr.bf16.mxu0 0
      %11915 = vmatpush2.bf16.msra.mxu0 %v10853
      %11916 = vmatprep.subr.bf16.mxu0 0
      %11917 = vmatpush2.bf16.msra.mxu0 %v10850
      %11918 = vmatprep.subr.bf16.mxu0 0
      %11919 = vmatpush2.bf16.msra.mxu0 %v10847
      %11920 = vmatprep.subr.bf16.mxu0 0
      %11921 = vmatpush2.bf16.msra.mxu0 %v10844
      %11922 = vmatprep.subr.bf16.mxu0 0
      %11923 = vmatpush2.bf16.msra.mxu0 %v10841
      %11924 = vmatprep.subr.bf16.mxu0 0
      %11925 = vmatpush2.bf16.msra.mxu0 %v10838
      %11926 = vmatprep.mubr.bf16.mxu0 %v9220
      %11927 = vmatmul.mubr.bf16.gmra.mxu0 %v9219
      %v11928 = vpop.f32.mrf.mxu0
      %v11929 = vadd.f32 %v11864, %v11928
      %v11930 = vpop.f32.mrf.mxu0
      %v11931 = vpop.f32.mrf.mxu0
      %v11932 = vadd.f32 %v11867, %v11931
      %v11933 = vpop.f32.mrf.mxu0
      %11934 = vmatprep.mubr.bf16.mxu0 %v9232
      %11935 = vmatmul.mubr.bf16.gmra.mxu0 %v9231
      %v11936 = vpop.f32.mrf.mxu0
      %v11937 = vadd.f32 %v11872, %v11936
      %v11938 = vpop.f32.mrf.mxu0
      %v11939 = vpop.f32.mrf.mxu0
      %v11940 = vadd.f32 %v11875, %v11939
      %v11941 = vpop.f32.mrf.mxu0
      %11942 = vmatprep.mubr.bf16.mxu0 %v9244
      %11943 = vmatmul.mubr.bf16.gmra.mxu0 %v9243
      %v11944 = vpop.f32.mrf.mxu0
      %v11945 = vadd.f32 %v11880, %v11944
      %v11946 = vpop.f32.mrf.mxu0
      %v11947 = vpop.f32.mrf.mxu0
      %v11948 = vadd.f32 %v11883, %v11947
      %v11949 = vpop.f32.mrf.mxu0
      %11950 = vmatprep.mubr.bf16.mxu0 %v9256
      %11951 = vmatmul.mubr.bf16.gmra.mxu0 %v9255
      %v11952 = vpop.f32.mrf.mxu0
      %v11953 = vadd.f32 %v11888, %v11952
      %v11954 = vpop.f32.mrf.mxu0
      %v11955 = vpop.f32.mrf.mxu0
      %v11956 = vadd.f32 %v11891, %v11955
      %v11957 = vpop.f32.mrf.mxu0
      %11958 = vdwg.mxu0
      %11959 = vmatprep.subr.bf16.mxu0 0
      %11960 = vmatpush1.bf16.msra.mxu0 %v10883
      %11961 = vmatprep.subr.bf16.mxu0 0
      %11962 = vmatpush1.bf16.msra.mxu0 %v10880
      %11963 = vmatprep.subr.bf16.mxu0 0
      %11964 = vmatpush1.bf16.msra.mxu0 %v10877
      %11965 = vmatprep.subr.bf16.mxu0 0
      %11966 = vmatpush1.bf16.msra.mxu0 %v10874
      %11967 = vmatprep.subr.bf16.mxu0 0
      %11968 = vmatpush1.bf16.msra.mxu0 %v10871
      %11969 = vmatprep.subr.bf16.mxu0 0
      %11970 = vmatpush1.bf16.msra.mxu0 %v10868
      %11971 = vmatprep.subr.bf16.mxu0 0
      %11972 = vmatpush1.bf16.msra.mxu0 %v10865
      %11973 = vmatprep.subr.bf16.mxu0 0
      %11974 = vmatpush1.bf16.msra.mxu0 %v10862
      %11975 = vmatprep.subr.bf16.mxu0 0
      %11976 = vmatpush2.bf16.msra.mxu0 %v10907
      %11977 = vmatprep.subr.bf16.mxu0 0
      %11978 = vmatpush2.bf16.msra.mxu0 %v10904
      %11979 = vmatprep.subr.bf16.mxu0 0
      %11980 = vmatpush2.bf16.msra.mxu0 %v10901
      %11981 = vmatprep.subr.bf16.mxu0 0
      %11982 = vmatpush2.bf16.msra.mxu0 %v10898
      %11983 = vmatprep.subr.bf16.mxu0 0
      %11984 = vmatpush2.bf16.msra.mxu0 %v10895
      %11985 = vmatprep.subr.bf16.mxu0 0
      %11986 = vmatpush2.bf16.msra.mxu0 %v10892
      %11987 = vmatprep.subr.bf16.mxu0 0
      %11988 = vmatpush2.bf16.msra.mxu0 %v10889
      %11989 = vmatprep.subr.bf16.mxu0 0
      %11990 = vmatpush2.bf16.msra.mxu0 %v10886
      %11991 = vmatprep.mubr.bf16.mxu0 %v9222
      %11992 = vmatmul.mubr.bf16.gmra.mxu0 %v9221
      %v11993 = vpop.f32.mrf.mxu0
      %v11994 = vadd.f32 %v11929, %v11993
      %v11995 = vpop.f32.mrf.mxu0
      %v11996 = vpop.f32.mrf.mxu0
      %v11997 = vadd.f32 %v11932, %v11996
      %v11998 = vpop.f32.mrf.mxu0
      %11999 = vmatprep.mubr.bf16.mxu0 %v9234
      %12000 = vmatmul.mubr.bf16.gmra.mxu0 %v9233
      %v12001 = vpop.f32.mrf.mxu0
      %v12002 = vadd.f32 %v11937, %v12001
      %v12003 = vpop.f32.mrf.mxu0
      %v12004 = vpop.f32.mrf.mxu0
      %v12005 = vadd.f32 %v11940, %v12004
      %v12006 = vpop.f32.mrf.mxu0
      %12007 = vmatprep.mubr.bf16.mxu0 %v9246
      %12008 = vmatmul.mubr.bf16.gmra.mxu0 %v9245
      %v12009 = vpop.f32.mrf.mxu0
      %v12010 = vadd.f32 %v11945, %v12009
      %v12011 = vpop.f32.mrf.mxu0
      %v12012 = vpop.f32.mrf.mxu0
      %v12013 = vadd.f32 %v11948, %v12012
      %v12014 = vpop.f32.mrf.mxu0
      %12015 = vmatprep.mubr.bf16.mxu0 %v9258
      %12016 = vmatmul.mubr.bf16.gmra.mxu0 %v9257
      %v12017 = vpop.f32.mrf.mxu0
      %v12018 = vadd.f32 %v11953, %v12017
      %v12019 = vpop.f32.mrf.mxu0
      %v12020 = vpop.f32.mrf.mxu0
      %v12021 = vadd.f32 %v11956, %v12020
      %v12022 = vpop.f32.mrf.mxu0
      %12023 = vdwg.mxu0
      %v12024 = vadd.f32 %v11596, %v6161
      %v12025 = vadd.f32 %v11598, %v6162
      %v12026 = vadd.f32 %v11994, %v6163
      %v12027 = vadd.f32 %v11600, %v6164
      %v12028 = vadd.f32 %v11602, %v6165
      %v12029 = vadd.f32 %v11997, %v6166
      %v12030 = vadd.f32 %v11606, %v6167
      %v12031 = vadd.f32 %v11608, %v6168
      %v12032 = vadd.f32 %v12002, %v6169
      %v12033 = vadd.f32 %v11610, %v6170
      %v12034 = vadd.f32 %v11612, %v6171
      %v12035 = vadd.f32 %v12005, %v6172
      %v12036 = vadd.f32 %v11616, %v6173
      %v12037 = vadd.f32 %v11618, %v6174
      %v12038 = vadd.f32 %v12010, %v6175
      %v12039 = vadd.f32 %v11620, %v6176
      %v12040 = vadd.f32 %v11622, %v6177
      %v12041 = vadd.f32 %v12013, %v6178
      %v12042 = vadd.f32 %v11626, %v6179
      %v12043 = vadd.f32 %v11628, %v6180
      %v12044 = vadd.f32 %v12018, %v6181
      %v12045 = vadd.f32 %v11630, %v6182
      %v12046 = vadd.f32 %v11632, %v6183
      %v12047 = vadd.f32 %v12021, %v6184
      %v12048 = vpack.c.bf16 %v12027, %v12024
      %v12049 = vpack.c.bf16 %v12028, %v12025
      %v12050 = vpack.c.bf16 %v12029, %v12026
      %v12051 = vpack.c.bf16 %v12033, %v12030
      %v12052 = vpack.c.bf16 %v12034, %v12031
      %v12053 = vpack.c.bf16 %v12035, %v12032
      %v12054 = vpack.c.bf16 %v12039, %v12036
      %v12055 = vpack.c.bf16 %v12040, %v12037
      %v12056 = vpack.c.bf16 %v12041, %v12038
      %v12057 = vpack.c.bf16 %v12045, %v12042
      %v12058 = vpack.c.bf16 %v12046, %v12043
      %v12059 = vpack.c.bf16 %v12047, %v12044
      %v12072 = vunpack.c.l.b16 %v12048
      %v12073 = vunpack.c.l.b16 %v12049
      %v12074 = vunpack.c.l.b16 %v12050
      %v12075 = vunpack.c.h.b16 %v12048
      %v12076 = vunpack.c.h.b16 %v12049
      %v12077 = vunpack.c.h.b16 %v12050
      %v12078 = vunpack.c.l.b16 %v12051
      %v12079 = vunpack.c.l.b16 %v12052
      %v12080 = vunpack.c.l.b16 %v12053
      %v12081 = vunpack.c.h.b16 %v12051
      %v12082 = vunpack.c.h.b16 %v12052
      %v12083 = vunpack.c.h.b16 %v12053
      %v12084 = vunpack.c.l.b16 %v12054
      %v12085 = vunpack.c.l.b16 %v12055
      %v12086 = vunpack.c.l.b16 %v12056
      %v12087 = vunpack.c.h.b16 %v12054
      %v12088 = vunpack.c.h.b16 %v12055
      %v12089 = vunpack.c.h.b16 %v12056
      %v12090 = vunpack.c.l.b16 %v12057
      %v12091 = vunpack.c.l.b16 %v12058
      %v12092 = vunpack.c.l.b16 %v12059
      %v12093 = vunpack.c.h.b16 %v12057
      %v12094 = vunpack.c.h.b16 %v12058
      %v12095 = vunpack.c.h.b16 %v12059
      %v12096 = vpack.c.b16 %v12073, %v12072
      %v12097 = vpack.c.b16 %v12074, %v12074
      %v12098 = vpack.c.b16 %v12076, %v12075
      %v12099 = vpack.c.b16 %v12077, %v12077
      %v12100 = vpack.c.b16 %v12079, %v12078
      %v12101 = vpack.c.b16 %v12080, %v12080
      %v12102 = vpack.c.b16 %v12082, %v12081
      %v12103 = vpack.c.b16 %v12083, %v12083
      %v12104 = vpack.c.b16 %v12085, %v12084
      %v12105 = vpack.c.b16 %v12086, %v12086
      %v12106 = vpack.c.b16 %v12088, %v12087
      %v12107 = vpack.c.b16 %v12089, %v12089
      %v12108 = vpack.c.b16 %v12091, %v12090
      %v12109 = vpack.c.b16 %v12092, %v12092
      %v12110 = vpack.c.b16 %v12094, %v12093
      %v12111 = vpack.c.b16 %v12095, %v12095
      %12128 = vst [vmem:[%s413] sm:$0xff] %v12096
      %12129 = vst [vmem:[%s413 + $0x8] sm:$0xf] %v12097
      %12130 = vst [vmem:[%s413 + $0xc] sm:$0xff] %v12098
      %12131 = vst [vmem:[%s413 + $0x14] sm:$0xf] %v12099
      %12132 = vst [vmem:[%s413 + $0x18] sm:$0xff] %v12100
      %12133 = vst [vmem:[%s413 + $0x20] sm:$0xf] %v12101
      %12134 = vst [vmem:[%s413 + $0x24] sm:$0xff] %v12102
      %12135 = vst [vmem:[%s413 + $0x2c] sm:$0xf] %v12103
      %12136 = vst [vmem:[%s413 + $0x30] sm:$0xff] %v12104
      %12137 = vst [vmem:[%s413 + $0x38] sm:$0xf] %v12105
      %12138 = vst [vmem:[%s413 + $0x3c] sm:$0xff] %v12106
      %12139 = vst [vmem:[%s413 + $0x44] sm:$0xf] %v12107
      %12140 = vst [vmem:[%s413 + $0x48] sm:$0xff] %v12108
      %12141 = vst [vmem:[%s413 + $0x50] sm:$0xf] %v12109
      %12142 = vst [vmem:[%s413 + $0x54] sm:$0xff] %v12110
      %12143 = vst [vmem:[%s413 + $0x5c] sm:$0xf] %v12111
      %p12144 = scmp.lt.s32.totalorder %s23, 1
      %s12145 = scalar_select %p12144, %s23, 1
      %s12146 = smul.addr %s12145, 24
      %s12147 = smul.addr %s12146, 4
      %s12148 = scalar_lea.vmem %s12, %s12147
      // Predicated region
      $region69: #{_lambda_.7} parent=67 // pred_check
        %p12149 = pneg %p298
      $region70: #{_lambda_.7} parent=67 // pred_check_branch
        %12151 = sbr.rel (%p12149) target = $region72
      $region71: #{_lambda_.7} parent=67 // pred_region
        _
      $region72: #{_lambda_.7} parent=67 // pred_fallthru
        _
    $region68: #{_lambda_.7} parent=5 // pred_fallthru
      _
    %p12152 = scmp.le.s32.totalorder 2, %s18
    // Predicated region
    $region73: #{_lambda_.7} parent=5 // pred_check
      %p12153 = pneg %p12152
    $region74: #{_lambda_.7} parent=5 // pred_check_branch
      %12155 = sbr.rel (%p12153) target = $region76
    $region75: #{_lambda_.7} parent=5 // pred_region
      %s12156 = ssub.s32 %s18, 2
      // Predicated region
      $region77: #{_lambda_.7} parent=75 // pred_check
        %p12157 = pneg %p304
      $region78: #{_lambda_.7} parent=75 // pred_check_branch
        %12159 = sbr.rel (%p12157) target = $region80
      $region79: #{_lambda_.7} parent=75 // pred_region
        %p12160 = scmp.lt.s32.totalorder %s24, 1
        %s12161 = scalar_select %p12160, %s24, 1
        %s12162 = smul.addr %s12161, 24
        %s12163 = smul.addr %s12162, 4
        %s12164 = scalar_lea.vmem %s12, %s12163
      $region80: #{_lambda_.7} parent=75 // pred_fallthru
        _
    $region76: #{_lambda_.7} parent=5 // pred_fallthru
      _
  $region6: #{_lambda_.7} parent=0 // loop_footer
    %s22 = sadd.s32 1, %s18
  $region7: #{_lambda_.7} parent=0 // loop_footer_branch
    %17 = sbr.rel target = $region3
  $region8: #{_lambda_.7} parent=0 // loop_exit
    _

</llo_original>
